<compile_context>
chip_gen: v6e
topology: v6e:2x2x1
jax: 0.10.0
libtpu: 0.0.40
codegen_flags: <defaults>
</compile_context>

<pallas_src>
import math

import jax
import jax.numpy as jnp
from jax import lax
from jax.experimental import pallas as pl
from jax.experimental.pallas import tpu as pltpu


def _stable_softplus(x):
    # == log(exp(x) + 1) (the literal PyTorch expression), but does not overflow for
    # large x (the literal form overflows to inf for x >~ 88 in f32).  Matches F.softplus.
    return jnp.maximum(x, 0.0) + jnp.log(1.0 + jnp.exp(-jnp.abs(x)))


def deep_factor_kernel(
    x_ref,      # (T, F, Bt)       time features: time-major, batch on the LANE axis
    wxT_ref,    # (12Hp, F)        fused input weights, rows [gf|gb|lf|lb] x [r|z|n] (Hp-padded)
    bx_ref,     # (12Hp, 1)        fused input biases (constant embedding already folded in)
    whh_ref,    # (12Hp, 4Hp)      block-diagonal recurrent weights -> ONE dot per step
    bhh_ref,    # (12Hp, 1)        fused recurrent biases
    load_ref,   # (2, Hp, 1)       loading vector: [forward half, backward half]
    fe_ref,     # (T, Bt)          out: exp(<global factors, loadings>)  (no in-kernel transpose)
    re_ref,     # (2, T, Hp, Bt)   out: softplus(local GRU outputs), direction-major
    proj_s,     # (4, T, 3Hp, Bt)  scratch: per-direction precomputed input projections
    gf_s,       # (T, Hp, Bt)      scratch: global forward hidden states
    gb_s,       # (T, Hp, Bt)      scratch: global backward hidden states
):
    T, F, Bt = x_ref.shape
    Hp = whh_ref.shape[0] // 12
    Hp3 = 3 * Hp

    # Hoist all (tiny) weights out of the loops.
    wxT = wxT_ref[...]
    bx = bx_ref[...]
    whh = whh_ref[...]
    bhh = bhh_ref[...]

    # ---- 1) Input projections for all 4 GRU directions (prologue, off the serial
    #         recurrence path).  Batch stays dense on lanes; the 4 direction blocks are
    #         scattered with sublane-aligned (3Hp-row) slices into a direction-major scratch.
    def project(t, _):
        p = jnp.dot(wxT, x_ref[t], preferred_element_type=jnp.float32) + bx   # (12Hp, Bt)
        for g in range(4):
            proj_s[g, t] = p[g * Hp3:(g + 1) * Hp3]
        return 0

    if T <= 32:
        for t in range(T):
            project(t, 0)
    else:
        lax.fori_loop(0, T, project, 0, unroll=4)

    def gru_gates(xp, hpg, h_prev):
        # PyTorch GRU gate order [r, z, n]; note b_hn stays inside the r* term.
        r = jax.nn.sigmoid(xp[0:Hp] + hpg[0:Hp])
        z = jax.nn.sigmoid(xp[Hp:2 * Hp] + hpg[Hp:2 * Hp])
        n = jnp.tanh(xp[2 * Hp:3 * Hp] + r * hpg[2 * Hp:3 * Hp])
        return (1.0 - z) * n + z * h_prev

    # ---- 2) All four recurrences advanced together in one loop step (fwd chains walk t up,
    #         bwd chains walk t down); ONE block-diagonal recurrent matmul per step.
    def step(i, h):                                     # h: (4Hp, Bt), batch on lanes
        tf = i
        tb = T - 1 - i
        hp = jnp.dot(whh, h, preferred_element_type=jnp.float32) + bhh       # (12Hp, Bt)
        h_gf = gru_gates(proj_s[0, tf], hp[0 * Hp3:1 * Hp3], h[0 * Hp:1 * Hp])
        h_gb = gru_gates(proj_s[1, tb], hp[1 * Hp3:2 * Hp3], h[1 * Hp:2 * Hp])
        h_lf = gru_gates(proj_s[2, tf], hp[2 * Hp3:3 * Hp3], h[2 * Hp:3 * Hp])
        h_lb = gru_gates(proj_s[3, tb], hp[3 * Hp3:4 * Hp3], h[3 * Hp:4 * Hp])
        gf_s[tf] = h_gf
        gb_s[tb] = h_gb
        # softplus applied at write time: the EUP slot is idle during the latency-bound
        # recurrence, and this removes the full re-read/re-write epilogue on re_ref.
        re_ref[0, tf] = _stable_softplus(h_lf)
        re_ref[1, tb] = _stable_softplus(h_lb)
        return jnp.concatenate([h_gf, h_gb, h_lf, h_lb], axis=0)

    h0 = jnp.zeros((4 * Hp, Bt), jnp.float32)
    if T <= 32:
        # Full unroll: lets the scheduler co-issue MXU/EUP/VPU work across neighbouring steps.
        h = h0
        for i in range(T):
            h = step(i, h)
    else:
        # TODO(synk): for production-size T, also stream proj_s over T chunks
        # (pltpu.emit_pipeline) instead of holding the whole projection in VMEM.
        lax.fori_loop(0, T, step, h0, unroll=2)

    # ---- 3) Tiny vectorised epilogue: loading reduction + exp, written (T, Bt) with batch
    #         lane-dense and no transpose (the (B, T, 1) layout is produced in the wrapper).
    expo = (jnp.sum(gf_s[...] * load_ref[0][None], axis=1) +
            jnp.sum(gb_s[...] * load_ref[1][None], axis=1))                   # (T, Bt)
    fe_ref[...] = jnp.exp(expo)


def deep_factor_forward(x, x_mark, y_mark, params, *, batch_tile=None):
    del x, y_mark  # unused by the PyTorch forward as well
    B, T, F = x_mark.shape
    E = params["b_embed"].shape[1]
    H = params["whh_gf"].shape[0]
    K = params["w_load"].shape[1]
    assert K == 2 * H, "num_factors must equal 2*num_hidden_global for the bmm to be valid"
    Hp = ((H + 7) // 8) * 8        # pad hidden size so every gate block is sublane-aligned

    f32 = jnp.float32

    def pad_gates(w):
        # (..., 3H) -> (..., 3Hp): zero-pad each of the [r|z|n] blocks independently.
        pads = [(0, 0)] * (w.ndim - 1) + [(0, Hp - H)]
        return jnp.concatenate(
            [jnp.pad(w[..., i * H:(i + 1) * H].astype(f32), pads) for i in range(3)], axis=-1)

    # ---- One-time parameter algebra (wrapper side, outside the kernel) ----
    embed = params["b_embed"].astype(f32)                 # Linear(1,E)(zeros) == its bias
    # Fold the constant embedding into the local GRU input biases; drop its weight rows.
    b_lf = params["bih_lf"] + embed @ params["wih_lf"][:E]
    b_lb = params["bih_lb"] + embed @ params["wih_lb"][:E]

    # Fused input projections, transposed for batch-on-lanes: rows = [gf | gb | lf | lb].
    wxT = jnp.concatenate([pad_gates(params["wih_gf"]),
                           pad_gates(params["wih_gb"]),
                           pad_gates(params["wih_lf"][E:]),
                           pad_gates(params["wih_lb"][E:])], axis=1).T        # (12Hp, F)
    bxT = jnp.concatenate([pad_gates(params["bih_gf"]),
                           pad_gates(params["bih_gb"]),
                           pad_gates(b_lf),
                           pad_gates(b_lb)], axis=1).T                        # (12Hp, 1)

    # Block-diagonal recurrent weights: the 4 per-step recurrent dots fuse into ONE.
    names = ("gf", "gb", "lf", "lb")
    whh_bd = jnp.zeros((12 * Hp, 4 * Hp), f32)
    for g, n in enumerate(names):
        wg = pad_gates(jnp.pad(params[f"whh_{n}"].astype(f32), ((0, Hp - H), (0, 0))))
        whh_bd = whh_bd.at[3 * g * Hp:3 * (g + 1) * Hp, g * Hp:(g + 1) * Hp].set(wg.T)
    bhh_bd = jnp.concatenate([pad_gates(params[f"bhh_{n}"]) for n in names], axis=1).T

    loadings = (embed @ params["w_load"]).reshape(2, H)            # [forward half, backward half]
    load = jnp.pad(loadings, ((0, 0), (0, Hp - H)))[:, :, None]    # (2, Hp, 1)

    x_t = jnp.transpose(x_mark.astype(f32), (1, 2, 0))             # (T, F, B): batch on lanes

    # Batch tiling: default is ONE grid step.  The recurrence is latency-bound and the grid is
    # a *serial* loop on single-TC chips, so splitting the batch only multiplies wall time and
    # repeats the prologue.  Manual override must keep lane-dense tiles (bt % 128 == 0).
    bt = B if batch_tile is None else batch_tile
    assert B % bt == 0 and (bt == B or bt % 128 == 0)
    nb = B // bt

    # Generous VMEM budget estimate (f32, lane/sublane padded) -> explicit compiler hint,
    # capped at 64 MiB so it stays safe on v7x.
    lane = lambda v: -(-v // 128) * 128
    sub = lambda v: -(-v // 8) * 8
    BL = lane(bt)
    est_bytes = 4 * (
        T * sub(F) * BL                          # x block
        + sub(T) * BL + 2 * T * Hp * BL          # fe + re output blocks
        + (4 * 3 + 2) * T * Hp * BL              # proj_s + gf_s + gb_s scratch
        + 12 * Hp * (lane(F) + lane(4 * Hp) + 2 * 128) + 2 * Hp * 128   # weights
    )
    vmem_limit = int(min(64 * 2 ** 20, max(32 * 2 ** 20, 3 * est_bytes)))

    def full_spec(arr):
        nd = arr.ndim
        return pl.BlockSpec(arr.shape, lambda b, _nd=nd: (0,) * _nd)

    fe_raw, re_raw = pl.pallas_call(
        deep_factor_kernel,
        out_shape=(jax.ShapeDtypeStruct((T, B), jnp.float32),
                   jax.ShapeDtypeStruct((2, T, Hp, B), jnp.float32)),
        grid=(nb,),
        in_specs=[
            pl.BlockSpec((T, F, bt), lambda b: (0, 0, b)),
            full_spec(wxT), full_spec(bxT),
            full_spec(whh_bd), full_spec(bhh_bd),
            full_spec(load),
        ],
        out_specs=(
            pl.BlockSpec((T, bt), lambda b: (0, b)),
            pl.BlockSpec((2, T, Hp, bt), lambda b: (0, 0, 0, b)),
        ),
        scratch_shapes=[
            pltpu.VMEM((4, T, 3 * Hp, bt), jnp.float32),   # input projections, direction-major
            pltpu.VMEM((T, Hp, bt), jnp.float32),          # global forward hidden states
            pltpu.VMEM((T, Hp, bt), jnp.float32),          # global backward hidden states
        ],
        compiler_params=pltpu.CompilerParams(
            dimension_semantics=("parallel",),
            vmem_limit_bytes=vmem_limit),
    )(x_t, wxT, bxT, whh_bd, bhh_bd, load)

    # Back to the PyTorch batch_first layouts (XLA-side layout plumbing, outside the kernel).
    fixed_effect = fe_raw.T[:, :, None]                                           # (B, T, 1)
    random_effect = jnp.transpose(re_raw[:, :, :H, :], (3, 1, 0, 2)).reshape(B, T, 2 * H)
    return fixed_effect, random_effect


# ----------------------------- pure-JAX reference ----------------------------
def reference_forward(x_mark, p):
    B, T, F = x_mark.shape
    E = p["b_embed"].shape[1]
    H = p["whh_gf"].shape[0]
    embed = jnp.broadcast_to(p["b_embed"], (B, E))
    loadings = embed @ p["w_load"]
    xt = jnp.transpose(x_mark, (1, 0, 2))
    local_in = jnp.concatenate([jnp.broadcast_to(embed[None], (T, B, E)), xt], axis=-1)

    def gru(x_seq, wih, whh, bih, bhh, reverse):
        out = [None] * T
        h = jnp.zeros((B, H), jnp.float32)
        order = range(T - 1, -1, -1) if reverse else range(T)
        for t in order:
            xp = x_seq[t] @ wih + bih
            hp = h @ whh + bhh
            r = jax.nn.sigmoid(xp[:, :H] + hp[:, :H])
            z = jax.nn.sigmoid(xp[:, H:2 * H] + hp[:, H:2 * H])
            n = jnp.tanh(xp[:, 2 * H:] + r * hp[:, 2 * H:])
            h = (1 - z) * n + z * h
            out[t] = h
        return jnp.stack(out, axis=0)

    gf = jnp.concatenate(
        [gru(xt, p["wih_gf"], p["whh_gf"], p["bih_gf"], p["bhh_gf"], False),
         gru(xt, p["wih_gb"], p["whh_gb"], p["bih_gb"], p["bhh_gb"], True)], axis=-1)
    lo = jnp.concatenate(
        [gru(local_in, p["wih_lf"], p["whh_lf"], p["bih_lf"], p["bhh_lf"], False),
         gru(local_in, p["wih_lb"], p["whh_lb"], p["bih_lb"], p["bhh_lb"], True)], axis=-1)
    fe = jnp.exp(jnp.sum(gf * loadings[None], axis=-1, keepdims=True))
    re = _stable_softplus(lo)   # == log(exp(lo) + 1)
    return jnp.transpose(fe, (1, 0, 2)), jnp.transpose(re, (1, 0, 2))


def init_params(key, F, E, H, K):
    ks = jax.random.split(key, 20)

    def u(k, shape, fan_in):
        s = 1.0 / math.sqrt(fan_in)
        return jax.random.uniform(k, shape, jnp.float32, -s, s)

    p = {
        "b_embed": u(ks[0], (1, E), 1),      # bias of Linear(1, E)
        "w_load": u(ks[1], (E, K), E),       # Linear(E, K, bias=False), stored (in, out)
    }
    in_sizes = {"gf": F, "gb": F, "lf": E + F, "lb": E + F}
    i = 2
    for n in ("gf", "gb", "lf", "lb"):
        p[f"wih_{n}"] = u(ks[i], (in_sizes[n], 3 * H), H); i += 1
        p[f"whh_{n}"] = u(ks[i], (H, 3 * H), H); i += 1
        p[f"bih_{n}"] = u(ks[i], (1, 3 * H), H); i += 1
        p[f"bhh_{n}"] = u(ks[i], (1, 3 * H), H); i += 1
    return p


if __name__ == "__main__":
    # freq='H' -> F = 5 time features; embedding_dim arg = 2 -> E = 2*5 = 10;
    # num_hidden_global = 5, num_factors = 10 (= 2*H so the original bmm is valid).
    B, T, F = 16, 8, 5
    E, H = 10, 5
    K = 2 * H
    c_in, pred_len = 1, 4

    key = jax.random.PRNGKey(0)
    k_x, k_xm, k_ym, k_p = jax.random.split(key, 4)
    x = jax.random.normal(k_x, (B, T, c_in), jnp.float32)
    x_mark = jax.random.normal(k_xm, (B, T, F), jnp.float32)
    y_mark = jax.random.normal(k_ym, (B, pred_len, F), jnp.float32)
    params = init_params(k_p, F, E, H, K)

    fixed_effect, random_effect = deep_factor_forward(x, x_mark, y_mark, params)
    jax.block_until_ready((fixed_effect, random_effect))

    fe_ref, re_ref = reference_forward(x_mark, params)
    assert fixed_effect.shape == (B, T, 1) and random_effect.shape == (B, T, 2 * H)
    assert jnp.allclose(fixed_effect, fe_ref, atol=1e-4, rtol=1e-4)
    assert jnp.allclose(random_effect, re_ref, atol=1e-4, rtol=1e-4)

    print("KERNEL_OK")
</pallas_src>

<mosaic_0001>
module attributes {stable_mosaic.version = 11 : i64} {
  func.func @deep_factor_kernel(%arg0: i32, %arg1: memref<8x5x16xf32, #tpu.memory_space<vmem>>, %arg2: memref<96x5xf32, #tpu.memory_space<vmem>>, %arg3: memref<96x1xf32, #tpu.memory_space<vmem>>, %arg4: memref<96x32xf32, #tpu.memory_space<vmem>>, %arg5: memref<96x1xf32, #tpu.memory_space<vmem>>, %arg6: memref<2x8x1xf32, #tpu.memory_space<vmem>>, %arg7: memref<8x16xf32, #tpu.memory_space<vmem>>, %arg8: memref<2x8x8x16xf32, #tpu.memory_space<vmem>>, %arg9: memref<4x8x24x16xf32, #tpu.memory_space<vmem>>, %arg10: memref<8x8x16xf32, #tpu.memory_space<vmem>>, %arg11: memref<8x8x16xf32, #tpu.memory_space<vmem>>) attributes {dimension_semantics = [#tpu.dimension_semantics<parallel>], iteration_bounds = array<i64: 1>, scalar_prefetch = 0 : i64, scratch_operands = 3 : i64, tpu.core_type = #tpu.core_type<tc>, window_params = [{transform_indices = @transform_0, window_bounds = array<i64: 8, 5, 16>}, {pipeline_mode = #tpu.pipeline_mode<synchronous>, transform_indices = @transform_1, window_bounds = array<i64: 96, 5>}, {pipeline_mode = #tpu.pipeline_mode<synchronous>, transform_indices = @transform_2, window_bounds = array<i64: 96, 1>}, {pipeline_mode = #tpu.pipeline_mode<synchronous>, transform_indices = @transform_3, window_bounds = array<i64: 96, 32>}, {pipeline_mode = #tpu.pipeline_mode<synchronous>, transform_indices = @transform_4, window_bounds = array<i64: 96, 1>}, {pipeline_mode = #tpu.pipeline_mode<synchronous>, transform_indices = @transform_5, window_bounds = array<i64: 2, 8, 1>}, {transform_indices = @transform_6, window_bounds = array<i64: 8, 16>}, {transform_indices = @transform_7, window_bounds = array<i64: 2, 8, 8, 16>}]} {
    %c0 = arith.constant 0 : index
    %c0_0 = arith.constant 0 : index
    %0 = vector.load %arg2[%c0, %c0_0] : memref<96x5xf32, #tpu.memory_space<vmem>>, vector<96x5xf32>
    %c0_1 = arith.constant 0 : index
    %c0_2 = arith.constant 0 : index
    %1 = vector.load %arg3[%c0_1, %c0_2] : memref<96x1xf32, #tpu.memory_space<vmem>>, vector<96x1xf32>
    %c0_3 = arith.constant 0 : index
    %c0_4 = arith.constant 0 : index
    %2 = vector.load %arg4[%c0_3, %c0_4] : memref<96x32xf32, #tpu.memory_space<vmem>>, vector<96x32xf32>
    %c0_5 = arith.constant 0 : index
    %c0_6 = arith.constant 0 : index
    %3 = vector.load %arg5[%c0_5, %c0_6] : memref<96x1xf32, #tpu.memory_space<vmem>>, vector<96x1xf32>
    %c0_7 = arith.constant 0 : index
    %c0_8 = arith.constant 0 : index
    %c0_9 = arith.constant 0 : index
    %4 = vector.load %arg1[%c0_7, %c0_8, %c0_9] : memref<8x5x16xf32, #tpu.memory_space<vmem>>, vector<1x5x16xf32>
    %5 = vector.shape_cast %4 : vector<1x5x16xf32> to vector<5x16xf32>
    %cst = arith.constant dense<0.000000e+00> : vector<96x16xf32>
    %6 = tpu.matmul %0, %5, %cst {dimension_numbers = #tpu.dot_dimension_numbers<[1], [0], [0], [1], [0, 0, 1, 1], [], []>} : vector<96x5xf32>, vector<5x16xf32>, vector<96x16xf32> -> vector<96x16xf32>
    %7 = vector.broadcast %1 : vector<96x1xf32> to vector<96x16xf32>
    %8 = arith.addf %6, %7 : vector<96x16xf32>
    %9 = vector.extract_strided_slice %8 {offsets = [0, 0], sizes = [24, 16], strides = [1, 1]} : vector<96x16xf32> to vector<24x16xf32>
    %c0_10 = arith.constant 0 : index
    %c0_11 = arith.constant 0 : index
    %c0_12 = arith.constant 0 : index
    %c0_13 = arith.constant 0 : index
    %10 = vector.load %arg9[%c0_10, %c0_11, %c0_12, %c0_13] : memref<4x8x24x16xf32, #tpu.memory_space<vmem>>, vector<1x1x24x16xf32>
    %11 = vector.shape_cast %10 : vector<1x1x24x16xf32> to vector<24x16xf32>
    %12 = vector.shape_cast %9 : vector<24x16xf32> to vector<1x1x24x16xf32>
    tpu.vector_store %arg9[%c0_10, %c0_11, %c0_12, %c0_13], %12 {strides = array<i32>} : memref<4x8x24x16xf32, #tpu.memory_space<vmem>>, vector<1x1x24x16xf32>,
    %13 = vector.extract_strided_slice %8 {offsets = [24, 0], sizes = [24, 16], strides = [1, 1]} : vector<96x16xf32> to vector<24x16xf32>
    %c1 = arith.constant 1 : index
    %c0_14 = arith.constant 0 : index
    %c0_15 = arith.constant 0 : index
    %c0_16 = arith.constant 0 : index
    %14 = vector.load %arg9[%c1, %c0_14, %c0_15, %c0_16] : memref<4x8x24x16xf32, #tpu.memory_space<vmem>>, vector<1x1x24x16xf32>
    %15 = vector.shape_cast %14 : vector<1x1x24x16xf32> to vector<24x16xf32>
    %16 = vector.shape_cast %13 : vector<24x16xf32> to vector<1x1x24x16xf32>
    tpu.vector_store %arg9[%c1, %c0_14, %c0_15, %c0_16], %16 {strides = array<i32>} : memref<4x8x24x16xf32, #tpu.memory_space<vmem>>, vector<1x1x24x16xf32>,
    %17 = vector.extract_strided_slice %8 {offsets = [48, 0], sizes = [24, 16], strides = [1, 1]} : vector<96x16xf32> to vector<24x16xf32>
    %c2 = arith.constant 2 : index
    %c0_17 = arith.constant 0 : index
    %c0_18 = arith.constant 0 : index
    %c0_19 = arith.constant 0 : index
    %18 = vector.load %arg9[%c2, %c0_17, %c0_18, %c0_19] : memref<4x8x24x16xf32, #tpu.memory_space<vmem>>, vector<1x1x24x16xf32>
    %19 = vector.shape_cast %18 : vector<1x1x24x16xf32> to vector<24x16xf32>
    %20 = vector.shape_cast %17 : vector<24x16xf32> to vector<1x1x24x16xf32>
    tpu.vector_store %arg9[%c2, %c0_17, %c0_18, %c0_19], %20 {strides = array<i32>} : memref<4x8x24x16xf32, #tpu.memory_space<vmem>>, vector<1x1x24x16xf32>,
    %21 = vector.extract_strided_slice %8 {offsets = [72, 0], sizes = [24, 16], strides = [1, 1]} : vector<96x16xf32> to vector<24x16xf32>
    %c3 = arith.constant 3 : index
    %c0_20 = arith.constant 0 : index
    %c0_21 = arith.constant 0 : index
    %c0_22 = arith.constant 0 : index
    %22 = vector.load %arg9[%c3, %c0_20, %c0_21, %c0_22] : memref<4x8x24x16xf32, #tpu.memory_space<vmem>>, vector<1x1x24x16xf32>
    %23 = vector.shape_cast %22 : vector<1x1x24x16xf32> to vector<24x16xf32>
    %24 = vector.shape_cast %21 : vector<24x16xf32> to vector<1x1x24x16xf32>
    tpu.vector_store %arg9[%c3, %c0_20, %c0_21, %c0_22], %24 {strides = array<i32>} : memref<4x8x24x16xf32, #tpu.memory_space<vmem>>, vector<1x1x24x16xf32>,
    %c1_23 = arith.constant 1 : index
    %c0_24 = arith.constant 0 : index
    %c0_25 = arith.constant 0 : index
    %25 = vector.load %arg1[%c1_23, %c0_24, %c0_25] : memref<8x5x16xf32, #tpu.memory_space<vmem>>, vector<1x5x16xf32>
    %26 = vector.shape_cast %25 : vector<1x5x16xf32> to vector<5x16xf32>
    %cst_26 = arith.constant dense<0.000000e+00> : vector<96x16xf32>
    %27 = tpu.matmul %0, %26, %cst_26 {dimension_numbers = #tpu.dot_dimension_numbers<[1], [0], [0], [1], [0, 0, 1, 1], [], []>} : vector<96x5xf32>, vector<5x16xf32>, vector<96x16xf32> -> vector<96x16xf32>
    %28 = vector.broadcast %1 : vector<96x1xf32> to vector<96x16xf32>
    %29 = arith.addf %27, %28 : vector<96x16xf32>
    %30 = vector.extract_strided_slice %29 {offsets = [0, 0], sizes = [24, 16], strides = [1, 1]} : vector<96x16xf32> to vector<24x16xf32>
    %c0_27 = arith.constant 0 : index
    %c1_28 = arith.constant 1 : index
    %c0_29 = arith.constant 0 : index
    %c0_30 = arith.constant 0 : index
    %31 = vector.load %arg9[%c0_27, %c1_28, %c0_29, %c0_30] : memref<4x8x24x16xf32, #tpu.memory_space<vmem>>, vector<1x1x24x16xf32>
    %32 = vector.shape_cast %31 : vector<1x1x24x16xf32> to vector<24x16xf32>
    %33 = vector.shape_cast %30 : vector<24x16xf32> to vector<1x1x24x16xf32>
    tpu.vector_store %arg9[%c0_27, %c1_28, %c0_29, %c0_30], %33 {strides = array<i32>} : memref<4x8x24x16xf32, #tpu.memory_space<vmem>>, vector<1x1x24x16xf32>,
    %34 = vector.extract_strided_slice %29 {offsets = [24, 0], sizes = [24, 16], strides = [1, 1]} : vector<96x16xf32> to vector<24x16xf32>
    %c1_31 = arith.constant 1 : index
    %c1_32 = arith.constant 1 : index
    %c0_33 = arith.constant 0 : index
    %c0_34 = arith.constant 0 : index
    %35 = vector.load %arg9[%c1_31, %c1_32, %c0_33, %c0_34] : memref<4x8x24x16xf32, #tpu.memory_space<vmem>>, vector<1x1x24x16xf32>
    %36 = vector.shape_cast %35 : vector<1x1x24x16xf32> to vector<24x16xf32>
    %37 = vector.shape_cast %34 : vector<24x16xf32> to vector<1x1x24x16xf32>
    tpu.vector_store %arg9[%c1_31, %c1_32, %c0_33, %c0_34], %37 {strides = array<i32>} : memref<4x8x24x16xf32, #tpu.memory_space<vmem>>, vector<1x1x24x16xf32>,
    %38 = vector.extract_strided_slice %29 {offsets = [48, 0], sizes = [24, 16], strides = [1, 1]} : vector<96x16xf32> to vector<24x16xf32>
    %c2_35 = arith.constant 2 : index
    %c1_36 = arith.constant 1 : index
    %c0_37 = arith.constant 0 : index
    %c0_38 = arith.constant 0 : index
    %39 = vector.load %arg9[%c2_35, %c1_36, %c0_37, %c0_38] : memref<4x8x24x16xf32, #tpu.memory_space<vmem>>, vector<1x1x24x16xf32>
    %40 = vector.shape_cast %39 : vector<1x1x24x16xf32> to vector<24x16xf32>
    %41 = vector.shape_cast %38 : vector<24x16xf32> to vector<1x1x24x16xf32>
    tpu.vector_store %arg9[%c2_35, %c1_36, %c0_37, %c0_38], %41 {strides = array<i32>} : memref<4x8x24x16xf32, #tpu.memory_space<vmem>>, vector<1x1x24x16xf32>,
    %42 = vector.extract_strided_slice %29 {offsets = [72, 0], sizes = [24, 16], strides = [1, 1]} : vector<96x16xf32> to vector<24x16xf32>
    %c3_39 = arith.constant 3 : index
    %c1_40 = arith.constant 1 : index
    %c0_41 = arith.constant 0 : index
    %c0_42 = arith.constant 0 : index
    %43 = vector.load %arg9[%c3_39, %c1_40, %c0_41, %c0_42] : memref<4x8x24x16xf32, #tpu.memory_space<vmem>>, vector<1x1x24x16xf32>
    %44 = vector.shape_cast %43 : vector<1x1x24x16xf32> to vector<24x16xf32>
    %45 = vector.shape_cast %42 : vector<24x16xf32> to vector<1x1x24x16xf32>
    tpu.vector_store %arg9[%c3_39, %c1_40, %c0_41, %c0_42], %45 {strides = array<i32>} : memref<4x8x24x16xf32, #tpu.memory_space<vmem>>, vector<1x1x24x16xf32>,
    %c2_43 = arith.constant 2 : index
    %c0_44 = arith.constant 0 : index
    %c0_45 = arith.constant 0 : index
    %46 = vector.load %arg1[%c2_43, %c0_44, %c0_45] : memref<8x5x16xf32, #tpu.memory_space<vmem>>, vector<1x5x16xf32>
    %47 = vector.shape_cast %46 : vector<1x5x16xf32> to vector<5x16xf32>
    %cst_46 = arith.constant dense<0.000000e+00> : vector<96x16xf32>
    %48 = tpu.matmul %0, %47, %cst_46 {dimension_numbers = #tpu.dot_dimension_numbers<[1], [0], [0], [1], [0, 0, 1, 1], [], []>} : vector<96x5xf32>, vector<5x16xf32>, vector<96x16xf32> -> vector<96x16xf32>
    %49 = vector.broadcast %1 : vector<96x1xf32> to vector<96x16xf32>
    %50 = arith.addf %48, %49 : vector<96x16xf32>
    %51 = vector.extract_strided_slice %50 {offsets = [0, 0], sizes = [24, 16], strides = [1, 1]} : vector<96x16xf32> to vector<24x16xf32>
    %c0_47 = arith.constant 0 : index
    %c2_48 = arith.constant 2 : index
    %c0_49 = arith.constant 0 : index
    %c0_50 = arith.constant 0 : index
    %52 = vector.load %arg9[%c0_47, %c2_48, %c0_49, %c0_50] : memref<4x8x24x16xf32, #tpu.memory_space<vmem>>, vector<1x1x24x16xf32>
    %53 = vector.shape_cast %52 : vector<1x1x24x16xf32> to vector<24x16xf32>
    %54 = vector.shape_cast %51 : vector<24x16xf32> to vector<1x1x24x16xf32>
    tpu.vector_store %arg9[%c0_47, %c2_48, %c0_49, %c0_50], %54 {strides = array<i32>} : memref<4x8x24x16xf32, #tpu.memory_space<vmem>>, vector<1x1x24x16xf32>,
    %55 = vector.extract_strided_slice %50 {offsets = [24, 0], sizes = [24, 16], strides = [1, 1]} : vector<96x16xf32> to vector<24x16xf32>
    %c1_51 = arith.constant 1 : index
    %c2_52 = arith.constant 2 : index
    %c0_53 = arith.constant 0 : index
    %c0_54 = arith.constant 0 : index
    %56 = vector.load %arg9[%c1_51, %c2_52, %c0_53, %c0_54] : memref<4x8x24x16xf32, #tpu.memory_space<vmem>>, vector<1x1x24x16xf32>
    %57 = vector.shape_cast %56 : vector<1x1x24x16xf32> to vector<24x16xf32>
    %58 = vector.shape_cast %55 : vector<24x16xf32> to vector<1x1x24x16xf32>
    tpu.vector_store %arg9[%c1_51, %c2_52, %c0_53, %c0_54], %58 {strides = array<i32>} : memref<4x8x24x16xf32, #tpu.memory_space<vmem>>, vector<1x1x24x16xf32>,
    %59 = vector.extract_strided_slice %50 {offsets = [48, 0], sizes = [24, 16], strides = [1, 1]} : vector<96x16xf32> to vector<24x16xf32>
    %c2_55 = arith.constant 2 : index
    %c2_56 = arith.constant 2 : index
    %c0_57 = arith.constant 0 : index
    %c0_58 = arith.constant 0 : index
    %60 = vector.load %arg9[%c2_55, %c2_56, %c0_57, %c0_58] : memref<4x8x24x16xf32, #tpu.memory_space<vmem>>, vector<1x1x24x16xf32>
    %61 = vector.shape_cast %60 : vector<1x1x24x16xf32> to vector<24x16xf32>
    %62 = vector.shape_cast %59 : vector<24x16xf32> to vector<1x1x24x16xf32>
    tpu.vector_store %arg9[%c2_55, %c2_56, %c0_57, %c0_58], %62 {strides = array<i32>} : memref<4x8x24x16xf32, #tpu.memory_space<vmem>>, vector<1x1x24x16xf32>,
    %63 = vector.extract_strided_slice %50 {offsets = [72, 0], sizes = [24, 16], strides = [1, 1]} : vector<96x16xf32> to vector<24x16xf32>
    %c3_59 = arith.constant 3 : index
    %c2_60 = arith.constant 2 : index
    %c0_61 = arith.constant 0 : index
    %c0_62 = arith.constant 0 : index
    %64 = vector.load %arg9[%c3_59, %c2_60, %c0_61, %c0_62] : memref<4x8x24x16xf32, #tpu.memory_space<vmem>>, vector<1x1x24x16xf32>
    %65 = vector.shape_cast %64 : vector<1x1x24x16xf32> to vector<24x16xf32>
    %66 = vector.shape_cast %63 : vector<24x16xf32> to vector<1x1x24x16xf32>
    tpu.vector_store %arg9[%c3_59, %c2_60, %c0_61, %c0_62], %66 {strides = array<i32>} : memref<4x8x24x16xf32, #tpu.memory_space<vmem>>, vector<1x1x24x16xf32>,
    %c3_63 = arith.constant 3 : index
    %c0_64 = arith.constant 0 : index
    %c0_65 = arith.constant 0 : index
    %67 = vector.load %arg1[%c3_63, %c0_64, %c0_65] : memref<8x5x16xf32, #tpu.memory_space<vmem>>, vector<1x5x16xf32>
    %68 = vector.shape_cast %67 : vector<1x5x16xf32> to vector<5x16xf32>
    %cst_66 = arith.constant dense<0.000000e+00> : vector<96x16xf32>
    %69 = tpu.matmul %0, %68, %cst_66 {dimension_numbers = #tpu.dot_dimension_numbers<[1], [0], [0], [1], [0, 0, 1, 1], [], []>} : vector<96x5xf32>, vector<5x16xf32>, vector<96x16xf32> -> vector<96x16xf32>
    %70 = vector.broadcast %1 : vector<96x1xf32> to vector<96x16xf32>
    %71 = arith.addf %69, %70 : vector<96x16xf32>
    %72 = vector.extract_strided_slice %71 {offsets = [0, 0], sizes = [24, 16], strides = [1, 1]} : vector<96x16xf32> to vector<24x16xf32>
    %c0_67 = arith.constant 0 : index
    %c3_68 = arith.constant 3 : index
    %c0_69 = arith.constant 0 : index
    %c0_70 = arith.constant 0 : index
    %73 = vector.load %arg9[%c0_67, %c3_68, %c0_69, %c0_70] : memref<4x8x24x16xf32, #tpu.memory_space<vmem>>, vector<1x1x24x16xf32>
    %74 = vector.shape_cast %73 : vector<1x1x24x16xf32> to vector<24x16xf32>
    %75 = vector.shape_cast %72 : vector<24x16xf32> to vector<1x1x24x16xf32>
    tpu.vector_store %arg9[%c0_67, %c3_68, %c0_69, %c0_70], %75 {strides = array<i32>} : memref<4x8x24x16xf32, #tpu.memory_space<vmem>>, vector<1x1x24x16xf32>,
    %76 = vector.extract_strided_slice %71 {offsets = [24, 0], sizes = [24, 16], strides = [1, 1]} : vector<96x16xf32> to vector<24x16xf32>
    %c1_71 = arith.constant 1 : index
    %c3_72 = arith.constant 3 : index
    %c0_73 = arith.constant 0 : index
    %c0_74 = arith.constant 0 : index
    %77 = vector.load %arg9[%c1_71, %c3_72, %c0_73, %c0_74] : memref<4x8x24x16xf32, #tpu.memory_space<vmem>>, vector<1x1x24x16xf32>
    %78 = vector.shape_cast %77 : vector<1x1x24x16xf32> to vector<24x16xf32>
    %79 = vector.shape_cast %76 : vector<24x16xf32> to vector<1x1x24x16xf32>
    tpu.vector_store %arg9[%c1_71, %c3_72, %c0_73, %c0_74], %79 {strides = array<i32>} : memref<4x8x24x16xf32, #tpu.memory_space<vmem>>, vector<1x1x24x16xf32>,
    %80 = vector.extract_strided_slice %71 {offsets = [48, 0], sizes = [24, 16], strides = [1, 1]} : vector<96x16xf32> to vector<24x16xf32>
    %c2_75 = arith.constant 2 : index
    %c3_76 = arith.constant 3 : index
    %c0_77 = arith.constant 0 : index
    %c0_78 = arith.constant 0 : index
    %81 = vector.load %arg9[%c2_75, %c3_76, %c0_77, %c0_78] : memref<4x8x24x16xf32, #tpu.memory_space<vmem>>, vector<1x1x24x16xf32>
    %82 = vector.shape_cast %81 : vector<1x1x24x16xf32> to vector<24x16xf32>
    %83 = vector.shape_cast %80 : vector<24x16xf32> to vector<1x1x24x16xf32>
    tpu.vector_store %arg9[%c2_75, %c3_76, %c0_77, %c0_78], %83 {strides = array<i32>} : memref<4x8x24x16xf32, #tpu.memory_space<vmem>>, vector<1x1x24x16xf32>,
    %84 = vector.extract_strided_slice %71 {offsets = [72, 0], sizes = [24, 16], strides = [1, 1]} : vector<96x16xf32> to vector<24x16xf32>
    %c3_79 = arith.constant 3 : index
    %c3_80 = arith.constant 3 : index
    %c0_81 = arith.constant 0 : index
    %c0_82 = arith.constant 0 : index
    %85 = vector.load %arg9[%c3_79, %c3_80, %c0_81, %c0_82] : memref<4x8x24x16xf32, #tpu.memory_space<vmem>>, vector<1x1x24x16xf32>
    %86 = vector.shape_cast %85 : vector<1x1x24x16xf32> to vector<24x16xf32>
    %87 = vector.shape_cast %84 : vector<24x16xf32> to vector<1x1x24x16xf32>
    tpu.vector_store %arg9[%c3_79, %c3_80, %c0_81, %c0_82], %87 {strides = array<i32>} : memref<4x8x24x16xf32, #tpu.memory_space<vmem>>, vector<1x1x24x16xf32>,
    %c4 = arith.constant 4 : index
    %c0_83 = arith.constant 0 : index
    %c0_84 = arith.constant 0 : index
    %88 = vector.load %arg1[%c4, %c0_83, %c0_84] : memref<8x5x16xf32, #tpu.memory_space<vmem>>, vector<1x5x16xf32>
    %89 = vector.shape_cast %88 : vector<1x5x16xf32> to vector<5x16xf32>
    %cst_85 = arith.constant dense<0.000000e+00> : vector<96x16xf32>
    %90 = tpu.matmul %0, %89, %cst_85 {dimension_numbers = #tpu.dot_dimension_numbers<[1], [0], [0], [1], [0, 0, 1, 1], [], []>} : vector<96x5xf32>, vector<5x16xf32>, vector<96x16xf32> -> vector<96x16xf32>
    %91 = vector.broadcast %1 : vector<96x1xf32> to vector<96x16xf32>
    %92 = arith.addf %90, %91 : vector<96x16xf32>
    %93 = vector.extract_strided_slice %92 {offsets = [0, 0], sizes = [24, 16], strides = [1, 1]} : vector<96x16xf32> to vector<24x16xf32>
    %c0_86 = arith.constant 0 : index
    %c4_87 = arith.constant 4 : index
    %c0_88 = arith.constant 0 : index
    %c0_89 = arith.constant 0 : index
    %94 = vector.load %arg9[%c0_86, %c4_87, %c0_88, %c0_89] : memref<4x8x24x16xf32, #tpu.memory_space<vmem>>, vector<1x1x24x16xf32>
    %95 = vector.shape_cast %94 : vector<1x1x24x16xf32> to vector<24x16xf32>
    %96 = vector.shape_cast %93 : vector<24x16xf32> to vector<1x1x24x16xf32>
    tpu.vector_store %arg9[%c0_86, %c4_87, %c0_88, %c0_89], %96 {strides = array<i32>} : memref<4x8x24x16xf32, #tpu.memory_space<vmem>>, vector<1x1x24x16xf32>,
    %97 = vector.extract_strided_slice %92 {offsets = [24, 0], sizes = [24, 16], strides = [1, 1]} : vector<96x16xf32> to vector<24x16xf32>
    %c1_90 = arith.constant 1 : index
    %c4_91 = arith.constant 4 : index
    %c0_92 = arith.constant 0 : index
    %c0_93 = arith.constant 0 : index
    %98 = vector.load %arg9[%c1_90, %c4_91, %c0_92, %c0_93] : memref<4x8x24x16xf32, #tpu.memory_space<vmem>>, vector<1x1x24x16xf32>
    %99 = vector.shape_cast %98 : vector<1x1x24x16xf32> to vector<24x16xf32>
    %100 = vector.shape_cast %97 : vector<24x16xf32> to vector<1x1x24x16xf32>
    tpu.vector_store %arg9[%c1_90, %c4_91, %c0_92, %c0_93], %100 {strides = array<i32>} : memref<4x8x24x16xf32, #tpu.memory_space<vmem>>, vector<1x1x24x16xf32>,
    %101 = vector.extract_strided_slice %92 {offsets = [48, 0], sizes = [24, 16], strides = [1, 1]} : vector<96x16xf32> to vector<24x16xf32>
    %c2_94 = arith.constant 2 : index
    %c4_95 = arith.constant 4 : index
    %c0_96 = arith.constant 0 : index
    %c0_97 = arith.constant 0 : index
    %102 = vector.load %arg9[%c2_94, %c4_95, %c0_96, %c0_97] : memref<4x8x24x16xf32, #tpu.memory_space<vmem>>, vector<1x1x24x16xf32>
    %103 = vector.shape_cast %102 : vector<1x1x24x16xf32> to vector<24x16xf32>
    %104 = vector.shape_cast %101 : vector<24x16xf32> to vector<1x1x24x16xf32>
    tpu.vector_store %arg9[%c2_94, %c4_95, %c0_96, %c0_97], %104 {strides = array<i32>} : memref<4x8x24x16xf32, #tpu.memory_space<vmem>>, vector<1x1x24x16xf32>,
    %105 = vector.extract_strided_slice %92 {offsets = [72, 0], sizes = [24, 16], strides = [1, 1]} : vector<96x16xf32> to vector<24x16xf32>
    %c3_98 = arith.constant 3 : index
    %c4_99 = arith.constant 4 : index
    %c0_100 = arith.constant 0 : index
    %c0_101 = arith.constant 0 : index
    %106 = vector.load %arg9[%c3_98, %c4_99, %c0_100, %c0_101] : memref<4x8x24x16xf32, #tpu.memory_space<vmem>>, vector<1x1x24x16xf32>
    %107 = vector.shape_cast %106 : vector<1x1x24x16xf32> to vector<24x16xf32>
    %108 = vector.shape_cast %105 : vector<24x16xf32> to vector<1x1x24x16xf32>
    tpu.vector_store %arg9[%c3_98, %c4_99, %c0_100, %c0_101], %108 {strides = array<i32>} : memref<4x8x24x16xf32, #tpu.memory_space<vmem>>, vector<1x1x24x16xf32>,
    %c5 = arith.constant 5 : index
    %c0_102 = arith.constant 0 : index
    %c0_103 = arith.constant 0 : index
    %109 = vector.load %arg1[%c5, %c0_102, %c0_103] : memref<8x5x16xf32, #tpu.memory_space<vmem>>, vector<1x5x16xf32>
    %110 = vector.shape_cast %109 : vector<1x5x16xf32> to vector<5x16xf32>
    %cst_104 = arith.constant dense<0.000000e+00> : vector<96x16xf32>
    %111 = tpu.matmul %0, %110, %cst_104 {dimension_numbers = #tpu.dot_dimension_numbers<[1], [0], [0], [1], [0, 0, 1, 1], [], []>} : vector<96x5xf32>, vector<5x16xf32>, vector<96x16xf32> -> vector<96x16xf32>
    %112 = vector.broadcast %1 : vector<96x1xf32> to vector<96x16xf32>
    %113 = arith.addf %111, %112 : vector<96x16xf32>
    %114 = vector.extract_strided_slice %113 {offsets = [0, 0], sizes = [24, 16], strides = [1, 1]} : vector<96x16xf32> to vector<24x16xf32>
    %c0_105 = arith.constant 0 : index
    %c5_106 = arith.constant 5 : index
    %c0_107 = arith.constant 0 : index
    %c0_108 = arith.constant 0 : index
    %115 = vector.load %arg9[%c0_105, %c5_106, %c0_107, %c0_108] : memref<4x8x24x16xf32, #tpu.memory_space<vmem>>, vector<1x1x24x16xf32>
    %116 = vector.shape_cast %115 : vector<1x1x24x16xf32> to vector<24x16xf32>
    %117 = vector.shape_cast %114 : vector<24x16xf32> to vector<1x1x24x16xf32>
    tpu.vector_store %arg9[%c0_105, %c5_106, %c0_107, %c0_108], %117 {strides = array<i32>} : memref<4x8x24x16xf32, #tpu.memory_space<vmem>>, vector<1x1x24x16xf32>,
    %118 = vector.extract_strided_slice %113 {offsets = [24, 0], sizes = [24, 16], strides = [1, 1]} : vector<96x16xf32> to vector<24x16xf32>
    %c1_109 = arith.constant 1 : index
    %c5_110 = arith.constant 5 : index
    %c0_111 = arith.constant 0 : index
    %c0_112 = arith.constant 0 : index
    %119 = vector.load %arg9[%c1_109, %c5_110, %c0_111, %c0_112] : memref<4x8x24x16xf32, #tpu.memory_space<vmem>>, vector<1x1x24x16xf32>
    %120 = vector.shape_cast %119 : vector<1x1x24x16xf32> to vector<24x16xf32>
    %121 = vector.shape_cast %118 : vector<24x16xf32> to vector<1x1x24x16xf32>
    tpu.vector_store %arg9[%c1_109, %c5_110, %c0_111, %c0_112], %121 {strides = array<i32>} : memref<4x8x24x16xf32, #tpu.memory_space<vmem>>, vector<1x1x24x16xf32>,
    %122 = vector.extract_strided_slice %113 {offsets = [48, 0], sizes = [24, 16], strides = [1, 1]} : vector<96x16xf32> to vector<24x16xf32>
    %c2_113 = arith.constant 2 : index
    %c5_114 = arith.constant 5 : index
    %c0_115 = arith.constant 0 : index
    %c0_116 = arith.constant 0 : index
    %123 = vector.load %arg9[%c2_113, %c5_114, %c0_115, %c0_116] : memref<4x8x24x16xf32, #tpu.memory_space<vmem>>, vector<1x1x24x16xf32>
    %124 = vector.shape_cast %123 : vector<1x1x24x16xf32> to vector<24x16xf32>
    %125 = vector.shape_cast %122 : vector<24x16xf32> to vector<1x1x24x16xf32>
    tpu.vector_store %arg9[%c2_113, %c5_114, %c0_115, %c0_116], %125 {strides = array<i32>} : memref<4x8x24x16xf32, #tpu.memory_space<vmem>>, vector<1x1x24x16xf32>,
    %126 = vector.extract_strided_slice %113 {offsets = [72, 0], sizes = [24, 16], strides = [1, 1]} : vector<96x16xf32> to vector<24x16xf32>
    %c3_117 = arith.constant 3 : index
    %c5_118 = arith.constant 5 : index
    %c0_119 = arith.constant 0 : index
    %c0_120 = arith.constant 0 : index
    %127 = vector.load %arg9[%c3_117, %c5_118, %c0_119, %c0_120] : memref<4x8x24x16xf32, #tpu.memory_space<vmem>>, vector<1x1x24x16xf32>
    %128 = vector.shape_cast %127 : vector<1x1x24x16xf32> to vector<24x16xf32>
    %129 = vector.shape_cast %126 : vector<24x16xf32> to vector<1x1x24x16xf32>
    tpu.vector_store %arg9[%c3_117, %c5_118, %c0_119, %c0_120], %129 {strides = array<i32>} : memref<4x8x24x16xf32, #tpu.memory_space<vmem>>, vector<1x1x24x16xf32>,
    %c6 = arith.constant 6 : index
    %c0_121 = arith.constant 0 : index
    %c0_122 = arith.constant 0 : index
    %130 = vector.load %arg1[%c6, %c0_121, %c0_122] : memref<8x5x16xf32, #tpu.memory_space<vmem>>, vector<1x5x16xf32>
    %131 = vector.shape_cast %130 : vector<1x5x16xf32> to vector<5x16xf32>
    %cst_123 = arith.constant dense<0.000000e+00> : vector<96x16xf32>
    %132 = tpu.matmul %0, %131, %cst_123 {dimension_numbers = #tpu.dot_dimension_numbers<[1], [0], [0], [1], [0, 0, 1, 1], [], []>} : vector<96x5xf32>, vector<5x16xf32>, vector<96x16xf32> -> vector<96x16xf32>
    %133 = vector.broadcast %1 : vector<96x1xf32> to vector<96x16xf32>
    %134 = arith.addf %132, %133 : vector<96x16xf32>
    %135 = vector.extract_strided_slice %134 {offsets = [0, 0], sizes = [24, 16], strides = [1, 1]} : vector<96x16xf32> to vector<24x16xf32>
    %c0_124 = arith.constant 0 : index
    %c6_125 = arith.constant 6 : index
    %c0_126 = arith.constant 0 : index
    %c0_127 = arith.constant 0 : index
    %136 = vector.load %arg9[%c0_124, %c6_125, %c0_126, %c0_127] : memref<4x8x24x16xf32, #tpu.memory_space<vmem>>, vector<1x1x24x16xf32>
    %137 = vector.shape_cast %136 : vector<1x1x24x16xf32> to vector<24x16xf32>
    %138 = vector.shape_cast %135 : vector<24x16xf32> to vector<1x1x24x16xf32>
    tpu.vector_store %arg9[%c0_124, %c6_125, %c0_126, %c0_127], %138 {strides = array<i32>} : memref<4x8x24x16xf32, #tpu.memory_space<vmem>>, vector<1x1x24x16xf32>,
    %139 = vector.extract_strided_slice %134 {offsets = [24, 0], sizes = [24, 16], strides = [1, 1]} : vector<96x16xf32> to vector<24x16xf32>
    %c1_128 = arith.constant 1 : index
    %c6_129 = arith.constant 6 : index
    %c0_130 = arith.constant 0 : index
    %c0_131 = arith.constant 0 : index
    %140 = vector.load %arg9[%c1_128, %c6_129, %c0_130, %c0_131] : memref<4x8x24x16xf32, #tpu.memory_space<vmem>>, vector<1x1x24x16xf32>
    %141 = vector.shape_cast %140 : vector<1x1x24x16xf32> to vector<24x16xf32>
    %142 = vector.shape_cast %139 : vector<24x16xf32> to vector<1x1x24x16xf32>
    tpu.vector_store %arg9[%c1_128, %c6_129, %c0_130, %c0_131], %142 {strides = array<i32>} : memref<4x8x24x16xf32, #tpu.memory_space<vmem>>, vector<1x1x24x16xf32>,
    %143 = vector.extract_strided_slice %134 {offsets = [48, 0], sizes = [24, 16], strides = [1, 1]} : vector<96x16xf32> to vector<24x16xf32>
    %c2_132 = arith.constant 2 : index
    %c6_133 = arith.constant 6 : index
    %c0_134 = arith.constant 0 : index
    %c0_135 = arith.constant 0 : index
    %144 = vector.load %arg9[%c2_132, %c6_133, %c0_134, %c0_135] : memref<4x8x24x16xf32, #tpu.memory_space<vmem>>, vector<1x1x24x16xf32>
    %145 = vector.shape_cast %144 : vector<1x1x24x16xf32> to vector<24x16xf32>
    %146 = vector.shape_cast %143 : vector<24x16xf32> to vector<1x1x24x16xf32>
    tpu.vector_store %arg9[%c2_132, %c6_133, %c0_134, %c0_135], %146 {strides = array<i32>} : memref<4x8x24x16xf32, #tpu.memory_space<vmem>>, vector<1x1x24x16xf32>,
    %147 = vector.extract_strided_slice %134 {offsets = [72, 0], sizes = [24, 16], strides = [1, 1]} : vector<96x16xf32> to vector<24x16xf32>
    %c3_136 = arith.constant 3 : index
    %c6_137 = arith.constant 6 : index
    %c0_138 = arith.constant 0 : index
    %c0_139 = arith.constant 0 : index
    %148 = vector.load %arg9[%c3_136, %c6_137, %c0_138, %c0_139] : memref<4x8x24x16xf32, #tpu.memory_space<vmem>>, vector<1x1x24x16xf32>
    %149 = vector.shape_cast %148 : vector<1x1x24x16xf32> to vector<24x16xf32>
    %150 = vector.shape_cast %147 : vector<24x16xf32> to vector<1x1x24x16xf32>
    tpu.vector_store %arg9[%c3_136, %c6_137, %c0_138, %c0_139], %150 {strides = array<i32>} : memref<4x8x24x16xf32, #tpu.memory_space<vmem>>, vector<1x1x24x16xf32>,
    %c7 = arith.constant 7 : index
    %c0_140 = arith.constant 0 : index
    %c0_141 = arith.constant 0 : index
    %151 = vector.load %arg1[%c7, %c0_140, %c0_141] : memref<8x5x16xf32, #tpu.memory_space<vmem>>, vector<1x5x16xf32>
    %152 = vector.shape_cast %151 : vector<1x5x16xf32> to vector<5x16xf32>
    %cst_142 = arith.constant dense<0.000000e+00> : vector<96x16xf32>
    %153 = tpu.matmul %0, %152, %cst_142 {dimension_numbers = #tpu.dot_dimension_numbers<[1], [0], [0], [1], [0, 0, 1, 1], [], []>} : vector<96x5xf32>, vector<5x16xf32>, vector<96x16xf32> -> vector<96x16xf32>
    %154 = vector.broadcast %1 : vector<96x1xf32> to vector<96x16xf32>
    %155 = arith.addf %153, %154 : vector<96x16xf32>
    %156 = vector.extract_strided_slice %155 {offsets = [0, 0], sizes = [24, 16], strides = [1, 1]} : vector<96x16xf32> to vector<24x16xf32>
    %c0_143 = arith.constant 0 : index
    %c7_144 = arith.constant 7 : index
    %c0_145 = arith.constant 0 : index
    %c0_146 = arith.constant 0 : index
    %157 = vector.load %arg9[%c0_143, %c7_144, %c0_145, %c0_146] : memref<4x8x24x16xf32, #tpu.memory_space<vmem>>, vector<1x1x24x16xf32>
    %158 = vector.shape_cast %157 : vector<1x1x24x16xf32> to vector<24x16xf32>
    %159 = vector.shape_cast %156 : vector<24x16xf32> to vector<1x1x24x16xf32>
    tpu.vector_store %arg9[%c0_143, %c7_144, %c0_145, %c0_146], %159 {strides = array<i32>} : memref<4x8x24x16xf32, #tpu.memory_space<vmem>>, vector<1x1x24x16xf32>,
    %160 = vector.extract_strided_slice %155 {offsets = [24, 0], sizes = [24, 16], strides = [1, 1]} : vector<96x16xf32> to vector<24x16xf32>
    %c1_147 = arith.constant 1 : index
    %c7_148 = arith.constant 7 : index
    %c0_149 = arith.constant 0 : index
    %c0_150 = arith.constant 0 : index
    %161 = vector.load %arg9[%c1_147, %c7_148, %c0_149, %c0_150] : memref<4x8x24x16xf32, #tpu.memory_space<vmem>>, vector<1x1x24x16xf32>
    %162 = vector.shape_cast %161 : vector<1x1x24x16xf32> to vector<24x16xf32>
    %163 = vector.shape_cast %160 : vector<24x16xf32> to vector<1x1x24x16xf32>
    tpu.vector_store %arg9[%c1_147, %c7_148, %c0_149, %c0_150], %163 {strides = array<i32>} : memref<4x8x24x16xf32, #tpu.memory_space<vmem>>, vector<1x1x24x16xf32>,
    %164 = vector.extract_strided_slice %155 {offsets = [48, 0], sizes = [24, 16], strides = [1, 1]} : vector<96x16xf32> to vector<24x16xf32>
    %c2_151 = arith.constant 2 : index
    %c7_152 = arith.constant 7 : index
    %c0_153 = arith.constant 0 : index
    %c0_154 = arith.constant 0 : index
    %165 = vector.load %arg9[%c2_151, %c7_152, %c0_153, %c0_154] : memref<4x8x24x16xf32, #tpu.memory_space<vmem>>, vector<1x1x24x16xf32>
    %166 = vector.shape_cast %165 : vector<1x1x24x16xf32> to vector<24x16xf32>
    %167 = vector.shape_cast %164 : vector<24x16xf32> to vector<1x1x24x16xf32>
    tpu.vector_store %arg9[%c2_151, %c7_152, %c0_153, %c0_154], %167 {strides = array<i32>} : memref<4x8x24x16xf32, #tpu.memory_space<vmem>>, vector<1x1x24x16xf32>,
    %168 = vector.extract_strided_slice %155 {offsets = [72, 0], sizes = [24, 16], strides = [1, 1]} : vector<96x16xf32> to vector<24x16xf32>
    %c3_155 = arith.constant 3 : index
    %c7_156 = arith.constant 7 : index
    %c0_157 = arith.constant 0 : index
    %c0_158 = arith.constant 0 : index
    %169 = vector.load %arg9[%c3_155, %c7_156, %c0_157, %c0_158] : memref<4x8x24x16xf32, #tpu.memory_space<vmem>>, vector<1x1x24x16xf32>
    %170 = vector.shape_cast %169 : vector<1x1x24x16xf32> to vector<24x16xf32>
    %171 = vector.shape_cast %168 : vector<24x16xf32> to vector<1x1x24x16xf32>
    tpu.vector_store %arg9[%c3_155, %c7_156, %c0_157, %c0_158], %171 {strides = array<i32>} : memref<4x8x24x16xf32, #tpu.memory_space<vmem>>, vector<1x1x24x16xf32>,
    %cst_159 = arith.constant 0.000000e+00 : f32
    %172 = vector.broadcast %cst_159 : f32 to vector<32x16xf32>
    %cst_160 = arith.constant dense<0.000000e+00> : vector<96x16xf32>
    %173 = tpu.matmul %2, %172, %cst_160 {dimension_numbers = #tpu.dot_dimension_numbers<[1], [0], [0], [1], [0, 0, 1, 1], [], []>} : vector<96x32xf32>, vector<32x16xf32>, vector<96x16xf32> -> vector<96x16xf32>
    %174 = vector.broadcast %3 : vector<96x1xf32> to vector<96x16xf32>
    %175 = arith.addf %173, %174 : vector<96x16xf32>
    %c0_161 = arith.constant 0 : index
    %c0_162 = arith.constant 0 : index
    %c0_163 = arith.constant 0 : index
    %c0_164 = arith.constant 0 : index
    %176 = vector.load %arg9[%c0_161, %c0_162, %c0_163, %c0_164] : memref<4x8x24x16xf32, #tpu.memory_space<vmem>>, vector<1x1x24x16xf32>
    %177 = vector.shape_cast %176 : vector<1x1x24x16xf32> to vector<24x16xf32>
    %178 = vector.extract_strided_slice %175 {offsets = [0, 0], sizes = [24, 16], strides = [1, 1]} : vector<96x16xf32> to vector<24x16xf32>
    %179 = vector.extract_strided_slice %172 {offsets = [0, 0], sizes = [8, 16], strides = [1, 1]} : vector<32x16xf32> to vector<8x16xf32>
    %180 = vector.extract_strided_slice %177 {offsets = [0, 0], sizes = [8, 16], strides = [1, 1]} : vector<24x16xf32> to vector<8x16xf32>
    %181 = vector.extract_strided_slice %178 {offsets = [0, 0], sizes = [8, 16], strides = [1, 1]} : vector<24x16xf32> to vector<8x16xf32>
    %182 = arith.addf %180, %181 : vector<8x16xf32>
    %183 = arith.negf %182 : vector<8x16xf32>
    %184 = math.exp %183 : vector<8x16xf32>
    %cst_165 = arith.constant 1.000000e+00 : f32
    %185 = vector.broadcast %cst_165 : f32 to vector<8x16xf32>
    %186 = arith.addf %185, %184 : vector<8x16xf32>
    %187 = arith.divf %185, %186 : vector<8x16xf32>
    %188 = vector.extract_strided_slice %177 {offsets = [8, 0], sizes = [8, 16], strides = [1, 1]} : vector<24x16xf32> to vector<8x16xf32>
    %189 = vector.extract_strided_slice %178 {offsets = [8, 0], sizes = [8, 16], strides = [1, 1]} : vector<24x16xf32> to vector<8x16xf32>
    %190 = arith.addf %188, %189 : vector<8x16xf32>
    %191 = arith.negf %190 : vector<8x16xf32>
    %192 = math.exp %191 : vector<8x16xf32>
    %cst_166 = arith.constant 1.000000e+00 : f32
    %193 = vector.broadcast %cst_166 : f32 to vector<8x16xf32>
    %194 = arith.addf %193, %192 : vector<8x16xf32>
    %195 = arith.divf %193, %194 : vector<8x16xf32>
    %196 = vector.extract_strided_slice %177 {offsets = [16, 0], sizes = [8, 16], strides = [1, 1]} : vector<24x16xf32> to vector<8x16xf32>
    %197 = vector.extract_strided_slice %178 {offsets = [16, 0], sizes = [8, 16], strides = [1, 1]} : vector<24x16xf32> to vector<8x16xf32>
    %198 = arith.mulf %187, %197 : vector<8x16xf32>
    %199 = arith.addf %196, %198 : vector<8x16xf32>
    %200 = math.tanh %199 : vector<8x16xf32>
    %cst_167 = arith.constant 1.000000e+00 : f32
    %201 = vector.broadcast %cst_167 : f32 to vector<8x16xf32>
    %202 = arith.subf %201, %195 : vector<8x16xf32>
    %203 = arith.mulf %202, %200 : vector<8x16xf32>
    %204 = arith.mulf %195, %179 : vector<8x16xf32>
    %205 = arith.addf %203, %204 : vector<8x16xf32>
    %c1_168 = arith.constant 1 : index
    %c7_169 = arith.constant 7 : index
    %c0_170 = arith.constant 0 : index
    %c0_171 = arith.constant 0 : index
    %206 = vector.load %arg9[%c1_168, %c7_169, %c0_170, %c0_171] : memref<4x8x24x16xf32, #tpu.memory_space<vmem>>, vector<1x1x24x16xf32>
    %207 = vector.shape_cast %206 : vector<1x1x24x16xf32> to vector<24x16xf32>
    %208 = vector.extract_strided_slice %175 {offsets = [24, 0], sizes = [24, 16], strides = [1, 1]} : vector<96x16xf32> to vector<24x16xf32>
    %209 = vector.extract_strided_slice %172 {offsets = [8, 0], sizes = [8, 16], strides = [1, 1]} : vector<32x16xf32> to vector<8x16xf32>
    %210 = vector.extract_strided_slice %207 {offsets = [0, 0], sizes = [8, 16], strides = [1, 1]} : vector<24x16xf32> to vector<8x16xf32>
    %211 = vector.extract_strided_slice %208 {offsets = [0, 0], sizes = [8, 16], strides = [1, 1]} : vector<24x16xf32> to vector<8x16xf32>
    %212 = arith.addf %210, %211 : vector<8x16xf32>
    %213 = arith.negf %212 : vector<8x16xf32>
    %214 = math.exp %213 : vector<8x16xf32>
    %cst_172 = arith.constant 1.000000e+00 : f32
    %215 = vector.broadcast %cst_172 : f32 to vector<8x16xf32>
    %216 = arith.addf %215, %214 : vector<8x16xf32>
    %217 = arith.divf %215, %216 : vector<8x16xf32>
    %218 = vector.extract_strided_slice %207 {offsets = [8, 0], sizes = [8, 16], strides = [1, 1]} : vector<24x16xf32> to vector<8x16xf32>
    %219 = vector.extract_strided_slice %208 {offsets = [8, 0], sizes = [8, 16], strides = [1, 1]} : vector<24x16xf32> to vector<8x16xf32>
    %220 = arith.addf %218, %219 : vector<8x16xf32>
    %221 = arith.negf %220 : vector<8x16xf32>
    %222 = math.exp %221 : vector<8x16xf32>
    %cst_173 = arith.constant 1.000000e+00 : f32
    %223 = vector.broadcast %cst_173 : f32 to vector<8x16xf32>
    %224 = arith.addf %223, %222 : vector<8x16xf32>
    %225 = arith.divf %223, %224 : vector<8x16xf32>
    %226 = vector.extract_strided_slice %207 {offsets = [16, 0], sizes = [8, 16], strides = [1, 1]} : vector<24x16xf32> to vector<8x16xf32>
    %227 = vector.extract_strided_slice %208 {offsets = [16, 0], sizes = [8, 16], strides = [1, 1]} : vector<24x16xf32> to vector<8x16xf32>
    %228 = arith.mulf %217, %227 : vector<8x16xf32>
    %229 = arith.addf %226, %228 : vector<8x16xf32>
    %230 = math.tanh %229 : vector<8x16xf32>
    %cst_174 = arith.constant 1.000000e+00 : f32
    %231 = vector.broadcast %cst_174 : f32 to vector<8x16xf32>
    %232 = arith.subf %231, %225 : vector<8x16xf32>
    %233 = arith.mulf %232, %230 : vector<8x16xf32>
    %234 = arith.mulf %225, %209 : vector<8x16xf32>
    %235 = arith.addf %233, %234 : vector<8x16xf32>
    %c2_175 = arith.constant 2 : index
    %c0_176 = arith.constant 0 : index
    %c0_177 = arith.constant 0 : index
    %c0_178 = arith.constant 0 : index
    %236 = vector.load %arg9[%c2_175, %c0_176, %c0_177, %c0_178] : memref<4x8x24x16xf32, #tpu.memory_space<vmem>>, vector<1x1x24x16xf32>
    %237 = vector.shape_cast %236 : vector<1x1x24x16xf32> to vector<24x16xf32>
    %238 = vector.extract_strided_slice %175 {offsets = [48, 0], sizes = [24, 16], strides = [1, 1]} : vector<96x16xf32> to vector<24x16xf32>
    %239 = vector.extract_strided_slice %172 {offsets = [16, 0], sizes = [8, 16], strides = [1, 1]} : vector<32x16xf32> to vector<8x16xf32>
    %240 = vector.extract_strided_slice %237 {offsets = [0, 0], sizes = [8, 16], strides = [1, 1]} : vector<24x16xf32> to vector<8x16xf32>
    %241 = vector.extract_strided_slice %238 {offsets = [0, 0], sizes = [8, 16], strides = [1, 1]} : vector<24x16xf32> to vector<8x16xf32>
    %242 = arith.addf %240, %241 : vector<8x16xf32>
    %243 = arith.negf %242 : vector<8x16xf32>
    %244 = math.exp %243 : vector<8x16xf32>
    %cst_179 = arith.constant 1.000000e+00 : f32
    %245 = vector.broadcast %cst_179 : f32 to vector<8x16xf32>
    %246 = arith.addf %245, %244 : vector<8x16xf32>
    %247 = arith.divf %245, %246 : vector<8x16xf32>
    %248 = vector.extract_strided_slice %237 {offsets = [8, 0], sizes = [8, 16], strides = [1, 1]} : vector<24x16xf32> to vector<8x16xf32>
    %249 = vector.extract_strided_slice %238 {offsets = [8, 0], sizes = [8, 16], strides = [1, 1]} : vector<24x16xf32> to vector<8x16xf32>
    %250 = arith.addf %248, %249 : vector<8x16xf32>
    %251 = arith.negf %250 : vector<8x16xf32>
    %252 = math.exp %251 : vector<8x16xf32>
    %cst_180 = arith.constant 1.000000e+00 : f32
    %253 = vector.broadcast %cst_180 : f32 to vector<8x16xf32>
    %254 = arith.addf %253, %252 : vector<8x16xf32>
    %255 = arith.divf %253, %254 : vector<8x16xf32>
    %256 = vector.extract_strided_slice %237 {offsets = [16, 0], sizes = [8, 16], strides = [1, 1]} : vector<24x16xf32> to vector<8x16xf32>
    %257 = vector.extract_strided_slice %238 {offsets = [16, 0], sizes = [8, 16], strides = [1, 1]} : vector<24x16xf32> to vector<8x16xf32>
    %258 = arith.mulf %247, %257 : vector<8x16xf32>
    %259 = arith.addf %256, %258 : vector<8x16xf32>
    %260 = math.tanh %259 : vector<8x16xf32>
    %cst_181 = arith.constant 1.000000e+00 : f32
    %261 = vector.broadcast %cst_181 : f32 to vector<8x16xf32>
    %262 = arith.subf %261, %255 : vector<8x16xf32>
    %263 = arith.mulf %262, %260 : vector<8x16xf32>
    %264 = arith.mulf %255, %239 : vector<8x16xf32>
    %265 = arith.addf %263, %264 : vector<8x16xf32>
    %c3_182 = arith.constant 3 : index
    %c7_183 = arith.constant 7 : index
    %c0_184 = arith.constant 0 : index
    %c0_185 = arith.constant 0 : index
    %266 = vector.load %arg9[%c3_182, %c7_183, %c0_184, %c0_185] : memref<4x8x24x16xf32, #tpu.memory_space<vmem>>, vector<1x1x24x16xf32>
    %267 = vector.shape_cast %266 : vector<1x1x24x16xf32> to vector<24x16xf32>
    %268 = vector.extract_strided_slice %175 {offsets = [72, 0], sizes = [24, 16], strides = [1, 1]} : vector<96x16xf32> to vector<24x16xf32>
    %269 = vector.extract_strided_slice %172 {offsets = [24, 0], sizes = [8, 16], strides = [1, 1]} : vector<32x16xf32> to vector<8x16xf32>
    %270 = vector.extract_strided_slice %267 {offsets = [0, 0], sizes = [8, 16], strides = [1, 1]} : vector<24x16xf32> to vector<8x16xf32>
    %271 = vector.extract_strided_slice %268 {offsets = [0, 0], sizes = [8, 16], strides = [1, 1]} : vector<24x16xf32> to vector<8x16xf32>
    %272 = arith.addf %270, %271 : vector<8x16xf32>
    %273 = arith.negf %272 : vector<8x16xf32>
    %274 = math.exp %273 : vector<8x16xf32>
    %cst_186 = arith.constant 1.000000e+00 : f32
    %275 = vector.broadcast %cst_186 : f32 to vector<8x16xf32>
    %276 = arith.addf %275, %274 : vector<8x16xf32>
    %277 = arith.divf %275, %276 : vector<8x16xf32>
    %278 = vector.extract_strided_slice %267 {offsets = [8, 0], sizes = [8, 16], strides = [1, 1]} : vector<24x16xf32> to vector<8x16xf32>
    %279 = vector.extract_strided_slice %268 {offsets = [8, 0], sizes = [8, 16], strides = [1, 1]} : vector<24x16xf32> to vector<8x16xf32>
    %280 = arith.addf %278, %279 : vector<8x16xf32>
    %281 = arith.negf %280 : vector<8x16xf32>
    %282 = math.exp %281 : vector<8x16xf32>
    %cst_187 = arith.constant 1.000000e+00 : f32
    %283 = vector.broadcast %cst_187 : f32 to vector<8x16xf32>
    %284 = arith.addf %283, %282 : vector<8x16xf32>
    %285 = arith.divf %283, %284 : vector<8x16xf32>
    %286 = vector.extract_strided_slice %267 {offsets = [16, 0], sizes = [8, 16], strides = [1, 1]} : vector<24x16xf32> to vector<8x16xf32>
    %287 = vector.extract_strided_slice %268 {offsets = [16, 0], sizes = [8, 16], strides = [1, 1]} : vector<24x16xf32> to vector<8x16xf32>
    %288 = arith.mulf %277, %287 : vector<8x16xf32>
    %289 = arith.addf %286, %288 : vector<8x16xf32>
    %290 = math.tanh %289 : vector<8x16xf32>
    %cst_188 = arith.constant 1.000000e+00 : f32
    %291 = vector.broadcast %cst_188 : f32 to vector<8x16xf32>
    %292 = arith.subf %291, %285 : vector<8x16xf32>
    %293 = arith.mulf %292, %290 : vector<8x16xf32>
    %294 = arith.mulf %285, %269 : vector<8x16xf32>
    %295 = arith.addf %293, %294 : vector<8x16xf32>
    %c0_189 = arith.constant 0 : index
    %c0_190 = arith.constant 0 : index
    %c0_191 = arith.constant 0 : index
    %296 = vector.load %arg10[%c0_189, %c0_190, %c0_191] : memref<8x8x16xf32, #tpu.memory_space<vmem>>, vector<1x8x16xf32>
    %297 = vector.shape_cast %296 : vector<1x8x16xf32> to vector<8x16xf32>
    %298 = vector.shape_cast %205 : vector<8x16xf32> to vector<1x8x16xf32>
    tpu.vector_store %arg10[%c0_189, %c0_190, %c0_191], %298 {strides = array<i32>} : memref<8x8x16xf32, #tpu.memory_space<vmem>>, vector<1x8x16xf32>,
    %c7_192 = arith.constant 7 : index
    %c0_193 = arith.constant 0 : index
    %c0_194 = arith.constant 0 : index
    %299 = vector.load %arg11[%c7_192, %c0_193, %c0_194] : memref<8x8x16xf32, #tpu.memory_space<vmem>>, vector<1x8x16xf32>
    %300 = vector.shape_cast %299 : vector<1x8x16xf32> to vector<8x16xf32>
    %301 = vector.shape_cast %235 : vector<8x16xf32> to vector<1x8x16xf32>
    tpu.vector_store %arg11[%c7_192, %c0_193, %c0_194], %301 {strides = array<i32>} : memref<8x8x16xf32, #tpu.memory_space<vmem>>, vector<1x8x16xf32>,
    %cst_195 = arith.constant 0.000000e+00 : f32
    %302 = vector.broadcast %cst_195 : f32 to vector<8x16xf32>
    %303 = arith.maximumf %265, %302 : vector<8x16xf32>
    %304 = math.absf %265 : vector<8x16xf32>
    %cst_196 = arith.constant 0.000000e+00 : f32
    %305 = vector.broadcast %cst_196 : f32 to vector<8x16xf32>
    %306 = arith.subf %305, %304 : vector<8x16xf32>
    %307 = math.exp %306 : vector<8x16xf32>
    %cst_197 = arith.constant 1.000000e+00 : f32
    %308 = vector.broadcast %cst_197 : f32 to vector<8x16xf32>
    %309 = arith.addf %308, %307 : vector<8x16xf32>
    %310 = math.log %309 : vector<8x16xf32>
    %311 = arith.addf %303, %310 : vector<8x16xf32>
    %c0_198 = arith.constant 0 : index
    %c0_199 = arith.constant 0 : index
    %c0_200 = arith.constant 0 : index
    %c0_201 = arith.constant 0 : index
    %312 = vector.load %arg8[%c0_198, %c0_199, %c0_200, %c0_201] : memref<2x8x8x16xf32, #tpu.memory_space<vmem>>, vector<1x1x8x16xf32>
    %313 = vector.shape_cast %312 : vector<1x1x8x16xf32> to vector<8x16xf32>
    %314 = vector.shape_cast %311 : vector<8x16xf32> to vector<1x1x8x16xf32>
    tpu.vector_store %arg8[%c0_198, %c0_199, %c0_200, %c0_201], %314 {strides = array<i32>} : memref<2x8x8x16xf32, #tpu.memory_space<vmem>>, vector<1x1x8x16xf32>,
    %cst_202 = arith.constant 0.000000e+00 : f32
    %315 = vector.broadcast %cst_202 : f32 to vector<8x16xf32>
    %316 = arith.maximumf %295, %315 : vector<8x16xf32>
    %317 = math.absf %295 : vector<8x16xf32>
    %cst_203 = arith.constant 0.000000e+00 : f32
    %318 = vector.broadcast %cst_203 : f32 to vector<8x16xf32>
    %319 = arith.subf %318, %317 : vector<8x16xf32>
    %320 = math.exp %319 : vector<8x16xf32>
    %cst_204 = arith.constant 1.000000e+00 : f32
    %321 = vector.broadcast %cst_204 : f32 to vector<8x16xf32>
    %322 = arith.addf %321, %320 : vector<8x16xf32>
    %323 = math.log %322 : vector<8x16xf32>
    %324 = arith.addf %316, %323 : vector<8x16xf32>
    %c1_205 = arith.constant 1 : index
    %c7_206 = arith.constant 7 : index
    %c0_207 = arith.constant 0 : index
    %c0_208 = arith.constant 0 : index
    %325 = vector.load %arg8[%c1_205, %c7_206, %c0_207, %c0_208] : memref<2x8x8x16xf32, #tpu.memory_space<vmem>>, vector<1x1x8x16xf32>
    %326 = vector.shape_cast %325 : vector<1x1x8x16xf32> to vector<8x16xf32>
    %327 = vector.shape_cast %324 : vector<8x16xf32> to vector<1x1x8x16xf32>
    tpu.vector_store %arg8[%c1_205, %c7_206, %c0_207, %c0_208], %327 {strides = array<i32>} : memref<2x8x8x16xf32, #tpu.memory_space<vmem>>, vector<1x1x8x16xf32>,
    %328 = tpu.concatenate %205, %235, %265, %295 in 0 : vector<8x16xf32>, vector<8x16xf32>, vector<8x16xf32>, vector<8x16xf32> -> vector<32x16xf32>
    %cst_209 = arith.constant dense<0.000000e+00> : vector<96x16xf32>
    %329 = tpu.matmul %2, %328, %cst_209 {dimension_numbers = #tpu.dot_dimension_numbers<[1], [0], [0], [1], [0, 0, 1, 1], [], []>} : vector<96x32xf32>, vector<32x16xf32>, vector<96x16xf32> -> vector<96x16xf32>
    %330 = vector.broadcast %3 : vector<96x1xf32> to vector<96x16xf32>
    %331 = arith.addf %329, %330 : vector<96x16xf32>
    %c0_210 = arith.constant 0 : index
    %c1_211 = arith.constant 1 : index
    %c0_212 = arith.constant 0 : index
    %c0_213 = arith.constant 0 : index
    %332 = vector.load %arg9[%c0_210, %c1_211, %c0_212, %c0_213] : memref<4x8x24x16xf32, #tpu.memory_space<vmem>>, vector<1x1x24x16xf32>
    %333 = vector.shape_cast %332 : vector<1x1x24x16xf32> to vector<24x16xf32>
    %334 = vector.extract_strided_slice %331 {offsets = [0, 0], sizes = [24, 16], strides = [1, 1]} : vector<96x16xf32> to vector<24x16xf32>
    %335 = vector.extract_strided_slice %328 {offsets = [0, 0], sizes = [8, 16], strides = [1, 1]} : vector<32x16xf32> to vector<8x16xf32>
    %336 = vector.extract_strided_slice %333 {offsets = [0, 0], sizes = [8, 16], strides = [1, 1]} : vector<24x16xf32> to vector<8x16xf32>
    %337 = vector.extract_strided_slice %334 {offsets = [0, 0], sizes = [8, 16], strides = [1, 1]} : vector<24x16xf32> to vector<8x16xf32>
    %338 = arith.addf %336, %337 : vector<8x16xf32>
    %339 = arith.negf %338 : vector<8x16xf32>
    %340 = math.exp %339 : vector<8x16xf32>
    %cst_214 = arith.constant 1.000000e+00 : f32
    %341 = vector.broadcast %cst_214 : f32 to vector<8x16xf32>
    %342 = arith.addf %341, %340 : vector<8x16xf32>
    %343 = arith.divf %341, %342 : vector<8x16xf32>
    %344 = vector.extract_strided_slice %333 {offsets = [8, 0], sizes = [8, 16], strides = [1, 1]} : vector<24x16xf32> to vector<8x16xf32>
    %345 = vector.extract_strided_slice %334 {offsets = [8, 0], sizes = [8, 16], strides = [1, 1]} : vector<24x16xf32> to vector<8x16xf32>
    %346 = arith.addf %344, %345 : vector<8x16xf32>
    %347 = arith.negf %346 : vector<8x16xf32>
    %348 = math.exp %347 : vector<8x16xf32>
    %cst_215 = arith.constant 1.000000e+00 : f32
    %349 = vector.broadcast %cst_215 : f32 to vector<8x16xf32>
    %350 = arith.addf %349, %348 : vector<8x16xf32>
    %351 = arith.divf %349, %350 : vector<8x16xf32>
    %352 = vector.extract_strided_slice %333 {offsets = [16, 0], sizes = [8, 16], strides = [1, 1]} : vector<24x16xf32> to vector<8x16xf32>
    %353 = vector.extract_strided_slice %334 {offsets = [16, 0], sizes = [8, 16], strides = [1, 1]} : vector<24x16xf32> to vector<8x16xf32>
    %354 = arith.mulf %343, %353 : vector<8x16xf32>
    %355 = arith.addf %352, %354 : vector<8x16xf32>
    %356 = math.tanh %355 : vector<8x16xf32>
    %cst_216 = arith.constant 1.000000e+00 : f32
    %357 = vector.broadcast %cst_216 : f32 to vector<8x16xf32>
    %358 = arith.subf %357, %351 : vector<8x16xf32>
    %359 = arith.mulf %358, %356 : vector<8x16xf32>
    %360 = arith.mulf %351, %335 : vector<8x16xf32>
    %361 = arith.addf %359, %360 : vector<8x16xf32>
    %c1_217 = arith.constant 1 : index
    %c6_218 = arith.constant 6 : index
    %c0_219 = arith.constant 0 : index
    %c0_220 = arith.constant 0 : index
    %362 = vector.load %arg9[%c1_217, %c6_218, %c0_219, %c0_220] : memref<4x8x24x16xf32, #tpu.memory_space<vmem>>, vector<1x1x24x16xf32>
    %363 = vector.shape_cast %362 : vector<1x1x24x16xf32> to vector<24x16xf32>
    %364 = vector.extract_strided_slice %331 {offsets = [24, 0], sizes = [24, 16], strides = [1, 1]} : vector<96x16xf32> to vector<24x16xf32>
    %365 = vector.extract_strided_slice %328 {offsets = [8, 0], sizes = [8, 16], strides = [1, 1]} : vector<32x16xf32> to vector<8x16xf32>
    %366 = vector.extract_strided_slice %363 {offsets = [0, 0], sizes = [8, 16], strides = [1, 1]} : vector<24x16xf32> to vector<8x16xf32>
    %367 = vector.extract_strided_slice %364 {offsets = [0, 0], sizes = [8, 16], strides = [1, 1]} : vector<24x16xf32> to vector<8x16xf32>
    %368 = arith.addf %366, %367 : vector<8x16xf32>
    %369 = arith.negf %368 : vector<8x16xf32>
    %370 = math.exp %369 : vector<8x16xf32>
    %cst_221 = arith.constant 1.000000e+00 : f32
    %371 = vector.broadcast %cst_221 : f32 to vector<8x16xf32>
    %372 = arith.addf %371, %370 : vector<8x16xf32>
    %373 = arith.divf %371, %372 : vector<8x16xf32>
    %374 = vector.extract_strided_slice %363 {offsets = [8, 0], sizes = [8, 16], strides = [1, 1]} : vector<24x16xf32> to vector<8x16xf32>
    %375 = vector.extract_strided_slice %364 {offsets = [8, 0], sizes = [8, 16], strides = [1, 1]} : vector<24x16xf32> to vector<8x16xf32>
    %376 = arith.addf %374, %375 : vector<8x16xf32>
    %377 = arith.negf %376 : vector<8x16xf32>
    %378 = math.exp %377 : vector<8x16xf32>
    %cst_222 = arith.constant 1.000000e+00 : f32
    %379 = vector.broadcast %cst_222 : f32 to vector<8x16xf32>
    %380 = arith.addf %379, %378 : vector<8x16xf32>
    %381 = arith.divf %379, %380 : vector<8x16xf32>
    %382 = vector.extract_strided_slice %363 {offsets = [16, 0], sizes = [8, 16], strides = [1, 1]} : vector<24x16xf32> to vector<8x16xf32>
    %383 = vector.extract_strided_slice %364 {offsets = [16, 0], sizes = [8, 16], strides = [1, 1]} : vector<24x16xf32> to vector<8x16xf32>
    %384 = arith.mulf %373, %383 : vector<8x16xf32>
    %385 = arith.addf %382, %384 : vector<8x16xf32>
    %386 = math.tanh %385 : vector<8x16xf32>
    %cst_223 = arith.constant 1.000000e+00 : f32
    %387 = vector.broadcast %cst_223 : f32 to vector<8x16xf32>
    %388 = arith.subf %387, %381 : vector<8x16xf32>
    %389 = arith.mulf %388, %386 : vector<8x16xf32>
    %390 = arith.mulf %381, %365 : vector<8x16xf32>
    %391 = arith.addf %389, %390 : vector<8x16xf32>
    %c2_224 = arith.constant 2 : index
    %c1_225 = arith.constant 1 : index
    %c0_226 = arith.constant 0 : index
    %c0_227 = arith.constant 0 : index
    %392 = vector.load %arg9[%c2_224, %c1_225, %c0_226, %c0_227] : memref<4x8x24x16xf32, #tpu.memory_space<vmem>>, vector<1x1x24x16xf32>
    %393 = vector.shape_cast %392 : vector<1x1x24x16xf32> to vector<24x16xf32>
    %394 = vector.extract_strided_slice %331 {offsets = [48, 0], sizes = [24, 16], strides = [1, 1]} : vector<96x16xf32> to vector<24x16xf32>
    %395 = vector.extract_strided_slice %328 {offsets = [16, 0], sizes = [8, 16], strides = [1, 1]} : vector<32x16xf32> to vector<8x16xf32>
    %396 = vector.extract_strided_slice %393 {offsets = [0, 0], sizes = [8, 16], strides = [1, 1]} : vector<24x16xf32> to vector<8x16xf32>
    %397 = vector.extract_strided_slice %394 {offsets = [0, 0], sizes = [8, 16], strides = [1, 1]} : vector<24x16xf32> to vector<8x16xf32>
    %398 = arith.addf %396, %397 : vector<8x16xf32>
    %399 = arith.negf %398 : vector<8x16xf32>
    %400 = math.exp %399 : vector<8x16xf32>
    %cst_228 = arith.constant 1.000000e+00 : f32
    %401 = vector.broadcast %cst_228 : f32 to vector<8x16xf32>
    %402 = arith.addf %401, %400 : vector<8x16xf32>
    %403 = arith.divf %401, %402 : vector<8x16xf32>
    %404 = vector.extract_strided_slice %393 {offsets = [8, 0], sizes = [8, 16], strides = [1, 1]} : vector<24x16xf32> to vector<8x16xf32>
    %405 = vector.extract_strided_slice %394 {offsets = [8, 0], sizes = [8, 16], strides = [1, 1]} : vector<24x16xf32> to vector<8x16xf32>
    %406 = arith.addf %404, %405 : vector<8x16xf32>
    %407 = arith.negf %406 : vector<8x16xf32>
    %408 = math.exp %407 : vector<8x16xf32>
    %cst_229 = arith.constant 1.000000e+00 : f32
    %409 = vector.broadcast %cst_229 : f32 to vector<8x16xf32>
    %410 = arith.addf %409, %408 : vector<8x16xf32>
    %411 = arith.divf %409, %410 : vector<8x16xf32>
    %412 = vector.extract_strided_slice %393 {offsets = [16, 0], sizes = [8, 16], strides = [1, 1]} : vector<24x16xf32> to vector<8x16xf32>
    %413 = vector.extract_strided_slice %394 {offsets = [16, 0], sizes = [8, 16], strides = [1, 1]} : vector<24x16xf32> to vector<8x16xf32>
    %414 = arith.mulf %403, %413 : vector<8x16xf32>
    %415 = arith.addf %412, %414 : vector<8x16xf32>
    %416 = math.tanh %415 : vector<8x16xf32>
    %cst_230 = arith.constant 1.000000e+00 : f32
    %417 = vector.broadcast %cst_230 : f32 to vector<8x16xf32>
    %418 = arith.subf %417, %411 : vector<8x16xf32>
    %419 = arith.mulf %418, %416 : vector<8x16xf32>
    %420 = arith.mulf %411, %395 : vector<8x16xf32>
    %421 = arith.addf %419, %420 : vector<8x16xf32>
    %c3_231 = arith.constant 3 : index
    %c6_232 = arith.constant 6 : index
    %c0_233 = arith.constant 0 : index
    %c0_234 = arith.constant 0 : index
    %422 = vector.load %arg9[%c3_231, %c6_232, %c0_233, %c0_234] : memref<4x8x24x16xf32, #tpu.memory_space<vmem>>, vector<1x1x24x16xf32>
    %423 = vector.shape_cast %422 : vector<1x1x24x16xf32> to vector<24x16xf32>
    %424 = vector.extract_strided_slice %331 {offsets = [72, 0], sizes = [24, 16], strides = [1, 1]} : vector<96x16xf32> to vector<24x16xf32>
    %425 = vector.extract_strided_slice %328 {offsets = [24, 0], sizes = [8, 16], strides = [1, 1]} : vector<32x16xf32> to vector<8x16xf32>
    %426 = vector.extract_strided_slice %423 {offsets = [0, 0], sizes = [8, 16], strides = [1, 1]} : vector<24x16xf32> to vector<8x16xf32>
    %427 = vector.extract_strided_slice %424 {offsets = [0, 0], sizes = [8, 16], strides = [1, 1]} : vector<24x16xf32> to vector<8x16xf32>
    %428 = arith.addf %426, %427 : vector<8x16xf32>
    %429 = arith.negf %428 : vector<8x16xf32>
    %430 = math.exp %429 : vector<8x16xf32>
    %cst_235 = arith.constant 1.000000e+00 : f32
    %431 = vector.broadcast %cst_235 : f32 to vector<8x16xf32>
    %432 = arith.addf %431, %430 : vector<8x16xf32>
    %433 = arith.divf %431, %432 : vector<8x16xf32>
    %434 = vector.extract_strided_slice %423 {offsets = [8, 0], sizes = [8, 16], strides = [1, 1]} : vector<24x16xf32> to vector<8x16xf32>
    %435 = vector.extract_strided_slice %424 {offsets = [8, 0], sizes = [8, 16], strides = [1, 1]} : vector<24x16xf32> to vector<8x16xf32>
    %436 = arith.addf %434, %435 : vector<8x16xf32>
    %437 = arith.negf %436 : vector<8x16xf32>
    %438 = math.exp %437 : vector<8x16xf32>
    %cst_236 = arith.constant 1.000000e+00 : f32
    %439 = vector.broadcast %cst_236 : f32 to vector<8x16xf32>
    %440 = arith.addf %439, %438 : vector<8x16xf32>
    %441 = arith.divf %439, %440 : vector<8x16xf32>
    %442 = vector.extract_strided_slice %423 {offsets = [16, 0], sizes = [8, 16], strides = [1, 1]} : vector<24x16xf32> to vector<8x16xf32>
    %443 = vector.extract_strided_slice %424 {offsets = [16, 0], sizes = [8, 16], strides = [1, 1]} : vector<24x16xf32> to vector<8x16xf32>
    %444 = arith.mulf %433, %443 : vector<8x16xf32>
    %445 = arith.addf %442, %444 : vector<8x16xf32>
    %446 = math.tanh %445 : vector<8x16xf32>
    %cst_237 = arith.constant 1.000000e+00 : f32
    %447 = vector.broadcast %cst_237 : f32 to vector<8x16xf32>
    %448 = arith.subf %447, %441 : vector<8x16xf32>
    %449 = arith.mulf %448, %446 : vector<8x16xf32>
    %450 = arith.mulf %441, %425 : vector<8x16xf32>
    %451 = arith.addf %449, %450 : vector<8x16xf32>
    %c1_238 = arith.constant 1 : index
    %c0_239 = arith.constant 0 : index
    %c0_240 = arith.constant 0 : index
    %452 = vector.load %arg10[%c1_238, %c0_239, %c0_240] : memref<8x8x16xf32, #tpu.memory_space<vmem>>, vector<1x8x16xf32>
    %453 = vector.shape_cast %452 : vector<1x8x16xf32> to vector<8x16xf32>
    %454 = vector.shape_cast %361 : vector<8x16xf32> to vector<1x8x16xf32>
    tpu.vector_store %arg10[%c1_238, %c0_239, %c0_240], %454 {strides = array<i32>} : memref<8x8x16xf32, #tpu.memory_space<vmem>>, vector<1x8x16xf32>,
    %c6_241 = arith.constant 6 : index
    %c0_242 = arith.constant 0 : index
    %c0_243 = arith.constant 0 : index
    %455 = vector.load %arg11[%c6_241, %c0_242, %c0_243] : memref<8x8x16xf32, #tpu.memory_space<vmem>>, vector<1x8x16xf32>
    %456 = vector.shape_cast %455 : vector<1x8x16xf32> to vector<8x16xf32>
    %457 = vector.shape_cast %391 : vector<8x16xf32> to vector<1x8x16xf32>
    tpu.vector_store %arg11[%c6_241, %c0_242, %c0_243], %457 {strides = array<i32>} : memref<8x8x16xf32, #tpu.memory_space<vmem>>, vector<1x8x16xf32>,
    %cst_244 = arith.constant 0.000000e+00 : f32
    %458 = vector.broadcast %cst_244 : f32 to vector<8x16xf32>
    %459 = arith.maximumf %421, %458 : vector<8x16xf32>
    %460 = math.absf %421 : vector<8x16xf32>
    %cst_245 = arith.constant 0.000000e+00 : f32
    %461 = vector.broadcast %cst_245 : f32 to vector<8x16xf32>
    %462 = arith.subf %461, %460 : vector<8x16xf32>
    %463 = math.exp %462 : vector<8x16xf32>
    %cst_246 = arith.constant 1.000000e+00 : f32
    %464 = vector.broadcast %cst_246 : f32 to vector<8x16xf32>
    %465 = arith.addf %464, %463 : vector<8x16xf32>
    %466 = math.log %465 : vector<8x16xf32>
    %467 = arith.addf %459, %466 : vector<8x16xf32>
    %c0_247 = arith.constant 0 : index
    %c1_248 = arith.constant 1 : index
    %c0_249 = arith.constant 0 : index
    %c0_250 = arith.constant 0 : index
    %468 = vector.load %arg8[%c0_247, %c1_248, %c0_249, %c0_250] : memref<2x8x8x16xf32, #tpu.memory_space<vmem>>, vector<1x1x8x16xf32>
    %469 = vector.shape_cast %468 : vector<1x1x8x16xf32> to vector<8x16xf32>
    %470 = vector.shape_cast %467 : vector<8x16xf32> to vector<1x1x8x16xf32>
    tpu.vector_store %arg8[%c0_247, %c1_248, %c0_249, %c0_250], %470 {strides = array<i32>} : memref<2x8x8x16xf32, #tpu.memory_space<vmem>>, vector<1x1x8x16xf32>,
    %cst_251 = arith.constant 0.000000e+00 : f32
    %471 = vector.broadcast %cst_251 : f32 to vector<8x16xf32>
    %472 = arith.maximumf %451, %471 : vector<8x16xf32>
    %473 = math.absf %451 : vector<8x16xf32>
    %cst_252 = arith.constant 0.000000e+00 : f32
    %474 = vector.broadcast %cst_252 : f32 to vector<8x16xf32>
    %475 = arith.subf %474, %473 : vector<8x16xf32>
    %476 = math.exp %475 : vector<8x16xf32>
    %cst_253 = arith.constant 1.000000e+00 : f32
    %477 = vector.broadcast %cst_253 : f32 to vector<8x16xf32>
    %478 = arith.addf %477, %476 : vector<8x16xf32>
    %479 = math.log %478 : vector<8x16xf32>
    %480 = arith.addf %472, %479 : vector<8x16xf32>
    %c1_254 = arith.constant 1 : index
    %c6_255 = arith.constant 6 : index
    %c0_256 = arith.constant 0 : index
    %c0_257 = arith.constant 0 : index
    %481 = vector.load %arg8[%c1_254, %c6_255, %c0_256, %c0_257] : memref<2x8x8x16xf32, #tpu.memory_space<vmem>>, vector<1x1x8x16xf32>
    %482 = vector.shape_cast %481 : vector<1x1x8x16xf32> to vector<8x16xf32>
    %483 = vector.shape_cast %480 : vector<8x16xf32> to vector<1x1x8x16xf32>
    tpu.vector_store %arg8[%c1_254, %c6_255, %c0_256, %c0_257], %483 {strides = array<i32>} : memref<2x8x8x16xf32, #tpu.memory_space<vmem>>, vector<1x1x8x16xf32>,
    %484 = tpu.concatenate %361, %391, %421, %451 in 0 : vector<8x16xf32>, vector<8x16xf32>, vector<8x16xf32>, vector<8x16xf32> -> vector<32x16xf32>
    %cst_258 = arith.constant dense<0.000000e+00> : vector<96x16xf32>
    %485 = tpu.matmul %2, %484, %cst_258 {dimension_numbers = #tpu.dot_dimension_numbers<[1], [0], [0], [1], [0, 0, 1, 1], [], []>} : vector<96x32xf32>, vector<32x16xf32>, vector<96x16xf32> -> vector<96x16xf32>
    %486 = vector.broadcast %3 : vector<96x1xf32> to vector<96x16xf32>
    %487 = arith.addf %485, %486 : vector<96x16xf32>
    %c0_259 = arith.constant 0 : index
    %c2_260 = arith.constant 2 : index
    %c0_261 = arith.constant 0 : index
    %c0_262 = arith.constant 0 : index
    %488 = vector.load %arg9[%c0_259, %c2_260, %c0_261, %c0_262] : memref<4x8x24x16xf32, #tpu.memory_space<vmem>>, vector<1x1x24x16xf32>
    %489 = vector.shape_cast %488 : vector<1x1x24x16xf32> to vector<24x16xf32>
    %490 = vector.extract_strided_slice %487 {offsets = [0, 0], sizes = [24, 16], strides = [1, 1]} : vector<96x16xf32> to vector<24x16xf32>
    %491 = vector.extract_strided_slice %484 {offsets = [0, 0], sizes = [8, 16], strides = [1, 1]} : vector<32x16xf32> to vector<8x16xf32>
    %492 = vector.extract_strided_slice %489 {offsets = [0, 0], sizes = [8, 16], strides = [1, 1]} : vector<24x16xf32> to vector<8x16xf32>
    %493 = vector.extract_strided_slice %490 {offsets = [0, 0], sizes = [8, 16], strides = [1, 1]} : vector<24x16xf32> to vector<8x16xf32>
    %494 = arith.addf %492, %493 : vector<8x16xf32>
    %495 = arith.negf %494 : vector<8x16xf32>
    %496 = math.exp %495 : vector<8x16xf32>
    %cst_263 = arith.constant 1.000000e+00 : f32
    %497 = vector.broadcast %cst_263 : f32 to vector<8x16xf32>
    %498 = arith.addf %497, %496 : vector<8x16xf32>
    %499 = arith.divf %497, %498 : vector<8x16xf32>
    %500 = vector.extract_strided_slice %489 {offsets = [8, 0], sizes = [8, 16], strides = [1, 1]} : vector<24x16xf32> to vector<8x16xf32>
    %501 = vector.extract_strided_slice %490 {offsets = [8, 0], sizes = [8, 16], strides = [1, 1]} : vector<24x16xf32> to vector<8x16xf32>
    %502 = arith.addf %500, %501 : vector<8x16xf32>
    %503 = arith.negf %502 : vector<8x16xf32>
    %504 = math.exp %503 : vector<8x16xf32>
    %cst_264 = arith.constant 1.000000e+00 : f32
    %505 = vector.broadcast %cst_264 : f32 to vector<8x16xf32>
    %506 = arith.addf %505, %504 : vector<8x16xf32>
    %507 = arith.divf %505, %506 : vector<8x16xf32>
    %508 = vector.extract_strided_slice %489 {offsets = [16, 0], sizes = [8, 16], strides = [1, 1]} : vector<24x16xf32> to vector<8x16xf32>
    %509 = vector.extract_strided_slice %490 {offsets = [16, 0], sizes = [8, 16], strides = [1, 1]} : vector<24x16xf32> to vector<8x16xf32>
    %510 = arith.mulf %499, %509 : vector<8x16xf32>
    %511 = arith.addf %508, %510 : vector<8x16xf32>
    %512 = math.tanh %511 : vector<8x16xf32>
    %cst_265 = arith.constant 1.000000e+00 : f32
    %513 = vector.broadcast %cst_265 : f32 to vector<8x16xf32>
    %514 = arith.subf %513, %507 : vector<8x16xf32>
    %515 = arith.mulf %514, %512 : vector<8x16xf32>
    %516 = arith.mulf %507, %491 : vector<8x16xf32>
    %517 = arith.addf %515, %516 : vector<8x16xf32>
    %c1_266 = arith.constant 1 : index
    %c5_267 = arith.constant 5 : index
    %c0_268 = arith.constant 0 : index
    %c0_269 = arith.constant 0 : index
    %518 = vector.load %arg9[%c1_266, %c5_267, %c0_268, %c0_269] : memref<4x8x24x16xf32, #tpu.memory_space<vmem>>, vector<1x1x24x16xf32>
    %519 = vector.shape_cast %518 : vector<1x1x24x16xf32> to vector<24x16xf32>
    %520 = vector.extract_strided_slice %487 {offsets = [24, 0], sizes = [24, 16], strides = [1, 1]} : vector<96x16xf32> to vector<24x16xf32>
    %521 = vector.extract_strided_slice %484 {offsets = [8, 0], sizes = [8, 16], strides = [1, 1]} : vector<32x16xf32> to vector<8x16xf32>
    %522 = vector.extract_strided_slice %519 {offsets = [0, 0], sizes = [8, 16], strides = [1, 1]} : vector<24x16xf32> to vector<8x16xf32>
    %523 = vector.extract_strided_slice %520 {offsets = [0, 0], sizes = [8, 16], strides = [1, 1]} : vector<24x16xf32> to vector<8x16xf32>
    %524 = arith.addf %522, %523 : vector<8x16xf32>
    %525 = arith.negf %524 : vector<8x16xf32>
    %526 = math.exp %525 : vector<8x16xf32>
    %cst_270 = arith.constant 1.000000e+00 : f32
    %527 = vector.broadcast %cst_270 : f32 to vector<8x16xf32>
    %528 = arith.addf %527, %526 : vector<8x16xf32>
    %529 = arith.divf %527, %528 : vector<8x16xf32>
    %530 = vector.extract_strided_slice %519 {offsets = [8, 0], sizes = [8, 16], strides = [1, 1]} : vector<24x16xf32> to vector<8x16xf32>
    %531 = vector.extract_strided_slice %520 {offsets = [8, 0], sizes = [8, 16], strides = [1, 1]} : vector<24x16xf32> to vector<8x16xf32>
    %532 = arith.addf %530, %531 : vector<8x16xf32>
    %533 = arith.negf %532 : vector<8x16xf32>
    %534 = math.exp %533 : vector<8x16xf32>
    %cst_271 = arith.constant 1.000000e+00 : f32
    %535 = vector.broadcast %cst_271 : f32 to vector<8x16xf32>
    %536 = arith.addf %535, %534 : vector<8x16xf32>
    %537 = arith.divf %535, %536 : vector<8x16xf32>
    %538 = vector.extract_strided_slice %519 {offsets = [16, 0], sizes = [8, 16], strides = [1, 1]} : vector<24x16xf32> to vector<8x16xf32>
    %539 = vector.extract_strided_slice %520 {offsets = [16, 0], sizes = [8, 16], strides = [1, 1]} : vector<24x16xf32> to vector<8x16xf32>
    %540 = arith.mulf %529, %539 : vector<8x16xf32>
    %541 = arith.addf %538, %540 : vector<8x16xf32>
    %542 = math.tanh %541 : vector<8x16xf32>
    %cst_272 = arith.constant 1.000000e+00 : f32
    %543 = vector.broadcast %cst_272 : f32 to vector<8x16xf32>
    %544 = arith.subf %543, %537 : vector<8x16xf32>
    %545 = arith.mulf %544, %542 : vector<8x16xf32>
    %546 = arith.mulf %537, %521 : vector<8x16xf32>
    %547 = arith.addf %545, %546 : vector<8x16xf32>
    %c2_273 = arith.constant 2 : index
    %c2_274 = arith.constant 2 : index
    %c0_275 = arith.constant 0 : index
    %c0_276 = arith.constant 0 : index
    %548 = vector.load %arg9[%c2_273, %c2_274, %c0_275, %c0_276] : memref<4x8x24x16xf32, #tpu.memory_space<vmem>>, vector<1x1x24x16xf32>
    %549 = vector.shape_cast %548 : vector<1x1x24x16xf32> to vector<24x16xf32>
    %550 = vector.extract_strided_slice %487 {offsets = [48, 0], sizes = [24, 16], strides = [1, 1]} : vector<96x16xf32> to vector<24x16xf32>
    %551 = vector.extract_strided_slice %484 {offsets = [16, 0], sizes = [8, 16], strides = [1, 1]} : vector<32x16xf32> to vector<8x16xf32>
    %552 = vector.extract_strided_slice %549 {offsets = [0, 0], sizes = [8, 16], strides = [1, 1]} : vector<24x16xf32> to vector<8x16xf32>
    %553 = vector.extract_strided_slice %550 {offsets = [0, 0], sizes = [8, 16], strides = [1, 1]} : vector<24x16xf32> to vector<8x16xf32>
    %554 = arith.addf %552, %553 : vector<8x16xf32>
    %555 = arith.negf %554 : vector<8x16xf32>
    %556 = math.exp %555 : vector<8x16xf32>
    %cst_277 = arith.constant 1.000000e+00 : f32
    %557 = vector.broadcast %cst_277 : f32 to vector<8x16xf32>
    %558 = arith.addf %557, %556 : vector<8x16xf32>
    %559 = arith.divf %557, %558 : vector<8x16xf32>
    %560 = vector.extract_strided_slice %549 {offsets = [8, 0], sizes = [8, 16], strides = [1, 1]} : vector<24x16xf32> to vector<8x16xf32>
    %561 = vector.extract_strided_slice %550 {offsets = [8, 0], sizes = [8, 16], strides = [1, 1]} : vector<24x16xf32> to vector<8x16xf32>
    %562 = arith.addf %560, %561 : vector<8x16xf32>
    %563 = arith.negf %562 : vector<8x16xf32>
    %564 = math.exp %563 : vector<8x16xf32>
    %cst_278 = arith.constant 1.000000e+00 : f32
    %565 = vector.broadcast %cst_278 : f32 to vector<8x16xf32>
    %566 = arith.addf %565, %564 : vector<8x16xf32>
    %567 = arith.divf %565, %566 : vector<8x16xf32>
    %568 = vector.extract_strided_slice %549 {offsets = [16, 0], sizes = [8, 16], strides = [1, 1]} : vector<24x16xf32> to vector<8x16xf32>
    %569 = vector.extract_strided_slice %550 {offsets = [16, 0], sizes = [8, 16], strides = [1, 1]} : vector<24x16xf32> to vector<8x16xf32>
    %570 = arith.mulf %559, %569 : vector<8x16xf32>
    %571 = arith.addf %568, %570 : vector<8x16xf32>
    %572 = math.tanh %571 : vector<8x16xf32>
    %cst_279 = arith.constant 1.000000e+00 : f32
    %573 = vector.broadcast %cst_279 : f32 to vector<8x16xf32>
    %574 = arith.subf %573, %567 : vector<8x16xf32>
    %575 = arith.mulf %574, %572 : vector<8x16xf32>
    %576 = arith.mulf %567, %551 : vector<8x16xf32>
    %577 = arith.addf %575, %576 : vector<8x16xf32>
    %c3_280 = arith.constant 3 : index
    %c5_281 = arith.constant 5 : index
    %c0_282 = arith.constant 0 : index
    %c0_283 = arith.constant 0 : index
    %578 = vector.load %arg9[%c3_280, %c5_281, %c0_282, %c0_283] : memref<4x8x24x16xf32, #tpu.memory_space<vmem>>, vector<1x1x24x16xf32>
    %579 = vector.shape_cast %578 : vector<1x1x24x16xf32> to vector<24x16xf32>
    %580 = vector.extract_strided_slice %487 {offsets = [72, 0], sizes = [24, 16], strides = [1, 1]} : vector<96x16xf32> to vector<24x16xf32>
    %581 = vector.extract_strided_slice %484 {offsets = [24, 0], sizes = [8, 16], strides = [1, 1]} : vector<32x16xf32> to vector<8x16xf32>
    %582 = vector.extract_strided_slice %579 {offsets = [0, 0], sizes = [8, 16], strides = [1, 1]} : vector<24x16xf32> to vector<8x16xf32>
    %583 = vector.extract_strided_slice %580 {offsets = [0, 0], sizes = [8, 16], strides = [1, 1]} : vector<24x16xf32> to vector<8x16xf32>
    %584 = arith.addf %582, %583 : vector<8x16xf32>
    %585 = arith.negf %584 : vector<8x16xf32>
    %586 = math.exp %585 : vector<8x16xf32>
    %cst_284 = arith.constant 1.000000e+00 : f32
    %587 = vector.broadcast %cst_284 : f32 to vector<8x16xf32>
    %588 = arith.addf %587, %586 : vector<8x16xf32>
    %589 = arith.divf %587, %588 : vector<8x16xf32>
    %590 = vector.extract_strided_slice %579 {offsets = [8, 0], sizes = [8, 16], strides = [1, 1]} : vector<24x16xf32> to vector<8x16xf32>
    %591 = vector.extract_strided_slice %580 {offsets = [8, 0], sizes = [8, 16], strides = [1, 1]} : vector<24x16xf32> to vector<8x16xf32>
    %592 = arith.addf %590, %591 : vector<8x16xf32>
    %593 = arith.negf %592 : vector<8x16xf32>
    %594 = math.exp %593 : vector<8x16xf32>
    %cst_285 = arith.constant 1.000000e+00 : f32
    %595 = vector.broadcast %cst_285 : f32 to vector<8x16xf32>
    %596 = arith.addf %595, %594 : vector<8x16xf32>
    %597 = arith.divf %595, %596 : vector<8x16xf32>
    %598 = vector.extract_strided_slice %579 {offsets = [16, 0], sizes = [8, 16], strides = [1, 1]} : vector<24x16xf32> to vector<8x16xf32>
    %599 = vector.extract_strided_slice %580 {offsets = [16, 0], sizes = [8, 16], strides = [1, 1]} : vector<24x16xf32> to vector<8x16xf32>
    %600 = arith.mulf %589, %599 : vector<8x16xf32>
    %601 = arith.addf %598, %600 : vector<8x16xf32>
    %602 = math.tanh %601 : vector<8x16xf32>
    %cst_286 = arith.constant 1.000000e+00 : f32
    %603 = vector.broadcast %cst_286 : f32 to vector<8x16xf32>
    %604 = arith.subf %603, %597 : vector<8x16xf32>
    %605 = arith.mulf %604, %602 : vector<8x16xf32>
    %606 = arith.mulf %597, %581 : vector<8x16xf32>
    %607 = arith.addf %605, %606 : vector<8x16xf32>
    %c2_287 = arith.constant 2 : index
    %c0_288 = arith.constant 0 : index
    %c0_289 = arith.constant 0 : index
    %608 = vector.load %arg10[%c2_287, %c0_288, %c0_289] : memref<8x8x16xf32, #tpu.memory_space<vmem>>, vector<1x8x16xf32>
    %609 = vector.shape_cast %608 : vector<1x8x16xf32> to vector<8x16xf32>
    %610 = vector.shape_cast %517 : vector<8x16xf32> to vector<1x8x16xf32>
    tpu.vector_store %arg10[%c2_287, %c0_288, %c0_289], %610 {strides = array<i32>} : memref<8x8x16xf32, #tpu.memory_space<vmem>>, vector<1x8x16xf32>,
    %c5_290 = arith.constant 5 : index
    %c0_291 = arith.constant 0 : index
    %c0_292 = arith.constant 0 : index
    %611 = vector.load %arg11[%c5_290, %c0_291, %c0_292] : memref<8x8x16xf32, #tpu.memory_space<vmem>>, vector<1x8x16xf32>
    %612 = vector.shape_cast %611 : vector<1x8x16xf32> to vector<8x16xf32>
    %613 = vector.shape_cast %547 : vector<8x16xf32> to vector<1x8x16xf32>
    tpu.vector_store %arg11[%c5_290, %c0_291, %c0_292], %613 {strides = array<i32>} : memref<8x8x16xf32, #tpu.memory_space<vmem>>, vector<1x8x16xf32>,
    %cst_293 = arith.constant 0.000000e+00 : f32
    %614 = vector.broadcast %cst_293 : f32 to vector<8x16xf32>
    %615 = arith.maximumf %577, %614 : vector<8x16xf32>
    %616 = math.absf %577 : vector<8x16xf32>
    %cst_294 = arith.constant 0.000000e+00 : f32
    %617 = vector.broadcast %cst_294 : f32 to vector<8x16xf32>
    %618 = arith.subf %617, %616 : vector<8x16xf32>
    %619 = math.exp %618 : vector<8x16xf32>
    %cst_295 = arith.constant 1.000000e+00 : f32
    %620 = vector.broadcast %cst_295 : f32 to vector<8x16xf32>
    %621 = arith.addf %620, %619 : vector<8x16xf32>
    %622 = math.log %621 : vector<8x16xf32>
    %623 = arith.addf %615, %622 : vector<8x16xf32>
    %c0_296 = arith.constant 0 : index
    %c2_297 = arith.constant 2 : index
    %c0_298 = arith.constant 0 : index
    %c0_299 = arith.constant 0 : index
    %624 = vector.load %arg8[%c0_296, %c2_297, %c0_298, %c0_299] : memref<2x8x8x16xf32, #tpu.memory_space<vmem>>, vector<1x1x8x16xf32>
    %625 = vector.shape_cast %624 : vector<1x1x8x16xf32> to vector<8x16xf32>
    %626 = vector.shape_cast %623 : vector<8x16xf32> to vector<1x1x8x16xf32>
    tpu.vector_store %arg8[%c0_296, %c2_297, %c0_298, %c0_299], %626 {strides = array<i32>} : memref<2x8x8x16xf32, #tpu.memory_space<vmem>>, vector<1x1x8x16xf32>,
    %cst_300 = arith.constant 0.000000e+00 : f32
    %627 = vector.broadcast %cst_300 : f32 to vector<8x16xf32>
    %628 = arith.maximumf %607, %627 : vector<8x16xf32>
    %629 = math.absf %607 : vector<8x16xf32>
    %cst_301 = arith.constant 0.000000e+00 : f32
    %630 = vector.broadcast %cst_301 : f32 to vector<8x16xf32>
    %631 = arith.subf %630, %629 : vector<8x16xf32>
    %632 = math.exp %631 : vector<8x16xf32>
    %cst_302 = arith.constant 1.000000e+00 : f32
    %633 = vector.broadcast %cst_302 : f32 to vector<8x16xf32>
    %634 = arith.addf %633, %632 : vector<8x16xf32>
    %635 = math.log %634 : vector<8x16xf32>
    %636 = arith.addf %628, %635 : vector<8x16xf32>
    %c1_303 = arith.constant 1 : index
    %c5_304 = arith.constant 5 : index
    %c0_305 = arith.constant 0 : index
    %c0_306 = arith.constant 0 : index
    %637 = vector.load %arg8[%c1_303, %c5_304, %c0_305, %c0_306] : memref<2x8x8x16xf32, #tpu.memory_space<vmem>>, vector<1x1x8x16xf32>
    %638 = vector.shape_cast %637 : vector<1x1x8x16xf32> to vector<8x16xf32>
    %639 = vector.shape_cast %636 : vector<8x16xf32> to vector<1x1x8x16xf32>
    tpu.vector_store %arg8[%c1_303, %c5_304, %c0_305, %c0_306], %639 {strides = array<i32>} : memref<2x8x8x16xf32, #tpu.memory_space<vmem>>, vector<1x1x8x16xf32>,
    %640 = tpu.concatenate %517, %547, %577, %607 in 0 : vector<8x16xf32>, vector<8x16xf32>, vector<8x16xf32>, vector<8x16xf32> -> vector<32x16xf32>
    %cst_307 = arith.constant dense<0.000000e+00> : vector<96x16xf32>
    %641 = tpu.matmul %2, %640, %cst_307 {dimension_numbers = #tpu.dot_dimension_numbers<[1], [0], [0], [1], [0, 0, 1, 1], [], []>} : vector<96x32xf32>, vector<32x16xf32>, vector<96x16xf32> -> vector<96x16xf32>
    %642 = vector.broadcast %3 : vector<96x1xf32> to vector<96x16xf32>
    %643 = arith.addf %641, %642 : vector<96x16xf32>
    %c0_308 = arith.constant 0 : index
    %c3_309 = arith.constant 3 : index
    %c0_310 = arith.constant 0 : index
    %c0_311 = arith.constant 0 : index
    %644 = vector.load %arg9[%c0_308, %c3_309, %c0_310, %c0_311] : memref<4x8x24x16xf32, #tpu.memory_space<vmem>>, vector<1x1x24x16xf32>
    %645 = vector.shape_cast %644 : vector<1x1x24x16xf32> to vector<24x16xf32>
    %646 = vector.extract_strided_slice %643 {offsets = [0, 0], sizes = [24, 16], strides = [1, 1]} : vector<96x16xf32> to vector<24x16xf32>
    %647 = vector.extract_strided_slice %640 {offsets = [0, 0], sizes = [8, 16], strides = [1, 1]} : vector<32x16xf32> to vector<8x16xf32>
    %648 = vector.extract_strided_slice %645 {offsets = [0, 0], sizes = [8, 16], strides = [1, 1]} : vector<24x16xf32> to vector<8x16xf32>
    %649 = vector.extract_strided_slice %646 {offsets = [0, 0], sizes = [8, 16], strides = [1, 1]} : vector<24x16xf32> to vector<8x16xf32>
    %650 = arith.addf %648, %649 : vector<8x16xf32>
    %651 = arith.negf %650 : vector<8x16xf32>
    %652 = math.exp %651 : vector<8x16xf32>
    %cst_312 = arith.constant 1.000000e+00 : f32
    %653 = vector.broadcast %cst_312 : f32 to vector<8x16xf32>
    %654 = arith.addf %653, %652 : vector<8x16xf32>
    %655 = arith.divf %653, %654 : vector<8x16xf32>
    %656 = vector.extract_strided_slice %645 {offsets = [8, 0], sizes = [8, 16], strides = [1, 1]} : vector<24x16xf32> to vector<8x16xf32>
    %657 = vector.extract_strided_slice %646 {offsets = [8, 0], sizes = [8, 16], strides = [1, 1]} : vector<24x16xf32> to vector<8x16xf32>
    %658 = arith.addf %656, %657 : vector<8x16xf32>
    %659 = arith.negf %658 : vector<8x16xf32>
    %660 = math.exp %659 : vector<8x16xf32>
    %cst_313 = arith.constant 1.000000e+00 : f32
    %661 = vector.broadcast %cst_313 : f32 to vector<8x16xf32>
    %662 = arith.addf %661, %660 : vector<8x16xf32>
    %663 = arith.divf %661, %662 : vector<8x16xf32>
    %664 = vector.extract_strided_slice %645 {offsets = [16, 0], sizes = [8, 16], strides = [1, 1]} : vector<24x16xf32> to vector<8x16xf32>
    %665 = vector.extract_strided_slice %646 {offsets = [16, 0], sizes = [8, 16], strides = [1, 1]} : vector<24x16xf32> to vector<8x16xf32>
    %666 = arith.mulf %655, %665 : vector<8x16xf32>
    %667 = arith.addf %664, %666 : vector<8x16xf32>
    %668 = math.tanh %667 : vector<8x16xf32>
    %cst_314 = arith.constant 1.000000e+00 : f32
    %669 = vector.broadcast %cst_314 : f32 to vector<8x16xf32>
    %670 = arith.subf %669, %663 : vector<8x16xf32>
    %671 = arith.mulf %670, %668 : vector<8x16xf32>
    %672 = arith.mulf %663, %647 : vector<8x16xf32>
    %673 = arith.addf %671, %672 : vector<8x16xf32>
    %c1_315 = arith.constant 1 : index
    %c4_316 = arith.constant 4 : index
    %c0_317 = arith.constant 0 : index
    %c0_318 = arith.constant 0 : index
    %674 = vector.load %arg9[%c1_315, %c4_316, %c0_317, %c0_318] : memref<4x8x24x16xf32, #tpu.memory_space<vmem>>, vector<1x1x24x16xf32>
    %675 = vector.shape_cast %674 : vector<1x1x24x16xf32> to vector<24x16xf32>
    %676 = vector.extract_strided_slice %643 {offsets = [24, 0], sizes = [24, 16], strides = [1, 1]} : vector<96x16xf32> to vector<24x16xf32>
    %677 = vector.extract_strided_slice %640 {offsets = [8, 0], sizes = [8, 16], strides = [1, 1]} : vector<32x16xf32> to vector<8x16xf32>
    %678 = vector.extract_strided_slice %675 {offsets = [0, 0], sizes = [8, 16], strides = [1, 1]} : vector<24x16xf32> to vector<8x16xf32>
    %679 = vector.extract_strided_slice %676 {offsets = [0, 0], sizes = [8, 16], strides = [1, 1]} : vector<24x16xf32> to vector<8x16xf32>
    %680 = arith.addf %678, %679 : vector<8x16xf32>
    %681 = arith.negf %680 : vector<8x16xf32>
    %682 = math.exp %681 : vector<8x16xf32>
    %cst_319 = arith.constant 1.000000e+00 : f32
    %683 = vector.broadcast %cst_319 : f32 to vector<8x16xf32>
    %684 = arith.addf %683, %682 : vector<8x16xf32>
    %685 = arith.divf %683, %684 : vector<8x16xf32>
    %686 = vector.extract_strided_slice %675 {offsets = [8, 0], sizes = [8, 16], strides = [1, 1]} : vector<24x16xf32> to vector<8x16xf32>
    %687 = vector.extract_strided_slice %676 {offsets = [8, 0], sizes = [8, 16], strides = [1, 1]} : vector<24x16xf32> to vector<8x16xf32>
    %688 = arith.addf %686, %687 : vector<8x16xf32>
    %689 = arith.negf %688 : vector<8x16xf32>
    %690 = math.exp %689 : vector<8x16xf32>
    %cst_320 = arith.constant 1.000000e+00 : f32
    %691 = vector.broadcast %cst_320 : f32 to vector<8x16xf32>
    %692 = arith.addf %691, %690 : vector<8x16xf32>
    %693 = arith.divf %691, %692 : vector<8x16xf32>
    %694 = vector.extract_strided_slice %675 {offsets = [16, 0], sizes = [8, 16], strides = [1, 1]} : vector<24x16xf32> to vector<8x16xf32>
    %695 = vector.extract_strided_slice %676 {offsets = [16, 0], sizes = [8, 16], strides = [1, 1]} : vector<24x16xf32> to vector<8x16xf32>
    %696 = arith.mulf %685, %695 : vector<8x16xf32>
    %697 = arith.addf %694, %696 : vector<8x16xf32>
    %698 = math.tanh %697 : vector<8x16xf32>
    %cst_321 = arith.constant 1.000000e+00 : f32
    %699 = vector.broadcast %cst_321 : f32 to vector<8x16xf32>
    %700 = arith.subf %699, %693 : vector<8x16xf32>
    %701 = arith.mulf %700, %698 : vector<8x16xf32>
    %702 = arith.mulf %693, %677 : vector<8x16xf32>
    %703 = arith.addf %701, %702 : vector<8x16xf32>
    %c2_322 = arith.constant 2 : index
    %c3_323 = arith.constant 3 : index
    %c0_324 = arith.constant 0 : index
    %c0_325 = arith.constant 0 : index
    %704 = vector.load %arg9[%c2_322, %c3_323, %c0_324, %c0_325] : memref<4x8x24x16xf32, #tpu.memory_space<vmem>>, vector<1x1x24x16xf32>
    %705 = vector.shape_cast %704 : vector<1x1x24x16xf32> to vector<24x16xf32>
    %706 = vector.extract_strided_slice %643 {offsets = [48, 0], sizes = [24, 16], strides = [1, 1]} : vector<96x16xf32> to vector<24x16xf32>
    %707 = vector.extract_strided_slice %640 {offsets = [16, 0], sizes = [8, 16], strides = [1, 1]} : vector<32x16xf32> to vector<8x16xf32>
    %708 = vector.extract_strided_slice %705 {offsets = [0, 0], sizes = [8, 16], strides = [1, 1]} : vector<24x16xf32> to vector<8x16xf32>
    %709 = vector.extract_strided_slice %706 {offsets = [0, 0], sizes = [8, 16], strides = [1, 1]} : vector<24x16xf32> to vector<8x16xf32>
    %710 = arith.addf %708, %709 : vector<8x16xf32>
    %711 = arith.negf %710 : vector<8x16xf32>
    %712 = math.exp %711 : vector<8x16xf32>
    %cst_326 = arith.constant 1.000000e+00 : f32
    %713 = vector.broadcast %cst_326 : f32 to vector<8x16xf32>
    %714 = arith.addf %713, %712 : vector<8x16xf32>
    %715 = arith.divf %713, %714 : vector<8x16xf32>
    %716 = vector.extract_strided_slice %705 {offsets = [8, 0], sizes = [8, 16], strides = [1, 1]} : vector<24x16xf32> to vector<8x16xf32>
    %717 = vector.extract_strided_slice %706 {offsets = [8, 0], sizes = [8, 16], strides = [1, 1]} : vector<24x16xf32> to vector<8x16xf32>
    %718 = arith.addf %716, %717 : vector<8x16xf32>
    %719 = arith.negf %718 : vector<8x16xf32>
    %720 = math.exp %719 : vector<8x16xf32>
    %cst_327 = arith.constant 1.000000e+00 : f32
    %721 = vector.broadcast %cst_327 : f32 to vector<8x16xf32>
    %722 = arith.addf %721, %720 : vector<8x16xf32>
    %723 = arith.divf %721, %722 : vector<8x16xf32>
    %724 = vector.extract_strided_slice %705 {offsets = [16, 0], sizes = [8, 16], strides = [1, 1]} : vector<24x16xf32> to vector<8x16xf32>
    %725 = vector.extract_strided_slice %706 {offsets = [16, 0], sizes = [8, 16], strides = [1, 1]} : vector<24x16xf32> to vector<8x16xf32>
    %726 = arith.mulf %715, %725 : vector<8x16xf32>
    %727 = arith.addf %724, %726 : vector<8x16xf32>
    %728 = math.tanh %727 : vector<8x16xf32>
    %cst_328 = arith.constant 1.000000e+00 : f32
    %729 = vector.broadcast %cst_328 : f32 to vector<8x16xf32>
    %730 = arith.subf %729, %723 : vector<8x16xf32>
    %731 = arith.mulf %730, %728 : vector<8x16xf32>
    %732 = arith.mulf %723, %707 : vector<8x16xf32>
    %733 = arith.addf %731, %732 : vector<8x16xf32>
    %c3_329 = arith.constant 3 : index
    %c4_330 = arith.constant 4 : index
    %c0_331 = arith.constant 0 : index
    %c0_332 = arith.constant 0 : index
    %734 = vector.load %arg9[%c3_329, %c4_330, %c0_331, %c0_332] : memref<4x8x24x16xf32, #tpu.memory_space<vmem>>, vector<1x1x24x16xf32>
    %735 = vector.shape_cast %734 : vector<1x1x24x16xf32> to vector<24x16xf32>
    %736 = vector.extract_strided_slice %643 {offsets = [72, 0], sizes = [24, 16], strides = [1, 1]} : vector<96x16xf32> to vector<24x16xf32>
    %737 = vector.extract_strided_slice %640 {offsets = [24, 0], sizes = [8, 16], strides = [1, 1]} : vector<32x16xf32> to vector<8x16xf32>
    %738 = vector.extract_strided_slice %735 {offsets = [0, 0], sizes = [8, 16], strides = [1, 1]} : vector<24x16xf32> to vector<8x16xf32>
    %739 = vector.extract_strided_slice %736 {offsets = [0, 0], sizes = [8, 16], strides = [1, 1]} : vector<24x16xf32> to vector<8x16xf32>
    %740 = arith.addf %738, %739 : vector<8x16xf32>
    %741 = arith.negf %740 : vector<8x16xf32>
    %742 = math.exp %741 : vector<8x16xf32>
    %cst_333 = arith.constant 1.000000e+00 : f32
    %743 = vector.broadcast %cst_333 : f32 to vector<8x16xf32>
    %744 = arith.addf %743, %742 : vector<8x16xf32>
    %745 = arith.divf %743, %744 : vector<8x16xf32>
    %746 = vector.extract_strided_slice %735 {offsets = [8, 0], sizes = [8, 16], strides = [1, 1]} : vector<24x16xf32> to vector<8x16xf32>
    %747 = vector.extract_strided_slice %736 {offsets = [8, 0], sizes = [8, 16], strides = [1, 1]} : vector<24x16xf32> to vector<8x16xf32>
    %748 = arith.addf %746, %747 : vector<8x16xf32>
    %749 = arith.negf %748 : vector<8x16xf32>
    %750 = math.exp %749 : vector<8x16xf32>
    %cst_334 = arith.constant 1.000000e+00 : f32
    %751 = vector.broadcast %cst_334 : f32 to vector<8x16xf32>
    %752 = arith.addf %751, %750 : vector<8x16xf32>
    %753 = arith.divf %751, %752 : vector<8x16xf32>
    %754 = vector.extract_strided_slice %735 {offsets = [16, 0], sizes = [8, 16], strides = [1, 1]} : vector<24x16xf32> to vector<8x16xf32>
    %755 = vector.extract_strided_slice %736 {offsets = [16, 0], sizes = [8, 16], strides = [1, 1]} : vector<24x16xf32> to vector<8x16xf32>
    %756 = arith.mulf %745, %755 : vector<8x16xf32>
    %757 = arith.addf %754, %756 : vector<8x16xf32>
    %758 = math.tanh %757 : vector<8x16xf32>
    %cst_335 = arith.constant 1.000000e+00 : f32
    %759 = vector.broadcast %cst_335 : f32 to vector<8x16xf32>
    %760 = arith.subf %759, %753 : vector<8x16xf32>
    %761 = arith.mulf %760, %758 : vector<8x16xf32>
    %762 = arith.mulf %753, %737 : vector<8x16xf32>
    %763 = arith.addf %761, %762 : vector<8x16xf32>
    %c3_336 = arith.constant 3 : index
    %c0_337 = arith.constant 0 : index
    %c0_338 = arith.constant 0 : index
    %764 = vector.load %arg10[%c3_336, %c0_337, %c0_338] : memref<8x8x16xf32, #tpu.memory_space<vmem>>, vector<1x8x16xf32>
    %765 = vector.shape_cast %764 : vector<1x8x16xf32> to vector<8x16xf32>
    %766 = vector.shape_cast %673 : vector<8x16xf32> to vector<1x8x16xf32>
    tpu.vector_store %arg10[%c3_336, %c0_337, %c0_338], %766 {strides = array<i32>} : memref<8x8x16xf32, #tpu.memory_space<vmem>>, vector<1x8x16xf32>,
    %c4_339 = arith.constant 4 : index
    %c0_340 = arith.constant 0 : index
    %c0_341 = arith.constant 0 : index
    %767 = vector.load %arg11[%c4_339, %c0_340, %c0_341] : memref<8x8x16xf32, #tpu.memory_space<vmem>>, vector<1x8x16xf32>
    %768 = vector.shape_cast %767 : vector<1x8x16xf32> to vector<8x16xf32>
    %769 = vector.shape_cast %703 : vector<8x16xf32> to vector<1x8x16xf32>
    tpu.vector_store %arg11[%c4_339, %c0_340, %c0_341], %769 {strides = array<i32>} : memref<8x8x16xf32, #tpu.memory_space<vmem>>, vector<1x8x16xf32>,
    %cst_342 = arith.constant 0.000000e+00 : f32
    %770 = vector.broadcast %cst_342 : f32 to vector<8x16xf32>
    %771 = arith.maximumf %733, %770 : vector<8x16xf32>
    %772 = math.absf %733 : vector<8x16xf32>
    %cst_343 = arith.constant 0.000000e+00 : f32
    %773 = vector.broadcast %cst_343 : f32 to vector<8x16xf32>
    %774 = arith.subf %773, %772 : vector<8x16xf32>
    %775 = math.exp %774 : vector<8x16xf32>
    %cst_344 = arith.constant 1.000000e+00 : f32
    %776 = vector.broadcast %cst_344 : f32 to vector<8x16xf32>
    %777 = arith.addf %776, %775 : vector<8x16xf32>
    %778 = math.log %777 : vector<8x16xf32>
    %779 = arith.addf %771, %778 : vector<8x16xf32>
    %c0_345 = arith.constant 0 : index
    %c3_346 = arith.constant 3 : index
    %c0_347 = arith.constant 0 : index
    %c0_348 = arith.constant 0 : index
    %780 = vector.load %arg8[%c0_345, %c3_346, %c0_347, %c0_348] : memref<2x8x8x16xf32, #tpu.memory_space<vmem>>, vector<1x1x8x16xf32>
    %781 = vector.shape_cast %780 : vector<1x1x8x16xf32> to vector<8x16xf32>
    %782 = vector.shape_cast %779 : vector<8x16xf32> to vector<1x1x8x16xf32>
    tpu.vector_store %arg8[%c0_345, %c3_346, %c0_347, %c0_348], %782 {strides = array<i32>} : memref<2x8x8x16xf32, #tpu.memory_space<vmem>>, vector<1x1x8x16xf32>,
    %cst_349 = arith.constant 0.000000e+00 : f32
    %783 = vector.broadcast %cst_349 : f32 to vector<8x16xf32>
    %784 = arith.maximumf %763, %783 : vector<8x16xf32>
    %785 = math.absf %763 : vector<8x16xf32>
    %cst_350 = arith.constant 0.000000e+00 : f32
    %786 = vector.broadcast %cst_350 : f32 to vector<8x16xf32>
    %787 = arith.subf %786, %785 : vector<8x16xf32>
    %788 = math.exp %787 : vector<8x16xf32>
    %cst_351 = arith.constant 1.000000e+00 : f32
    %789 = vector.broadcast %cst_351 : f32 to vector<8x16xf32>
    %790 = arith.addf %789, %788 : vector<8x16xf32>
    %791 = math.log %790 : vector<8x16xf32>
    %792 = arith.addf %784, %791 : vector<8x16xf32>
    %c1_352 = arith.constant 1 : index
    %c4_353 = arith.constant 4 : index
    %c0_354 = arith.constant 0 : index
    %c0_355 = arith.constant 0 : index
    %793 = vector.load %arg8[%c1_352, %c4_353, %c0_354, %c0_355] : memref<2x8x8x16xf32, #tpu.memory_space<vmem>>, vector<1x1x8x16xf32>
    %794 = vector.shape_cast %793 : vector<1x1x8x16xf32> to vector<8x16xf32>
    %795 = vector.shape_cast %792 : vector<8x16xf32> to vector<1x1x8x16xf32>
    tpu.vector_store %arg8[%c1_352, %c4_353, %c0_354, %c0_355], %795 {strides = array<i32>} : memref<2x8x8x16xf32, #tpu.memory_space<vmem>>, vector<1x1x8x16xf32>,
    %796 = tpu.concatenate %673, %703, %733, %763 in 0 : vector<8x16xf32>, vector<8x16xf32>, vector<8x16xf32>, vector<8x16xf32> -> vector<32x16xf32>
    %cst_356 = arith.constant dense<0.000000e+00> : vector<96x16xf32>
    %797 = tpu.matmul %2, %796, %cst_356 {dimension_numbers = #tpu.dot_dimension_numbers<[1], [0], [0], [1], [0, 0, 1, 1], [], []>} : vector<96x32xf32>, vector<32x16xf32>, vector<96x16xf32> -> vector<96x16xf32>
    %798 = vector.broadcast %3 : vector<96x1xf32> to vector<96x16xf32>
    %799 = arith.addf %797, %798 : vector<96x16xf32>
    %c0_357 = arith.constant 0 : index
    %c4_358 = arith.constant 4 : index
    %c0_359 = arith.constant 0 : index
    %c0_360 = arith.constant 0 : index
    %800 = vector.load %arg9[%c0_357, %c4_358, %c0_359, %c0_360] : memref<4x8x24x16xf32, #tpu.memory_space<vmem>>, vector<1x1x24x16xf32>
    %801 = vector.shape_cast %800 : vector<1x1x24x16xf32> to vector<24x16xf32>
    %802 = vector.extract_strided_slice %799 {offsets = [0, 0], sizes = [24, 16], strides = [1, 1]} : vector<96x16xf32> to vector<24x16xf32>
    %803 = vector.extract_strided_slice %796 {offsets = [0, 0], sizes = [8, 16], strides = [1, 1]} : vector<32x16xf32> to vector<8x16xf32>
    %804 = vector.extract_strided_slice %801 {offsets = [0, 0], sizes = [8, 16], strides = [1, 1]} : vector<24x16xf32> to vector<8x16xf32>
    %805 = vector.extract_strided_slice %802 {offsets = [0, 0], sizes = [8, 16], strides = [1, 1]} : vector<24x16xf32> to vector<8x16xf32>
    %806 = arith.addf %804, %805 : vector<8x16xf32>
    %807 = arith.negf %806 : vector<8x16xf32>
    %808 = math.exp %807 : vector<8x16xf32>
    %cst_361 = arith.constant 1.000000e+00 : f32
    %809 = vector.broadcast %cst_361 : f32 to vector<8x16xf32>
    %810 = arith.addf %809, %808 : vector<8x16xf32>
    %811 = arith.divf %809, %810 : vector<8x16xf32>
    %812 = vector.extract_strided_slice %801 {offsets = [8, 0], sizes = [8, 16], strides = [1, 1]} : vector<24x16xf32> to vector<8x16xf32>
    %813 = vector.extract_strided_slice %802 {offsets = [8, 0], sizes = [8, 16], strides = [1, 1]} : vector<24x16xf32> to vector<8x16xf32>
    %814 = arith.addf %812, %813 : vector<8x16xf32>
    %815 = arith.negf %814 : vector<8x16xf32>
    %816 = math.exp %815 : vector<8x16xf32>
    %cst_362 = arith.constant 1.000000e+00 : f32
    %817 = vector.broadcast %cst_362 : f32 to vector<8x16xf32>
    %818 = arith.addf %817, %816 : vector<8x16xf32>
    %819 = arith.divf %817, %818 : vector<8x16xf32>
    %820 = vector.extract_strided_slice %801 {offsets = [16, 0], sizes = [8, 16], strides = [1, 1]} : vector<24x16xf32> to vector<8x16xf32>
    %821 = vector.extract_strided_slice %802 {offsets = [16, 0], sizes = [8, 16], strides = [1, 1]} : vector<24x16xf32> to vector<8x16xf32>
    %822 = arith.mulf %811, %821 : vector<8x16xf32>
    %823 = arith.addf %820, %822 : vector<8x16xf32>
    %824 = math.tanh %823 : vector<8x16xf32>
    %cst_363 = arith.constant 1.000000e+00 : f32
    %825 = vector.broadcast %cst_363 : f32 to vector<8x16xf32>
    %826 = arith.subf %825, %819 : vector<8x16xf32>
    %827 = arith.mulf %826, %824 : vector<8x16xf32>
    %828 = arith.mulf %819, %803 : vector<8x16xf32>
    %829 = arith.addf %827, %828 : vector<8x16xf32>
    %c1_364 = arith.constant 1 : index
    %c3_365 = arith.constant 3 : index
    %c0_366 = arith.constant 0 : index
    %c0_367 = arith.constant 0 : index
    %830 = vector.load %arg9[%c1_364, %c3_365, %c0_366, %c0_367] : memref<4x8x24x16xf32, #tpu.memory_space<vmem>>, vector<1x1x24x16xf32>
    %831 = vector.shape_cast %830 : vector<1x1x24x16xf32> to vector<24x16xf32>
    %832 = vector.extract_strided_slice %799 {offsets = [24, 0], sizes = [24, 16], strides = [1, 1]} : vector<96x16xf32> to vector<24x16xf32>
    %833 = vector.extract_strided_slice %796 {offsets = [8, 0], sizes = [8, 16], strides = [1, 1]} : vector<32x16xf32> to vector<8x16xf32>
    %834 = vector.extract_strided_slice %831 {offsets = [0, 0], sizes = [8, 16], strides = [1, 1]} : vector<24x16xf32> to vector<8x16xf32>
    %835 = vector.extract_strided_slice %832 {offsets = [0, 0], sizes = [8, 16], strides = [1, 1]} : vector<24x16xf32> to vector<8x16xf32>
    %836 = arith.addf %834, %835 : vector<8x16xf32>
    %837 = arith.negf %836 : vector<8x16xf32>
    %838 = math.exp %837 : vector<8x16xf32>
    %cst_368 = arith.constant 1.000000e+00 : f32
    %839 = vector.broadcast %cst_368 : f32 to vector<8x16xf32>
    %840 = arith.addf %839, %838 : vector<8x16xf32>
    %841 = arith.divf %839, %840 : vector<8x16xf32>
    %842 = vector.extract_strided_slice %831 {offsets = [8, 0], sizes = [8, 16], strides = [1, 1]} : vector<24x16xf32> to vector<8x16xf32>
    %843 = vector.extract_strided_slice %832 {offsets = [8, 0], sizes = [8, 16], strides = [1, 1]} : vector<24x16xf32> to vector<8x16xf32>
    %844 = arith.addf %842, %843 : vector<8x16xf32>
    %845 = arith.negf %844 : vector<8x16xf32>
    %846 = math.exp %845 : vector<8x16xf32>
    %cst_369 = arith.constant 1.000000e+00 : f32
    %847 = vector.broadcast %cst_369 : f32 to vector<8x16xf32>
    %848 = arith.addf %847, %846 : vector<8x16xf32>
    %849 = arith.divf %847, %848 : vector<8x16xf32>
    %850 = vector.extract_strided_slice %831 {offsets = [16, 0], sizes = [8, 16], strides = [1, 1]} : vector<24x16xf32> to vector<8x16xf32>
    %851 = vector.extract_strided_slice %832 {offsets = [16, 0], sizes = [8, 16], strides = [1, 1]} : vector<24x16xf32> to vector<8x16xf32>
    %852 = arith.mulf %841, %851 : vector<8x16xf32>
    %853 = arith.addf %850, %852 : vector<8x16xf32>
    %854 = math.tanh %853 : vector<8x16xf32>
    %cst_370 = arith.constant 1.000000e+00 : f32
    %855 = vector.broadcast %cst_370 : f32 to vector<8x16xf32>
    %856 = arith.subf %855, %849 : vector<8x16xf32>
    %857 = arith.mulf %856, %854 : vector<8x16xf32>
    %858 = arith.mulf %849, %833 : vector<8x16xf32>
    %859 = arith.addf %857, %858 : vector<8x16xf32>
    %c2_371 = arith.constant 2 : index
    %c4_372 = arith.constant 4 : index
    %c0_373 = arith.constant 0 : index
    %c0_374 = arith.constant 0 : index
    %860 = vector.load %arg9[%c2_371, %c4_372, %c0_373, %c0_374] : memref<4x8x24x16xf32, #tpu.memory_space<vmem>>, vector<1x1x24x16xf32>
    %861 = vector.shape_cast %860 : vector<1x1x24x16xf32> to vector<24x16xf32>
    %862 = vector.extract_strided_slice %799 {offsets = [48, 0], sizes = [24, 16], strides = [1, 1]} : vector<96x16xf32> to vector<24x16xf32>
    %863 = vector.extract_strided_slice %796 {offsets = [16, 0], sizes = [8, 16], strides = [1, 1]} : vector<32x16xf32> to vector<8x16xf32>
    %864 = vector.extract_strided_slice %861 {offsets = [0, 0], sizes = [8, 16], strides = [1, 1]} : vector<24x16xf32> to vector<8x16xf32>
    %865 = vector.extract_strided_slice %862 {offsets = [0, 0], sizes = [8, 16], strides = [1, 1]} : vector<24x16xf32> to vector<8x16xf32>
    %866 = arith.addf %864, %865 : vector<8x16xf32>
    %867 = arith.negf %866 : vector<8x16xf32>
    %868 = math.exp %867 : vector<8x16xf32>
    %cst_375 = arith.constant 1.000000e+00 : f32
    %869 = vector.broadcast %cst_375 : f32 to vector<8x16xf32>
    %870 = arith.addf %869, %868 : vector<8x16xf32>
    %871 = arith.divf %869, %870 : vector<8x16xf32>
    %872 = vector.extract_strided_slice %861 {offsets = [8, 0], sizes = [8, 16], strides = [1, 1]} : vector<24x16xf32> to vector<8x16xf32>
    %873 = vector.extract_strided_slice %862 {offsets = [8, 0], sizes = [8, 16], strides = [1, 1]} : vector<24x16xf32> to vector<8x16xf32>
    %874 = arith.addf %872, %873 : vector<8x16xf32>
    %875 = arith.negf %874 : vector<8x16xf32>
    %876 = math.exp %875 : vector<8x16xf32>
    %cst_376 = arith.constant 1.000000e+00 : f32
    %877 = vector.broadcast %cst_376 : f32 to vector<8x16xf32>
    %878 = arith.addf %877, %876 : vector<8x16xf32>
    %879 = arith.divf %877, %878 : vector<8x16xf32>
    %880 = vector.extract_strided_slice %861 {offsets = [16, 0], sizes = [8, 16], strides = [1, 1]} : vector<24x16xf32> to vector<8x16xf32>
    %881 = vector.extract_strided_slice %862 {offsets = [16, 0], sizes = [8, 16], strides = [1, 1]} : vector<24x16xf32> to vector<8x16xf32>
    %882 = arith.mulf %871, %881 : vector<8x16xf32>
    %883 = arith.addf %880, %882 : vector<8x16xf32>
    %884 = math.tanh %883 : vector<8x16xf32>
    %cst_377 = arith.constant 1.000000e+00 : f32
    %885 = vector.broadcast %cst_377 : f32 to vector<8x16xf32>
    %886 = arith.subf %885, %879 : vector<8x16xf32>
    %887 = arith.mulf %886, %884 : vector<8x16xf32>
    %888 = arith.mulf %879, %863 : vector<8x16xf32>
    %889 = arith.addf %887, %888 : vector<8x16xf32>
    %c3_378 = arith.constant 3 : index
    %c3_379 = arith.constant 3 : index
    %c0_380 = arith.constant 0 : index
    %c0_381 = arith.constant 0 : index
    %890 = vector.load %arg9[%c3_378, %c3_379, %c0_380, %c0_381] : memref<4x8x24x16xf32, #tpu.memory_space<vmem>>, vector<1x1x24x16xf32>
    %891 = vector.shape_cast %890 : vector<1x1x24x16xf32> to vector<24x16xf32>
    %892 = vector.extract_strided_slice %799 {offsets = [72, 0], sizes = [24, 16], strides = [1, 1]} : vector<96x16xf32> to vector<24x16xf32>
    %893 = vector.extract_strided_slice %796 {offsets = [24, 0], sizes = [8, 16], strides = [1, 1]} : vector<32x16xf32> to vector<8x16xf32>
    %894 = vector.extract_strided_slice %891 {offsets = [0, 0], sizes = [8, 16], strides = [1, 1]} : vector<24x16xf32> to vector<8x16xf32>
    %895 = vector.extract_strided_slice %892 {offsets = [0, 0], sizes = [8, 16], strides = [1, 1]} : vector<24x16xf32> to vector<8x16xf32>
    %896 = arith.addf %894, %895 : vector<8x16xf32>
    %897 = arith.negf %896 : vector<8x16xf32>
    %898 = math.exp %897 : vector<8x16xf32>
    %cst_382 = arith.constant 1.000000e+00 : f32
    %899 = vector.broadcast %cst_382 : f32 to vector<8x16xf32>
    %900 = arith.addf %899, %898 : vector<8x16xf32>
    %901 = arith.divf %899, %900 : vector<8x16xf32>
    %902 = vector.extract_strided_slice %891 {offsets = [8, 0], sizes = [8, 16], strides = [1, 1]} : vector<24x16xf32> to vector<8x16xf32>
    %903 = vector.extract_strided_slice %892 {offsets = [8, 0], sizes = [8, 16], strides = [1, 1]} : vector<24x16xf32> to vector<8x16xf32>
    %904 = arith.addf %902, %903 : vector<8x16xf32>
    %905 = arith.negf %904 : vector<8x16xf32>
    %906 = math.exp %905 : vector<8x16xf32>
    %cst_383 = arith.constant 1.000000e+00 : f32
    %907 = vector.broadcast %cst_383 : f32 to vector<8x16xf32>
    %908 = arith.addf %907, %906 : vector<8x16xf32>
    %909 = arith.divf %907, %908 : vector<8x16xf32>
    %910 = vector.extract_strided_slice %891 {offsets = [16, 0], sizes = [8, 16], strides = [1, 1]} : vector<24x16xf32> to vector<8x16xf32>
    %911 = vector.extract_strided_slice %892 {offsets = [16, 0], sizes = [8, 16], strides = [1, 1]} : vector<24x16xf32> to vector<8x16xf32>
    %912 = arith.mulf %901, %911 : vector<8x16xf32>
    %913 = arith.addf %910, %912 : vector<8x16xf32>
    %914 = math.tanh %913 : vector<8x16xf32>
    %cst_384 = arith.constant 1.000000e+00 : f32
    %915 = vector.broadcast %cst_384 : f32 to vector<8x16xf32>
    %916 = arith.subf %915, %909 : vector<8x16xf32>
    %917 = arith.mulf %916, %914 : vector<8x16xf32>
    %918 = arith.mulf %909, %893 : vector<8x16xf32>
    %919 = arith.addf %917, %918 : vector<8x16xf32>
    %c4_385 = arith.constant 4 : index
    %c0_386 = arith.constant 0 : index
    %c0_387 = arith.constant 0 : index
    %920 = vector.load %arg10[%c4_385, %c0_386, %c0_387] : memref<8x8x16xf32, #tpu.memory_space<vmem>>, vector<1x8x16xf32>
    %921 = vector.shape_cast %920 : vector<1x8x16xf32> to vector<8x16xf32>
    %922 = vector.shape_cast %829 : vector<8x16xf32> to vector<1x8x16xf32>
    tpu.vector_store %arg10[%c4_385, %c0_386, %c0_387], %922 {strides = array<i32>} : memref<8x8x16xf32, #tpu.memory_space<vmem>>, vector<1x8x16xf32>,
    %c3_388 = arith.constant 3 : index
    %c0_389 = arith.constant 0 : index
    %c0_390 = arith.constant 0 : index
    %923 = vector.load %arg11[%c3_388, %c0_389, %c0_390] : memref<8x8x16xf32, #tpu.memory_space<vmem>>, vector<1x8x16xf32>
    %924 = vector.shape_cast %923 : vector<1x8x16xf32> to vector<8x16xf32>
    %925 = vector.shape_cast %859 : vector<8x16xf32> to vector<1x8x16xf32>
    tpu.vector_store %arg11[%c3_388, %c0_389, %c0_390], %925 {strides = array<i32>} : memref<8x8x16xf32, #tpu.memory_space<vmem>>, vector<1x8x16xf32>,
    %cst_391 = arith.constant 0.000000e+00 : f32
    %926 = vector.broadcast %cst_391 : f32 to vector<8x16xf32>
    %927 = arith.maximumf %889, %926 : vector<8x16xf32>
    %928 = math.absf %889 : vector<8x16xf32>
    %cst_392 = arith.constant 0.000000e+00 : f32
    %929 = vector.broadcast %cst_392 : f32 to vector<8x16xf32>
    %930 = arith.subf %929, %928 : vector<8x16xf32>
    %931 = math.exp %930 : vector<8x16xf32>
    %cst_393 = arith.constant 1.000000e+00 : f32
    %932 = vector.broadcast %cst_393 : f32 to vector<8x16xf32>
    %933 = arith.addf %932, %931 : vector<8x16xf32>
    %934 = math.log %933 : vector<8x16xf32>
    %935 = arith.addf %927, %934 : vector<8x16xf32>
    %c0_394 = arith.constant 0 : index
    %c4_395 = arith.constant 4 : index
    %c0_396 = arith.constant 0 : index
    %c0_397 = arith.constant 0 : index
    %936 = vector.load %arg8[%c0_394, %c4_395, %c0_396, %c0_397] : memref<2x8x8x16xf32, #tpu.memory_space<vmem>>, vector<1x1x8x16xf32>
    %937 = vector.shape_cast %936 : vector<1x1x8x16xf32> to vector<8x16xf32>
    %938 = vector.shape_cast %935 : vector<8x16xf32> to vector<1x1x8x16xf32>
    tpu.vector_store %arg8[%c0_394, %c4_395, %c0_396, %c0_397], %938 {strides = array<i32>} : memref<2x8x8x16xf32, #tpu.memory_space<vmem>>, vector<1x1x8x16xf32>,
    %cst_398 = arith.constant 0.000000e+00 : f32
    %939 = vector.broadcast %cst_398 : f32 to vector<8x16xf32>
    %940 = arith.maximumf %919, %939 : vector<8x16xf32>
    %941 = math.absf %919 : vector<8x16xf32>
    %cst_399 = arith.constant 0.000000e+00 : f32
    %942 = vector.broadcast %cst_399 : f32 to vector<8x16xf32>
    %943 = arith.subf %942, %941 : vector<8x16xf32>
    %944 = math.exp %943 : vector<8x16xf32>
    %cst_400 = arith.constant 1.000000e+00 : f32
    %945 = vector.broadcast %cst_400 : f32 to vector<8x16xf32>
    %946 = arith.addf %945, %944 : vector<8x16xf32>
    %947 = math.log %946 : vector<8x16xf32>
    %948 = arith.addf %940, %947 : vector<8x16xf32>
    %c1_401 = arith.constant 1 : index
    %c3_402 = arith.constant 3 : index
    %c0_403 = arith.constant 0 : index
    %c0_404 = arith.constant 0 : index
    %949 = vector.load %arg8[%c1_401, %c3_402, %c0_403, %c0_404] : memref<2x8x8x16xf32, #tpu.memory_space<vmem>>, vector<1x1x8x16xf32>
    %950 = vector.shape_cast %949 : vector<1x1x8x16xf32> to vector<8x16xf32>
    %951 = vector.shape_cast %948 : vector<8x16xf32> to vector<1x1x8x16xf32>
    tpu.vector_store %arg8[%c1_401, %c3_402, %c0_403, %c0_404], %951 {strides = array<i32>} : memref<2x8x8x16xf32, #tpu.memory_space<vmem>>, vector<1x1x8x16xf32>,
    %952 = tpu.concatenate %829, %859, %889, %919 in 0 : vector<8x16xf32>, vector<8x16xf32>, vector<8x16xf32>, vector<8x16xf32> -> vector<32x16xf32>
    %cst_405 = arith.constant dense<0.000000e+00> : vector<96x16xf32>
    %953 = tpu.matmul %2, %952, %cst_405 {dimension_numbers = #tpu.dot_dimension_numbers<[1], [0], [0], [1], [0, 0, 1, 1], [], []>} : vector<96x32xf32>, vector<32x16xf32>, vector<96x16xf32> -> vector<96x16xf32>
    %954 = vector.broadcast %3 : vector<96x1xf32> to vector<96x16xf32>
    %955 = arith.addf %953, %954 : vector<96x16xf32>
    %c0_406 = arith.constant 0 : index
    %c5_407 = arith.constant 5 : index
    %c0_408 = arith.constant 0 : index
    %c0_409 = arith.constant 0 : index
    %956 = vector.load %arg9[%c0_406, %c5_407, %c0_408, %c0_409] : memref<4x8x24x16xf32, #tpu.memory_space<vmem>>, vector<1x1x24x16xf32>
    %957 = vector.shape_cast %956 : vector<1x1x24x16xf32> to vector<24x16xf32>
    %958 = vector.extract_strided_slice %955 {offsets = [0, 0], sizes = [24, 16], strides = [1, 1]} : vector<96x16xf32> to vector<24x16xf32>
    %959 = vector.extract_strided_slice %952 {offsets = [0, 0], sizes = [8, 16], strides = [1, 1]} : vector<32x16xf32> to vector<8x16xf32>
    %960 = vector.extract_strided_slice %957 {offsets = [0, 0], sizes = [8, 16], strides = [1, 1]} : vector<24x16xf32> to vector<8x16xf32>
    %961 = vector.extract_strided_slice %958 {offsets = [0, 0], sizes = [8, 16], strides = [1, 1]} : vector<24x16xf32> to vector<8x16xf32>
    %962 = arith.addf %960, %961 : vector<8x16xf32>
    %963 = arith.negf %962 : vector<8x16xf32>
    %964 = math.exp %963 : vector<8x16xf32>
    %cst_410 = arith.constant 1.000000e+00 : f32
    %965 = vector.broadcast %cst_410 : f32 to vector<8x16xf32>
    %966 = arith.addf %965, %964 : vector<8x16xf32>
    %967 = arith.divf %965, %966 : vector<8x16xf32>
    %968 = vector.extract_strided_slice %957 {offsets = [8, 0], sizes = [8, 16], strides = [1, 1]} : vector<24x16xf32> to vector<8x16xf32>
    %969 = vector.extract_strided_slice %958 {offsets = [8, 0], sizes = [8, 16], strides = [1, 1]} : vector<24x16xf32> to vector<8x16xf32>
    %970 = arith.addf %968, %969 : vector<8x16xf32>
    %971 = arith.negf %970 : vector<8x16xf32>
    %972 = math.exp %971 : vector<8x16xf32>
    %cst_411 = arith.constant 1.000000e+00 : f32
    %973 = vector.broadcast %cst_411 : f32 to vector<8x16xf32>
    %974 = arith.addf %973, %972 : vector<8x16xf32>
    %975 = arith.divf %973, %974 : vector<8x16xf32>
    %976 = vector.extract_strided_slice %957 {offsets = [16, 0], sizes = [8, 16], strides = [1, 1]} : vector<24x16xf32> to vector<8x16xf32>
    %977 = vector.extract_strided_slice %958 {offsets = [16, 0], sizes = [8, 16], strides = [1, 1]} : vector<24x16xf32> to vector<8x16xf32>
    %978 = arith.mulf %967, %977 : vector<8x16xf32>
    %979 = arith.addf %976, %978 : vector<8x16xf32>
    %980 = math.tanh %979 : vector<8x16xf32>
    %cst_412 = arith.constant 1.000000e+00 : f32
    %981 = vector.broadcast %cst_412 : f32 to vector<8x16xf32>
    %982 = arith.subf %981, %975 : vector<8x16xf32>
    %983 = arith.mulf %982, %980 : vector<8x16xf32>
    %984 = arith.mulf %975, %959 : vector<8x16xf32>
    %985 = arith.addf %983, %984 : vector<8x16xf32>
    %c1_413 = arith.constant 1 : index
    %c2_414 = arith.constant 2 : index
    %c0_415 = arith.constant 0 : index
    %c0_416 = arith.constant 0 : index
    %986 = vector.load %arg9[%c1_413, %c2_414, %c0_415, %c0_416] : memref<4x8x24x16xf32, #tpu.memory_space<vmem>>, vector<1x1x24x16xf32>
    %987 = vector.shape_cast %986 : vector<1x1x24x16xf32> to vector<24x16xf32>
    %988 = vector.extract_strided_slice %955 {offsets = [24, 0], sizes = [24, 16], strides = [1, 1]} : vector<96x16xf32> to vector<24x16xf32>
    %989 = vector.extract_strided_slice %952 {offsets = [8, 0], sizes = [8, 16], strides = [1, 1]} : vector<32x16xf32> to vector<8x16xf32>
    %990 = vector.extract_strided_slice %987 {offsets = [0, 0], sizes = [8, 16], strides = [1, 1]} : vector<24x16xf32> to vector<8x16xf32>
    %991 = vector.extract_strided_slice %988 {offsets = [0, 0], sizes = [8, 16], strides = [1, 1]} : vector<24x16xf32> to vector<8x16xf32>
    %992 = arith.addf %990, %991 : vector<8x16xf32>
    %993 = arith.negf %992 : vector<8x16xf32>
    %994 = math.exp %993 : vector<8x16xf32>
    %cst_417 = arith.constant 1.000000e+00 : f32
    %995 = vector.broadcast %cst_417 : f32 to vector<8x16xf32>
    %996 = arith.addf %995, %994 : vector<8x16xf32>
    %997 = arith.divf %995, %996 : vector<8x16xf32>
    %998 = vector.extract_strided_slice %987 {offsets = [8, 0], sizes = [8, 16], strides = [1, 1]} : vector<24x16xf32> to vector<8x16xf32>
    %999 = vector.extract_strided_slice %988 {offsets = [8, 0], sizes = [8, 16], strides = [1, 1]} : vector<24x16xf32> to vector<8x16xf32>
    %1000 = arith.addf %998, %999 : vector<8x16xf32>
    %1001 = arith.negf %1000 : vector<8x16xf32>
    %1002 = math.exp %1001 : vector<8x16xf32>
    %cst_418 = arith.constant 1.000000e+00 : f32
    %1003 = vector.broadcast %cst_418 : f32 to vector<8x16xf32>
    %1004 = arith.addf %1003, %1002 : vector<8x16xf32>
    %1005 = arith.divf %1003, %1004 : vector<8x16xf32>
    %1006 = vector.extract_strided_slice %987 {offsets = [16, 0], sizes = [8, 16], strides = [1, 1]} : vector<24x16xf32> to vector<8x16xf32>
    %1007 = vector.extract_strided_slice %988 {offsets = [16, 0], sizes = [8, 16], strides = [1, 1]} : vector<24x16xf32> to vector<8x16xf32>
    %1008 = arith.mulf %997, %1007 : vector<8x16xf32>
    %1009 = arith.addf %1006, %1008 : vector<8x16xf32>
    %1010 = math.tanh %1009 : vector<8x16xf32>
    %cst_419 = arith.constant 1.000000e+00 : f32
    %1011 = vector.broadcast %cst_419 : f32 to vector<8x16xf32>
    %1012 = arith.subf %1011, %1005 : vector<8x16xf32>
    %1013 = arith.mulf %1012, %1010 : vector<8x16xf32>
    %1014 = arith.mulf %1005, %989 : vector<8x16xf32>
    %1015 = arith.addf %1013, %1014 : vector<8x16xf32>
    %c2_420 = arith.constant 2 : index
    %c5_421 = arith.constant 5 : index
    %c0_422 = arith.constant 0 : index
    %c0_423 = arith.constant 0 : index
    %1016 = vector.load %arg9[%c2_420, %c5_421, %c0_422, %c0_423] : memref<4x8x24x16xf32, #tpu.memory_space<vmem>>, vector<1x1x24x16xf32>
    %1017 = vector.shape_cast %1016 : vector<1x1x24x16xf32> to vector<24x16xf32>
    %1018 = vector.extract_strided_slice %955 {offsets = [48, 0], sizes = [24, 16], strides = [1, 1]} : vector<96x16xf32> to vector<24x16xf32>
    %1019 = vector.extract_strided_slice %952 {offsets = [16, 0], sizes = [8, 16], strides = [1, 1]} : vector<32x16xf32> to vector<8x16xf32>
    %1020 = vector.extract_strided_slice %1017 {offsets = [0, 0], sizes = [8, 16], strides = [1, 1]} : vector<24x16xf32> to vector<8x16xf32>
    %1021 = vector.extract_strided_slice %1018 {offsets = [0, 0], sizes = [8, 16], strides = [1, 1]} : vector<24x16xf32> to vector<8x16xf32>
    %1022 = arith.addf %1020, %1021 : vector<8x16xf32>
    %1023 = arith.negf %1022 : vector<8x16xf32>
    %1024 = math.exp %1023 : vector<8x16xf32>
    %cst_424 = arith.constant 1.000000e+00 : f32
    %1025 = vector.broadcast %cst_424 : f32 to vector<8x16xf32>
    %1026 = arith.addf %1025, %1024 : vector<8x16xf32>
    %1027 = arith.divf %1025, %1026 : vector<8x16xf32>
    %1028 = vector.extract_strided_slice %1017 {offsets = [8, 0], sizes = [8, 16], strides = [1, 1]} : vector<24x16xf32> to vector<8x16xf32>
    %1029 = vector.extract_strided_slice %1018 {offsets = [8, 0], sizes = [8, 16], strides = [1, 1]} : vector<24x16xf32> to vector<8x16xf32>
    %1030 = arith.addf %1028, %1029 : vector<8x16xf32>
    %1031 = arith.negf %1030 : vector<8x16xf32>
    %1032 = math.exp %1031 : vector<8x16xf32>
    %cst_425 = arith.constant 1.000000e+00 : f32
    %1033 = vector.broadcast %cst_425 : f32 to vector<8x16xf32>
    %1034 = arith.addf %1033, %1032 : vector<8x16xf32>
    %1035 = arith.divf %1033, %1034 : vector<8x16xf32>
    %1036 = vector.extract_strided_slice %1017 {offsets = [16, 0], sizes = [8, 16], strides = [1, 1]} : vector<24x16xf32> to vector<8x16xf32>
    %1037 = vector.extract_strided_slice %1018 {offsets = [16, 0], sizes = [8, 16], strides = [1, 1]} : vector<24x16xf32> to vector<8x16xf32>
    %1038 = arith.mulf %1027, %1037 : vector<8x16xf32>
    %1039 = arith.addf %1036, %1038 : vector<8x16xf32>
    %1040 = math.tanh %1039 : vector<8x16xf32>
    %cst_426 = arith.constant 1.000000e+00 : f32
    %1041 = vector.broadcast %cst_426 : f32 to vector<8x16xf32>
    %1042 = arith.subf %1041, %1035 : vector<8x16xf32>
    %1043 = arith.mulf %1042, %1040 : vector<8x16xf32>
    %1044 = arith.mulf %1035, %1019 : vector<8x16xf32>
    %1045 = arith.addf %1043, %1044 : vector<8x16xf32>
    %c3_427 = arith.constant 3 : index
    %c2_428 = arith.constant 2 : index
    %c0_429 = arith.constant 0 : index
    %c0_430 = arith.constant 0 : index
    %1046 = vector.load %arg9[%c3_427, %c2_428, %c0_429, %c0_430] : memref<4x8x24x16xf32, #tpu.memory_space<vmem>>, vector<1x1x24x16xf32>
    %1047 = vector.shape_cast %1046 : vector<1x1x24x16xf32> to vector<24x16xf32>
    %1048 = vector.extract_strided_slice %955 {offsets = [72, 0], sizes = [24, 16], strides = [1, 1]} : vector<96x16xf32> to vector<24x16xf32>
    %1049 = vector.extract_strided_slice %952 {offsets = [24, 0], sizes = [8, 16], strides = [1, 1]} : vector<32x16xf32> to vector<8x16xf32>
    %1050 = vector.extract_strided_slice %1047 {offsets = [0, 0], sizes = [8, 16], strides = [1, 1]} : vector<24x16xf32> to vector<8x16xf32>
    %1051 = vector.extract_strided_slice %1048 {offsets = [0, 0], sizes = [8, 16], strides = [1, 1]} : vector<24x16xf32> to vector<8x16xf32>
    %1052 = arith.addf %1050, %1051 : vector<8x16xf32>
    %1053 = arith.negf %1052 : vector<8x16xf32>
    %1054 = math.exp %1053 : vector<8x16xf32>
    %cst_431 = arith.constant 1.000000e+00 : f32
    %1055 = vector.broadcast %cst_431 : f32 to vector<8x16xf32>
    %1056 = arith.addf %1055, %1054 : vector<8x16xf32>
    %1057 = arith.divf %1055, %1056 : vector<8x16xf32>
    %1058 = vector.extract_strided_slice %1047 {offsets = [8, 0], sizes = [8, 16], strides = [1, 1]} : vector<24x16xf32> to vector<8x16xf32>
    %1059 = vector.extract_strided_slice %1048 {offsets = [8, 0], sizes = [8, 16], strides = [1, 1]} : vector<24x16xf32> to vector<8x16xf32>
    %1060 = arith.addf %1058, %1059 : vector<8x16xf32>
    %1061 = arith.negf %1060 : vector<8x16xf32>
    %1062 = math.exp %1061 : vector<8x16xf32>
    %cst_432 = arith.constant 1.000000e+00 : f32
    %1063 = vector.broadcast %cst_432 : f32 to vector<8x16xf32>
    %1064 = arith.addf %1063, %1062 : vector<8x16xf32>
    %1065 = arith.divf %1063, %1064 : vector<8x16xf32>
    %1066 = vector.extract_strided_slice %1047 {offsets = [16, 0], sizes = [8, 16], strides = [1, 1]} : vector<24x16xf32> to vector<8x16xf32>
    %1067 = vector.extract_strided_slice %1048 {offsets = [16, 0], sizes = [8, 16], strides = [1, 1]} : vector<24x16xf32> to vector<8x16xf32>
    %1068 = arith.mulf %1057, %1067 : vector<8x16xf32>
    %1069 = arith.addf %1066, %1068 : vector<8x16xf32>
    %1070 = math.tanh %1069 : vector<8x16xf32>
    %cst_433 = arith.constant 1.000000e+00 : f32
    %1071 = vector.broadcast %cst_433 : f32 to vector<8x16xf32>
    %1072 = arith.subf %1071, %1065 : vector<8x16xf32>
    %1073 = arith.mulf %1072, %1070 : vector<8x16xf32>
    %1074 = arith.mulf %1065, %1049 : vector<8x16xf32>
    %1075 = arith.addf %1073, %1074 : vector<8x16xf32>
    %c5_434 = arith.constant 5 : index
    %c0_435 = arith.constant 0 : index
    %c0_436 = arith.constant 0 : index
    %1076 = vector.load %arg10[%c5_434, %c0_435, %c0_436] : memref<8x8x16xf32, #tpu.memory_space<vmem>>, vector<1x8x16xf32>
    %1077 = vector.shape_cast %1076 : vector<1x8x16xf32> to vector<8x16xf32>
    %1078 = vector.shape_cast %985 : vector<8x16xf32> to vector<1x8x16xf32>
    tpu.vector_store %arg10[%c5_434, %c0_435, %c0_436], %1078 {strides = array<i32>} : memref<8x8x16xf32, #tpu.memory_space<vmem>>, vector<1x8x16xf32>,
    %c2_437 = arith.constant 2 : index
    %c0_438 = arith.constant 0 : index
    %c0_439 = arith.constant 0 : index
    %1079 = vector.load %arg11[%c2_437, %c0_438, %c0_439] : memref<8x8x16xf32, #tpu.memory_space<vmem>>, vector<1x8x16xf32>
    %1080 = vector.shape_cast %1079 : vector<1x8x16xf32> to vector<8x16xf32>
    %1081 = vector.shape_cast %1015 : vector<8x16xf32> to vector<1x8x16xf32>
    tpu.vector_store %arg11[%c2_437, %c0_438, %c0_439], %1081 {strides = array<i32>} : memref<8x8x16xf32, #tpu.memory_space<vmem>>, vector<1x8x16xf32>,
    %cst_440 = arith.constant 0.000000e+00 : f32
    %1082 = vector.broadcast %cst_440 : f32 to vector<8x16xf32>
    %1083 = arith.maximumf %1045, %1082 : vector<8x16xf32>
    %1084 = math.absf %1045 : vector<8x16xf32>
    %cst_441 = arith.constant 0.000000e+00 : f32
    %1085 = vector.broadcast %cst_441 : f32 to vector<8x16xf32>
    %1086 = arith.subf %1085, %1084 : vector<8x16xf32>
    %1087 = math.exp %1086 : vector<8x16xf32>
    %cst_442 = arith.constant 1.000000e+00 : f32
    %1088 = vector.broadcast %cst_442 : f32 to vector<8x16xf32>
    %1089 = arith.addf %1088, %1087 : vector<8x16xf32>
    %1090 = math.log %1089 : vector<8x16xf32>
    %1091 = arith.addf %1083, %1090 : vector<8x16xf32>
    %c0_443 = arith.constant 0 : index
    %c5_444 = arith.constant 5 : index
    %c0_445 = arith.constant 0 : index
    %c0_446 = arith.constant 0 : index
    %1092 = vector.load %arg8[%c0_443, %c5_444, %c0_445, %c0_446] : memref<2x8x8x16xf32, #tpu.memory_space<vmem>>, vector<1x1x8x16xf32>
    %1093 = vector.shape_cast %1092 : vector<1x1x8x16xf32> to vector<8x16xf32>
    %1094 = vector.shape_cast %1091 : vector<8x16xf32> to vector<1x1x8x16xf32>
    tpu.vector_store %arg8[%c0_443, %c5_444, %c0_445, %c0_446], %1094 {strides = array<i32>} : memref<2x8x8x16xf32, #tpu.memory_space<vmem>>, vector<1x1x8x16xf32>,
    %cst_447 = arith.constant 0.000000e+00 : f32
    %1095 = vector.broadcast %cst_447 : f32 to vector<8x16xf32>
    %1096 = arith.maximumf %1075, %1095 : vector<8x16xf32>
    %1097 = math.absf %1075 : vector<8x16xf32>
    %cst_448 = arith.constant 0.000000e+00 : f32
    %1098 = vector.broadcast %cst_448 : f32 to vector<8x16xf32>
    %1099 = arith.subf %1098, %1097 : vector<8x16xf32>
    %1100 = math.exp %1099 : vector<8x16xf32>
    %cst_449 = arith.constant 1.000000e+00 : f32
    %1101 = vector.broadcast %cst_449 : f32 to vector<8x16xf32>
    %1102 = arith.addf %1101, %1100 : vector<8x16xf32>
    %1103 = math.log %1102 : vector<8x16xf32>
    %1104 = arith.addf %1096, %1103 : vector<8x16xf32>
    %c1_450 = arith.constant 1 : index
    %c2_451 = arith.constant 2 : index
    %c0_452 = arith.constant 0 : index
    %c0_453 = arith.constant 0 : index
    %1105 = vector.load %arg8[%c1_450, %c2_451, %c0_452, %c0_453] : memref<2x8x8x16xf32, #tpu.memory_space<vmem>>, vector<1x1x8x16xf32>
    %1106 = vector.shape_cast %1105 : vector<1x1x8x16xf32> to vector<8x16xf32>
    %1107 = vector.shape_cast %1104 : vector<8x16xf32> to vector<1x1x8x16xf32>
    tpu.vector_store %arg8[%c1_450, %c2_451, %c0_452, %c0_453], %1107 {strides = array<i32>} : memref<2x8x8x16xf32, #tpu.memory_space<vmem>>, vector<1x1x8x16xf32>,
    %1108 = tpu.concatenate %985, %1015, %1045, %1075 in 0 : vector<8x16xf32>, vector<8x16xf32>, vector<8x16xf32>, vector<8x16xf32> -> vector<32x16xf32>
    %cst_454 = arith.constant dense<0.000000e+00> : vector<96x16xf32>
    %1109 = tpu.matmul %2, %1108, %cst_454 {dimension_numbers = #tpu.dot_dimension_numbers<[1], [0], [0], [1], [0, 0, 1, 1], [], []>} : vector<96x32xf32>, vector<32x16xf32>, vector<96x16xf32> -> vector<96x16xf32>
    %1110 = vector.broadcast %3 : vector<96x1xf32> to vector<96x16xf32>
    %1111 = arith.addf %1109, %1110 : vector<96x16xf32>
    %c0_455 = arith.constant 0 : index
    %c6_456 = arith.constant 6 : index
    %c0_457 = arith.constant 0 : index
    %c0_458 = arith.constant 0 : index
    %1112 = vector.load %arg9[%c0_455, %c6_456, %c0_457, %c0_458] : memref<4x8x24x16xf32, #tpu.memory_space<vmem>>, vector<1x1x24x16xf32>
    %1113 = vector.shape_cast %1112 : vector<1x1x24x16xf32> to vector<24x16xf32>
    %1114 = vector.extract_strided_slice %1111 {offsets = [0, 0], sizes = [24, 16], strides = [1, 1]} : vector<96x16xf32> to vector<24x16xf32>
    %1115 = vector.extract_strided_slice %1108 {offsets = [0, 0], sizes = [8, 16], strides = [1, 1]} : vector<32x16xf32> to vector<8x16xf32>
    %1116 = vector.extract_strided_slice %1113 {offsets = [0, 0], sizes = [8, 16], strides = [1, 1]} : vector<24x16xf32> to vector<8x16xf32>
    %1117 = vector.extract_strided_slice %1114 {offsets = [0, 0], sizes = [8, 16], strides = [1, 1]} : vector<24x16xf32> to vector<8x16xf32>
    %1118 = arith.addf %1116, %1117 : vector<8x16xf32>
    %1119 = arith.negf %1118 : vector<8x16xf32>
    %1120 = math.exp %1119 : vector<8x16xf32>
    %cst_459 = arith.constant 1.000000e+00 : f32
    %1121 = vector.broadcast %cst_459 : f32 to vector<8x16xf32>
    %1122 = arith.addf %1121, %1120 : vector<8x16xf32>
    %1123 = arith.divf %1121, %1122 : vector<8x16xf32>
    %1124 = vector.extract_strided_slice %1113 {offsets = [8, 0], sizes = [8, 16], strides = [1, 1]} : vector<24x16xf32> to vector<8x16xf32>
    %1125 = vector.extract_strided_slice %1114 {offsets = [8, 0], sizes = [8, 16], strides = [1, 1]} : vector<24x16xf32> to vector<8x16xf32>
    %1126 = arith.addf %1124, %1125 : vector<8x16xf32>
    %1127 = arith.negf %1126 : vector<8x16xf32>
    %1128 = math.exp %1127 : vector<8x16xf32>
    %cst_460 = arith.constant 1.000000e+00 : f32
    %1129 = vector.broadcast %cst_460 : f32 to vector<8x16xf32>
    %1130 = arith.addf %1129, %1128 : vector<8x16xf32>
    %1131 = arith.divf %1129, %1130 : vector<8x16xf32>
    %1132 = vector.extract_strided_slice %1113 {offsets = [16, 0], sizes = [8, 16], strides = [1, 1]} : vector<24x16xf32> to vector<8x16xf32>
    %1133 = vector.extract_strided_slice %1114 {offsets = [16, 0], sizes = [8, 16], strides = [1, 1]} : vector<24x16xf32> to vector<8x16xf32>
    %1134 = arith.mulf %1123, %1133 : vector<8x16xf32>
    %1135 = arith.addf %1132, %1134 : vector<8x16xf32>
    %1136 = math.tanh %1135 : vector<8x16xf32>
    %cst_461 = arith.constant 1.000000e+00 : f32
    %1137 = vector.broadcast %cst_461 : f32 to vector<8x16xf32>
    %1138 = arith.subf %1137, %1131 : vector<8x16xf32>
    %1139 = arith.mulf %1138, %1136 : vector<8x16xf32>
    %1140 = arith.mulf %1131, %1115 : vector<8x16xf32>
    %1141 = arith.addf %1139, %1140 : vector<8x16xf32>
    %c1_462 = arith.constant 1 : index
    %c1_463 = arith.constant 1 : index
    %c0_464 = arith.constant 0 : index
    %c0_465 = arith.constant 0 : index
    %1142 = vector.load %arg9[%c1_462, %c1_463, %c0_464, %c0_465] : memref<4x8x24x16xf32, #tpu.memory_space<vmem>>, vector<1x1x24x16xf32>
    %1143 = vector.shape_cast %1142 : vector<1x1x24x16xf32> to vector<24x16xf32>
    %1144 = vector.extract_strided_slice %1111 {offsets = [24, 0], sizes = [24, 16], strides = [1, 1]} : vector<96x16xf32> to vector<24x16xf32>
    %1145 = vector.extract_strided_slice %1108 {offsets = [8, 0], sizes = [8, 16], strides = [1, 1]} : vector<32x16xf32> to vector<8x16xf32>
    %1146 = vector.extract_strided_slice %1143 {offsets = [0, 0], sizes = [8, 16], strides = [1, 1]} : vector<24x16xf32> to vector<8x16xf32>
    %1147 = vector.extract_strided_slice %1144 {offsets = [0, 0], sizes = [8, 16], strides = [1, 1]} : vector<24x16xf32> to vector<8x16xf32>
    %1148 = arith.addf %1146, %1147 : vector<8x16xf32>
    %1149 = arith.negf %1148 : vector<8x16xf32>
    %1150 = math.exp %1149 : vector<8x16xf32>
    %cst_466 = arith.constant 1.000000e+00 : f32
    %1151 = vector.broadcast %cst_466 : f32 to vector<8x16xf32>
    %1152 = arith.addf %1151, %1150 : vector<8x16xf32>
    %1153 = arith.divf %1151, %1152 : vector<8x16xf32>
    %1154 = vector.extract_strided_slice %1143 {offsets = [8, 0], sizes = [8, 16], strides = [1, 1]} : vector<24x16xf32> to vector<8x16xf32>
    %1155 = vector.extract_strided_slice %1144 {offsets = [8, 0], sizes = [8, 16], strides = [1, 1]} : vector<24x16xf32> to vector<8x16xf32>
    %1156 = arith.addf %1154, %1155 : vector<8x16xf32>
    %1157 = arith.negf %1156 : vector<8x16xf32>
    %1158 = math.exp %1157 : vector<8x16xf32>
    %cst_467 = arith.constant 1.000000e+00 : f32
    %1159 = vector.broadcast %cst_467 : f32 to vector<8x16xf32>
    %1160 = arith.addf %1159, %1158 : vector<8x16xf32>
    %1161 = arith.divf %1159, %1160 : vector<8x16xf32>
    %1162 = vector.extract_strided_slice %1143 {offsets = [16, 0], sizes = [8, 16], strides = [1, 1]} : vector<24x16xf32> to vector<8x16xf32>
    %1163 = vector.extract_strided_slice %1144 {offsets = [16, 0], sizes = [8, 16], strides = [1, 1]} : vector<24x16xf32> to vector<8x16xf32>
    %1164 = arith.mulf %1153, %1163 : vector<8x16xf32>
    %1165 = arith.addf %1162, %1164 : vector<8x16xf32>
    %1166 = math.tanh %1165 : vector<8x16xf32>
    %cst_468 = arith.constant 1.000000e+00 : f32
    %1167 = vector.broadcast %cst_468 : f32 to vector<8x16xf32>
    %1168 = arith.subf %1167, %1161 : vector<8x16xf32>
    %1169 = arith.mulf %1168, %1166 : vector<8x16xf32>
    %1170 = arith.mulf %1161, %1145 : vector<8x16xf32>
    %1171 = arith.addf %1169, %1170 : vector<8x16xf32>
    %c2_469 = arith.constant 2 : index
    %c6_470 = arith.constant 6 : index
    %c0_471 = arith.constant 0 : index
    %c0_472 = arith.constant 0 : index
    %1172 = vector.load %arg9[%c2_469, %c6_470, %c0_471, %c0_472] : memref<4x8x24x16xf32, #tpu.memory_space<vmem>>, vector<1x1x24x16xf32>
    %1173 = vector.shape_cast %1172 : vector<1x1x24x16xf32> to vector<24x16xf32>
    %1174 = vector.extract_strided_slice %1111 {offsets = [48, 0], sizes = [24, 16], strides = [1, 1]} : vector<96x16xf32> to vector<24x16xf32>
    %1175 = vector.extract_strided_slice %1108 {offsets = [16, 0], sizes = [8, 16], strides = [1, 1]} : vector<32x16xf32> to vector<8x16xf32>
    %1176 = vector.extract_strided_slice %1173 {offsets = [0, 0], sizes = [8, 16], strides = [1, 1]} : vector<24x16xf32> to vector<8x16xf32>
    %1177 = vector.extract_strided_slice %1174 {offsets = [0, 0], sizes = [8, 16], strides = [1, 1]} : vector<24x16xf32> to vector<8x16xf32>
    %1178 = arith.addf %1176, %1177 : vector<8x16xf32>
    %1179 = arith.negf %1178 : vector<8x16xf32>
    %1180 = math.exp %1179 : vector<8x16xf32>
    %cst_473 = arith.constant 1.000000e+00 : f32
    %1181 = vector.broadcast %cst_473 : f32 to vector<8x16xf32>
    %1182 = arith.addf %1181, %1180 : vector<8x16xf32>
    %1183 = arith.divf %1181, %1182 : vector<8x16xf32>
    %1184 = vector.extract_strided_slice %1173 {offsets = [8, 0], sizes = [8, 16], strides = [1, 1]} : vector<24x16xf32> to vector<8x16xf32>
    %1185 = vector.extract_strided_slice %1174 {offsets = [8, 0], sizes = [8, 16], strides = [1, 1]} : vector<24x16xf32> to vector<8x16xf32>
    %1186 = arith.addf %1184, %1185 : vector<8x16xf32>
    %1187 = arith.negf %1186 : vector<8x16xf32>
    %1188 = math.exp %1187 : vector<8x16xf32>
    %cst_474 = arith.constant 1.000000e+00 : f32
    %1189 = vector.broadcast %cst_474 : f32 to vector<8x16xf32>
    %1190 = arith.addf %1189, %1188 : vector<8x16xf32>
    %1191 = arith.divf %1189, %1190 : vector<8x16xf32>
    %1192 = vector.extract_strided_slice %1173 {offsets = [16, 0], sizes = [8, 16], strides = [1, 1]} : vector<24x16xf32> to vector<8x16xf32>
    %1193 = vector.extract_strided_slice %1174 {offsets = [16, 0], sizes = [8, 16], strides = [1, 1]} : vector<24x16xf32> to vector<8x16xf32>
    %1194 = arith.mulf %1183, %1193 : vector<8x16xf32>
    %1195 = arith.addf %1192, %1194 : vector<8x16xf32>
    %1196 = math.tanh %1195 : vector<8x16xf32>
    %cst_475 = arith.constant 1.000000e+00 : f32
    %1197 = vector.broadcast %cst_475 : f32 to vector<8x16xf32>
    %1198 = arith.subf %1197, %1191 : vector<8x16xf32>
    %1199 = arith.mulf %1198, %1196 : vector<8x16xf32>
    %1200 = arith.mulf %1191, %1175 : vector<8x16xf32>
    %1201 = arith.addf %1199, %1200 : vector<8x16xf32>
    %c3_476 = arith.constant 3 : index
    %c1_477 = arith.constant 1 : index
    %c0_478 = arith.constant 0 : index
    %c0_479 = arith.constant 0 : index
    %1202 = vector.load %arg9[%c3_476, %c1_477, %c0_478, %c0_479] : memref<4x8x24x16xf32, #tpu.memory_space<vmem>>, vector<1x1x24x16xf32>
    %1203 = vector.shape_cast %1202 : vector<1x1x24x16xf32> to vector<24x16xf32>
    %1204 = vector.extract_strided_slice %1111 {offsets = [72, 0], sizes = [24, 16], strides = [1, 1]} : vector<96x16xf32> to vector<24x16xf32>
    %1205 = vector.extract_strided_slice %1108 {offsets = [24, 0], sizes = [8, 16], strides = [1, 1]} : vector<32x16xf32> to vector<8x16xf32>
    %1206 = vector.extract_strided_slice %1203 {offsets = [0, 0], sizes = [8, 16], strides = [1, 1]} : vector<24x16xf32> to vector<8x16xf32>
    %1207 = vector.extract_strided_slice %1204 {offsets = [0, 0], sizes = [8, 16], strides = [1, 1]} : vector<24x16xf32> to vector<8x16xf32>
    %1208 = arith.addf %1206, %1207 : vector<8x16xf32>
    %1209 = arith.negf %1208 : vector<8x16xf32>
    %1210 = math.exp %1209 : vector<8x16xf32>
    %cst_480 = arith.constant 1.000000e+00 : f32
    %1211 = vector.broadcast %cst_480 : f32 to vector<8x16xf32>
    %1212 = arith.addf %1211, %1210 : vector<8x16xf32>
    %1213 = arith.divf %1211, %1212 : vector<8x16xf32>
    %1214 = vector.extract_strided_slice %1203 {offsets = [8, 0], sizes = [8, 16], strides = [1, 1]} : vector<24x16xf32> to vector<8x16xf32>
    %1215 = vector.extract_strided_slice %1204 {offsets = [8, 0], sizes = [8, 16], strides = [1, 1]} : vector<24x16xf32> to vector<8x16xf32>
    %1216 = arith.addf %1214, %1215 : vector<8x16xf32>
    %1217 = arith.negf %1216 : vector<8x16xf32>
    %1218 = math.exp %1217 : vector<8x16xf32>
    %cst_481 = arith.constant 1.000000e+00 : f32
    %1219 = vector.broadcast %cst_481 : f32 to vector<8x16xf32>
    %1220 = arith.addf %1219, %1218 : vector<8x16xf32>
    %1221 = arith.divf %1219, %1220 : vector<8x16xf32>
    %1222 = vector.extract_strided_slice %1203 {offsets = [16, 0], sizes = [8, 16], strides = [1, 1]} : vector<24x16xf32> to vector<8x16xf32>
    %1223 = vector.extract_strided_slice %1204 {offsets = [16, 0], sizes = [8, 16], strides = [1, 1]} : vector<24x16xf32> to vector<8x16xf32>
    %1224 = arith.mulf %1213, %1223 : vector<8x16xf32>
    %1225 = arith.addf %1222, %1224 : vector<8x16xf32>
    %1226 = math.tanh %1225 : vector<8x16xf32>
    %cst_482 = arith.constant 1.000000e+00 : f32
    %1227 = vector.broadcast %cst_482 : f32 to vector<8x16xf32>
    %1228 = arith.subf %1227, %1221 : vector<8x16xf32>
    %1229 = arith.mulf %1228, %1226 : vector<8x16xf32>
    %1230 = arith.mulf %1221, %1205 : vector<8x16xf32>
    %1231 = arith.addf %1229, %1230 : vector<8x16xf32>
    %c6_483 = arith.constant 6 : index
    %c0_484 = arith.constant 0 : index
    %c0_485 = arith.constant 0 : index
    %1232 = vector.load %arg10[%c6_483, %c0_484, %c0_485] : memref<8x8x16xf32, #tpu.memory_space<vmem>>, vector<1x8x16xf32>
    %1233 = vector.shape_cast %1232 : vector<1x8x16xf32> to vector<8x16xf32>
    %1234 = vector.shape_cast %1141 : vector<8x16xf32> to vector<1x8x16xf32>
    tpu.vector_store %arg10[%c6_483, %c0_484, %c0_485], %1234 {strides = array<i32>} : memref<8x8x16xf32, #tpu.memory_space<vmem>>, vector<1x8x16xf32>,
    %c1_486 = arith.constant 1 : index
    %c0_487 = arith.constant 0 : index
    %c0_488 = arith.constant 0 : index
    %1235 = vector.load %arg11[%c1_486, %c0_487, %c0_488] : memref<8x8x16xf32, #tpu.memory_space<vmem>>, vector<1x8x16xf32>
    %1236 = vector.shape_cast %1235 : vector<1x8x16xf32> to vector<8x16xf32>
    %1237 = vector.shape_cast %1171 : vector<8x16xf32> to vector<1x8x16xf32>
    tpu.vector_store %arg11[%c1_486, %c0_487, %c0_488], %1237 {strides = array<i32>} : memref<8x8x16xf32, #tpu.memory_space<vmem>>, vector<1x8x16xf32>,
    %cst_489 = arith.constant 0.000000e+00 : f32
    %1238 = vector.broadcast %cst_489 : f32 to vector<8x16xf32>
    %1239 = arith.maximumf %1201, %1238 : vector<8x16xf32>
    %1240 = math.absf %1201 : vector<8x16xf32>
    %cst_490 = arith.constant 0.000000e+00 : f32
    %1241 = vector.broadcast %cst_490 : f32 to vector<8x16xf32>
    %1242 = arith.subf %1241, %1240 : vector<8x16xf32>
    %1243 = math.exp %1242 : vector<8x16xf32>
    %cst_491 = arith.constant 1.000000e+00 : f32
    %1244 = vector.broadcast %cst_491 : f32 to vector<8x16xf32>
    %1245 = arith.addf %1244, %1243 : vector<8x16xf32>
    %1246 = math.log %1245 : vector<8x16xf32>
    %1247 = arith.addf %1239, %1246 : vector<8x16xf32>
    %c0_492 = arith.constant 0 : index
    %c6_493 = arith.constant 6 : index
    %c0_494 = arith.constant 0 : index
    %c0_495 = arith.constant 0 : index
    %1248 = vector.load %arg8[%c0_492, %c6_493, %c0_494, %c0_495] : memref<2x8x8x16xf32, #tpu.memory_space<vmem>>, vector<1x1x8x16xf32>
    %1249 = vector.shape_cast %1248 : vector<1x1x8x16xf32> to vector<8x16xf32>
    %1250 = vector.shape_cast %1247 : vector<8x16xf32> to vector<1x1x8x16xf32>
    tpu.vector_store %arg8[%c0_492, %c6_493, %c0_494, %c0_495], %1250 {strides = array<i32>} : memref<2x8x8x16xf32, #tpu.memory_space<vmem>>, vector<1x1x8x16xf32>,
    %cst_496 = arith.constant 0.000000e+00 : f32
    %1251 = vector.broadcast %cst_496 : f32 to vector<8x16xf32>
    %1252 = arith.maximumf %1231, %1251 : vector<8x16xf32>
    %1253 = math.absf %1231 : vector<8x16xf32>
    %cst_497 = arith.constant 0.000000e+00 : f32
    %1254 = vector.broadcast %cst_497 : f32 to vector<8x16xf32>
    %1255 = arith.subf %1254, %1253 : vector<8x16xf32>
    %1256 = math.exp %1255 : vector<8x16xf32>
    %cst_498 = arith.constant 1.000000e+00 : f32
    %1257 = vector.broadcast %cst_498 : f32 to vector<8x16xf32>
    %1258 = arith.addf %1257, %1256 : vector<8x16xf32>
    %1259 = math.log %1258 : vector<8x16xf32>
    %1260 = arith.addf %1252, %1259 : vector<8x16xf32>
    %c1_499 = arith.constant 1 : index
    %c1_500 = arith.constant 1 : index
    %c0_501 = arith.constant 0 : index
    %c0_502 = arith.constant 0 : index
    %1261 = vector.load %arg8[%c1_499, %c1_500, %c0_501, %c0_502] : memref<2x8x8x16xf32, #tpu.memory_space<vmem>>, vector<1x1x8x16xf32>
    %1262 = vector.shape_cast %1261 : vector<1x1x8x16xf32> to vector<8x16xf32>
    %1263 = vector.shape_cast %1260 : vector<8x16xf32> to vector<1x1x8x16xf32>
    tpu.vector_store %arg8[%c1_499, %c1_500, %c0_501, %c0_502], %1263 {strides = array<i32>} : memref<2x8x8x16xf32, #tpu.memory_space<vmem>>, vector<1x1x8x16xf32>,
    %1264 = tpu.concatenate %1141, %1171, %1201, %1231 in 0 : vector<8x16xf32>, vector<8x16xf32>, vector<8x16xf32>, vector<8x16xf32> -> vector<32x16xf32>
    %cst_503 = arith.constant dense<0.000000e+00> : vector<96x16xf32>
    %1265 = tpu.matmul %2, %1264, %cst_503 {dimension_numbers = #tpu.dot_dimension_numbers<[1], [0], [0], [1], [0, 0, 1, 1], [], []>} : vector<96x32xf32>, vector<32x16xf32>, vector<96x16xf32> -> vector<96x16xf32>
    %1266 = vector.broadcast %3 : vector<96x1xf32> to vector<96x16xf32>
    %1267 = arith.addf %1265, %1266 : vector<96x16xf32>
    %c0_504 = arith.constant 0 : index
    %c7_505 = arith.constant 7 : index
    %c0_506 = arith.constant 0 : index
    %c0_507 = arith.constant 0 : index
    %1268 = vector.load %arg9[%c0_504, %c7_505, %c0_506, %c0_507] : memref<4x8x24x16xf32, #tpu.memory_space<vmem>>, vector<1x1x24x16xf32>
    %1269 = vector.shape_cast %1268 : vector<1x1x24x16xf32> to vector<24x16xf32>
    %1270 = vector.extract_strided_slice %1267 {offsets = [0, 0], sizes = [24, 16], strides = [1, 1]} : vector<96x16xf32> to vector<24x16xf32>
    %1271 = vector.extract_strided_slice %1264 {offsets = [0, 0], sizes = [8, 16], strides = [1, 1]} : vector<32x16xf32> to vector<8x16xf32>
    %1272 = vector.extract_strided_slice %1269 {offsets = [0, 0], sizes = [8, 16], strides = [1, 1]} : vector<24x16xf32> to vector<8x16xf32>
    %1273 = vector.extract_strided_slice %1270 {offsets = [0, 0], sizes = [8, 16], strides = [1, 1]} : vector<24x16xf32> to vector<8x16xf32>
    %1274 = arith.addf %1272, %1273 : vector<8x16xf32>
    %1275 = arith.negf %1274 : vector<8x16xf32>
    %1276 = math.exp %1275 : vector<8x16xf32>
    %cst_508 = arith.constant 1.000000e+00 : f32
    %1277 = vector.broadcast %cst_508 : f32 to vector<8x16xf32>
    %1278 = arith.addf %1277, %1276 : vector<8x16xf32>
    %1279 = arith.divf %1277, %1278 : vector<8x16xf32>
    %1280 = vector.extract_strided_slice %1269 {offsets = [8, 0], sizes = [8, 16], strides = [1, 1]} : vector<24x16xf32> to vector<8x16xf32>
    %1281 = vector.extract_strided_slice %1270 {offsets = [8, 0], sizes = [8, 16], strides = [1, 1]} : vector<24x16xf32> to vector<8x16xf32>
    %1282 = arith.addf %1280, %1281 : vector<8x16xf32>
    %1283 = arith.negf %1282 : vector<8x16xf32>
    %1284 = math.exp %1283 : vector<8x16xf32>
    %cst_509 = arith.constant 1.000000e+00 : f32
    %1285 = vector.broadcast %cst_509 : f32 to vector<8x16xf32>
    %1286 = arith.addf %1285, %1284 : vector<8x16xf32>
    %1287 = arith.divf %1285, %1286 : vector<8x16xf32>
    %1288 = vector.extract_strided_slice %1269 {offsets = [16, 0], sizes = [8, 16], strides = [1, 1]} : vector<24x16xf32> to vector<8x16xf32>
    %1289 = vector.extract_strided_slice %1270 {offsets = [16, 0], sizes = [8, 16], strides = [1, 1]} : vector<24x16xf32> to vector<8x16xf32>
    %1290 = arith.mulf %1279, %1289 : vector<8x16xf32>
    %1291 = arith.addf %1288, %1290 : vector<8x16xf32>
    %1292 = math.tanh %1291 : vector<8x16xf32>
    %cst_510 = arith.constant 1.000000e+00 : f32
    %1293 = vector.broadcast %cst_510 : f32 to vector<8x16xf32>
    %1294 = arith.subf %1293, %1287 : vector<8x16xf32>
    %1295 = arith.mulf %1294, %1292 : vector<8x16xf32>
    %1296 = arith.mulf %1287, %1271 : vector<8x16xf32>
    %1297 = arith.addf %1295, %1296 : vector<8x16xf32>
    %c1_511 = arith.constant 1 : index
    %c0_512 = arith.constant 0 : index
    %c0_513 = arith.constant 0 : index
    %c0_514 = arith.constant 0 : index
    %1298 = vector.load %arg9[%c1_511, %c0_512, %c0_513, %c0_514] : memref<4x8x24x16xf32, #tpu.memory_space<vmem>>, vector<1x1x24x16xf32>
    %1299 = vector.shape_cast %1298 : vector<1x1x24x16xf32> to vector<24x16xf32>
    %1300 = vector.extract_strided_slice %1267 {offsets = [24, 0], sizes = [24, 16], strides = [1, 1]} : vector<96x16xf32> to vector<24x16xf32>
    %1301 = vector.extract_strided_slice %1264 {offsets = [8, 0], sizes = [8, 16], strides = [1, 1]} : vector<32x16xf32> to vector<8x16xf32>
    %1302 = vector.extract_strided_slice %1299 {offsets = [0, 0], sizes = [8, 16], strides = [1, 1]} : vector<24x16xf32> to vector<8x16xf32>
    %1303 = vector.extract_strided_slice %1300 {offsets = [0, 0], sizes = [8, 16], strides = [1, 1]} : vector<24x16xf32> to vector<8x16xf32>
    %1304 = arith.addf %1302, %1303 : vector<8x16xf32>
    %1305 = arith.negf %1304 : vector<8x16xf32>
    %1306 = math.exp %1305 : vector<8x16xf32>
    %cst_515 = arith.constant 1.000000e+00 : f32
    %1307 = vector.broadcast %cst_515 : f32 to vector<8x16xf32>
    %1308 = arith.addf %1307, %1306 : vector<8x16xf32>
    %1309 = arith.divf %1307, %1308 : vector<8x16xf32>
    %1310 = vector.extract_strided_slice %1299 {offsets = [8, 0], sizes = [8, 16], strides = [1, 1]} : vector<24x16xf32> to vector<8x16xf32>
    %1311 = vector.extract_strided_slice %1300 {offsets = [8, 0], sizes = [8, 16], strides = [1, 1]} : vector<24x16xf32> to vector<8x16xf32>
    %1312 = arith.addf %1310, %1311 : vector<8x16xf32>
    %1313 = arith.negf %1312 : vector<8x16xf32>
    %1314 = math.exp %1313 : vector<8x16xf32>
    %cst_516 = arith.constant 1.000000e+00 : f32
    %1315 = vector.broadcast %cst_516 : f32 to vector<8x16xf32>
    %1316 = arith.addf %1315, %1314 : vector<8x16xf32>
    %1317 = arith.divf %1315, %1316 : vector<8x16xf32>
    %1318 = vector.extract_strided_slice %1299 {offsets = [16, 0], sizes = [8, 16], strides = [1, 1]} : vector<24x16xf32> to vector<8x16xf32>
    %1319 = vector.extract_strided_slice %1300 {offsets = [16, 0], sizes = [8, 16], strides = [1, 1]} : vector<24x16xf32> to vector<8x16xf32>
    %1320 = arith.mulf %1309, %1319 : vector<8x16xf32>
    %1321 = arith.addf %1318, %1320 : vector<8x16xf32>
    %1322 = math.tanh %1321 : vector<8x16xf32>
    %cst_517 = arith.constant 1.000000e+00 : f32
    %1323 = vector.broadcast %cst_517 : f32 to vector<8x16xf32>
    %1324 = arith.subf %1323, %1317 : vector<8x16xf32>
    %1325 = arith.mulf %1324, %1322 : vector<8x16xf32>
    %1326 = arith.mulf %1317, %1301 : vector<8x16xf32>
    %1327 = arith.addf %1325, %1326 : vector<8x16xf32>
    %c2_518 = arith.constant 2 : index
    %c7_519 = arith.constant 7 : index
    %c0_520 = arith.constant 0 : index
    %c0_521 = arith.constant 0 : index
    %1328 = vector.load %arg9[%c2_518, %c7_519, %c0_520, %c0_521] : memref<4x8x24x16xf32, #tpu.memory_space<vmem>>, vector<1x1x24x16xf32>
    %1329 = vector.shape_cast %1328 : vector<1x1x24x16xf32> to vector<24x16xf32>
    %1330 = vector.extract_strided_slice %1267 {offsets = [48, 0], sizes = [24, 16], strides = [1, 1]} : vector<96x16xf32> to vector<24x16xf32>
    %1331 = vector.extract_strided_slice %1264 {offsets = [16, 0], sizes = [8, 16], strides = [1, 1]} : vector<32x16xf32> to vector<8x16xf32>
    %1332 = vector.extract_strided_slice %1329 {offsets = [0, 0], sizes = [8, 16], strides = [1, 1]} : vector<24x16xf32> to vector<8x16xf32>
    %1333 = vector.extract_strided_slice %1330 {offsets = [0, 0], sizes = [8, 16], strides = [1, 1]} : vector<24x16xf32> to vector<8x16xf32>
    %1334 = arith.addf %1332, %1333 : vector<8x16xf32>
    %1335 = arith.negf %1334 : vector<8x16xf32>
    %1336 = math.exp %1335 : vector<8x16xf32>
    %cst_522 = arith.constant 1.000000e+00 : f32
    %1337 = vector.broadcast %cst_522 : f32 to vector<8x16xf32>
    %1338 = arith.addf %1337, %1336 : vector<8x16xf32>
    %1339 = arith.divf %1337, %1338 : vector<8x16xf32>
    %1340 = vector.extract_strided_slice %1329 {offsets = [8, 0], sizes = [8, 16], strides = [1, 1]} : vector<24x16xf32> to vector<8x16xf32>
    %1341 = vector.extract_strided_slice %1330 {offsets = [8, 0], sizes = [8, 16], strides = [1, 1]} : vector<24x16xf32> to vector<8x16xf32>
    %1342 = arith.addf %1340, %1341 : vector<8x16xf32>
    %1343 = arith.negf %1342 : vector<8x16xf32>
    %1344 = math.exp %1343 : vector<8x16xf32>
    %cst_523 = arith.constant 1.000000e+00 : f32
    %1345 = vector.broadcast %cst_523 : f32 to vector<8x16xf32>
    %1346 = arith.addf %1345, %1344 : vector<8x16xf32>
    %1347 = arith.divf %1345, %1346 : vector<8x16xf32>
    %1348 = vector.extract_strided_slice %1329 {offsets = [16, 0], sizes = [8, 16], strides = [1, 1]} : vector<24x16xf32> to vector<8x16xf32>
    %1349 = vector.extract_strided_slice %1330 {offsets = [16, 0], sizes = [8, 16], strides = [1, 1]} : vector<24x16xf32> to vector<8x16xf32>
    %1350 = arith.mulf %1339, %1349 : vector<8x16xf32>
    %1351 = arith.addf %1348, %1350 : vector<8x16xf32>
    %1352 = math.tanh %1351 : vector<8x16xf32>
    %cst_524 = arith.constant 1.000000e+00 : f32
    %1353 = vector.broadcast %cst_524 : f32 to vector<8x16xf32>
    %1354 = arith.subf %1353, %1347 : vector<8x16xf32>
    %1355 = arith.mulf %1354, %1352 : vector<8x16xf32>
    %1356 = arith.mulf %1347, %1331 : vector<8x16xf32>
    %1357 = arith.addf %1355, %1356 : vector<8x16xf32>
    %c3_525 = arith.constant 3 : index
    %c0_526 = arith.constant 0 : index
    %c0_527 = arith.constant 0 : index
    %c0_528 = arith.constant 0 : index
    %1358 = vector.load %arg9[%c3_525, %c0_526, %c0_527, %c0_528] : memref<4x8x24x16xf32, #tpu.memory_space<vmem>>, vector<1x1x24x16xf32>
    %1359 = vector.shape_cast %1358 : vector<1x1x24x16xf32> to vector<24x16xf32>
    %1360 = vector.extract_strided_slice %1267 {offsets = [72, 0], sizes = [24, 16], strides = [1, 1]} : vector<96x16xf32> to vector<24x16xf32>
    %1361 = vector.extract_strided_slice %1264 {offsets = [24, 0], sizes = [8, 16], strides = [1, 1]} : vector<32x16xf32> to vector<8x16xf32>
    %1362 = vector.extract_strided_slice %1359 {offsets = [0, 0], sizes = [8, 16], strides = [1, 1]} : vector<24x16xf32> to vector<8x16xf32>
    %1363 = vector.extract_strided_slice %1360 {offsets = [0, 0], sizes = [8, 16], strides = [1, 1]} : vector<24x16xf32> to vector<8x16xf32>
    %1364 = arith.addf %1362, %1363 : vector<8x16xf32>
    %1365 = arith.negf %1364 : vector<8x16xf32>
    %1366 = math.exp %1365 : vector<8x16xf32>
    %cst_529 = arith.constant 1.000000e+00 : f32
    %1367 = vector.broadcast %cst_529 : f32 to vector<8x16xf32>
    %1368 = arith.addf %1367, %1366 : vector<8x16xf32>
    %1369 = arith.divf %1367, %1368 : vector<8x16xf32>
    %1370 = vector.extract_strided_slice %1359 {offsets = [8, 0], sizes = [8, 16], strides = [1, 1]} : vector<24x16xf32> to vector<8x16xf32>
    %1371 = vector.extract_strided_slice %1360 {offsets = [8, 0], sizes = [8, 16], strides = [1, 1]} : vector<24x16xf32> to vector<8x16xf32>
    %1372 = arith.addf %1370, %1371 : vector<8x16xf32>
    %1373 = arith.negf %1372 : vector<8x16xf32>
    %1374 = math.exp %1373 : vector<8x16xf32>
    %cst_530 = arith.constant 1.000000e+00 : f32
    %1375 = vector.broadcast %cst_530 : f32 to vector<8x16xf32>
    %1376 = arith.addf %1375, %1374 : vector<8x16xf32>
    %1377 = arith.divf %1375, %1376 : vector<8x16xf32>
    %1378 = vector.extract_strided_slice %1359 {offsets = [16, 0], sizes = [8, 16], strides = [1, 1]} : vector<24x16xf32> to vector<8x16xf32>
    %1379 = vector.extract_strided_slice %1360 {offsets = [16, 0], sizes = [8, 16], strides = [1, 1]} : vector<24x16xf32> to vector<8x16xf32>
    %1380 = arith.mulf %1369, %1379 : vector<8x16xf32>
    %1381 = arith.addf %1378, %1380 : vector<8x16xf32>
    %1382 = math.tanh %1381 : vector<8x16xf32>
    %cst_531 = arith.constant 1.000000e+00 : f32
    %1383 = vector.broadcast %cst_531 : f32 to vector<8x16xf32>
    %1384 = arith.subf %1383, %1377 : vector<8x16xf32>
    %1385 = arith.mulf %1384, %1382 : vector<8x16xf32>
    %1386 = arith.mulf %1377, %1361 : vector<8x16xf32>
    %1387 = arith.addf %1385, %1386 : vector<8x16xf32>
    %c7_532 = arith.constant 7 : index
    %c0_533 = arith.constant 0 : index
    %c0_534 = arith.constant 0 : index
    %1388 = vector.load %arg10[%c7_532, %c0_533, %c0_534] : memref<8x8x16xf32, #tpu.memory_space<vmem>>, vector<1x8x16xf32>
    %1389 = vector.shape_cast %1388 : vector<1x8x16xf32> to vector<8x16xf32>
    %1390 = vector.shape_cast %1297 : vector<8x16xf32> to vector<1x8x16xf32>
    tpu.vector_store %arg10[%c7_532, %c0_533, %c0_534], %1390 {strides = array<i32>} : memref<8x8x16xf32, #tpu.memory_space<vmem>>, vector<1x8x16xf32>,
    %c0_535 = arith.constant 0 : index
    %c0_536 = arith.constant 0 : index
    %c0_537 = arith.constant 0 : index
    %1391 = vector.load %arg11[%c0_535, %c0_536, %c0_537] : memref<8x8x16xf32, #tpu.memory_space<vmem>>, vector<1x8x16xf32>
    %1392 = vector.shape_cast %1391 : vector<1x8x16xf32> to vector<8x16xf32>
    %1393 = vector.shape_cast %1327 : vector<8x16xf32> to vector<1x8x16xf32>
    tpu.vector_store %arg11[%c0_535, %c0_536, %c0_537], %1393 {strides = array<i32>} : memref<8x8x16xf32, #tpu.memory_space<vmem>>, vector<1x8x16xf32>,
    %cst_538 = arith.constant 0.000000e+00 : f32
    %1394 = vector.broadcast %cst_538 : f32 to vector<8x16xf32>
    %1395 = arith.maximumf %1357, %1394 : vector<8x16xf32>
    %1396 = math.absf %1357 : vector<8x16xf32>
    %cst_539 = arith.constant 0.000000e+00 : f32
    %1397 = vector.broadcast %cst_539 : f32 to vector<8x16xf32>
    %1398 = arith.subf %1397, %1396 : vector<8x16xf32>
    %1399 = math.exp %1398 : vector<8x16xf32>
    %cst_540 = arith.constant 1.000000e+00 : f32
    %1400 = vector.broadcast %cst_540 : f32 to vector<8x16xf32>
    %1401 = arith.addf %1400, %1399 : vector<8x16xf32>
    %1402 = math.log %1401 : vector<8x16xf32>
    %1403 = arith.addf %1395, %1402 : vector<8x16xf32>
    %c0_541 = arith.constant 0 : index
    %c7_542 = arith.constant 7 : index
    %c0_543 = arith.constant 0 : index
    %c0_544 = arith.constant 0 : index
    %1404 = vector.load %arg8[%c0_541, %c7_542, %c0_543, %c0_544] : memref<2x8x8x16xf32, #tpu.memory_space<vmem>>, vector<1x1x8x16xf32>
    %1405 = vector.shape_cast %1404 : vector<1x1x8x16xf32> to vector<8x16xf32>
    %1406 = vector.shape_cast %1403 : vector<8x16xf32> to vector<1x1x8x16xf32>
    tpu.vector_store %arg8[%c0_541, %c7_542, %c0_543, %c0_544], %1406 {strides = array<i32>} : memref<2x8x8x16xf32, #tpu.memory_space<vmem>>, vector<1x1x8x16xf32>,
    %cst_545 = arith.constant 0.000000e+00 : f32
    %1407 = vector.broadcast %cst_545 : f32 to vector<8x16xf32>
    %1408 = arith.maximumf %1387, %1407 : vector<8x16xf32>
    %1409 = math.absf %1387 : vector<8x16xf32>
    %cst_546 = arith.constant 0.000000e+00 : f32
    %1410 = vector.broadcast %cst_546 : f32 to vector<8x16xf32>
    %1411 = arith.subf %1410, %1409 : vector<8x16xf32>
    %1412 = math.exp %1411 : vector<8x16xf32>
    %cst_547 = arith.constant 1.000000e+00 : f32
    %1413 = vector.broadcast %cst_547 : f32 to vector<8x16xf32>
    %1414 = arith.addf %1413, %1412 : vector<8x16xf32>
    %1415 = math.log %1414 : vector<8x16xf32>
    %1416 = arith.addf %1408, %1415 : vector<8x16xf32>
    %c1_548 = arith.constant 1 : index
    %c0_549 = arith.constant 0 : index
    %c0_550 = arith.constant 0 : index
    %c0_551 = arith.constant 0 : index
    %1417 = vector.load %arg8[%c1_548, %c0_549, %c0_550, %c0_551] : memref<2x8x8x16xf32, #tpu.memory_space<vmem>>, vector<1x1x8x16xf32>
    %1418 = vector.shape_cast %1417 : vector<1x1x8x16xf32> to vector<8x16xf32>
    %1419 = vector.shape_cast %1416 : vector<8x16xf32> to vector<1x1x8x16xf32>
    tpu.vector_store %arg8[%c1_548, %c0_549, %c0_550, %c0_551], %1419 {strides = array<i32>} : memref<2x8x8x16xf32, #tpu.memory_space<vmem>>, vector<1x1x8x16xf32>,
    %c0_552 = arith.constant 0 : index
    %c0_553 = arith.constant 0 : index
    %c0_554 = arith.constant 0 : index
    %1420 = vector.load %arg10[%c0_552, %c0_553, %c0_554] : memref<8x8x16xf32, #tpu.memory_space<vmem>>, vector<8x8x16xf32>
    %c0_555 = arith.constant 0 : index
    %c0_556 = arith.constant 0 : index
    %c0_557 = arith.constant 0 : index
    %1421 = vector.load %arg6[%c0_555, %c0_556, %c0_557] : memref<2x8x1xf32, #tpu.memory_space<vmem>>, vector<1x8x1xf32>
    %1422 = vector.shape_cast %1421 : vector<1x8x1xf32> to vector<8x1xf32>
    %1423 = vector.shape_cast %1422 : vector<8x1xf32> to vector<1x8x1xf32>
    %1424 = vector.broadcast %1423 : vector<1x8x1xf32> to vector<8x8x16xf32>
    %1425 = arith.mulf %1420, %1424 : vector<8x8x16xf32>
    %cst_558 = arith.constant dense<0.000000e+00> : vector<8x16xf32>
    %1426 = vector.multi_reduction <add>, %1425, %cst_558 [1] : vector<8x8x16xf32> to vector<8x16xf32>
    %c0_559 = arith.constant 0 : index
    %c0_560 = arith.constant 0 : index
    %c0_561 = arith.constant 0 : index
    %1427 = vector.load %arg11[%c0_559, %c0_560, %c0_561] : memref<8x8x16xf32, #tpu.memory_space<vmem>>, vector<8x8x16xf32>
    %c1_562 = arith.constant 1 : index
    %c0_563 = arith.constant 0 : index
    %c0_564 = arith.constant 0 : index
    %1428 = vector.load %arg6[%c1_562, %c0_563, %c0_564] : memref<2x8x1xf32, #tpu.memory_space<vmem>>, vector<1x8x1xf32>
    %1429 = vector.shape_cast %1428 : vector<1x8x1xf32> to vector<8x1xf32>
    %1430 = vector.shape_cast %1429 : vector<8x1xf32> to vector<1x8x1xf32>
    %1431 = vector.broadcast %1430 : vector<1x8x1xf32> to vector<8x8x16xf32>
    %1432 = arith.mulf %1427, %1431 : vector<8x8x16xf32>
    %cst_565 = arith.constant dense<0.000000e+00> : vector<8x16xf32>
    %1433 = vector.multi_reduction <add>, %1432, %cst_565 [1] : vector<8x8x16xf32> to vector<8x16xf32>
    %1434 = arith.addf %1426, %1433 : vector<8x16xf32>
    %1435 = math.exp %1434 : vector<8x16xf32>
    %c0_566 = arith.constant 0 : index
    %c0_567 = arith.constant 0 : index
    %1436 = vector.load %arg7[%c0_566, %c0_567] : memref<8x16xf32, #tpu.memory_space<vmem>>, vector<8x16xf32>
    tpu.vector_store %arg7[%c0_566, %c0_567], %1435 {strides = array<i32>} : memref<8x16xf32, #tpu.memory_space<vmem>>, vector<8x16xf32>,
    return
  }
  func.func @transform_0(%arg0: i32) -> (i32, i32, i32) {
    %c0_i32 = arith.constant 0 : i32
    %c0_i32_0 = arith.constant 0 : i32
    %c0_i32_1 = arith.constant 0 : i32
    return %c0_i32, %c0_i32_0, %arg0 : i32, i32, i32
  }
  func.func @transform_1(%arg0: i32) -> (i32, i32) {
    %c0_i32 = arith.constant 0 : i32
    %c0_i32_0 = arith.constant 0 : i32
    %c0_i32_1 = arith.constant 0 : i32
    return %c0_i32, %c0_i32_0 : i32, i32
  }
  func.func @transform_2(%arg0: i32) -> (i32, i32) {
    %c0_i32 = arith.constant 0 : i32
    %c0_i32_0 = arith.constant 0 : i32
    %c0_i32_1 = arith.constant 0 : i32
    return %c0_i32, %c0_i32_0 : i32, i32
  }
  func.func @transform_3(%arg0: i32) -> (i32, i32) {
    %c0_i32 = arith.constant 0 : i32
    %c0_i32_0 = arith.constant 0 : i32
    %c0_i32_1 = arith.constant 0 : i32
    return %c0_i32, %c0_i32_0 : i32, i32
  }
  func.func @transform_4(%arg0: i32) -> (i32, i32) {
    %c0_i32 = arith.constant 0 : i32
    %c0_i32_0 = arith.constant 0 : i32
    %c0_i32_1 = arith.constant 0 : i32
    return %c0_i32, %c0_i32_0 : i32, i32
  }
  func.func @transform_5(%arg0: i32) -> (i32, i32, i32) {
    %c0_i32 = arith.constant 0 : i32
    %c0_i32_0 = arith.constant 0 : i32
    %c0_i32_1 = arith.constant 0 : i32
    %c0_i32_2 = arith.constant 0 : i32
    return %c0_i32, %c0_i32_0, %c0_i32_1 : i32, i32, i32
  }
  func.func @transform_6(%arg0: i32) -> (i32, i32) {
    %c0_i32 = arith.constant 0 : i32
    %c0_i32_0 = arith.constant 0 : i32
    return %c0_i32, %arg0 : i32, i32
  }
  func.func @transform_7(%arg0: i32) -> (i32, i32, i32, i32) {
    %c0_i32 = arith.constant 0 : i32
    %c0_i32_0 = arith.constant 0 : i32
    %c0_i32_1 = arith.constant 0 : i32
    %c0_i32_2 = arith.constant 0 : i32
    return %c0_i32, %c0_i32_0, %c0_i32_1, %arg0 : i32, i32, i32, i32
  }
}

</mosaic_0001>

<llo_original>
// kernel: tpu_custom_call.1
$region0: #{tpu_custom_call.1}
  #allocation0 [shape = 'u32[]', space=smem, size = 0x4, offset = 0x4, fixed_abs, tag = 'smem constant byte address 0x4 - core index']
  #allocation1 [shape = 'u32[144,128]{1,0:T(1,128)}', space=vmem, size = 0x12000, scoped, tag = 'internal scratch']
  #allocation2 [shape = 'f32[4,8,24,16]{3,2,1,0:T(8,128)}', space=vmem, size = 0x60000, scoped, tag = 'scratch operand']
  #allocation3 [shape = 'f32[8,8,16]{2,1,0:T(8,128)}', space=vmem, size = 0x8000, scoped, tag = 'scratch operand']
  #allocation4 [shape = 'f32[8,8,16]{2,1,0:T(8,128)}', space=vmem, size = 0x8000, scoped, tag = 'scratch operand']
  %s0 = inlined_call_operand.vmem [shape: f32[8,5,16], index: 0, kind: input, shape index: {}]
  %s1 = inlined_call_operand.vmem [shape: f32[96,5], index: 1, kind: input, shape index: {}]
  %s2 = inlined_call_operand.vmem [shape: f32[96,1], index: 2, kind: input, shape index: {}]
  %s3 = inlined_call_operand.vmem [shape: f32[96,32], index: 3, kind: input, shape index: {}]
  %s4 = inlined_call_operand.vmem [shape: f32[96,1], index: 4, kind: input, shape index: {}]
  %s5 = inlined_call_operand.vmem [shape: f32[2,8,1], index: 5, kind: input, shape index: {}]
  %s6 = inlined_call_operand.hbm [shape: f32[8,16], index: 6, kind: output, shape index: {0}]
  %s7 = inlined_call_operand.hbm [shape: f32[2,8,8,16], index: 7, kind: output, shape index: {1}]
  %8 = xla_tuple %s6, %s7
  %s9 = sld [smem:[#allocation0]]
  $region42: #{tpu_custom_call.1} parent=0
    _
  %s11 = ssub.s32 1, %s9
  %s12 = scalar_select 0, %s11, %s9
  $region1: #{tpu_custom_call.1} parent=0
    #allocation5 [shape = 'u8[4096]{0}', space=vmem, size = 0x1000, scoped, tag = 'output window, operand 0, single buffered']
    #allocation6 [shape = 's32[1]{0}', space=sflag, size = 0x4, scoped, tag = 'scoped memory for tpu_custom_call.1']
    #allocation7 [shape = 'u8[65536]{0}', space=vmem, size = 0x10000, scoped, tag = 'output window, operand 1, single buffered']
    #allocation8 [shape = 's32[1]{0}', space=sflag, size = 0x4, scoped, tag = 'scoped memory for tpu_custom_call.1']
    %13 = vsyncpa [#allocation6], 0
    %14 = vsyncpa [#allocation8], 0
    // Predicated region
    $region2: #{tpu_custom_call.1} parent=1 // pred_check
      _
    $region3: #{tpu_custom_call.1} parent=1 // pred_check_branch
      %16 = sbr.rel (0) target = $region5
    $region4: #{tpu_custom_call.1} parent=1 // pred_region
      _
    $region5: #{tpu_custom_call.1} parent=1 // pred_fallthru
      _
    // Predicated region
    $region6: #{tpu_custom_call.1} parent=1 // pred_check
      _
    $region7: #{tpu_custom_call.1} parent=1 // pred_check_branch
      %18 = sbr.rel (0) target = $region9
    $region8: #{tpu_custom_call.1} parent=1 // pred_region
      _
    $region9: #{tpu_custom_call.1} parent=1 // pred_fallthru
      _
    // Predicated region
    $region10: #{tpu_custom_call.1} parent=1 // pred_check
      _
    $region11: #{tpu_custom_call.1} parent=1 // pred_check_branch
      %20 = sbr.rel (0) target = $region13
    $region12: #{tpu_custom_call.1} parent=1 // pred_region
      _
    $region13: #{tpu_custom_call.1} parent=1 // pred_fallthru
      _
    // Predicated region
    $region14: #{tpu_custom_call.1} parent=1 // pred_check
      _
    $region15: #{tpu_custom_call.1} parent=1 // pred_check_branch
      %22 = sbr.rel (0) target = $region17
    $region16: #{tpu_custom_call.1} parent=1 // pred_region
      _
    $region17: #{tpu_custom_call.1} parent=1 // pred_fallthru
      _
    // Predicated region
    $region18: #{tpu_custom_call.1} parent=1 // pred_check
      _
    $region19: #{tpu_custom_call.1} parent=1 // pred_check_branch
      %24 = sbr.rel (0) target = $region21
    $region20: #{tpu_custom_call.1} parent=1 // pred_region
      _
    $region21: #{tpu_custom_call.1} parent=1 // pred_fallthru
      _
    // Predicated region
    $region22: #{tpu_custom_call.1} parent=1 // pred_check
      _
    $region23: #{tpu_custom_call.1} parent=1 // pred_check_branch
      %26 = sbr.rel (0) target = $region25
    $region24: #{tpu_custom_call.1} parent=1 // pred_region
      _
    $region25: #{tpu_custom_call.1} parent=1 // pred_fallthru
      _
    %v27 = vld [vmem:[%s1] sm:$0xff]
    %v28 = vld [vmem:[%s1 + $0x8] sm:$0xff]
    %v29 = vld [vmem:[%s1 + $0x10] sm:$0xff]
    %v30 = vld [vmem:[%s1 + $0x18] sm:$0xff]
    %v31 = vld [vmem:[%s1 + $0x20] sm:$0xff]
    %v32 = vld [vmem:[%s1 + $0x28] sm:$0xff]
    %v33 = vld [vmem:[%s1 + $0x30] sm:$0xff]
    %v34 = vld [vmem:[%s1 + $0x38] sm:$0xff]
    %v35 = vld [vmem:[%s1 + $0x40] sm:$0xff]
    %v36 = vld [vmem:[%s1 + $0x48] sm:$0xff]
    %v37 = vld [vmem:[%s1 + $0x50] sm:$0xff]
    %v38 = vld [vmem:[%s1 + $0x58] sm:$0xff]
    %v39 = vld [vmem:[%s2] sm:$0xff]
    %v40 = vld [vmem:[%s2 + $0x8] sm:$0xff]
    %v41 = vld [vmem:[%s2 + $0x10] sm:$0xff]
    %v42 = vld [vmem:[%s2 + $0x18] sm:$0xff]
    %v43 = vld [vmem:[%s2 + $0x20] sm:$0xff]
    %v44 = vld [vmem:[%s2 + $0x28] sm:$0xff]
    %v45 = vld [vmem:[%s2 + $0x30] sm:$0xff]
    %v46 = vld [vmem:[%s2 + $0x38] sm:$0xff]
    %v47 = vld [vmem:[%s2 + $0x40] sm:$0xff]
    %v48 = vld [vmem:[%s2 + $0x48] sm:$0xff]
    %v49 = vld [vmem:[%s2 + $0x50] sm:$0xff]
    %v50 = vld [vmem:[%s2 + $0x58] sm:$0xff]
    %v51 = vld [vmem:[%s3] sm:$0xff]
    %v52 = vld [vmem:[%s3 + $0x8] sm:$0xff]
    %v53 = vld [vmem:[%s3 + $0x10] sm:$0xff]
    %v54 = vld [vmem:[%s3 + $0x18] sm:$0xff]
    %v55 = vld [vmem:[%s3 + $0x20] sm:$0xff]
    %v56 = vld [vmem:[%s3 + $0x28] sm:$0xff]
    %v57 = vld [vmem:[%s3 + $0x30] sm:$0xff]
    %v58 = vld [vmem:[%s3 + $0x38] sm:$0xff]
    %v59 = vld [vmem:[%s3 + $0x40] sm:$0xff]
    %v60 = vld [vmem:[%s3 + $0x48] sm:$0xff]
    %v61 = vld [vmem:[%s3 + $0x50] sm:$0xff]
    %v62 = vld [vmem:[%s3 + $0x58] sm:$0xff]
    %v63 = vld [vmem:[%s4] sm:$0xff]
    %v64 = vld [vmem:[%s4 + $0x8] sm:$0xff]
    %v65 = vld [vmem:[%s4 + $0x10] sm:$0xff]
    %v66 = vld [vmem:[%s4 + $0x18] sm:$0xff]
    %v67 = vld [vmem:[%s4 + $0x20] sm:$0xff]
    %v68 = vld [vmem:[%s4 + $0x28] sm:$0xff]
    %v69 = vld [vmem:[%s4 + $0x30] sm:$0xff]
    %v70 = vld [vmem:[%s4 + $0x38] sm:$0xff]
    %v71 = vld [vmem:[%s4 + $0x40] sm:$0xff]
    %v72 = vld [vmem:[%s4 + $0x48] sm:$0xff]
    %v73 = vld [vmem:[%s4 + $0x50] sm:$0xff]
    %v74 = vld [vmem:[%s4 + $0x58] sm:$0xff]
    %v75 = vld [vmem:[%s0] sm:$0x1f]
    %77 = vset.pattern.permute.xlu0 0
    %78 = vperm.xlu0 %77, %v39
    %v79 = vpop.permute.xlu0 %78
    %82 = vset.pattern.permute.xlu0 0
    %83 = vperm.xlu0 %82, %v40
    %v84 = vpop.permute.xlu0 %83
    %87 = vset.pattern.permute.xlu0 0
    %88 = vperm.xlu0 %87, %v41
    %v89 = vpop.permute.xlu0 %88
    %92 = vset.pattern.permute.xlu0 0
    %93 = vperm.xlu0 %92, %v42
    %v94 = vpop.permute.xlu0 %93
    %97 = vset.pattern.permute.xlu0 0
    %98 = vperm.xlu0 %97, %v43
    %v99 = vpop.permute.xlu0 %98
    %102 = vset.pattern.permute.xlu0 0
    %103 = vperm.xlu0 %102, %v44
    %v104 = vpop.permute.xlu0 %103
    %107 = vset.pattern.permute.xlu0 0
    %108 = vperm.xlu0 %107, %v45
    %v109 = vpop.permute.xlu0 %108
    %112 = vset.pattern.permute.xlu0 0
    %113 = vperm.xlu0 %112, %v46
    %v114 = vpop.permute.xlu0 %113
    %117 = vset.pattern.permute.xlu0 0
    %118 = vperm.xlu0 %117, %v47
    %v119 = vpop.permute.xlu0 %118
    %122 = vset.pattern.permute.xlu0 0
    %123 = vperm.xlu0 %122, %v48
    %v124 = vpop.permute.xlu0 %123
    %127 = vset.pattern.permute.xlu0 0
    %128 = vperm.xlu0 %127, %v49
    %v129 = vpop.permute.xlu0 %128
    %132 = vset.pattern.permute.xlu0 0
    %133 = vperm.xlu0 %132, %v50
    %v134 = vpop.permute.xlu0 %133
    %vm136 = vcmask 39936
    %v138 = vsel %vm136, %v27, 0
    %v141 = vsel %vm136, %v28, 0
    %v144 = vsel %vm136, %v29, 0
    %v147 = vsel %vm136, %v30, 0
    %v150 = vsel %vm136, %v31, 0
    %v153 = vsel %vm136, %v32, 0
    %v156 = vsel %vm136, %v33, 0
    %v159 = vsel %vm136, %v34, 0
    %v162 = vsel %vm136, %v35, 0
    %v165 = vsel %vm136, %v36, 0
    %v168 = vsel %vm136, %v37, 0
    %v171 = vsel %vm136, %v38, 0
    %vm173 = vcmask 1044480
    %v175 = vsel %vm173, %v75, 0
    %177 = vmatprep.subr.mxu0 0.0
    %178 = vmatpush1.msra.mxu0 0.0
    %179 = vmatprep.subr.mxu0 0.0
    %180 = vmatpush1.msra.mxu0 0.0
    %181 = vmatprep.subr.mxu0 0.0
    %182 = vmatpush1.msra.mxu0 0.0
    %183 = vmatprep.subr.mxu0 0.0
    %184 = vmatpush1.msra.mxu0 0.0
    %185 = vmatprep.subr.mxu0 0.0
    %186 = vmatpush1.msra.mxu0 0.0
    %187 = vmatprep.subr.mxu0 0.0
    %188 = vmatpush1.msra.mxu0 0.0
    %189 = vmatprep.subr.mxu0 0.0
    %190 = vmatpush1.msra.mxu0 0.0
    %191 = vmatprep.subr.mxu0 0.0
    %192 = vmatpush1.msra.mxu0 0.0
    %193 = vmatprep.subr.mxu0 0.0
    %194 = vmatpush1.msra.mxu0 0.0
    %195 = vmatprep.subr.mxu0 0.0
    %196 = vmatpush1.msra.mxu0 0.0
    %197 = vmatprep.subr.mxu0 0.0
    %198 = vmatpush1.msra.mxu0 0.0
    %199 = vmatprep.subr.mxu0 0.0
    %200 = vmatpush1.msra.mxu0 0.0
    %201 = vmatprep.subr.mxu0 0.0
    %202 = vmatpush1.msra.mxu0 0.0
    %203 = vmatprep.subr.mxu0 0.0
    %204 = vmatpush1.msra.mxu0 0.0
    %205 = vmatprep.subr.mxu0 0.0
    %206 = vmatpush1.msra.mxu0 0.0
    %207 = vmatprep.subr.mxu0 0.0
    %208 = vmatpush1.msra.mxu0 %v175
    %209 = vmatprep.subr.mxu0 0.0
    %210 = vmatpush2.msra.mxu0 0.0
    %211 = vmatprep.subr.mxu0 0.0
    %212 = vmatpush2.msra.mxu0 0.0
    %213 = vmatprep.subr.mxu0 0.0
    %214 = vmatpush2.msra.mxu0 0.0
    %215 = vmatprep.subr.mxu0 0.0
    %216 = vmatpush2.msra.mxu0 0.0
    %217 = vmatprep.subr.mxu0 0.0
    %218 = vmatpush2.msra.mxu0 0.0
    %219 = vmatprep.subr.mxu0 0.0
    %220 = vmatpush2.msra.mxu0 0.0
    %221 = vmatprep.subr.mxu0 0.0
    %222 = vmatpush2.msra.mxu0 0.0
    %223 = vmatprep.subr.mxu0 0.0
    %224 = vmatpush2.msra.mxu0 0.0
    %225 = vmatprep.subr.mxu0 0.0
    %226 = vmatpush2.msra.mxu0 0.0
    %227 = vmatprep.subr.mxu0 0.0
    %228 = vmatpush2.msra.mxu0 0.0
    %229 = vmatprep.subr.mxu0 0.0
    %230 = vmatpush2.msra.mxu0 0.0
    %231 = vmatprep.subr.mxu0 0.0
    %232 = vmatpush2.msra.mxu0 0.0
    %233 = vmatprep.subr.mxu0 0.0
    %234 = vmatpush2.msra.mxu0 0.0
    %235 = vmatprep.subr.mxu0 0.0
    %236 = vmatpush2.msra.mxu0 0.0
    %237 = vmatprep.subr.mxu0 0.0
    %238 = vmatpush2.msra.mxu0 0.0
    %239 = vmatprep.subr.mxu0 0.0
    %240 = vmatpush2.msra.mxu0 0.0
    %241 = vmatprep.mubr.f32.mxu0 0.0
    %242 = vmatmul.mubr.f32.gmra.mxu0 %v138
    %v243 = vpop.f32.mrf.mxu0
    %v244 = vadd.f32 %v79, %v243
    %v245 = vpop.f32.mrf.mxu0
    %246 = vmatprep.mubr.f32.mxu0 0.0
    %247 = vmatmul.mubr.f32.gmra.mxu0 %v141
    %v248 = vpop.f32.mrf.mxu0
    %v249 = vadd.f32 %v84, %v248
    %v250 = vpop.f32.mrf.mxu0
    %251 = vmatprep.mubr.f32.mxu0 0.0
    %252 = vmatmul.mubr.f32.gmra.mxu0 %v144
    %v253 = vpop.f32.mrf.mxu0
    %v254 = vadd.f32 %v89, %v253
    %v255 = vpop.f32.mrf.mxu0
    %256 = vmatprep.mubr.f32.mxu0 0.0
    %257 = vmatmul.mubr.f32.gmra.mxu0 %v147
    %v258 = vpop.f32.mrf.mxu0
    %v259 = vadd.f32 %v94, %v258
    %v260 = vpop.f32.mrf.mxu0
    %261 = vmatprep.mubr.f32.mxu0 0.0
    %262 = vmatmul.mubr.f32.gmra.mxu0 %v150
    %v263 = vpop.f32.mrf.mxu0
    %v264 = vadd.f32 %v99, %v263
    %v265 = vpop.f32.mrf.mxu0
    %266 = vmatprep.mubr.f32.mxu0 0.0
    %267 = vmatmul.mubr.f32.gmra.mxu0 %v153
    %v268 = vpop.f32.mrf.mxu0
    %v269 = vadd.f32 %v104, %v268
    %v270 = vpop.f32.mrf.mxu0
    %271 = vmatprep.mubr.f32.mxu0 0.0
    %272 = vmatmul.mubr.f32.gmra.mxu0 %v156
    %v273 = vpop.f32.mrf.mxu0
    %v274 = vadd.f32 %v109, %v273
    %v275 = vpop.f32.mrf.mxu0
    %276 = vmatprep.mubr.f32.mxu0 0.0
    %277 = vmatmul.mubr.f32.gmra.mxu0 %v159
    %v278 = vpop.f32.mrf.mxu0
    %v279 = vadd.f32 %v114, %v278
    %v280 = vpop.f32.mrf.mxu0
    %281 = vmatprep.mubr.f32.mxu0 0.0
    %282 = vmatmul.mubr.f32.gmra.mxu0 %v162
    %v283 = vpop.f32.mrf.mxu0
    %v284 = vadd.f32 %v119, %v283
    %v285 = vpop.f32.mrf.mxu0
    %286 = vmatprep.mubr.f32.mxu0 0.0
    %287 = vmatmul.mubr.f32.gmra.mxu0 %v165
    %v288 = vpop.f32.mrf.mxu0
    %v289 = vadd.f32 %v124, %v288
    %v290 = vpop.f32.mrf.mxu0
    %291 = vmatprep.mubr.f32.mxu0 0.0
    %292 = vmatmul.mubr.f32.gmra.mxu0 %v168
    %v293 = vpop.f32.mrf.mxu0
    %v294 = vadd.f32 %v129, %v293
    %v295 = vpop.f32.mrf.mxu0
    %296 = vmatprep.mubr.f32.mxu0 0.0
    %297 = vmatmul.mubr.f32.gmra.mxu0 %v171
    %v298 = vpop.f32.mrf.mxu0
    %v299 = vadd.f32 %v134, %v298
    %v300 = vpop.f32.mrf.mxu0
    %301 = vdwg.mxu0
    %vm302 = vcmask 130048
    %303 = vst.msk [vmem:[#allocation2] sm:$0xff] %vm302, %v244
    %304 = vst.msk [vmem:[#allocation2 + $0x8] sm:$0xff] %vm302, %v249
    %305 = vst.msk [vmem:[#allocation2 + $0x10] sm:$0xff] %vm302, %v254
    %s306 = scalar_lea.vmem [#allocation2], 192
    %307 = vst.msk [vmem:[%s306] sm:$0xff] %vm302, %v259
    %308 = vst.msk [vmem:[%s306 + $0x8] sm:$0xff] %vm302, %v264
    %309 = vst.msk [vmem:[%s306 + $0x10] sm:$0xff] %vm302, %v269
    %s310 = scalar_lea.vmem [#allocation2], 384
    %311 = vst.msk [vmem:[%s310] sm:$0xff] %vm302, %v274
    %312 = vst.msk [vmem:[%s310 + $0x8] sm:$0xff] %vm302, %v279
    %313 = vst.msk [vmem:[%s310 + $0x10] sm:$0xff] %vm302, %v284
    %s314 = scalar_lea.vmem [#allocation2], 576
    %315 = vst.msk [vmem:[%s314] sm:$0xff] %vm302, %v289
    %316 = vst.msk [vmem:[%s314 + $0x8] sm:$0xff] %vm302, %v294
    %317 = vst.msk [vmem:[%s314 + $0x10] sm:$0xff] %vm302, %v299
    %s318 = scalar_lea.vmem %s0, 8
    %v319 = vld [vmem:[%s318] sm:$0x1f]
    %v321 = vsel %vm173, %v319, 0
    %323 = vmatprep.subr.mxu0 0.0
    %324 = vmatpush1.msra.mxu0 0.0
    %325 = vmatprep.subr.mxu0 0.0
    %326 = vmatpush1.msra.mxu0 0.0
    %327 = vmatprep.subr.mxu0 0.0
    %328 = vmatpush1.msra.mxu0 0.0
    %329 = vmatprep.subr.mxu0 0.0
    %330 = vmatpush1.msra.mxu0 0.0
    %331 = vmatprep.subr.mxu0 0.0
    %332 = vmatpush1.msra.mxu0 0.0
    %333 = vmatprep.subr.mxu0 0.0
    %334 = vmatpush1.msra.mxu0 0.0
    %335 = vmatprep.subr.mxu0 0.0
    %336 = vmatpush1.msra.mxu0 0.0
    %337 = vmatprep.subr.mxu0 0.0
    %338 = vmatpush1.msra.mxu0 0.0
    %339 = vmatprep.subr.mxu0 0.0
    %340 = vmatpush1.msra.mxu0 0.0
    %341 = vmatprep.subr.mxu0 0.0
    %342 = vmatpush1.msra.mxu0 0.0
    %343 = vmatprep.subr.mxu0 0.0
    %344 = vmatpush1.msra.mxu0 0.0
    %345 = vmatprep.subr.mxu0 0.0
    %346 = vmatpush1.msra.mxu0 0.0
    %347 = vmatprep.subr.mxu0 0.0
    %348 = vmatpush1.msra.mxu0 0.0
    %349 = vmatprep.subr.mxu0 0.0
    %350 = vmatpush1.msra.mxu0 0.0
    %351 = vmatprep.subr.mxu0 0.0
    %352 = vmatpush1.msra.mxu0 0.0
    %353 = vmatprep.subr.mxu0 0.0
    %354 = vmatpush1.msra.mxu0 %v321
    %355 = vmatprep.subr.mxu0 0.0
    %356 = vmatpush2.msra.mxu0 0.0
    %357 = vmatprep.subr.mxu0 0.0
    %358 = vmatpush2.msra.mxu0 0.0
    %359 = vmatprep.subr.mxu0 0.0
    %360 = vmatpush2.msra.mxu0 0.0
    %361 = vmatprep.subr.mxu0 0.0
    %362 = vmatpush2.msra.mxu0 0.0
    %363 = vmatprep.subr.mxu0 0.0
    %364 = vmatpush2.msra.mxu0 0.0
    %365 = vmatprep.subr.mxu0 0.0
    %366 = vmatpush2.msra.mxu0 0.0
    %367 = vmatprep.subr.mxu0 0.0
    %368 = vmatpush2.msra.mxu0 0.0
    %369 = vmatprep.subr.mxu0 0.0
    %370 = vmatpush2.msra.mxu0 0.0
    %371 = vmatprep.subr.mxu0 0.0
    %372 = vmatpush2.msra.mxu0 0.0
    %373 = vmatprep.subr.mxu0 0.0
    %374 = vmatpush2.msra.mxu0 0.0
    %375 = vmatprep.subr.mxu0 0.0
    %376 = vmatpush2.msra.mxu0 0.0
    %377 = vmatprep.subr.mxu0 0.0
    %378 = vmatpush2.msra.mxu0 0.0
    %379 = vmatprep.subr.mxu0 0.0
    %380 = vmatpush2.msra.mxu0 0.0
    %381 = vmatprep.subr.mxu0 0.0
    %382 = vmatpush2.msra.mxu0 0.0
    %383 = vmatprep.subr.mxu0 0.0
    %384 = vmatpush2.msra.mxu0 0.0
    %385 = vmatprep.subr.mxu0 0.0
    %386 = vmatpush2.msra.mxu0 0.0
    %387 = vmatprep.mubr.f32.mxu0 0.0
    %388 = vmatmul.mubr.f32.gmra.mxu0 %v138
    %v389 = vpop.f32.mrf.mxu0
    %v390 = vadd.f32 %v79, %v389
    %v391 = vpop.f32.mrf.mxu0
    %392 = vmatprep.mubr.f32.mxu0 0.0
    %393 = vmatmul.mubr.f32.gmra.mxu0 %v141
    %v394 = vpop.f32.mrf.mxu0
    %v395 = vadd.f32 %v84, %v394
    %v396 = vpop.f32.mrf.mxu0
    %397 = vmatprep.mubr.f32.mxu0 0.0
    %398 = vmatmul.mubr.f32.gmra.mxu0 %v144
    %v399 = vpop.f32.mrf.mxu0
    %v400 = vadd.f32 %v89, %v399
    %v401 = vpop.f32.mrf.mxu0
    %402 = vmatprep.mubr.f32.mxu0 0.0
    %403 = vmatmul.mubr.f32.gmra.mxu0 %v147
    %v404 = vpop.f32.mrf.mxu0
    %v405 = vadd.f32 %v94, %v404
    %v406 = vpop.f32.mrf.mxu0
    %407 = vmatprep.mubr.f32.mxu0 0.0
    %408 = vmatmul.mubr.f32.gmra.mxu0 %v150
    %v409 = vpop.f32.mrf.mxu0
    %v410 = vadd.f32 %v99, %v409
    %v411 = vpop.f32.mrf.mxu0
    %412 = vmatprep.mubr.f32.mxu0 0.0
    %413 = vmatmul.mubr.f32.gmra.mxu0 %v153
    %v414 = vpop.f32.mrf.mxu0
    %v415 = vadd.f32 %v104, %v414
    %v416 = vpop.f32.mrf.mxu0
    %417 = vmatprep.mubr.f32.mxu0 0.0
    %418 = vmatmul.mubr.f32.gmra.mxu0 %v156
    %v419 = vpop.f32.mrf.mxu0
    %v420 = vadd.f32 %v109, %v419
    %v421 = vpop.f32.mrf.mxu0
    %422 = vmatprep.mubr.f32.mxu0 0.0
    %423 = vmatmul.mubr.f32.gmra.mxu0 %v159
    %v424 = vpop.f32.mrf.mxu0
    %v425 = vadd.f32 %v114, %v424
    %v426 = vpop.f32.mrf.mxu0
    %427 = vmatprep.mubr.f32.mxu0 0.0
    %428 = vmatmul.mubr.f32.gmra.mxu0 %v162
    %v429 = vpop.f32.mrf.mxu0
    %v430 = vadd.f32 %v119, %v429
    %v431 = vpop.f32.mrf.mxu0
    %432 = vmatprep.mubr.f32.mxu0 0.0
    %433 = vmatmul.mubr.f32.gmra.mxu0 %v165
    %v434 = vpop.f32.mrf.mxu0
    %v435 = vadd.f32 %v124, %v434
    %v436 = vpop.f32.mrf.mxu0
    %437 = vmatprep.mubr.f32.mxu0 0.0
    %438 = vmatmul.mubr.f32.gmra.mxu0 %v168
    %v439 = vpop.f32.mrf.mxu0
    %v440 = vadd.f32 %v129, %v439
    %v441 = vpop.f32.mrf.mxu0
    %442 = vmatprep.mubr.f32.mxu0 0.0
    %443 = vmatmul.mubr.f32.gmra.mxu0 %v171
    %v444 = vpop.f32.mrf.mxu0
    %v445 = vadd.f32 %v134, %v444
    %v446 = vpop.f32.mrf.mxu0
    %447 = vdwg.mxu0
    %s448 = scalar_lea.vmem [#allocation2], 24
    %449 = vst.msk [vmem:[%s448] sm:$0xff] %vm302, %v390
    %450 = vst.msk [vmem:[%s448 + $0x8] sm:$0xff] %vm302, %v395
    %451 = vst.msk [vmem:[%s448 + $0x10] sm:$0xff] %vm302, %v400
    %s452 = scalar_lea.vmem [#allocation2], 216
    %453 = vst.msk [vmem:[%s452] sm:$0xff] %vm302, %v405
    %454 = vst.msk [vmem:[%s452 + $0x8] sm:$0xff] %vm302, %v410
    %455 = vst.msk [vmem:[%s452 + $0x10] sm:$0xff] %vm302, %v415
    %s456 = scalar_lea.vmem [#allocation2], 408
    %457 = vst.msk [vmem:[%s456] sm:$0xff] %vm302, %v420
    %458 = vst.msk [vmem:[%s456 + $0x8] sm:$0xff] %vm302, %v425
    %459 = vst.msk [vmem:[%s456 + $0x10] sm:$0xff] %vm302, %v430
    %s460 = scalar_lea.vmem [#allocation2], 600
    %461 = vst.msk [vmem:[%s460] sm:$0xff] %vm302, %v435
    %462 = vst.msk [vmem:[%s460 + $0x8] sm:$0xff] %vm302, %v440
    %463 = vst.msk [vmem:[%s460 + $0x10] sm:$0xff] %vm302, %v445
    %s464 = scalar_lea.vmem %s0, 16
    %v465 = vld [vmem:[%s464] sm:$0x1f]
    %v467 = vsel %vm173, %v465, 0
    %469 = vmatprep.subr.mxu0 0.0
    %470 = vmatpush1.msra.mxu0 0.0
    %471 = vmatprep.subr.mxu0 0.0
    %472 = vmatpush1.msra.mxu0 0.0
    %473 = vmatprep.subr.mxu0 0.0
    %474 = vmatpush1.msra.mxu0 0.0
    %475 = vmatprep.subr.mxu0 0.0
    %476 = vmatpush1.msra.mxu0 0.0
    %477 = vmatprep.subr.mxu0 0.0
    %478 = vmatpush1.msra.mxu0 0.0
    %479 = vmatprep.subr.mxu0 0.0
    %480 = vmatpush1.msra.mxu0 0.0
    %481 = vmatprep.subr.mxu0 0.0
    %482 = vmatpush1.msra.mxu0 0.0
    %483 = vmatprep.subr.mxu0 0.0
    %484 = vmatpush1.msra.mxu0 0.0
    %485 = vmatprep.subr.mxu0 0.0
    %486 = vmatpush1.msra.mxu0 0.0
    %487 = vmatprep.subr.mxu0 0.0
    %488 = vmatpush1.msra.mxu0 0.0
    %489 = vmatprep.subr.mxu0 0.0
    %490 = vmatpush1.msra.mxu0 0.0
    %491 = vmatprep.subr.mxu0 0.0
    %492 = vmatpush1.msra.mxu0 0.0
    %493 = vmatprep.subr.mxu0 0.0
    %494 = vmatpush1.msra.mxu0 0.0
    %495 = vmatprep.subr.mxu0 0.0
    %496 = vmatpush1.msra.mxu0 0.0
    %497 = vmatprep.subr.mxu0 0.0
    %498 = vmatpush1.msra.mxu0 0.0
    %499 = vmatprep.subr.mxu0 0.0
    %500 = vmatpush1.msra.mxu0 %v467
    %501 = vmatprep.subr.mxu0 0.0
    %502 = vmatpush2.msra.mxu0 0.0
    %503 = vmatprep.subr.mxu0 0.0
    %504 = vmatpush2.msra.mxu0 0.0
    %505 = vmatprep.subr.mxu0 0.0
    %506 = vmatpush2.msra.mxu0 0.0
    %507 = vmatprep.subr.mxu0 0.0
    %508 = vmatpush2.msra.mxu0 0.0
    %509 = vmatprep.subr.mxu0 0.0
    %510 = vmatpush2.msra.mxu0 0.0
    %511 = vmatprep.subr.mxu0 0.0
    %512 = vmatpush2.msra.mxu0 0.0
    %513 = vmatprep.subr.mxu0 0.0
    %514 = vmatpush2.msra.mxu0 0.0
    %515 = vmatprep.subr.mxu0 0.0
    %516 = vmatpush2.msra.mxu0 0.0
    %517 = vmatprep.subr.mxu0 0.0
    %518 = vmatpush2.msra.mxu0 0.0
    %519 = vmatprep.subr.mxu0 0.0
    %520 = vmatpush2.msra.mxu0 0.0
    %521 = vmatprep.subr.mxu0 0.0
    %522 = vmatpush2.msra.mxu0 0.0
    %523 = vmatprep.subr.mxu0 0.0
    %524 = vmatpush2.msra.mxu0 0.0
    %525 = vmatprep.subr.mxu0 0.0
    %526 = vmatpush2.msra.mxu0 0.0
    %527 = vmatprep.subr.mxu0 0.0
    %528 = vmatpush2.msra.mxu0 0.0
    %529 = vmatprep.subr.mxu0 0.0
    %530 = vmatpush2.msra.mxu0 0.0
    %531 = vmatprep.subr.mxu0 0.0
    %532 = vmatpush2.msra.mxu0 0.0
    %533 = vmatprep.mubr.f32.mxu0 0.0
    %534 = vmatmul.mubr.f32.gmra.mxu0 %v138
    %v535 = vpop.f32.mrf.mxu0
    %v536 = vadd.f32 %v79, %v535
    %v537 = vpop.f32.mrf.mxu0
    %538 = vmatprep.mubr.f32.mxu0 0.0
    %539 = vmatmul.mubr.f32.gmra.mxu0 %v141
    %v540 = vpop.f32.mrf.mxu0
    %v541 = vadd.f32 %v84, %v540
    %v542 = vpop.f32.mrf.mxu0
    %543 = vmatprep.mubr.f32.mxu0 0.0
    %544 = vmatmul.mubr.f32.gmra.mxu0 %v144
    %v545 = vpop.f32.mrf.mxu0
    %v546 = vadd.f32 %v89, %v545
    %v547 = vpop.f32.mrf.mxu0
    %548 = vmatprep.mubr.f32.mxu0 0.0
    %549 = vmatmul.mubr.f32.gmra.mxu0 %v147
    %v550 = vpop.f32.mrf.mxu0
    %v551 = vadd.f32 %v94, %v550
    %v552 = vpop.f32.mrf.mxu0
    %553 = vmatprep.mubr.f32.mxu0 0.0
    %554 = vmatmul.mubr.f32.gmra.mxu0 %v150
    %v555 = vpop.f32.mrf.mxu0
    %v556 = vadd.f32 %v99, %v555
    %v557 = vpop.f32.mrf.mxu0
    %558 = vmatprep.mubr.f32.mxu0 0.0
    %559 = vmatmul.mubr.f32.gmra.mxu0 %v153
    %v560 = vpop.f32.mrf.mxu0
    %v561 = vadd.f32 %v104, %v560
    %v562 = vpop.f32.mrf.mxu0
    %563 = vmatprep.mubr.f32.mxu0 0.0
    %564 = vmatmul.mubr.f32.gmra.mxu0 %v156
    %v565 = vpop.f32.mrf.mxu0
    %v566 = vadd.f32 %v109, %v565
    %v567 = vpop.f32.mrf.mxu0
    %568 = vmatprep.mubr.f32.mxu0 0.0
    %569 = vmatmul.mubr.f32.gmra.mxu0 %v159
    %v570 = vpop.f32.mrf.mxu0
    %v571 = vadd.f32 %v114, %v570
    %v572 = vpop.f32.mrf.mxu0
    %573 = vmatprep.mubr.f32.mxu0 0.0
    %574 = vmatmul.mubr.f32.gmra.mxu0 %v162
    %v575 = vpop.f32.mrf.mxu0
    %v576 = vadd.f32 %v119, %v575
    %v577 = vpop.f32.mrf.mxu0
    %578 = vmatprep.mubr.f32.mxu0 0.0
    %579 = vmatmul.mubr.f32.gmra.mxu0 %v165
    %v580 = vpop.f32.mrf.mxu0
    %v581 = vadd.f32 %v124, %v580
    %v582 = vpop.f32.mrf.mxu0
    %583 = vmatprep.mubr.f32.mxu0 0.0
    %584 = vmatmul.mubr.f32.gmra.mxu0 %v168
    %v585 = vpop.f32.mrf.mxu0
    %v586 = vadd.f32 %v129, %v585
    %v587 = vpop.f32.mrf.mxu0
    %588 = vmatprep.mubr.f32.mxu0 0.0
    %589 = vmatmul.mubr.f32.gmra.mxu0 %v171
    %v590 = vpop.f32.mrf.mxu0
    %v591 = vadd.f32 %v134, %v590
    %v592 = vpop.f32.mrf.mxu0
    %593 = vdwg.mxu0
    %s594 = scalar_lea.vmem [#allocation2], 48
    %595 = vst.msk [vmem:[%s594] sm:$0xff] %vm302, %v536
    %596 = vst.msk [vmem:[%s594 + $0x8] sm:$0xff] %vm302, %v541
    %597 = vst.msk [vmem:[%s594 + $0x10] sm:$0xff] %vm302, %v546
    %s598 = scalar_lea.vmem [#allocation2], 240
    %599 = vst.msk [vmem:[%s598] sm:$0xff] %vm302, %v551
    %600 = vst.msk [vmem:[%s598 + $0x8] sm:$0xff] %vm302, %v556
    %601 = vst.msk [vmem:[%s598 + $0x10] sm:$0xff] %vm302, %v561
    %s602 = scalar_lea.vmem [#allocation2], 432
    %603 = vst.msk [vmem:[%s602] sm:$0xff] %vm302, %v566
    %604 = vst.msk [vmem:[%s602 + $0x8] sm:$0xff] %vm302, %v571
    %605 = vst.msk [vmem:[%s602 + $0x10] sm:$0xff] %vm302, %v576
    %s606 = scalar_lea.vmem [#allocation2], 624
    %607 = vst.msk [vmem:[%s606] sm:$0xff] %vm302, %v581
    %608 = vst.msk [vmem:[%s606 + $0x8] sm:$0xff] %vm302, %v586
    %609 = vst.msk [vmem:[%s606 + $0x10] sm:$0xff] %vm302, %v591
    %s610 = scalar_lea.vmem %s0, 24
    %v611 = vld [vmem:[%s610] sm:$0x1f]
    %v613 = vsel %vm173, %v611, 0
    %615 = vmatprep.subr.mxu0 0.0
    %616 = vmatpush1.msra.mxu0 0.0
    %617 = vmatprep.subr.mxu0 0.0
    %618 = vmatpush1.msra.mxu0 0.0
    %619 = vmatprep.subr.mxu0 0.0
    %620 = vmatpush1.msra.mxu0 0.0
    %621 = vmatprep.subr.mxu0 0.0
    %622 = vmatpush1.msra.mxu0 0.0
    %623 = vmatprep.subr.mxu0 0.0
    %624 = vmatpush1.msra.mxu0 0.0
    %625 = vmatprep.subr.mxu0 0.0
    %626 = vmatpush1.msra.mxu0 0.0
    %627 = vmatprep.subr.mxu0 0.0
    %628 = vmatpush1.msra.mxu0 0.0
    %629 = vmatprep.subr.mxu0 0.0
    %630 = vmatpush1.msra.mxu0 0.0
    %631 = vmatprep.subr.mxu0 0.0
    %632 = vmatpush1.msra.mxu0 0.0
    %633 = vmatprep.subr.mxu0 0.0
    %634 = vmatpush1.msra.mxu0 0.0
    %635 = vmatprep.subr.mxu0 0.0
    %636 = vmatpush1.msra.mxu0 0.0
    %637 = vmatprep.subr.mxu0 0.0
    %638 = vmatpush1.msra.mxu0 0.0
    %639 = vmatprep.subr.mxu0 0.0
    %640 = vmatpush1.msra.mxu0 0.0
    %641 = vmatprep.subr.mxu0 0.0
    %642 = vmatpush1.msra.mxu0 0.0
    %643 = vmatprep.subr.mxu0 0.0
    %644 = vmatpush1.msra.mxu0 0.0
    %645 = vmatprep.subr.mxu0 0.0
    %646 = vmatpush1.msra.mxu0 %v613
    %647 = vmatprep.subr.mxu0 0.0
    %648 = vmatpush2.msra.mxu0 0.0
    %649 = vmatprep.subr.mxu0 0.0
    %650 = vmatpush2.msra.mxu0 0.0
    %651 = vmatprep.subr.mxu0 0.0
    %652 = vmatpush2.msra.mxu0 0.0
    %653 = vmatprep.subr.mxu0 0.0
    %654 = vmatpush2.msra.mxu0 0.0
    %655 = vmatprep.subr.mxu0 0.0
    %656 = vmatpush2.msra.mxu0 0.0
    %657 = vmatprep.subr.mxu0 0.0
    %658 = vmatpush2.msra.mxu0 0.0
    %659 = vmatprep.subr.mxu0 0.0
    %660 = vmatpush2.msra.mxu0 0.0
    %661 = vmatprep.subr.mxu0 0.0
    %662 = vmatpush2.msra.mxu0 0.0
    %663 = vmatprep.subr.mxu0 0.0
    %664 = vmatpush2.msra.mxu0 0.0
    %665 = vmatprep.subr.mxu0 0.0
    %666 = vmatpush2.msra.mxu0 0.0
    %667 = vmatprep.subr.mxu0 0.0
    %668 = vmatpush2.msra.mxu0 0.0
    %669 = vmatprep.subr.mxu0 0.0
    %670 = vmatpush2.msra.mxu0 0.0
    %671 = vmatprep.subr.mxu0 0.0
    %672 = vmatpush2.msra.mxu0 0.0
    %673 = vmatprep.subr.mxu0 0.0
    %674 = vmatpush2.msra.mxu0 0.0
    %675 = vmatprep.subr.mxu0 0.0
    %676 = vmatpush2.msra.mxu0 0.0
    %677 = vmatprep.subr.mxu0 0.0
    %678 = vmatpush2.msra.mxu0 0.0
    %679 = vmatprep.mubr.f32.mxu0 0.0
    %680 = vmatmul.mubr.f32.gmra.mxu0 %v138
    %v681 = vpop.f32.mrf.mxu0
    %v682 = vadd.f32 %v79, %v681
    %v683 = vpop.f32.mrf.mxu0
    %684 = vmatprep.mubr.f32.mxu0 0.0
    %685 = vmatmul.mubr.f32.gmra.mxu0 %v141
    %v686 = vpop.f32.mrf.mxu0
    %v687 = vadd.f32 %v84, %v686
    %v688 = vpop.f32.mrf.mxu0
    %689 = vmatprep.mubr.f32.mxu0 0.0
    %690 = vmatmul.mubr.f32.gmra.mxu0 %v144
    %v691 = vpop.f32.mrf.mxu0
    %v692 = vadd.f32 %v89, %v691
    %v693 = vpop.f32.mrf.mxu0
    %694 = vmatprep.mubr.f32.mxu0 0.0
    %695 = vmatmul.mubr.f32.gmra.mxu0 %v147
    %v696 = vpop.f32.mrf.mxu0
    %v697 = vadd.f32 %v94, %v696
    %v698 = vpop.f32.mrf.mxu0
    %699 = vmatprep.mubr.f32.mxu0 0.0
    %700 = vmatmul.mubr.f32.gmra.mxu0 %v150
    %v701 = vpop.f32.mrf.mxu0
    %v702 = vadd.f32 %v99, %v701
    %v703 = vpop.f32.mrf.mxu0
    %704 = vmatprep.mubr.f32.mxu0 0.0
    %705 = vmatmul.mubr.f32.gmra.mxu0 %v153
    %v706 = vpop.f32.mrf.mxu0
    %v707 = vadd.f32 %v104, %v706
    %v708 = vpop.f32.mrf.mxu0
    %709 = vmatprep.mubr.f32.mxu0 0.0
    %710 = vmatmul.mubr.f32.gmra.mxu0 %v156
    %v711 = vpop.f32.mrf.mxu0
    %v712 = vadd.f32 %v109, %v711
    %v713 = vpop.f32.mrf.mxu0
    %714 = vmatprep.mubr.f32.mxu0 0.0
    %715 = vmatmul.mubr.f32.gmra.mxu0 %v159
    %v716 = vpop.f32.mrf.mxu0
    %v717 = vadd.f32 %v114, %v716
    %v718 = vpop.f32.mrf.mxu0
    %719 = vmatprep.mubr.f32.mxu0 0.0
    %720 = vmatmul.mubr.f32.gmra.mxu0 %v162
    %v721 = vpop.f32.mrf.mxu0
    %v722 = vadd.f32 %v119, %v721
    %v723 = vpop.f32.mrf.mxu0
    %724 = vmatprep.mubr.f32.mxu0 0.0
    %725 = vmatmul.mubr.f32.gmra.mxu0 %v165
    %v726 = vpop.f32.mrf.mxu0
    %v727 = vadd.f32 %v124, %v726
    %v728 = vpop.f32.mrf.mxu0
    %729 = vmatprep.mubr.f32.mxu0 0.0
    %730 = vmatmul.mubr.f32.gmra.mxu0 %v168
    %v731 = vpop.f32.mrf.mxu0
    %v732 = vadd.f32 %v129, %v731
    %v733 = vpop.f32.mrf.mxu0
    %734 = vmatprep.mubr.f32.mxu0 0.0
    %735 = vmatmul.mubr.f32.gmra.mxu0 %v171
    %v736 = vpop.f32.mrf.mxu0
    %v737 = vadd.f32 %v134, %v736
    %v738 = vpop.f32.mrf.mxu0
    %739 = vdwg.mxu0
    %s740 = scalar_lea.vmem [#allocation2], 72
    %741 = vst.msk [vmem:[%s740] sm:$0xff] %vm302, %v682
    %742 = vst.msk [vmem:[%s740 + $0x8] sm:$0xff] %vm302, %v687
    %743 = vst.msk [vmem:[%s740 + $0x10] sm:$0xff] %vm302, %v692
    %s744 = scalar_lea.vmem [#allocation2], 264
    %745 = vst.msk [vmem:[%s744] sm:$0xff] %vm302, %v697
    %746 = vst.msk [vmem:[%s744 + $0x8] sm:$0xff] %vm302, %v702
    %747 = vst.msk [vmem:[%s744 + $0x10] sm:$0xff] %vm302, %v707
    %s748 = scalar_lea.vmem [#allocation2], 456
    %749 = vst.msk [vmem:[%s748] sm:$0xff] %vm302, %v712
    %750 = vst.msk [vmem:[%s748 + $0x8] sm:$0xff] %vm302, %v717
    %751 = vst.msk [vmem:[%s748 + $0x10] sm:$0xff] %vm302, %v722
    %s752 = scalar_lea.vmem [#allocation2], 648
    %753 = vst.msk [vmem:[%s752] sm:$0xff] %vm302, %v727
    %754 = vst.msk [vmem:[%s752 + $0x8] sm:$0xff] %vm302, %v732
    %755 = vst.msk [vmem:[%s752 + $0x10] sm:$0xff] %vm302, %v737
    %s756 = scalar_lea.vmem %s0, 32
    %v757 = vld [vmem:[%s756] sm:$0x1f]
    %v759 = vsel %vm173, %v757, 0
    %761 = vmatprep.subr.mxu0 0.0
    %762 = vmatpush1.msra.mxu0 0.0
    %763 = vmatprep.subr.mxu0 0.0
    %764 = vmatpush1.msra.mxu0 0.0
    %765 = vmatprep.subr.mxu0 0.0
    %766 = vmatpush1.msra.mxu0 0.0
    %767 = vmatprep.subr.mxu0 0.0
    %768 = vmatpush1.msra.mxu0 0.0
    %769 = vmatprep.subr.mxu0 0.0
    %770 = vmatpush1.msra.mxu0 0.0
    %771 = vmatprep.subr.mxu0 0.0
    %772 = vmatpush1.msra.mxu0 0.0
    %773 = vmatprep.subr.mxu0 0.0
    %774 = vmatpush1.msra.mxu0 0.0
    %775 = vmatprep.subr.mxu0 0.0
    %776 = vmatpush1.msra.mxu0 0.0
    %777 = vmatprep.subr.mxu0 0.0
    %778 = vmatpush1.msra.mxu0 0.0
    %779 = vmatprep.subr.mxu0 0.0
    %780 = vmatpush1.msra.mxu0 0.0
    %781 = vmatprep.subr.mxu0 0.0
    %782 = vmatpush1.msra.mxu0 0.0
    %783 = vmatprep.subr.mxu0 0.0
    %784 = vmatpush1.msra.mxu0 0.0
    %785 = vmatprep.subr.mxu0 0.0
    %786 = vmatpush1.msra.mxu0 0.0
    %787 = vmatprep.subr.mxu0 0.0
    %788 = vmatpush1.msra.mxu0 0.0
    %789 = vmatprep.subr.mxu0 0.0
    %790 = vmatpush1.msra.mxu0 0.0
    %791 = vmatprep.subr.mxu0 0.0
    %792 = vmatpush1.msra.mxu0 %v759
    %793 = vmatprep.subr.mxu0 0.0
    %794 = vmatpush2.msra.mxu0 0.0
    %795 = vmatprep.subr.mxu0 0.0
    %796 = vmatpush2.msra.mxu0 0.0
    %797 = vmatprep.subr.mxu0 0.0
    %798 = vmatpush2.msra.mxu0 0.0
    %799 = vmatprep.subr.mxu0 0.0
    %800 = vmatpush2.msra.mxu0 0.0
    %801 = vmatprep.subr.mxu0 0.0
    %802 = vmatpush2.msra.mxu0 0.0
    %803 = vmatprep.subr.mxu0 0.0
    %804 = vmatpush2.msra.mxu0 0.0
    %805 = vmatprep.subr.mxu0 0.0
    %806 = vmatpush2.msra.mxu0 0.0
    %807 = vmatprep.subr.mxu0 0.0
    %808 = vmatpush2.msra.mxu0 0.0
    %809 = vmatprep.subr.mxu0 0.0
    %810 = vmatpush2.msra.mxu0 0.0
    %811 = vmatprep.subr.mxu0 0.0
    %812 = vmatpush2.msra.mxu0 0.0
    %813 = vmatprep.subr.mxu0 0.0
    %814 = vmatpush2.msra.mxu0 0.0
    %815 = vmatprep.subr.mxu0 0.0
    %816 = vmatpush2.msra.mxu0 0.0
    %817 = vmatprep.subr.mxu0 0.0
    %818 = vmatpush2.msra.mxu0 0.0
    %819 = vmatprep.subr.mxu0 0.0
    %820 = vmatpush2.msra.mxu0 0.0
    %821 = vmatprep.subr.mxu0 0.0
    %822 = vmatpush2.msra.mxu0 0.0
    %823 = vmatprep.subr.mxu0 0.0
    %824 = vmatpush2.msra.mxu0 0.0
    %825 = vmatprep.mubr.f32.mxu0 0.0
    %826 = vmatmul.mubr.f32.gmra.mxu0 %v138
    %v827 = vpop.f32.mrf.mxu0
    %v828 = vadd.f32 %v79, %v827
    %v829 = vpop.f32.mrf.mxu0
    %830 = vmatprep.mubr.f32.mxu0 0.0
    %831 = vmatmul.mubr.f32.gmra.mxu0 %v141
    %v832 = vpop.f32.mrf.mxu0
    %v833 = vadd.f32 %v84, %v832
    %v834 = vpop.f32.mrf.mxu0
    %835 = vmatprep.mubr.f32.mxu0 0.0
    %836 = vmatmul.mubr.f32.gmra.mxu0 %v144
    %v837 = vpop.f32.mrf.mxu0
    %v838 = vadd.f32 %v89, %v837
    %v839 = vpop.f32.mrf.mxu0
    %840 = vmatprep.mubr.f32.mxu0 0.0
    %841 = vmatmul.mubr.f32.gmra.mxu0 %v147
    %v842 = vpop.f32.mrf.mxu0
    %v843 = vadd.f32 %v94, %v842
    %v844 = vpop.f32.mrf.mxu0
    %845 = vmatprep.mubr.f32.mxu0 0.0
    %846 = vmatmul.mubr.f32.gmra.mxu0 %v150
    %v847 = vpop.f32.mrf.mxu0
    %v848 = vadd.f32 %v99, %v847
    %v849 = vpop.f32.mrf.mxu0
    %850 = vmatprep.mubr.f32.mxu0 0.0
    %851 = vmatmul.mubr.f32.gmra.mxu0 %v153
    %v852 = vpop.f32.mrf.mxu0
    %v853 = vadd.f32 %v104, %v852
    %v854 = vpop.f32.mrf.mxu0
    %855 = vmatprep.mubr.f32.mxu0 0.0
    %856 = vmatmul.mubr.f32.gmra.mxu0 %v156
    %v857 = vpop.f32.mrf.mxu0
    %v858 = vadd.f32 %v109, %v857
    %v859 = vpop.f32.mrf.mxu0
    %860 = vmatprep.mubr.f32.mxu0 0.0
    %861 = vmatmul.mubr.f32.gmra.mxu0 %v159
    %v862 = vpop.f32.mrf.mxu0
    %v863 = vadd.f32 %v114, %v862
    %v864 = vpop.f32.mrf.mxu0
    %865 = vmatprep.mubr.f32.mxu0 0.0
    %866 = vmatmul.mubr.f32.gmra.mxu0 %v162
    %v867 = vpop.f32.mrf.mxu0
    %v868 = vadd.f32 %v119, %v867
    %v869 = vpop.f32.mrf.mxu0
    %870 = vmatprep.mubr.f32.mxu0 0.0
    %871 = vmatmul.mubr.f32.gmra.mxu0 %v165
    %v872 = vpop.f32.mrf.mxu0
    %v873 = vadd.f32 %v124, %v872
    %v874 = vpop.f32.mrf.mxu0
    %875 = vmatprep.mubr.f32.mxu0 0.0
    %876 = vmatmul.mubr.f32.gmra.mxu0 %v168
    %v877 = vpop.f32.mrf.mxu0
    %v878 = vadd.f32 %v129, %v877
    %v879 = vpop.f32.mrf.mxu0
    %880 = vmatprep.mubr.f32.mxu0 0.0
    %881 = vmatmul.mubr.f32.gmra.mxu0 %v171
    %v882 = vpop.f32.mrf.mxu0
    %v883 = vadd.f32 %v134, %v882
    %v884 = vpop.f32.mrf.mxu0
    %885 = vdwg.mxu0
    %s886 = scalar_lea.vmem [#allocation2], 96
    %887 = vst.msk [vmem:[%s886] sm:$0xff] %vm302, %v828
    %888 = vst.msk [vmem:[%s886 + $0x8] sm:$0xff] %vm302, %v833
    %889 = vst.msk [vmem:[%s886 + $0x10] sm:$0xff] %vm302, %v838
    %s890 = scalar_lea.vmem [#allocation2], 288
    %891 = vst.msk [vmem:[%s890] sm:$0xff] %vm302, %v843
    %892 = vst.msk [vmem:[%s890 + $0x8] sm:$0xff] %vm302, %v848
    %893 = vst.msk [vmem:[%s890 + $0x10] sm:$0xff] %vm302, %v853
    %s894 = scalar_lea.vmem [#allocation2], 480
    %895 = vst.msk [vmem:[%s894] sm:$0xff] %vm302, %v858
    %896 = vst.msk [vmem:[%s894 + $0x8] sm:$0xff] %vm302, %v863
    %897 = vst.msk [vmem:[%s894 + $0x10] sm:$0xff] %vm302, %v868
    %s898 = scalar_lea.vmem [#allocation2], 672
    %899 = vst.msk [vmem:[%s898] sm:$0xff] %vm302, %v873
    %900 = vst.msk [vmem:[%s898 + $0x8] sm:$0xff] %vm302, %v878
    %901 = vst.msk [vmem:[%s898 + $0x10] sm:$0xff] %vm302, %v883
    %s902 = scalar_lea.vmem %s0, 40
    %v903 = vld [vmem:[%s902] sm:$0x1f]
    %v905 = vsel %vm173, %v903, 0
    %907 = vmatprep.subr.mxu0 0.0
    %908 = vmatpush1.msra.mxu0 0.0
    %909 = vmatprep.subr.mxu0 0.0
    %910 = vmatpush1.msra.mxu0 0.0
    %911 = vmatprep.subr.mxu0 0.0
    %912 = vmatpush1.msra.mxu0 0.0
    %913 = vmatprep.subr.mxu0 0.0
    %914 = vmatpush1.msra.mxu0 0.0
    %915 = vmatprep.subr.mxu0 0.0
    %916 = vmatpush1.msra.mxu0 0.0
    %917 = vmatprep.subr.mxu0 0.0
    %918 = vmatpush1.msra.mxu0 0.0
    %919 = vmatprep.subr.mxu0 0.0
    %920 = vmatpush1.msra.mxu0 0.0
    %921 = vmatprep.subr.mxu0 0.0
    %922 = vmatpush1.msra.mxu0 0.0
    %923 = vmatprep.subr.mxu0 0.0
    %924 = vmatpush1.msra.mxu0 0.0
    %925 = vmatprep.subr.mxu0 0.0
    %926 = vmatpush1.msra.mxu0 0.0
    %927 = vmatprep.subr.mxu0 0.0
    %928 = vmatpush1.msra.mxu0 0.0
    %929 = vmatprep.subr.mxu0 0.0
    %930 = vmatpush1.msra.mxu0 0.0
    %931 = vmatprep.subr.mxu0 0.0
    %932 = vmatpush1.msra.mxu0 0.0
    %933 = vmatprep.subr.mxu0 0.0
    %934 = vmatpush1.msra.mxu0 0.0
    %935 = vmatprep.subr.mxu0 0.0
    %936 = vmatpush1.msra.mxu0 0.0
    %937 = vmatprep.subr.mxu0 0.0
    %938 = vmatpush1.msra.mxu0 %v905
    %939 = vmatprep.subr.mxu0 0.0
    %940 = vmatpush2.msra.mxu0 0.0
    %941 = vmatprep.subr.mxu0 0.0
    %942 = vmatpush2.msra.mxu0 0.0
    %943 = vmatprep.subr.mxu0 0.0
    %944 = vmatpush2.msra.mxu0 0.0
    %945 = vmatprep.subr.mxu0 0.0
    %946 = vmatpush2.msra.mxu0 0.0
    %947 = vmatprep.subr.mxu0 0.0
    %948 = vmatpush2.msra.mxu0 0.0
    %949 = vmatprep.subr.mxu0 0.0
    %950 = vmatpush2.msra.mxu0 0.0
    %951 = vmatprep.subr.mxu0 0.0
    %952 = vmatpush2.msra.mxu0 0.0
    %953 = vmatprep.subr.mxu0 0.0
    %954 = vmatpush2.msra.mxu0 0.0
    %955 = vmatprep.subr.mxu0 0.0
    %956 = vmatpush2.msra.mxu0 0.0
    %957 = vmatprep.subr.mxu0 0.0
    %958 = vmatpush2.msra.mxu0 0.0
    %959 = vmatprep.subr.mxu0 0.0
    %960 = vmatpush2.msra.mxu0 0.0
    %961 = vmatprep.subr.mxu0 0.0
    %962 = vmatpush2.msra.mxu0 0.0
    %963 = vmatprep.subr.mxu0 0.0
    %964 = vmatpush2.msra.mxu0 0.0
    %965 = vmatprep.subr.mxu0 0.0
    %966 = vmatpush2.msra.mxu0 0.0
    %967 = vmatprep.subr.mxu0 0.0
    %968 = vmatpush2.msra.mxu0 0.0
    %969 = vmatprep.subr.mxu0 0.0
    %970 = vmatpush2.msra.mxu0 0.0
    %971 = vmatprep.mubr.f32.mxu0 0.0
    %972 = vmatmul.mubr.f32.gmra.mxu0 %v138
    %v973 = vpop.f32.mrf.mxu0
    %v974 = vadd.f32 %v79, %v973
    %v975 = vpop.f32.mrf.mxu0
    %976 = vmatprep.mubr.f32.mxu0 0.0
    %977 = vmatmul.mubr.f32.gmra.mxu0 %v141
    %v978 = vpop.f32.mrf.mxu0
    %v979 = vadd.f32 %v84, %v978
    %v980 = vpop.f32.mrf.mxu0
    %981 = vmatprep.mubr.f32.mxu0 0.0
    %982 = vmatmul.mubr.f32.gmra.mxu0 %v144
    %v983 = vpop.f32.mrf.mxu0
    %v984 = vadd.f32 %v89, %v983
    %v985 = vpop.f32.mrf.mxu0
    %986 = vmatprep.mubr.f32.mxu0 0.0
    %987 = vmatmul.mubr.f32.gmra.mxu0 %v147
    %v988 = vpop.f32.mrf.mxu0
    %v989 = vadd.f32 %v94, %v988
    %v990 = vpop.f32.mrf.mxu0
    %991 = vmatprep.mubr.f32.mxu0 0.0
    %992 = vmatmul.mubr.f32.gmra.mxu0 %v150
    %v993 = vpop.f32.mrf.mxu0
    %v994 = vadd.f32 %v99, %v993
    %v995 = vpop.f32.mrf.mxu0
    %996 = vmatprep.mubr.f32.mxu0 0.0
    %997 = vmatmul.mubr.f32.gmra.mxu0 %v153
    %v998 = vpop.f32.mrf.mxu0
    %v999 = vadd.f32 %v104, %v998
    %v1000 = vpop.f32.mrf.mxu0
    %1001 = vmatprep.mubr.f32.mxu0 0.0
    %1002 = vmatmul.mubr.f32.gmra.mxu0 %v156
    %v1003 = vpop.f32.mrf.mxu0
    %v1004 = vadd.f32 %v109, %v1003
    %v1005 = vpop.f32.mrf.mxu0
    %1006 = vmatprep.mubr.f32.mxu0 0.0
    %1007 = vmatmul.mubr.f32.gmra.mxu0 %v159
    %v1008 = vpop.f32.mrf.mxu0
    %v1009 = vadd.f32 %v114, %v1008
    %v1010 = vpop.f32.mrf.mxu0
    %1011 = vmatprep.mubr.f32.mxu0 0.0
    %1012 = vmatmul.mubr.f32.gmra.mxu0 %v162
    %v1013 = vpop.f32.mrf.mxu0
    %v1014 = vadd.f32 %v119, %v1013
    %v1015 = vpop.f32.mrf.mxu0
    %1016 = vmatprep.mubr.f32.mxu0 0.0
    %1017 = vmatmul.mubr.f32.gmra.mxu0 %v165
    %v1018 = vpop.f32.mrf.mxu0
    %v1019 = vadd.f32 %v124, %v1018
    %v1020 = vpop.f32.mrf.mxu0
    %1021 = vmatprep.mubr.f32.mxu0 0.0
    %1022 = vmatmul.mubr.f32.gmra.mxu0 %v168
    %v1023 = vpop.f32.mrf.mxu0
    %v1024 = vadd.f32 %v129, %v1023
    %v1025 = vpop.f32.mrf.mxu0
    %1026 = vmatprep.mubr.f32.mxu0 0.0
    %1027 = vmatmul.mubr.f32.gmra.mxu0 %v171
    %v1028 = vpop.f32.mrf.mxu0
    %v1029 = vadd.f32 %v134, %v1028
    %v1030 = vpop.f32.mrf.mxu0
    %1031 = vdwg.mxu0
    %s1032 = scalar_lea.vmem [#allocation2], 120
    %1033 = vst.msk [vmem:[%s1032] sm:$0xff] %vm302, %v974
    %1034 = vst.msk [vmem:[%s1032 + $0x8] sm:$0xff] %vm302, %v979
    %1035 = vst.msk [vmem:[%s1032 + $0x10] sm:$0xff] %vm302, %v984
    %s1036 = scalar_lea.vmem [#allocation2], 312
    %1037 = vst.msk [vmem:[%s1036] sm:$0xff] %vm302, %v989
    %1038 = vst.msk [vmem:[%s1036 + $0x8] sm:$0xff] %vm302, %v994
    %1039 = vst.msk [vmem:[%s1036 + $0x10] sm:$0xff] %vm302, %v999
    %s1040 = scalar_lea.vmem [#allocation2], 504
    %1041 = vst.msk [vmem:[%s1040] sm:$0xff] %vm302, %v1004
    %1042 = vst.msk [vmem:[%s1040 + $0x8] sm:$0xff] %vm302, %v1009
    %1043 = vst.msk [vmem:[%s1040 + $0x10] sm:$0xff] %vm302, %v1014
    %s1044 = scalar_lea.vmem [#allocation2], 696
    %1045 = vst.msk [vmem:[%s1044] sm:$0xff] %vm302, %v1019
    %1046 = vst.msk [vmem:[%s1044 + $0x8] sm:$0xff] %vm302, %v1024
    %1047 = vst.msk [vmem:[%s1044 + $0x10] sm:$0xff] %vm302, %v1029
    %s1048 = scalar_lea.vmem %s0, 48
    %v1049 = vld [vmem:[%s1048] sm:$0x1f]
    %v1051 = vsel %vm173, %v1049, 0
    %1053 = vmatprep.subr.mxu0 0.0
    %1054 = vmatpush1.msra.mxu0 0.0
    %1055 = vmatprep.subr.mxu0 0.0
    %1056 = vmatpush1.msra.mxu0 0.0
    %1057 = vmatprep.subr.mxu0 0.0
    %1058 = vmatpush1.msra.mxu0 0.0
    %1059 = vmatprep.subr.mxu0 0.0
    %1060 = vmatpush1.msra.mxu0 0.0
    %1061 = vmatprep.subr.mxu0 0.0
    %1062 = vmatpush1.msra.mxu0 0.0
    %1063 = vmatprep.subr.mxu0 0.0
    %1064 = vmatpush1.msra.mxu0 0.0
    %1065 = vmatprep.subr.mxu0 0.0
    %1066 = vmatpush1.msra.mxu0 0.0
    %1067 = vmatprep.subr.mxu0 0.0
    %1068 = vmatpush1.msra.mxu0 0.0
    %1069 = vmatprep.subr.mxu0 0.0
    %1070 = vmatpush1.msra.mxu0 0.0
    %1071 = vmatprep.subr.mxu0 0.0
    %1072 = vmatpush1.msra.mxu0 0.0
    %1073 = vmatprep.subr.mxu0 0.0
    %1074 = vmatpush1.msra.mxu0 0.0
    %1075 = vmatprep.subr.mxu0 0.0
    %1076 = vmatpush1.msra.mxu0 0.0
    %1077 = vmatprep.subr.mxu0 0.0
    %1078 = vmatpush1.msra.mxu0 0.0
    %1079 = vmatprep.subr.mxu0 0.0
    %1080 = vmatpush1.msra.mxu0 0.0
    %1081 = vmatprep.subr.mxu0 0.0
    %1082 = vmatpush1.msra.mxu0 0.0
    %1083 = vmatprep.subr.mxu0 0.0
    %1084 = vmatpush1.msra.mxu0 %v1051
    %1085 = vmatprep.subr.mxu0 0.0
    %1086 = vmatpush2.msra.mxu0 0.0
    %1087 = vmatprep.subr.mxu0 0.0
    %1088 = vmatpush2.msra.mxu0 0.0
    %1089 = vmatprep.subr.mxu0 0.0
    %1090 = vmatpush2.msra.mxu0 0.0
    %1091 = vmatprep.subr.mxu0 0.0
    %1092 = vmatpush2.msra.mxu0 0.0
    %1093 = vmatprep.subr.mxu0 0.0
    %1094 = vmatpush2.msra.mxu0 0.0
    %1095 = vmatprep.subr.mxu0 0.0
    %1096 = vmatpush2.msra.mxu0 0.0
    %1097 = vmatprep.subr.mxu0 0.0
    %1098 = vmatpush2.msra.mxu0 0.0
    %1099 = vmatprep.subr.mxu0 0.0
    %1100 = vmatpush2.msra.mxu0 0.0
    %1101 = vmatprep.subr.mxu0 0.0
    %1102 = vmatpush2.msra.mxu0 0.0
    %1103 = vmatprep.subr.mxu0 0.0
    %1104 = vmatpush2.msra.mxu0 0.0
    %1105 = vmatprep.subr.mxu0 0.0
    %1106 = vmatpush2.msra.mxu0 0.0
    %1107 = vmatprep.subr.mxu0 0.0
    %1108 = vmatpush2.msra.mxu0 0.0
    %1109 = vmatprep.subr.mxu0 0.0
    %1110 = vmatpush2.msra.mxu0 0.0
    %1111 = vmatprep.subr.mxu0 0.0
    %1112 = vmatpush2.msra.mxu0 0.0
    %1113 = vmatprep.subr.mxu0 0.0
    %1114 = vmatpush2.msra.mxu0 0.0
    %1115 = vmatprep.subr.mxu0 0.0
    %1116 = vmatpush2.msra.mxu0 0.0
    %1117 = vmatprep.mubr.f32.mxu0 0.0
    %1118 = vmatmul.mubr.f32.gmra.mxu0 %v138
    %v1119 = vpop.f32.mrf.mxu0
    %v1120 = vadd.f32 %v79, %v1119
    %v1121 = vpop.f32.mrf.mxu0
    %1122 = vmatprep.mubr.f32.mxu0 0.0
    %1123 = vmatmul.mubr.f32.gmra.mxu0 %v141
    %v1124 = vpop.f32.mrf.mxu0
    %v1125 = vadd.f32 %v84, %v1124
    %v1126 = vpop.f32.mrf.mxu0
    %1127 = vmatprep.mubr.f32.mxu0 0.0
    %1128 = vmatmul.mubr.f32.gmra.mxu0 %v144
    %v1129 = vpop.f32.mrf.mxu0
    %v1130 = vadd.f32 %v89, %v1129
    %v1131 = vpop.f32.mrf.mxu0
    %1132 = vmatprep.mubr.f32.mxu0 0.0
    %1133 = vmatmul.mubr.f32.gmra.mxu0 %v147
    %v1134 = vpop.f32.mrf.mxu0
    %v1135 = vadd.f32 %v94, %v1134
    %v1136 = vpop.f32.mrf.mxu0
    %1137 = vmatprep.mubr.f32.mxu0 0.0
    %1138 = vmatmul.mubr.f32.gmra.mxu0 %v150
    %v1139 = vpop.f32.mrf.mxu0
    %v1140 = vadd.f32 %v99, %v1139
    %v1141 = vpop.f32.mrf.mxu0
    %1142 = vmatprep.mubr.f32.mxu0 0.0
    %1143 = vmatmul.mubr.f32.gmra.mxu0 %v153
    %v1144 = vpop.f32.mrf.mxu0
    %v1145 = vadd.f32 %v104, %v1144
    %v1146 = vpop.f32.mrf.mxu0
    %1147 = vmatprep.mubr.f32.mxu0 0.0
    %1148 = vmatmul.mubr.f32.gmra.mxu0 %v156
    %v1149 = vpop.f32.mrf.mxu0
    %v1150 = vadd.f32 %v109, %v1149
    %v1151 = vpop.f32.mrf.mxu0
    %1152 = vmatprep.mubr.f32.mxu0 0.0
    %1153 = vmatmul.mubr.f32.gmra.mxu0 %v159
    %v1154 = vpop.f32.mrf.mxu0
    %v1155 = vadd.f32 %v114, %v1154
    %v1156 = vpop.f32.mrf.mxu0
    %1157 = vmatprep.mubr.f32.mxu0 0.0
    %1158 = vmatmul.mubr.f32.gmra.mxu0 %v162
    %v1159 = vpop.f32.mrf.mxu0
    %v1160 = vadd.f32 %v119, %v1159
    %v1161 = vpop.f32.mrf.mxu0
    %1162 = vmatprep.mubr.f32.mxu0 0.0
    %1163 = vmatmul.mubr.f32.gmra.mxu0 %v165
    %v1164 = vpop.f32.mrf.mxu0
    %v1165 = vadd.f32 %v124, %v1164
    %v1166 = vpop.f32.mrf.mxu0
    %1167 = vmatprep.mubr.f32.mxu0 0.0
    %1168 = vmatmul.mubr.f32.gmra.mxu0 %v168
    %v1169 = vpop.f32.mrf.mxu0
    %v1170 = vadd.f32 %v129, %v1169
    %v1171 = vpop.f32.mrf.mxu0
    %1172 = vmatprep.mubr.f32.mxu0 0.0
    %1173 = vmatmul.mubr.f32.gmra.mxu0 %v171
    %v1174 = vpop.f32.mrf.mxu0
    %v1175 = vadd.f32 %v134, %v1174
    %v1176 = vpop.f32.mrf.mxu0
    %1177 = vdwg.mxu0
    %s1178 = scalar_lea.vmem [#allocation2], 144
    %1179 = vst.msk [vmem:[%s1178] sm:$0xff] %vm302, %v1120
    %1180 = vst.msk [vmem:[%s1178 + $0x8] sm:$0xff] %vm302, %v1125
    %1181 = vst.msk [vmem:[%s1178 + $0x10] sm:$0xff] %vm302, %v1130
    %s1182 = scalar_lea.vmem [#allocation2], 336
    %1183 = vst.msk [vmem:[%s1182] sm:$0xff] %vm302, %v1135
    %1184 = vst.msk [vmem:[%s1182 + $0x8] sm:$0xff] %vm302, %v1140
    %1185 = vst.msk [vmem:[%s1182 + $0x10] sm:$0xff] %vm302, %v1145
    %s1186 = scalar_lea.vmem [#allocation2], 528
    %1187 = vst.msk [vmem:[%s1186] sm:$0xff] %vm302, %v1150
    %1188 = vst.msk [vmem:[%s1186 + $0x8] sm:$0xff] %vm302, %v1155
    %1189 = vst.msk [vmem:[%s1186 + $0x10] sm:$0xff] %vm302, %v1160
    %s1190 = scalar_lea.vmem [#allocation2], 720
    %1191 = vst.msk [vmem:[%s1190] sm:$0xff] %vm302, %v1165
    %1192 = vst.msk [vmem:[%s1190 + $0x8] sm:$0xff] %vm302, %v1170
    %1193 = vst.msk [vmem:[%s1190 + $0x10] sm:$0xff] %vm302, %v1175
    %s1194 = scalar_lea.vmem %s0, 56
    %v1195 = vld [vmem:[%s1194] sm:$0x1f]
    %v1197 = vsel %vm173, %v1195, 0
    %1199 = vmatprep.subr.mxu0 0.0
    %1200 = vmatpush1.msra.mxu0 0.0
    %1201 = vmatprep.subr.mxu0 0.0
    %1202 = vmatpush1.msra.mxu0 0.0
    %1203 = vmatprep.subr.mxu0 0.0
    %1204 = vmatpush1.msra.mxu0 0.0
    %1205 = vmatprep.subr.mxu0 0.0
    %1206 = vmatpush1.msra.mxu0 0.0
    %1207 = vmatprep.subr.mxu0 0.0
    %1208 = vmatpush1.msra.mxu0 0.0
    %1209 = vmatprep.subr.mxu0 0.0
    %1210 = vmatpush1.msra.mxu0 0.0
    %1211 = vmatprep.subr.mxu0 0.0
    %1212 = vmatpush1.msra.mxu0 0.0
    %1213 = vmatprep.subr.mxu0 0.0
    %1214 = vmatpush1.msra.mxu0 0.0
    %1215 = vmatprep.subr.mxu0 0.0
    %1216 = vmatpush1.msra.mxu0 0.0
    %1217 = vmatprep.subr.mxu0 0.0
    %1218 = vmatpush1.msra.mxu0 0.0
    %1219 = vmatprep.subr.mxu0 0.0
    %1220 = vmatpush1.msra.mxu0 0.0
    %1221 = vmatprep.subr.mxu0 0.0
    %1222 = vmatpush1.msra.mxu0 0.0
    %1223 = vmatprep.subr.mxu0 0.0
    %1224 = vmatpush1.msra.mxu0 0.0
    %1225 = vmatprep.subr.mxu0 0.0
    %1226 = vmatpush1.msra.mxu0 0.0
    %1227 = vmatprep.subr.mxu0 0.0
    %1228 = vmatpush1.msra.mxu0 0.0
    %1229 = vmatprep.subr.mxu0 0.0
    %1230 = vmatpush1.msra.mxu0 %v1197
    %1231 = vmatprep.subr.mxu0 0.0
    %1232 = vmatpush2.msra.mxu0 0.0
    %1233 = vmatprep.subr.mxu0 0.0
    %1234 = vmatpush2.msra.mxu0 0.0
    %1235 = vmatprep.subr.mxu0 0.0
    %1236 = vmatpush2.msra.mxu0 0.0
    %1237 = vmatprep.subr.mxu0 0.0
    %1238 = vmatpush2.msra.mxu0 0.0
    %1239 = vmatprep.subr.mxu0 0.0
    %1240 = vmatpush2.msra.mxu0 0.0
    %1241 = vmatprep.subr.mxu0 0.0
    %1242 = vmatpush2.msra.mxu0 0.0
    %1243 = vmatprep.subr.mxu0 0.0
    %1244 = vmatpush2.msra.mxu0 0.0
    %1245 = vmatprep.subr.mxu0 0.0
    %1246 = vmatpush2.msra.mxu0 0.0
    %1247 = vmatprep.subr.mxu0 0.0
    %1248 = vmatpush2.msra.mxu0 0.0
    %1249 = vmatprep.subr.mxu0 0.0
    %1250 = vmatpush2.msra.mxu0 0.0
    %1251 = vmatprep.subr.mxu0 0.0
    %1252 = vmatpush2.msra.mxu0 0.0
    %1253 = vmatprep.subr.mxu0 0.0
    %1254 = vmatpush2.msra.mxu0 0.0
    %1255 = vmatprep.subr.mxu0 0.0
    %1256 = vmatpush2.msra.mxu0 0.0
    %1257 = vmatprep.subr.mxu0 0.0
    %1258 = vmatpush2.msra.mxu0 0.0
    %1259 = vmatprep.subr.mxu0 0.0
    %1260 = vmatpush2.msra.mxu0 0.0
    %1261 = vmatprep.subr.mxu0 0.0
    %1262 = vmatpush2.msra.mxu0 0.0
    %1263 = vmatprep.mubr.f32.mxu0 0.0
    %1264 = vmatmul.mubr.f32.gmra.mxu0 %v138
    %v1265 = vpop.f32.mrf.mxu0
    %v1266 = vadd.f32 %v79, %v1265
    %v1267 = vpop.f32.mrf.mxu0
    %1268 = vmatprep.mubr.f32.mxu0 0.0
    %1269 = vmatmul.mubr.f32.gmra.mxu0 %v141
    %v1270 = vpop.f32.mrf.mxu0
    %v1271 = vadd.f32 %v84, %v1270
    %v1272 = vpop.f32.mrf.mxu0
    %1273 = vmatprep.mubr.f32.mxu0 0.0
    %1274 = vmatmul.mubr.f32.gmra.mxu0 %v144
    %v1275 = vpop.f32.mrf.mxu0
    %v1276 = vadd.f32 %v89, %v1275
    %v1277 = vpop.f32.mrf.mxu0
    %1278 = vmatprep.mubr.f32.mxu0 0.0
    %1279 = vmatmul.mubr.f32.gmra.mxu0 %v147
    %v1280 = vpop.f32.mrf.mxu0
    %v1281 = vadd.f32 %v94, %v1280
    %v1282 = vpop.f32.mrf.mxu0
    %1283 = vmatprep.mubr.f32.mxu0 0.0
    %1284 = vmatmul.mubr.f32.gmra.mxu0 %v150
    %v1285 = vpop.f32.mrf.mxu0
    %v1286 = vadd.f32 %v99, %v1285
    %v1287 = vpop.f32.mrf.mxu0
    %1288 = vmatprep.mubr.f32.mxu0 0.0
    %1289 = vmatmul.mubr.f32.gmra.mxu0 %v153
    %v1290 = vpop.f32.mrf.mxu0
    %v1291 = vadd.f32 %v104, %v1290
    %v1292 = vpop.f32.mrf.mxu0
    %1293 = vmatprep.mubr.f32.mxu0 0.0
    %1294 = vmatmul.mubr.f32.gmra.mxu0 %v156
    %v1295 = vpop.f32.mrf.mxu0
    %v1296 = vadd.f32 %v109, %v1295
    %v1297 = vpop.f32.mrf.mxu0
    %1298 = vmatprep.mubr.f32.mxu0 0.0
    %1299 = vmatmul.mubr.f32.gmra.mxu0 %v159
    %v1300 = vpop.f32.mrf.mxu0
    %v1301 = vadd.f32 %v114, %v1300
    %v1302 = vpop.f32.mrf.mxu0
    %1303 = vmatprep.mubr.f32.mxu0 0.0
    %1304 = vmatmul.mubr.f32.gmra.mxu0 %v162
    %v1305 = vpop.f32.mrf.mxu0
    %v1306 = vadd.f32 %v119, %v1305
    %v1307 = vpop.f32.mrf.mxu0
    %1308 = vmatprep.mubr.f32.mxu0 0.0
    %1309 = vmatmul.mubr.f32.gmra.mxu0 %v165
    %v1310 = vpop.f32.mrf.mxu0
    %v1311 = vadd.f32 %v124, %v1310
    %v1312 = vpop.f32.mrf.mxu0
    %1313 = vmatprep.mubr.f32.mxu0 0.0
    %1314 = vmatmul.mubr.f32.gmra.mxu0 %v168
    %v1315 = vpop.f32.mrf.mxu0
    %v1316 = vadd.f32 %v129, %v1315
    %v1317 = vpop.f32.mrf.mxu0
    %1318 = vmatprep.mubr.f32.mxu0 0.0
    %1319 = vmatmul.mubr.f32.gmra.mxu0 %v171
    %v1320 = vpop.f32.mrf.mxu0
    %v1321 = vadd.f32 %v134, %v1320
    %v1322 = vpop.f32.mrf.mxu0
    %1323 = vdwg.mxu0
    %s1324 = scalar_lea.vmem [#allocation2], 168
    %1325 = vst.msk [vmem:[%s1324] sm:$0xff] %vm302, %v1266
    %1326 = vst.msk [vmem:[%s1324 + $0x8] sm:$0xff] %vm302, %v1271
    %1327 = vst.msk [vmem:[%s1324 + $0x10] sm:$0xff] %vm302, %v1276
    %s1328 = scalar_lea.vmem [#allocation2], 360
    %1329 = vst.msk [vmem:[%s1328] sm:$0xff] %vm302, %v1281
    %1330 = vst.msk [vmem:[%s1328 + $0x8] sm:$0xff] %vm302, %v1286
    %1331 = vst.msk [vmem:[%s1328 + $0x10] sm:$0xff] %vm302, %v1291
    %s1332 = scalar_lea.vmem [#allocation2], 552
    %1333 = vst.msk [vmem:[%s1332] sm:$0xff] %vm302, %v1296
    %1334 = vst.msk [vmem:[%s1332 + $0x8] sm:$0xff] %vm302, %v1301
    %1335 = vst.msk [vmem:[%s1332 + $0x10] sm:$0xff] %vm302, %v1306
    %s1336 = scalar_lea.vmem [#allocation2], 744
    %1337 = vst.msk [vmem:[%s1336] sm:$0xff] %vm302, %v1311
    %1338 = vst.msk [vmem:[%s1336 + $0x8] sm:$0xff] %vm302, %v1316
    %1339 = vst.msk [vmem:[%s1336 + $0x10] sm:$0xff] %vm302, %v1321
    %1341 = vset.pattern.permute.xlu0 0
    %1342 = vperm.xlu0 %1341, %v63
    %v1343 = vpop.permute.xlu0 %1342
    %1346 = vset.pattern.permute.xlu0 0
    %1347 = vperm.xlu0 %1346, %v64
    %v1348 = vpop.permute.xlu0 %1347
    %1351 = vset.pattern.permute.xlu0 0
    %1352 = vperm.xlu0 %1351, %v65
    %v1353 = vpop.permute.xlu0 %1352
    %1356 = vset.pattern.permute.xlu0 0
    %1357 = vperm.xlu0 %1356, %v66
    %v1358 = vpop.permute.xlu0 %1357
    %1361 = vset.pattern.permute.xlu0 0
    %1362 = vperm.xlu0 %1361, %v67
    %v1363 = vpop.permute.xlu0 %1362
    %1366 = vset.pattern.permute.xlu0 0
    %1367 = vperm.xlu0 %1366, %v68
    %v1368 = vpop.permute.xlu0 %1367
    %1371 = vset.pattern.permute.xlu0 0
    %1372 = vperm.xlu0 %1371, %v69
    %v1373 = vpop.permute.xlu0 %1372
    %1376 = vset.pattern.permute.xlu0 0
    %1377 = vperm.xlu0 %1376, %v70
    %v1378 = vpop.permute.xlu0 %1377
    %1381 = vset.pattern.permute.xlu0 0
    %1382 = vperm.xlu0 %1381, %v71
    %v1383 = vpop.permute.xlu0 %1382
    %1386 = vset.pattern.permute.xlu0 0
    %1387 = vperm.xlu0 %1386, %v72
    %v1388 = vpop.permute.xlu0 %1387
    %1391 = vset.pattern.permute.xlu0 0
    %1392 = vperm.xlu0 %1391, %v73
    %v1393 = vpop.permute.xlu0 %1392
    %1396 = vset.pattern.permute.xlu0 0
    %1397 = vperm.xlu0 %1396, %v74
    %v1398 = vpop.permute.xlu0 %1397
    %vm1400 = vcmask 261120
    %v1402 = vsel %vm1400, %v51, 0
    %v1405 = vsel %vm1400, %v52, 0
    %v1408 = vsel %vm1400, %v53, 0
    %v1411 = vsel %vm1400, %v54, 0
    %v1414 = vsel %vm1400, %v55, 0
    %v1417 = vsel %vm1400, %v56, 0
    %v1420 = vsel %vm1400, %v57, 0
    %v1423 = vsel %vm1400, %v58, 0
    %v1426 = vsel %vm1400, %v59, 0
    %v1429 = vsel %vm1400, %v60, 0
    %v1432 = vsel %vm1400, %v61, 0
    %v1435 = vsel %vm1400, %v62, 0
    %1437 = vmatprep.subr.mxu0 0.0
    %1438 = vmatpush1.msra.mxu0 0.0
    %1439 = vmatprep.subr.mxu0 0.0
    %1440 = vmatpush1.msra.mxu0 0.0
    %1441 = vmatprep.subr.mxu0 0.0
    %1442 = vmatpush1.msra.mxu0 0.0
    %1443 = vmatprep.subr.mxu0 0.0
    %1444 = vmatpush1.msra.mxu0 0.0
    %1445 = vmatprep.subr.mxu0 0.0
    %1446 = vmatpush1.msra.mxu0 0.0
    %1447 = vmatprep.subr.mxu0 0.0
    %1448 = vmatpush1.msra.mxu0 0.0
    %1449 = vmatprep.subr.mxu0 0.0
    %1450 = vmatpush1.msra.mxu0 0.0
    %1451 = vmatprep.subr.mxu0 0.0
    %1452 = vmatpush1.msra.mxu0 0.0
    %1453 = vmatprep.subr.mxu0 0.0
    %1454 = vmatpush1.msra.mxu0 0.0
    %1455 = vmatprep.subr.mxu0 0.0
    %1456 = vmatpush1.msra.mxu0 0.0
    %1457 = vmatprep.subr.mxu0 0.0
    %1458 = vmatpush1.msra.mxu0 0.0
    %1459 = vmatprep.subr.mxu0 0.0
    %1460 = vmatpush1.msra.mxu0 0.0
    %1461 = vmatprep.subr.mxu0 0.0
    %1462 = vmatpush1.msra.mxu0 0.0
    %1463 = vmatprep.subr.mxu0 0.0
    %1464 = vmatpush1.msra.mxu0 0.0
    %1465 = vmatprep.subr.mxu0 0.0
    %1466 = vmatpush1.msra.mxu0 0.0
    %1467 = vmatprep.subr.mxu0 0.0
    %1468 = vmatpush1.msra.mxu0 0.0
    %1469 = vmatprep.subr.mxu0 0.0
    %1470 = vmatpush2.msra.mxu0 0.0
    %1471 = vmatprep.subr.mxu0 0.0
    %1472 = vmatpush2.msra.mxu0 0.0
    %1473 = vmatprep.subr.mxu0 0.0
    %1474 = vmatpush2.msra.mxu0 0.0
    %1475 = vmatprep.subr.mxu0 0.0
    %1476 = vmatpush2.msra.mxu0 0.0
    %1477 = vmatprep.subr.mxu0 0.0
    %1478 = vmatpush2.msra.mxu0 0.0
    %1479 = vmatprep.subr.mxu0 0.0
    %1480 = vmatpush2.msra.mxu0 0.0
    %1481 = vmatprep.subr.mxu0 0.0
    %1482 = vmatpush2.msra.mxu0 0.0
    %1483 = vmatprep.subr.mxu0 0.0
    %1484 = vmatpush2.msra.mxu0 0.0
    %1485 = vmatprep.subr.mxu0 0.0
    %1486 = vmatpush2.msra.mxu0 0.0
    %1487 = vmatprep.subr.mxu0 0.0
    %1488 = vmatpush2.msra.mxu0 0.0
    %1489 = vmatprep.subr.mxu0 0.0
    %1490 = vmatpush2.msra.mxu0 0.0
    %1491 = vmatprep.subr.mxu0 0.0
    %1492 = vmatpush2.msra.mxu0 0.0
    %1493 = vmatprep.subr.mxu0 0.0
    %1494 = vmatpush2.msra.mxu0 0.0
    %1495 = vmatprep.subr.mxu0 0.0
    %1496 = vmatpush2.msra.mxu0 0.0
    %1497 = vmatprep.subr.mxu0 0.0
    %1498 = vmatpush2.msra.mxu0 0.0
    %1499 = vmatprep.subr.mxu0 0.0
    %1500 = vmatpush2.msra.mxu0 0.0
    %1501 = vmatprep.mubr.f32.mxu0 0.0
    %1502 = vmatmul.mubr.f32.gmra.mxu0 %v1402
    %v1503 = vpop.f32.mrf.mxu0
    %v1504 = vadd.f32 %v1343, %v1503
    %v1505 = vpop.f32.mrf.mxu0
    %1506 = vmatprep.mubr.f32.mxu0 0.0
    %1507 = vmatmul.mubr.f32.gmra.mxu0 %v1405
    %v1508 = vpop.f32.mrf.mxu0
    %v1509 = vadd.f32 %v1348, %v1508
    %v1510 = vpop.f32.mrf.mxu0
    %1511 = vmatprep.mubr.f32.mxu0 0.0
    %1512 = vmatmul.mubr.f32.gmra.mxu0 %v1408
    %v1513 = vpop.f32.mrf.mxu0
    %v1514 = vadd.f32 %v1353, %v1513
    %v1515 = vpop.f32.mrf.mxu0
    %1516 = vmatprep.mubr.f32.mxu0 0.0
    %1517 = vmatmul.mubr.f32.gmra.mxu0 %v1411
    %v1518 = vpop.f32.mrf.mxu0
    %v1519 = vadd.f32 %v1358, %v1518
    %v1520 = vpop.f32.mrf.mxu0
    %1521 = vmatprep.mubr.f32.mxu0 0.0
    %1522 = vmatmul.mubr.f32.gmra.mxu0 %v1414
    %v1523 = vpop.f32.mrf.mxu0
    %v1524 = vadd.f32 %v1363, %v1523
    %v1525 = vpop.f32.mrf.mxu0
    %1526 = vmatprep.mubr.f32.mxu0 0.0
    %1527 = vmatmul.mubr.f32.gmra.mxu0 %v1417
    %v1528 = vpop.f32.mrf.mxu0
    %v1529 = vadd.f32 %v1368, %v1528
    %v1530 = vpop.f32.mrf.mxu0
    %1531 = vmatprep.mubr.f32.mxu0 0.0
    %1532 = vmatmul.mubr.f32.gmra.mxu0 %v1420
    %v1533 = vpop.f32.mrf.mxu0
    %v1534 = vadd.f32 %v1373, %v1533
    %v1535 = vpop.f32.mrf.mxu0
    %1536 = vmatprep.mubr.f32.mxu0 0.0
    %1537 = vmatmul.mubr.f32.gmra.mxu0 %v1423
    %v1538 = vpop.f32.mrf.mxu0
    %v1539 = vadd.f32 %v1378, %v1538
    %v1540 = vpop.f32.mrf.mxu0
    %1541 = vmatprep.mubr.f32.mxu0 0.0
    %1542 = vmatmul.mubr.f32.gmra.mxu0 %v1426
    %v1543 = vpop.f32.mrf.mxu0
    %v1544 = vadd.f32 %v1383, %v1543
    %v1545 = vpop.f32.mrf.mxu0
    %1546 = vmatprep.mubr.f32.mxu0 0.0
    %1547 = vmatmul.mubr.f32.gmra.mxu0 %v1429
    %v1548 = vpop.f32.mrf.mxu0
    %v1549 = vadd.f32 %v1388, %v1548
    %v1550 = vpop.f32.mrf.mxu0
    %1551 = vmatprep.mubr.f32.mxu0 0.0
    %1552 = vmatmul.mubr.f32.gmra.mxu0 %v1432
    %v1553 = vpop.f32.mrf.mxu0
    %v1554 = vadd.f32 %v1393, %v1553
    %v1555 = vpop.f32.mrf.mxu0
    %1556 = vmatprep.mubr.f32.mxu0 0.0
    %1557 = vmatmul.mubr.f32.gmra.mxu0 %v1435
    %v1558 = vpop.f32.mrf.mxu0
    %v1559 = vadd.f32 %v1398, %v1558
    %v1560 = vpop.f32.mrf.mxu0
    %1561 = vdwg.mxu0
    %v1562 = vld [vmem:[#allocation2] sm:$0xff]
    %v1563 = vld [vmem:[#allocation2 + $0x8] sm:$0xff]
    %v1564 = vld [vmem:[#allocation2 + $0x10] sm:$0xff]
    %v1565 = vadd.f32 %v1562, %v1504
    %v1566 = vxor.u32 %v1565, 2147483648
    %v1567 = vmul.f32 %v1566, 1.442695
    %v1568 = vpow.pop %v1567
    %v1569 = vadd.f32 %v1568, 1.0
    %v1570 = vrcp.pop %v1569
    %v1571 = vmul.f32 1.0, %v1570
    %v1572 = vadd.f32 %v1563, %v1509
    %v1573 = vxor.u32 %v1572, 2147483648
    %v1574 = vmul.f32 %v1573, 1.442695
    %v1575 = vpow.pop %v1574
    %v1576 = vadd.f32 %v1575, 1.0
    %v1577 = vrcp.pop %v1576
    %v1578 = vmul.f32 1.0, %v1577
    %v1579 = vmul.f32 %v1571, %v1514
    %v1580 = vadd.f32 %v1564, %v1579
    %v1581 = vtanh.pop %v1580
    %v1582 = vsub.f32 1.0, %v1578
    %v1583 = vmul.f32 %v1582, %v1581
    %v1584 = vmul.f32 %v1578, 0.0
    %v1585 = vadd.f32 %v1583, %v1584
    %v1586 = vld [vmem:[%s1328] sm:$0xff]
    %v1587 = vld [vmem:[%s1328 + $0x8] sm:$0xff]
    %v1588 = vld [vmem:[%s1328 + $0x10] sm:$0xff]
    %v1589 = vadd.f32 %v1586, %v1519
    %v1590 = vxor.u32 %v1589, 2147483648
    %v1591 = vmul.f32 %v1590, 1.442695
    %v1592 = vpow.pop %v1591
    %v1593 = vadd.f32 %v1592, 1.0
    %v1594 = vrcp.pop %v1593
    %v1595 = vmul.f32 1.0, %v1594
    %v1596 = vadd.f32 %v1587, %v1524
    %v1597 = vxor.u32 %v1596, 2147483648
    %v1598 = vmul.f32 %v1597, 1.442695
    %v1599 = vpow.pop %v1598
    %v1600 = vadd.f32 %v1599, 1.0
    %v1601 = vrcp.pop %v1600
    %v1602 = vmul.f32 1.0, %v1601
    %v1603 = vmul.f32 %v1595, %v1529
    %v1604 = vadd.f32 %v1588, %v1603
    %v1605 = vtanh.pop %v1604
    %v1606 = vsub.f32 1.0, %v1602
    %v1607 = vmul.f32 %v1606, %v1605
    %v1608 = vmul.f32 %v1602, 0.0
    %v1609 = vadd.f32 %v1607, %v1608
    %v1610 = vld [vmem:[%s310] sm:$0xff]
    %v1611 = vld [vmem:[%s310 + $0x8] sm:$0xff]
    %v1612 = vld [vmem:[%s310 + $0x10] sm:$0xff]
    %v1613 = vadd.f32 %v1610, %v1534
    %v1614 = vxor.u32 %v1613, 2147483648
    %v1615 = vmul.f32 %v1614, 1.442695
    %v1616 = vpow.pop %v1615
    %v1617 = vadd.f32 %v1616, 1.0
    %v1618 = vrcp.pop %v1617
    %v1619 = vmul.f32 1.0, %v1618
    %v1620 = vadd.f32 %v1611, %v1539
    %v1621 = vxor.u32 %v1620, 2147483648
    %v1622 = vmul.f32 %v1621, 1.442695
    %v1623 = vpow.pop %v1622
    %v1624 = vadd.f32 %v1623, 1.0
    %v1625 = vrcp.pop %v1624
    %v1626 = vmul.f32 1.0, %v1625
    %v1627 = vmul.f32 %v1619, %v1544
    %v1628 = vadd.f32 %v1612, %v1627
    %v1629 = vtanh.pop %v1628
    %v1630 = vsub.f32 1.0, %v1626
    %v1631 = vmul.f32 %v1630, %v1629
    %v1632 = vmul.f32 %v1626, 0.0
    %v1633 = vadd.f32 %v1631, %v1632
    %v1634 = vld [vmem:[%s1336] sm:$0xff]
    %v1635 = vld [vmem:[%s1336 + $0x8] sm:$0xff]
    %v1636 = vld [vmem:[%s1336 + $0x10] sm:$0xff]
    %v1637 = vadd.f32 %v1634, %v1549
    %v1638 = vxor.u32 %v1637, 2147483648
    %v1639 = vmul.f32 %v1638, 1.442695
    %v1640 = vpow.pop %v1639
    %v1641 = vadd.f32 %v1640, 1.0
    %v1642 = vrcp.pop %v1641
    %v1643 = vmul.f32 1.0, %v1642
    %v1644 = vadd.f32 %v1635, %v1554
    %v1645 = vxor.u32 %v1644, 2147483648
    %v1646 = vmul.f32 %v1645, 1.442695
    %v1647 = vpow.pop %v1646
    %v1648 = vadd.f32 %v1647, 1.0
    %v1649 = vrcp.pop %v1648
    %v1650 = vmul.f32 1.0, %v1649
    %v1651 = vmul.f32 %v1643, %v1559
    %v1652 = vadd.f32 %v1636, %v1651
    %v1653 = vtanh.pop %v1652
    %v1654 = vsub.f32 1.0, %v1650
    %v1655 = vmul.f32 %v1654, %v1653
    %v1656 = vmul.f32 %v1650, 0.0
    %v1657 = vadd.f32 %v1655, %v1656
    %1658 = vst.msk [vmem:[#allocation3] sm:$0xff] %vm302, %v1585
    %s1659 = scalar_lea.vmem [#allocation4], 56
    %1660 = vst.msk [vmem:[%s1659] sm:$0xff] %vm302, %v1609
    %v1661 = vmax.f32 %v1633, 0.0
    %v1662 = vand.u32 2147483647, %v1633
    %v1663 = vsub.f32 0.0, %v1662
    %v1664 = vmul.f32 %v1663, 1.442695
    %v1665 = vpow.pop %v1664
    %v1666 = vadd.f32 %v1665, 1.0
    %v1667 = vlog2.pop %v1666
    %v1668 = vmul.f32 %v1667, 0.6931472
    %v1669 = vadd.f32 %v1661, %v1668
    %1670 = vst.msk [vmem:[#allocation7] sm:$0xff] %vm302, %v1669
    %v1671 = vmax.f32 %v1657, 0.0
    %v1672 = vand.u32 2147483647, %v1657
    %v1673 = vsub.f32 0.0, %v1672
    %v1674 = vmul.f32 %v1673, 1.442695
    %v1675 = vpow.pop %v1674
    %v1676 = vadd.f32 %v1675, 1.0
    %v1677 = vlog2.pop %v1676
    %v1678 = vmul.f32 %v1677, 0.6931472
    %v1679 = vadd.f32 %v1671, %v1678
    %s1680 = scalar_lea.vmem [#allocation7], 120
    %1681 = vst.msk [vmem:[%s1680] sm:$0xff] %vm302, %v1679
    %1682 = vmatprep.subr.mxu0 0.0
    %1683 = vmatpush1.msra.mxu0 0.0
    %1684 = vmatprep.subr.mxu0 0.0
    %1685 = vmatpush1.msra.mxu0 0.0
    %1686 = vmatprep.subr.mxu0 0.0
    %1687 = vmatpush1.msra.mxu0 0.0
    %1688 = vmatprep.subr.mxu0 0.0
    %1689 = vmatpush1.msra.mxu0 0.0
    %1690 = vmatprep.subr.mxu0 0.0
    %1691 = vmatpush1.msra.mxu0 0.0
    %1692 = vmatprep.subr.mxu0 0.0
    %1693 = vmatpush1.msra.mxu0 0.0
    %1694 = vmatprep.subr.mxu0 0.0
    %1695 = vmatpush1.msra.mxu0 0.0
    %1696 = vmatprep.subr.mxu0 0.0
    %1697 = vmatpush1.msra.mxu0 0.0
    %1698 = vmatprep.subr.mxu0 0.0
    %1699 = vmatpush1.msra.mxu0 0.0
    %1700 = vmatprep.subr.mxu0 0.0
    %1701 = vmatpush1.msra.mxu0 0.0
    %1702 = vmatprep.subr.mxu0 0.0
    %1703 = vmatpush1.msra.mxu0 0.0
    %1704 = vmatprep.subr.mxu0 0.0
    %1705 = vmatpush1.msra.mxu0 0.0
    %1706 = vmatprep.subr.mxu0 0.0
    %1707 = vmatpush1.msra.mxu0 %v1657
    %1708 = vmatprep.subr.mxu0 0.0
    %1709 = vmatpush1.msra.mxu0 %v1633
    %1710 = vmatprep.subr.mxu0 0.0
    %1711 = vmatpush1.msra.mxu0 %v1609
    %1712 = vmatprep.subr.mxu0 0.0
    %1713 = vmatpush1.msra.mxu0 %v1585
    %1714 = vmatprep.subr.mxu0 0.0
    %1715 = vmatpush2.msra.mxu0 0.0
    %1716 = vmatprep.subr.mxu0 0.0
    %1717 = vmatpush2.msra.mxu0 0.0
    %1718 = vmatprep.subr.mxu0 0.0
    %1719 = vmatpush2.msra.mxu0 0.0
    %1720 = vmatprep.subr.mxu0 0.0
    %1721 = vmatpush2.msra.mxu0 0.0
    %1722 = vmatprep.subr.mxu0 0.0
    %1723 = vmatpush2.msra.mxu0 0.0
    %1724 = vmatprep.subr.mxu0 0.0
    %1725 = vmatpush2.msra.mxu0 0.0
    %1726 = vmatprep.subr.mxu0 0.0
    %1727 = vmatpush2.msra.mxu0 0.0
    %1728 = vmatprep.subr.mxu0 0.0
    %1729 = vmatpush2.msra.mxu0 0.0
    %1730 = vmatprep.subr.mxu0 0.0
    %1731 = vmatpush2.msra.mxu0 0.0
    %1732 = vmatprep.subr.mxu0 0.0
    %1733 = vmatpush2.msra.mxu0 0.0
    %1734 = vmatprep.subr.mxu0 0.0
    %1735 = vmatpush2.msra.mxu0 0.0
    %1736 = vmatprep.subr.mxu0 0.0
    %1737 = vmatpush2.msra.mxu0 0.0
    %1738 = vmatprep.subr.mxu0 0.0
    %1739 = vmatpush2.msra.mxu0 0.0
    %1740 = vmatprep.subr.mxu0 0.0
    %1741 = vmatpush2.msra.mxu0 0.0
    %1742 = vmatprep.subr.mxu0 0.0
    %1743 = vmatpush2.msra.mxu0 0.0
    %1744 = vmatprep.subr.mxu0 0.0
    %1745 = vmatpush2.msra.mxu0 0.0
    %1746 = vmatprep.mubr.f32.mxu0 0.0
    %1747 = vmatmul.mubr.f32.gmra.mxu0 %v1402
    %v1748 = vpop.f32.mrf.mxu0
    %v1749 = vadd.f32 %v1343, %v1748
    %v1750 = vpop.f32.mrf.mxu0
    %1751 = vmatprep.mubr.f32.mxu0 0.0
    %1752 = vmatmul.mubr.f32.gmra.mxu0 %v1405
    %v1753 = vpop.f32.mrf.mxu0
    %v1754 = vadd.f32 %v1348, %v1753
    %v1755 = vpop.f32.mrf.mxu0
    %1756 = vmatprep.mubr.f32.mxu0 0.0
    %1757 = vmatmul.mubr.f32.gmra.mxu0 %v1408
    %v1758 = vpop.f32.mrf.mxu0
    %v1759 = vadd.f32 %v1353, %v1758
    %v1760 = vpop.f32.mrf.mxu0
    %1761 = vmatprep.mubr.f32.mxu0 0.0
    %1762 = vmatmul.mubr.f32.gmra.mxu0 %v1411
    %v1763 = vpop.f32.mrf.mxu0
    %v1764 = vadd.f32 %v1358, %v1763
    %v1765 = vpop.f32.mrf.mxu0
    %1766 = vmatprep.mubr.f32.mxu0 0.0
    %1767 = vmatmul.mubr.f32.gmra.mxu0 %v1414
    %v1768 = vpop.f32.mrf.mxu0
    %v1769 = vadd.f32 %v1363, %v1768
    %v1770 = vpop.f32.mrf.mxu0
    %1771 = vmatprep.mubr.f32.mxu0 0.0
    %1772 = vmatmul.mubr.f32.gmra.mxu0 %v1417
    %v1773 = vpop.f32.mrf.mxu0
    %v1774 = vadd.f32 %v1368, %v1773
    %v1775 = vpop.f32.mrf.mxu0
    %1776 = vmatprep.mubr.f32.mxu0 0.0
    %1777 = vmatmul.mubr.f32.gmra.mxu0 %v1420
    %v1778 = vpop.f32.mrf.mxu0
    %v1779 = vadd.f32 %v1373, %v1778
    %v1780 = vpop.f32.mrf.mxu0
    %1781 = vmatprep.mubr.f32.mxu0 0.0
    %1782 = vmatmul.mubr.f32.gmra.mxu0 %v1423
    %v1783 = vpop.f32.mrf.mxu0
    %v1784 = vadd.f32 %v1378, %v1783
    %v1785 = vpop.f32.mrf.mxu0
    %1786 = vmatprep.mubr.f32.mxu0 0.0
    %1787 = vmatmul.mubr.f32.gmra.mxu0 %v1426
    %v1788 = vpop.f32.mrf.mxu0
    %v1789 = vadd.f32 %v1383, %v1788
    %v1790 = vpop.f32.mrf.mxu0
    %1791 = vmatprep.mubr.f32.mxu0 0.0
    %1792 = vmatmul.mubr.f32.gmra.mxu0 %v1429
    %v1793 = vpop.f32.mrf.mxu0
    %v1794 = vadd.f32 %v1388, %v1793
    %v1795 = vpop.f32.mrf.mxu0
    %1796 = vmatprep.mubr.f32.mxu0 0.0
    %1797 = vmatmul.mubr.f32.gmra.mxu0 %v1432
    %v1798 = vpop.f32.mrf.mxu0
    %v1799 = vadd.f32 %v1393, %v1798
    %v1800 = vpop.f32.mrf.mxu0
    %1801 = vmatprep.mubr.f32.mxu0 0.0
    %1802 = vmatmul.mubr.f32.gmra.mxu0 %v1435
    %v1803 = vpop.f32.mrf.mxu0
    %v1804 = vadd.f32 %v1398, %v1803
    %v1805 = vpop.f32.mrf.mxu0
    %1806 = vdwg.mxu0
    %v1807 = vld [vmem:[%s448] sm:$0xff]
    %v1808 = vld [vmem:[%s448 + $0x8] sm:$0xff]
    %v1809 = vld [vmem:[%s448 + $0x10] sm:$0xff]
    %v1810 = vadd.f32 %v1807, %v1749
    %v1811 = vxor.u32 %v1810, 2147483648
    %v1812 = vmul.f32 %v1811, 1.442695
    %v1813 = vpow.pop %v1812
    %v1814 = vadd.f32 %v1813, 1.0
    %v1815 = vrcp.pop %v1814
    %v1816 = vmul.f32 1.0, %v1815
    %v1817 = vadd.f32 %v1808, %v1754
    %v1818 = vxor.u32 %v1817, 2147483648
    %v1819 = vmul.f32 %v1818, 1.442695
    %v1820 = vpow.pop %v1819
    %v1821 = vadd.f32 %v1820, 1.0
    %v1822 = vrcp.pop %v1821
    %v1823 = vmul.f32 1.0, %v1822
    %v1824 = vmul.f32 %v1816, %v1759
    %v1825 = vadd.f32 %v1809, %v1824
    %v1826 = vtanh.pop %v1825
    %v1827 = vsub.f32 1.0, %v1823
    %v1828 = vmul.f32 %v1827, %v1826
    %v1829 = vmul.f32 %v1823, %v1585
    %v1830 = vadd.f32 %v1828, %v1829
    %v1831 = vld [vmem:[%s1182] sm:$0xff]
    %v1832 = vld [vmem:[%s1182 + $0x8] sm:$0xff]
    %v1833 = vld [vmem:[%s1182 + $0x10] sm:$0xff]
    %v1834 = vadd.f32 %v1831, %v1764
    %v1835 = vxor.u32 %v1834, 2147483648
    %v1836 = vmul.f32 %v1835, 1.442695
    %v1837 = vpow.pop %v1836
    %v1838 = vadd.f32 %v1837, 1.0
    %v1839 = vrcp.pop %v1838
    %v1840 = vmul.f32 1.0, %v1839
    %v1841 = vadd.f32 %v1832, %v1769
    %v1842 = vxor.u32 %v1841, 2147483648
    %v1843 = vmul.f32 %v1842, 1.442695
    %v1844 = vpow.pop %v1843
    %v1845 = vadd.f32 %v1844, 1.0
    %v1846 = vrcp.pop %v1845
    %v1847 = vmul.f32 1.0, %v1846
    %v1848 = vmul.f32 %v1840, %v1774
    %v1849 = vadd.f32 %v1833, %v1848
    %v1850 = vtanh.pop %v1849
    %v1851 = vsub.f32 1.0, %v1847
    %v1852 = vmul.f32 %v1851, %v1850
    %v1853 = vmul.f32 %v1847, %v1609
    %v1854 = vadd.f32 %v1852, %v1853
    %v1855 = vld [vmem:[%s456] sm:$0xff]
    %v1856 = vld [vmem:[%s456 + $0x8] sm:$0xff]
    %v1857 = vld [vmem:[%s456 + $0x10] sm:$0xff]
    %v1858 = vadd.f32 %v1855, %v1779
    %v1859 = vxor.u32 %v1858, 2147483648
    %v1860 = vmul.f32 %v1859, 1.442695
    %v1861 = vpow.pop %v1860
    %v1862 = vadd.f32 %v1861, 1.0
    %v1863 = vrcp.pop %v1862
    %v1864 = vmul.f32 1.0, %v1863
    %v1865 = vadd.f32 %v1856, %v1784
    %v1866 = vxor.u32 %v1865, 2147483648
    %v1867 = vmul.f32 %v1866, 1.442695
    %v1868 = vpow.pop %v1867
    %v1869 = vadd.f32 %v1868, 1.0
    %v1870 = vrcp.pop %v1869
    %v1871 = vmul.f32 1.0, %v1870
    %v1872 = vmul.f32 %v1864, %v1789
    %v1873 = vadd.f32 %v1857, %v1872
    %v1874 = vtanh.pop %v1873
    %v1875 = vsub.f32 1.0, %v1871
    %v1876 = vmul.f32 %v1875, %v1874
    %v1877 = vmul.f32 %v1871, %v1633
    %v1878 = vadd.f32 %v1876, %v1877
    %v1879 = vld [vmem:[%s1190] sm:$0xff]
    %v1880 = vld [vmem:[%s1190 + $0x8] sm:$0xff]
    %v1881 = vld [vmem:[%s1190 + $0x10] sm:$0xff]
    %v1882 = vadd.f32 %v1879, %v1794
    %v1883 = vxor.u32 %v1882, 2147483648
    %v1884 = vmul.f32 %v1883, 1.442695
    %v1885 = vpow.pop %v1884
    %v1886 = vadd.f32 %v1885, 1.0
    %v1887 = vrcp.pop %v1886
    %v1888 = vmul.f32 1.0, %v1887
    %v1889 = vadd.f32 %v1880, %v1799
    %v1890 = vxor.u32 %v1889, 2147483648
    %v1891 = vmul.f32 %v1890, 1.442695
    %v1892 = vpow.pop %v1891
    %v1893 = vadd.f32 %v1892, 1.0
    %v1894 = vrcp.pop %v1893
    %v1895 = vmul.f32 1.0, %v1894
    %v1896 = vmul.f32 %v1888, %v1804
    %v1897 = vadd.f32 %v1881, %v1896
    %v1898 = vtanh.pop %v1897
    %v1899 = vsub.f32 1.0, %v1895
    %v1900 = vmul.f32 %v1899, %v1898
    %v1901 = vmul.f32 %v1895, %v1657
    %v1902 = vadd.f32 %v1900, %v1901
    %s1903 = scalar_lea.vmem [#allocation3], 8
    %1904 = vst.msk [vmem:[%s1903] sm:$0xff] %vm302, %v1830
    %s1905 = scalar_lea.vmem [#allocation4], 48
    %1906 = vst.msk [vmem:[%s1905] sm:$0xff] %vm302, %v1854
    %v1907 = vmax.f32 %v1878, 0.0
    %v1908 = vand.u32 2147483647, %v1878
    %v1909 = vsub.f32 0.0, %v1908
    %v1910 = vmul.f32 %v1909, 1.442695
    %v1911 = vpow.pop %v1910
    %v1912 = vadd.f32 %v1911, 1.0
    %v1913 = vlog2.pop %v1912
    %v1914 = vmul.f32 %v1913, 0.6931472
    %v1915 = vadd.f32 %v1907, %v1914
    %s1916 = scalar_lea.vmem [#allocation7], 8
    %1917 = vst.msk [vmem:[%s1916] sm:$0xff] %vm302, %v1915
    %v1918 = vmax.f32 %v1902, 0.0
    %v1919 = vand.u32 2147483647, %v1902
    %v1920 = vsub.f32 0.0, %v1919
    %v1921 = vmul.f32 %v1920, 1.442695
    %v1922 = vpow.pop %v1921
    %v1923 = vadd.f32 %v1922, 1.0
    %v1924 = vlog2.pop %v1923
    %v1925 = vmul.f32 %v1924, 0.6931472
    %v1926 = vadd.f32 %v1918, %v1925
    %s1927 = scalar_lea.vmem [#allocation7], 112
    %1928 = vst.msk [vmem:[%s1927] sm:$0xff] %vm302, %v1926
    %1929 = vmatprep.subr.mxu0 0.0
    %1930 = vmatpush1.msra.mxu0 0.0
    %1931 = vmatprep.subr.mxu0 0.0
    %1932 = vmatpush1.msra.mxu0 0.0
    %1933 = vmatprep.subr.mxu0 0.0
    %1934 = vmatpush1.msra.mxu0 0.0
    %1935 = vmatprep.subr.mxu0 0.0
    %1936 = vmatpush1.msra.mxu0 0.0
    %1937 = vmatprep.subr.mxu0 0.0
    %1938 = vmatpush1.msra.mxu0 0.0
    %1939 = vmatprep.subr.mxu0 0.0
    %1940 = vmatpush1.msra.mxu0 0.0
    %1941 = vmatprep.subr.mxu0 0.0
    %1942 = vmatpush1.msra.mxu0 0.0
    %1943 = vmatprep.subr.mxu0 0.0
    %1944 = vmatpush1.msra.mxu0 0.0
    %1945 = vmatprep.subr.mxu0 0.0
    %1946 = vmatpush1.msra.mxu0 0.0
    %1947 = vmatprep.subr.mxu0 0.0
    %1948 = vmatpush1.msra.mxu0 0.0
    %1949 = vmatprep.subr.mxu0 0.0
    %1950 = vmatpush1.msra.mxu0 0.0
    %1951 = vmatprep.subr.mxu0 0.0
    %1952 = vmatpush1.msra.mxu0 0.0
    %1953 = vmatprep.subr.mxu0 0.0
    %1954 = vmatpush1.msra.mxu0 %v1902
    %1955 = vmatprep.subr.mxu0 0.0
    %1956 = vmatpush1.msra.mxu0 %v1878
    %1957 = vmatprep.subr.mxu0 0.0
    %1958 = vmatpush1.msra.mxu0 %v1854
    %1959 = vmatprep.subr.mxu0 0.0
    %1960 = vmatpush1.msra.mxu0 %v1830
    %1961 = vmatprep.subr.mxu0 0.0
    %1962 = vmatpush2.msra.mxu0 0.0
    %1963 = vmatprep.subr.mxu0 0.0
    %1964 = vmatpush2.msra.mxu0 0.0
    %1965 = vmatprep.subr.mxu0 0.0
    %1966 = vmatpush2.msra.mxu0 0.0
    %1967 = vmatprep.subr.mxu0 0.0
    %1968 = vmatpush2.msra.mxu0 0.0
    %1969 = vmatprep.subr.mxu0 0.0
    %1970 = vmatpush2.msra.mxu0 0.0
    %1971 = vmatprep.subr.mxu0 0.0
    %1972 = vmatpush2.msra.mxu0 0.0
    %1973 = vmatprep.subr.mxu0 0.0
    %1974 = vmatpush2.msra.mxu0 0.0
    %1975 = vmatprep.subr.mxu0 0.0
    %1976 = vmatpush2.msra.mxu0 0.0
    %1977 = vmatprep.subr.mxu0 0.0
    %1978 = vmatpush2.msra.mxu0 0.0
    %1979 = vmatprep.subr.mxu0 0.0
    %1980 = vmatpush2.msra.mxu0 0.0
    %1981 = vmatprep.subr.mxu0 0.0
    %1982 = vmatpush2.msra.mxu0 0.0
    %1983 = vmatprep.subr.mxu0 0.0
    %1984 = vmatpush2.msra.mxu0 0.0
    %1985 = vmatprep.subr.mxu0 0.0
    %1986 = vmatpush2.msra.mxu0 0.0
    %1987 = vmatprep.subr.mxu0 0.0
    %1988 = vmatpush2.msra.mxu0 0.0
    %1989 = vmatprep.subr.mxu0 0.0
    %1990 = vmatpush2.msra.mxu0 0.0
    %1991 = vmatprep.subr.mxu0 0.0
    %1992 = vmatpush2.msra.mxu0 0.0
    %1993 = vmatprep.mubr.f32.mxu0 0.0
    %1994 = vmatmul.mubr.f32.gmra.mxu0 %v1402
    %v1995 = vpop.f32.mrf.mxu0
    %v1996 = vadd.f32 %v1343, %v1995
    %v1997 = vpop.f32.mrf.mxu0
    %1998 = vmatprep.mubr.f32.mxu0 0.0
    %1999 = vmatmul.mubr.f32.gmra.mxu0 %v1405
    %v2000 = vpop.f32.mrf.mxu0
    %v2001 = vadd.f32 %v1348, %v2000
    %v2002 = vpop.f32.mrf.mxu0
    %2003 = vmatprep.mubr.f32.mxu0 0.0
    %2004 = vmatmul.mubr.f32.gmra.mxu0 %v1408
    %v2005 = vpop.f32.mrf.mxu0
    %v2006 = vadd.f32 %v1353, %v2005
    %v2007 = vpop.f32.mrf.mxu0
    %2008 = vmatprep.mubr.f32.mxu0 0.0
    %2009 = vmatmul.mubr.f32.gmra.mxu0 %v1411
    %v2010 = vpop.f32.mrf.mxu0
    %v2011 = vadd.f32 %v1358, %v2010
    %v2012 = vpop.f32.mrf.mxu0
    %2013 = vmatprep.mubr.f32.mxu0 0.0
    %2014 = vmatmul.mubr.f32.gmra.mxu0 %v1414
    %v2015 = vpop.f32.mrf.mxu0
    %v2016 = vadd.f32 %v1363, %v2015
    %v2017 = vpop.f32.mrf.mxu0
    %2018 = vmatprep.mubr.f32.mxu0 0.0
    %2019 = vmatmul.mubr.f32.gmra.mxu0 %v1417
    %v2020 = vpop.f32.mrf.mxu0
    %v2021 = vadd.f32 %v1368, %v2020
    %v2022 = vpop.f32.mrf.mxu0
    %2023 = vmatprep.mubr.f32.mxu0 0.0
    %2024 = vmatmul.mubr.f32.gmra.mxu0 %v1420
    %v2025 = vpop.f32.mrf.mxu0
    %v2026 = vadd.f32 %v1373, %v2025
    %v2027 = vpop.f32.mrf.mxu0
    %2028 = vmatprep.mubr.f32.mxu0 0.0
    %2029 = vmatmul.mubr.f32.gmra.mxu0 %v1423
    %v2030 = vpop.f32.mrf.mxu0
    %v2031 = vadd.f32 %v1378, %v2030
    %v2032 = vpop.f32.mrf.mxu0
    %2033 = vmatprep.mubr.f32.mxu0 0.0
    %2034 = vmatmul.mubr.f32.gmra.mxu0 %v1426
    %v2035 = vpop.f32.mrf.mxu0
    %v2036 = vadd.f32 %v1383, %v2035
    %v2037 = vpop.f32.mrf.mxu0
    %2038 = vmatprep.mubr.f32.mxu0 0.0
    %2039 = vmatmul.mubr.f32.gmra.mxu0 %v1429
    %v2040 = vpop.f32.mrf.mxu0
    %v2041 = vadd.f32 %v1388, %v2040
    %v2042 = vpop.f32.mrf.mxu0
    %2043 = vmatprep.mubr.f32.mxu0 0.0
    %2044 = vmatmul.mubr.f32.gmra.mxu0 %v1432
    %v2045 = vpop.f32.mrf.mxu0
    %v2046 = vadd.f32 %v1393, %v2045
    %v2047 = vpop.f32.mrf.mxu0
    %2048 = vmatprep.mubr.f32.mxu0 0.0
    %2049 = vmatmul.mubr.f32.gmra.mxu0 %v1435
    %v2050 = vpop.f32.mrf.mxu0
    %v2051 = vadd.f32 %v1398, %v2050
    %v2052 = vpop.f32.mrf.mxu0
    %2053 = vdwg.mxu0
    %v2054 = vld [vmem:[%s594] sm:$0xff]
    %v2055 = vld [vmem:[%s594 + $0x8] sm:$0xff]
    %v2056 = vld [vmem:[%s594 + $0x10] sm:$0xff]
    %v2057 = vadd.f32 %v2054, %v1996
    %v2058 = vxor.u32 %v2057, 2147483648
    %v2059 = vmul.f32 %v2058, 1.442695
    %v2060 = vpow.pop %v2059
    %v2061 = vadd.f32 %v2060, 1.0
    %v2062 = vrcp.pop %v2061
    %v2063 = vmul.f32 1.0, %v2062
    %v2064 = vadd.f32 %v2055, %v2001
    %v2065 = vxor.u32 %v2064, 2147483648
    %v2066 = vmul.f32 %v2065, 1.442695
    %v2067 = vpow.pop %v2066
    %v2068 = vadd.f32 %v2067, 1.0
    %v2069 = vrcp.pop %v2068
    %v2070 = vmul.f32 1.0, %v2069
    %v2071 = vmul.f32 %v2063, %v2006
    %v2072 = vadd.f32 %v2056, %v2071
    %v2073 = vtanh.pop %v2072
    %v2074 = vsub.f32 1.0, %v2070
    %v2075 = vmul.f32 %v2074, %v2073
    %v2076 = vmul.f32 %v2070, %v1830
    %v2077 = vadd.f32 %v2075, %v2076
    %v2078 = vld [vmem:[%s1036] sm:$0xff]
    %v2079 = vld [vmem:[%s1036 + $0x8] sm:$0xff]
    %v2080 = vld [vmem:[%s1036 + $0x10] sm:$0xff]
    %v2081 = vadd.f32 %v2078, %v2011
    %v2082 = vxor.u32 %v2081, 2147483648
    %v2083 = vmul.f32 %v2082, 1.442695
    %v2084 = vpow.pop %v2083
    %v2085 = vadd.f32 %v2084, 1.0
    %v2086 = vrcp.pop %v2085
    %v2087 = vmul.f32 1.0, %v2086
    %v2088 = vadd.f32 %v2079, %v2016
    %v2089 = vxor.u32 %v2088, 2147483648
    %v2090 = vmul.f32 %v2089, 1.442695
    %v2091 = vpow.pop %v2090
    %v2092 = vadd.f32 %v2091, 1.0
    %v2093 = vrcp.pop %v2092
    %v2094 = vmul.f32 1.0, %v2093
    %v2095 = vmul.f32 %v2087, %v2021
    %v2096 = vadd.f32 %v2080, %v2095
    %v2097 = vtanh.pop %v2096
    %v2098 = vsub.f32 1.0, %v2094
    %v2099 = vmul.f32 %v2098, %v2097
    %v2100 = vmul.f32 %v2094, %v1854
    %v2101 = vadd.f32 %v2099, %v2100
    %v2102 = vld [vmem:[%s602] sm:$0xff]
    %v2103 = vld [vmem:[%s602 + $0x8] sm:$0xff]
    %v2104 = vld [vmem:[%s602 + $0x10] sm:$0xff]
    %v2105 = vadd.f32 %v2102, %v2026
    %v2106 = vxor.u32 %v2105, 2147483648
    %v2107 = vmul.f32 %v2106, 1.442695
    %v2108 = vpow.pop %v2107
    %v2109 = vadd.f32 %v2108, 1.0
    %v2110 = vrcp.pop %v2109
    %v2111 = vmul.f32 1.0, %v2110
    %v2112 = vadd.f32 %v2103, %v2031
    %v2113 = vxor.u32 %v2112, 2147483648
    %v2114 = vmul.f32 %v2113, 1.442695
    %v2115 = vpow.pop %v2114
    %v2116 = vadd.f32 %v2115, 1.0
    %v2117 = vrcp.pop %v2116
    %v2118 = vmul.f32 1.0, %v2117
    %v2119 = vmul.f32 %v2111, %v2036
    %v2120 = vadd.f32 %v2104, %v2119
    %v2121 = vtanh.pop %v2120
    %v2122 = vsub.f32 1.0, %v2118
    %v2123 = vmul.f32 %v2122, %v2121
    %v2124 = vmul.f32 %v2118, %v1878
    %v2125 = vadd.f32 %v2123, %v2124
    %v2126 = vld [vmem:[%s1044] sm:$0xff]
    %v2127 = vld [vmem:[%s1044 + $0x8] sm:$0xff]
    %v2128 = vld [vmem:[%s1044 + $0x10] sm:$0xff]
    %v2129 = vadd.f32 %v2126, %v2041
    %v2130 = vxor.u32 %v2129, 2147483648
    %v2131 = vmul.f32 %v2130, 1.442695
    %v2132 = vpow.pop %v2131
    %v2133 = vadd.f32 %v2132, 1.0
    %v2134 = vrcp.pop %v2133
    %v2135 = vmul.f32 1.0, %v2134
    %v2136 = vadd.f32 %v2127, %v2046
    %v2137 = vxor.u32 %v2136, 2147483648
    %v2138 = vmul.f32 %v2137, 1.442695
    %v2139 = vpow.pop %v2138
    %v2140 = vadd.f32 %v2139, 1.0
    %v2141 = vrcp.pop %v2140
    %v2142 = vmul.f32 1.0, %v2141
    %v2143 = vmul.f32 %v2135, %v2051
    %v2144 = vadd.f32 %v2128, %v2143
    %v2145 = vtanh.pop %v2144
    %v2146 = vsub.f32 1.0, %v2142
    %v2147 = vmul.f32 %v2146, %v2145
    %v2148 = vmul.f32 %v2142, %v1902
    %v2149 = vadd.f32 %v2147, %v2148
    %s2150 = scalar_lea.vmem [#allocation3], 16
    %2151 = vst.msk [vmem:[%s2150] sm:$0xff] %vm302, %v2077
    %s2152 = scalar_lea.vmem [#allocation4], 40
    %2153 = vst.msk [vmem:[%s2152] sm:$0xff] %vm302, %v2101
    %v2154 = vmax.f32 %v2125, 0.0
    %v2155 = vand.u32 2147483647, %v2125
    %v2156 = vsub.f32 0.0, %v2155
    %v2157 = vmul.f32 %v2156, 1.442695
    %v2158 = vpow.pop %v2157
    %v2159 = vadd.f32 %v2158, 1.0
    %v2160 = vlog2.pop %v2159
    %v2161 = vmul.f32 %v2160, 0.6931472
    %v2162 = vadd.f32 %v2154, %v2161
    %s2163 = scalar_lea.vmem [#allocation7], 16
    %2164 = vst.msk [vmem:[%s2163] sm:$0xff] %vm302, %v2162
    %v2165 = vmax.f32 %v2149, 0.0
    %v2166 = vand.u32 2147483647, %v2149
    %v2167 = vsub.f32 0.0, %v2166
    %v2168 = vmul.f32 %v2167, 1.442695
    %v2169 = vpow.pop %v2168
    %v2170 = vadd.f32 %v2169, 1.0
    %v2171 = vlog2.pop %v2170
    %v2172 = vmul.f32 %v2171, 0.6931472
    %v2173 = vadd.f32 %v2165, %v2172
    %s2174 = scalar_lea.vmem [#allocation7], 104
    %2175 = vst.msk [vmem:[%s2174] sm:$0xff] %vm302, %v2173
    %2176 = vmatprep.subr.mxu0 0.0
    %2177 = vmatpush1.msra.mxu0 0.0
    %2178 = vmatprep.subr.mxu0 0.0
    %2179 = vmatpush1.msra.mxu0 0.0
    %2180 = vmatprep.subr.mxu0 0.0
    %2181 = vmatpush1.msra.mxu0 0.0
    %2182 = vmatprep.subr.mxu0 0.0
    %2183 = vmatpush1.msra.mxu0 0.0
    %2184 = vmatprep.subr.mxu0 0.0
    %2185 = vmatpush1.msra.mxu0 0.0
    %2186 = vmatprep.subr.mxu0 0.0
    %2187 = vmatpush1.msra.mxu0 0.0
    %2188 = vmatprep.subr.mxu0 0.0
    %2189 = vmatpush1.msra.mxu0 0.0
    %2190 = vmatprep.subr.mxu0 0.0
    %2191 = vmatpush1.msra.mxu0 0.0
    %2192 = vmatprep.subr.mxu0 0.0
    %2193 = vmatpush1.msra.mxu0 0.0
    %2194 = vmatprep.subr.mxu0 0.0
    %2195 = vmatpush1.msra.mxu0 0.0
    %2196 = vmatprep.subr.mxu0 0.0
    %2197 = vmatpush1.msra.mxu0 0.0
    %2198 = vmatprep.subr.mxu0 0.0
    %2199 = vmatpush1.msra.mxu0 0.0
    %2200 = vmatprep.subr.mxu0 0.0
    %2201 = vmatpush1.msra.mxu0 %v2149
    %2202 = vmatprep.subr.mxu0 0.0
    %2203 = vmatpush1.msra.mxu0 %v2125
    %2204 = vmatprep.subr.mxu0 0.0
    %2205 = vmatpush1.msra.mxu0 %v2101
    %2206 = vmatprep.subr.mxu0 0.0
    %2207 = vmatpush1.msra.mxu0 %v2077
    %2208 = vmatprep.subr.mxu0 0.0
    %2209 = vmatpush2.msra.mxu0 0.0
    %2210 = vmatprep.subr.mxu0 0.0
    %2211 = vmatpush2.msra.mxu0 0.0
    %2212 = vmatprep.subr.mxu0 0.0
    %2213 = vmatpush2.msra.mxu0 0.0
    %2214 = vmatprep.subr.mxu0 0.0
    %2215 = vmatpush2.msra.mxu0 0.0
    %2216 = vmatprep.subr.mxu0 0.0
    %2217 = vmatpush2.msra.mxu0 0.0
    %2218 = vmatprep.subr.mxu0 0.0
    %2219 = vmatpush2.msra.mxu0 0.0
    %2220 = vmatprep.subr.mxu0 0.0
    %2221 = vmatpush2.msra.mxu0 0.0
    %2222 = vmatprep.subr.mxu0 0.0
    %2223 = vmatpush2.msra.mxu0 0.0
    %2224 = vmatprep.subr.mxu0 0.0
    %2225 = vmatpush2.msra.mxu0 0.0
    %2226 = vmatprep.subr.mxu0 0.0
    %2227 = vmatpush2.msra.mxu0 0.0
    %2228 = vmatprep.subr.mxu0 0.0
    %2229 = vmatpush2.msra.mxu0 0.0
    %2230 = vmatprep.subr.mxu0 0.0
    %2231 = vmatpush2.msra.mxu0 0.0
    %2232 = vmatprep.subr.mxu0 0.0
    %2233 = vmatpush2.msra.mxu0 0.0
    %2234 = vmatprep.subr.mxu0 0.0
    %2235 = vmatpush2.msra.mxu0 0.0
    %2236 = vmatprep.subr.mxu0 0.0
    %2237 = vmatpush2.msra.mxu0 0.0
    %2238 = vmatprep.subr.mxu0 0.0
    %2239 = vmatpush2.msra.mxu0 0.0
    %2240 = vmatprep.mubr.f32.mxu0 0.0
    %2241 = vmatmul.mubr.f32.gmra.mxu0 %v1402
    %v2242 = vpop.f32.mrf.mxu0
    %v2243 = vadd.f32 %v1343, %v2242
    %v2244 = vpop.f32.mrf.mxu0
    %2245 = vmatprep.mubr.f32.mxu0 0.0
    %2246 = vmatmul.mubr.f32.gmra.mxu0 %v1405
    %v2247 = vpop.f32.mrf.mxu0
    %v2248 = vadd.f32 %v1348, %v2247
    %v2249 = vpop.f32.mrf.mxu0
    %2250 = vmatprep.mubr.f32.mxu0 0.0
    %2251 = vmatmul.mubr.f32.gmra.mxu0 %v1408
    %v2252 = vpop.f32.mrf.mxu0
    %v2253 = vadd.f32 %v1353, %v2252
    %v2254 = vpop.f32.mrf.mxu0
    %2255 = vmatprep.mubr.f32.mxu0 0.0
    %2256 = vmatmul.mubr.f32.gmra.mxu0 %v1411
    %v2257 = vpop.f32.mrf.mxu0
    %v2258 = vadd.f32 %v1358, %v2257
    %v2259 = vpop.f32.mrf.mxu0
    %2260 = vmatprep.mubr.f32.mxu0 0.0
    %2261 = vmatmul.mubr.f32.gmra.mxu0 %v1414
    %v2262 = vpop.f32.mrf.mxu0
    %v2263 = vadd.f32 %v1363, %v2262
    %v2264 = vpop.f32.mrf.mxu0
    %2265 = vmatprep.mubr.f32.mxu0 0.0
    %2266 = vmatmul.mubr.f32.gmra.mxu0 %v1417
    %v2267 = vpop.f32.mrf.mxu0
    %v2268 = vadd.f32 %v1368, %v2267
    %v2269 = vpop.f32.mrf.mxu0
    %2270 = vmatprep.mubr.f32.mxu0 0.0
    %2271 = vmatmul.mubr.f32.gmra.mxu0 %v1420
    %v2272 = vpop.f32.mrf.mxu0
    %v2273 = vadd.f32 %v1373, %v2272
    %v2274 = vpop.f32.mrf.mxu0
    %2275 = vmatprep.mubr.f32.mxu0 0.0
    %2276 = vmatmul.mubr.f32.gmra.mxu0 %v1423
    %v2277 = vpop.f32.mrf.mxu0
    %v2278 = vadd.f32 %v1378, %v2277
    %v2279 = vpop.f32.mrf.mxu0
    %2280 = vmatprep.mubr.f32.mxu0 0.0
    %2281 = vmatmul.mubr.f32.gmra.mxu0 %v1426
    %v2282 = vpop.f32.mrf.mxu0
    %v2283 = vadd.f32 %v1383, %v2282
    %v2284 = vpop.f32.mrf.mxu0
    %2285 = vmatprep.mubr.f32.mxu0 0.0
    %2286 = vmatmul.mubr.f32.gmra.mxu0 %v1429
    %v2287 = vpop.f32.mrf.mxu0
    %v2288 = vadd.f32 %v1388, %v2287
    %v2289 = vpop.f32.mrf.mxu0
    %2290 = vmatprep.mubr.f32.mxu0 0.0
    %2291 = vmatmul.mubr.f32.gmra.mxu0 %v1432
    %v2292 = vpop.f32.mrf.mxu0
    %v2293 = vadd.f32 %v1393, %v2292
    %v2294 = vpop.f32.mrf.mxu0
    %2295 = vmatprep.mubr.f32.mxu0 0.0
    %2296 = vmatmul.mubr.f32.gmra.mxu0 %v1435
    %v2297 = vpop.f32.mrf.mxu0
    %v2298 = vadd.f32 %v1398, %v2297
    %v2299 = vpop.f32.mrf.mxu0
    %2300 = vdwg.mxu0
    %v2301 = vld [vmem:[%s740] sm:$0xff]
    %v2302 = vld [vmem:[%s740 + $0x8] sm:$0xff]
    %v2303 = vld [vmem:[%s740 + $0x10] sm:$0xff]
    %v2304 = vadd.f32 %v2301, %v2243
    %v2305 = vxor.u32 %v2304, 2147483648
    %v2306 = vmul.f32 %v2305, 1.442695
    %v2307 = vpow.pop %v2306
    %v2308 = vadd.f32 %v2307, 1.0
    %v2309 = vrcp.pop %v2308
    %v2310 = vmul.f32 1.0, %v2309
    %v2311 = vadd.f32 %v2302, %v2248
    %v2312 = vxor.u32 %v2311, 2147483648
    %v2313 = vmul.f32 %v2312, 1.442695
    %v2314 = vpow.pop %v2313
    %v2315 = vadd.f32 %v2314, 1.0
    %v2316 = vrcp.pop %v2315
    %v2317 = vmul.f32 1.0, %v2316
    %v2318 = vmul.f32 %v2310, %v2253
    %v2319 = vadd.f32 %v2303, %v2318
    %v2320 = vtanh.pop %v2319
    %v2321 = vsub.f32 1.0, %v2317
    %v2322 = vmul.f32 %v2321, %v2320
    %v2323 = vmul.f32 %v2317, %v2077
    %v2324 = vadd.f32 %v2322, %v2323
    %v2325 = vld [vmem:[%s890] sm:$0xff]
    %v2326 = vld [vmem:[%s890 + $0x8] sm:$0xff]
    %v2327 = vld [vmem:[%s890 + $0x10] sm:$0xff]
    %v2328 = vadd.f32 %v2325, %v2258
    %v2329 = vxor.u32 %v2328, 2147483648
    %v2330 = vmul.f32 %v2329, 1.442695
    %v2331 = vpow.pop %v2330
    %v2332 = vadd.f32 %v2331, 1.0
    %v2333 = vrcp.pop %v2332
    %v2334 = vmul.f32 1.0, %v2333
    %v2335 = vadd.f32 %v2326, %v2263
    %v2336 = vxor.u32 %v2335, 2147483648
    %v2337 = vmul.f32 %v2336, 1.442695
    %v2338 = vpow.pop %v2337
    %v2339 = vadd.f32 %v2338, 1.0
    %v2340 = vrcp.pop %v2339
    %v2341 = vmul.f32 1.0, %v2340
    %v2342 = vmul.f32 %v2334, %v2268
    %v2343 = vadd.f32 %v2327, %v2342
    %v2344 = vtanh.pop %v2343
    %v2345 = vsub.f32 1.0, %v2341
    %v2346 = vmul.f32 %v2345, %v2344
    %v2347 = vmul.f32 %v2341, %v2101
    %v2348 = vadd.f32 %v2346, %v2347
    %v2349 = vld [vmem:[%s748] sm:$0xff]
    %v2350 = vld [vmem:[%s748 + $0x8] sm:$0xff]
    %v2351 = vld [vmem:[%s748 + $0x10] sm:$0xff]
    %v2352 = vadd.f32 %v2349, %v2273
    %v2353 = vxor.u32 %v2352, 2147483648
    %v2354 = vmul.f32 %v2353, 1.442695
    %v2355 = vpow.pop %v2354
    %v2356 = vadd.f32 %v2355, 1.0
    %v2357 = vrcp.pop %v2356
    %v2358 = vmul.f32 1.0, %v2357
    %v2359 = vadd.f32 %v2350, %v2278
    %v2360 = vxor.u32 %v2359, 2147483648
    %v2361 = vmul.f32 %v2360, 1.442695
    %v2362 = vpow.pop %v2361
    %v2363 = vadd.f32 %v2362, 1.0
    %v2364 = vrcp.pop %v2363
    %v2365 = vmul.f32 1.0, %v2364
    %v2366 = vmul.f32 %v2358, %v2283
    %v2367 = vadd.f32 %v2351, %v2366
    %v2368 = vtanh.pop %v2367
    %v2369 = vsub.f32 1.0, %v2365
    %v2370 = vmul.f32 %v2369, %v2368
    %v2371 = vmul.f32 %v2365, %v2125
    %v2372 = vadd.f32 %v2370, %v2371
    %v2373 = vld [vmem:[%s898] sm:$0xff]
    %v2374 = vld [vmem:[%s898 + $0x8] sm:$0xff]
    %v2375 = vld [vmem:[%s898 + $0x10] sm:$0xff]
    %v2376 = vadd.f32 %v2373, %v2288
    %v2377 = vxor.u32 %v2376, 2147483648
    %v2378 = vmul.f32 %v2377, 1.442695
    %v2379 = vpow.pop %v2378
    %v2380 = vadd.f32 %v2379, 1.0
    %v2381 = vrcp.pop %v2380
    %v2382 = vmul.f32 1.0, %v2381
    %v2383 = vadd.f32 %v2374, %v2293
    %v2384 = vxor.u32 %v2383, 2147483648
    %v2385 = vmul.f32 %v2384, 1.442695
    %v2386 = vpow.pop %v2385
    %v2387 = vadd.f32 %v2386, 1.0
    %v2388 = vrcp.pop %v2387
    %v2389 = vmul.f32 1.0, %v2388
    %v2390 = vmul.f32 %v2382, %v2298
    %v2391 = vadd.f32 %v2375, %v2390
    %v2392 = vtanh.pop %v2391
    %v2393 = vsub.f32 1.0, %v2389
    %v2394 = vmul.f32 %v2393, %v2392
    %v2395 = vmul.f32 %v2389, %v2149
    %v2396 = vadd.f32 %v2394, %v2395
    %s2397 = scalar_lea.vmem [#allocation3], 24
    %2398 = vst.msk [vmem:[%s2397] sm:$0xff] %vm302, %v2324
    %s2399 = scalar_lea.vmem [#allocation4], 32
    %2400 = vst.msk [vmem:[%s2399] sm:$0xff] %vm302, %v2348
    %v2401 = vmax.f32 %v2372, 0.0
    %v2402 = vand.u32 2147483647, %v2372
    %v2403 = vsub.f32 0.0, %v2402
    %v2404 = vmul.f32 %v2403, 1.442695
    %v2405 = vpow.pop %v2404
    %v2406 = vadd.f32 %v2405, 1.0
    %v2407 = vlog2.pop %v2406
    %v2408 = vmul.f32 %v2407, 0.6931472
    %v2409 = vadd.f32 %v2401, %v2408
    %s2410 = scalar_lea.vmem [#allocation7], 24
    %2411 = vst.msk [vmem:[%s2410] sm:$0xff] %vm302, %v2409
    %v2412 = vmax.f32 %v2396, 0.0
    %v2413 = vand.u32 2147483647, %v2396
    %v2414 = vsub.f32 0.0, %v2413
    %v2415 = vmul.f32 %v2414, 1.442695
    %v2416 = vpow.pop %v2415
    %v2417 = vadd.f32 %v2416, 1.0
    %v2418 = vlog2.pop %v2417
    %v2419 = vmul.f32 %v2418, 0.6931472
    %v2420 = vadd.f32 %v2412, %v2419
    %s2421 = scalar_lea.vmem [#allocation7], 96
    %2422 = vst.msk [vmem:[%s2421] sm:$0xff] %vm302, %v2420
    %2423 = vmatprep.subr.mxu0 0.0
    %2424 = vmatpush1.msra.mxu0 0.0
    %2425 = vmatprep.subr.mxu0 0.0
    %2426 = vmatpush1.msra.mxu0 0.0
    %2427 = vmatprep.subr.mxu0 0.0
    %2428 = vmatpush1.msra.mxu0 0.0
    %2429 = vmatprep.subr.mxu0 0.0
    %2430 = vmatpush1.msra.mxu0 0.0
    %2431 = vmatprep.subr.mxu0 0.0
    %2432 = vmatpush1.msra.mxu0 0.0
    %2433 = vmatprep.subr.mxu0 0.0
    %2434 = vmatpush1.msra.mxu0 0.0
    %2435 = vmatprep.subr.mxu0 0.0
    %2436 = vmatpush1.msra.mxu0 0.0
    %2437 = vmatprep.subr.mxu0 0.0
    %2438 = vmatpush1.msra.mxu0 0.0
    %2439 = vmatprep.subr.mxu0 0.0
    %2440 = vmatpush1.msra.mxu0 0.0
    %2441 = vmatprep.subr.mxu0 0.0
    %2442 = vmatpush1.msra.mxu0 0.0
    %2443 = vmatprep.subr.mxu0 0.0
    %2444 = vmatpush1.msra.mxu0 0.0
    %2445 = vmatprep.subr.mxu0 0.0
    %2446 = vmatpush1.msra.mxu0 0.0
    %2447 = vmatprep.subr.mxu0 0.0
    %2448 = vmatpush1.msra.mxu0 %v2396
    %2449 = vmatprep.subr.mxu0 0.0
    %2450 = vmatpush1.msra.mxu0 %v2372
    %2451 = vmatprep.subr.mxu0 0.0
    %2452 = vmatpush1.msra.mxu0 %v2348
    %2453 = vmatprep.subr.mxu0 0.0
    %2454 = vmatpush1.msra.mxu0 %v2324
    %2455 = vmatprep.subr.mxu0 0.0
    %2456 = vmatpush2.msra.mxu0 0.0
    %2457 = vmatprep.subr.mxu0 0.0
    %2458 = vmatpush2.msra.mxu0 0.0
    %2459 = vmatprep.subr.mxu0 0.0
    %2460 = vmatpush2.msra.mxu0 0.0
    %2461 = vmatprep.subr.mxu0 0.0
    %2462 = vmatpush2.msra.mxu0 0.0
    %2463 = vmatprep.subr.mxu0 0.0
    %2464 = vmatpush2.msra.mxu0 0.0
    %2465 = vmatprep.subr.mxu0 0.0
    %2466 = vmatpush2.msra.mxu0 0.0
    %2467 = vmatprep.subr.mxu0 0.0
    %2468 = vmatpush2.msra.mxu0 0.0
    %2469 = vmatprep.subr.mxu0 0.0
    %2470 = vmatpush2.msra.mxu0 0.0
    %2471 = vmatprep.subr.mxu0 0.0
    %2472 = vmatpush2.msra.mxu0 0.0
    %2473 = vmatprep.subr.mxu0 0.0
    %2474 = vmatpush2.msra.mxu0 0.0
    %2475 = vmatprep.subr.mxu0 0.0
    %2476 = vmatpush2.msra.mxu0 0.0
    %2477 = vmatprep.subr.mxu0 0.0
    %2478 = vmatpush2.msra.mxu0 0.0
    %2479 = vmatprep.subr.mxu0 0.0
    %2480 = vmatpush2.msra.mxu0 0.0
    %2481 = vmatprep.subr.mxu0 0.0
    %2482 = vmatpush2.msra.mxu0 0.0
    %2483 = vmatprep.subr.mxu0 0.0
    %2484 = vmatpush2.msra.mxu0 0.0
    %2485 = vmatprep.subr.mxu0 0.0
    %2486 = vmatpush2.msra.mxu0 0.0
    %2487 = vmatprep.mubr.f32.mxu0 0.0
    %2488 = vmatmul.mubr.f32.gmra.mxu0 %v1402
    %v2489 = vpop.f32.mrf.mxu0
    %v2490 = vadd.f32 %v1343, %v2489
    %v2491 = vpop.f32.mrf.mxu0
    %2492 = vmatprep.mubr.f32.mxu0 0.0
    %2493 = vmatmul.mubr.f32.gmra.mxu0 %v1405
    %v2494 = vpop.f32.mrf.mxu0
    %v2495 = vadd.f32 %v1348, %v2494
    %v2496 = vpop.f32.mrf.mxu0
    %2497 = vmatprep.mubr.f32.mxu0 0.0
    %2498 = vmatmul.mubr.f32.gmra.mxu0 %v1408
    %v2499 = vpop.f32.mrf.mxu0
    %v2500 = vadd.f32 %v1353, %v2499
    %v2501 = vpop.f32.mrf.mxu0
    %2502 = vmatprep.mubr.f32.mxu0 0.0
    %2503 = vmatmul.mubr.f32.gmra.mxu0 %v1411
    %v2504 = vpop.f32.mrf.mxu0
    %v2505 = vadd.f32 %v1358, %v2504
    %v2506 = vpop.f32.mrf.mxu0
    %2507 = vmatprep.mubr.f32.mxu0 0.0
    %2508 = vmatmul.mubr.f32.gmra.mxu0 %v1414
    %v2509 = vpop.f32.mrf.mxu0
    %v2510 = vadd.f32 %v1363, %v2509
    %v2511 = vpop.f32.mrf.mxu0
    %2512 = vmatprep.mubr.f32.mxu0 0.0
    %2513 = vmatmul.mubr.f32.gmra.mxu0 %v1417
    %v2514 = vpop.f32.mrf.mxu0
    %v2515 = vadd.f32 %v1368, %v2514
    %v2516 = vpop.f32.mrf.mxu0
    %2517 = vmatprep.mubr.f32.mxu0 0.0
    %2518 = vmatmul.mubr.f32.gmra.mxu0 %v1420
    %v2519 = vpop.f32.mrf.mxu0
    %v2520 = vadd.f32 %v1373, %v2519
    %v2521 = vpop.f32.mrf.mxu0
    %2522 = vmatprep.mubr.f32.mxu0 0.0
    %2523 = vmatmul.mubr.f32.gmra.mxu0 %v1423
    %v2524 = vpop.f32.mrf.mxu0
    %v2525 = vadd.f32 %v1378, %v2524
    %v2526 = vpop.f32.mrf.mxu0
    %2527 = vmatprep.mubr.f32.mxu0 0.0
    %2528 = vmatmul.mubr.f32.gmra.mxu0 %v1426
    %v2529 = vpop.f32.mrf.mxu0
    %v2530 = vadd.f32 %v1383, %v2529
    %v2531 = vpop.f32.mrf.mxu0
    %2532 = vmatprep.mubr.f32.mxu0 0.0
    %2533 = vmatmul.mubr.f32.gmra.mxu0 %v1429
    %v2534 = vpop.f32.mrf.mxu0
    %v2535 = vadd.f32 %v1388, %v2534
    %v2536 = vpop.f32.mrf.mxu0
    %2537 = vmatprep.mubr.f32.mxu0 0.0
    %2538 = vmatmul.mubr.f32.gmra.mxu0 %v1432
    %v2539 = vpop.f32.mrf.mxu0
    %v2540 = vadd.f32 %v1393, %v2539
    %v2541 = vpop.f32.mrf.mxu0
    %2542 = vmatprep.mubr.f32.mxu0 0.0
    %2543 = vmatmul.mubr.f32.gmra.mxu0 %v1435
    %v2544 = vpop.f32.mrf.mxu0
    %v2545 = vadd.f32 %v1398, %v2544
    %v2546 = vpop.f32.mrf.mxu0
    %2547 = vdwg.mxu0
    %v2548 = vld [vmem:[%s886] sm:$0xff]
    %v2549 = vld [vmem:[%s886 + $0x8] sm:$0xff]
    %v2550 = vld [vmem:[%s886 + $0x10] sm:$0xff]
    %v2551 = vadd.f32 %v2548, %v2490
    %v2552 = vxor.u32 %v2551, 2147483648
    %v2553 = vmul.f32 %v2552, 1.442695
    %v2554 = vpow.pop %v2553
    %v2555 = vadd.f32 %v2554, 1.0
    %v2556 = vrcp.pop %v2555
    %v2557 = vmul.f32 1.0, %v2556
    %v2558 = vadd.f32 %v2549, %v2495
    %v2559 = vxor.u32 %v2558, 2147483648
    %v2560 = vmul.f32 %v2559, 1.442695
    %v2561 = vpow.pop %v2560
    %v2562 = vadd.f32 %v2561, 1.0
    %v2563 = vrcp.pop %v2562
    %v2564 = vmul.f32 1.0, %v2563
    %v2565 = vmul.f32 %v2557, %v2500
    %v2566 = vadd.f32 %v2550, %v2565
    %v2567 = vtanh.pop %v2566
    %v2568 = vsub.f32 1.0, %v2564
    %v2569 = vmul.f32 %v2568, %v2567
    %v2570 = vmul.f32 %v2564, %v2324
    %v2571 = vadd.f32 %v2569, %v2570
    %v2572 = vld [vmem:[%s744] sm:$0xff]
    %v2573 = vld [vmem:[%s744 + $0x8] sm:$0xff]
    %v2574 = vld [vmem:[%s744 + $0x10] sm:$0xff]
    %v2575 = vadd.f32 %v2572, %v2505
    %v2576 = vxor.u32 %v2575, 2147483648
    %v2577 = vmul.f32 %v2576, 1.442695
    %v2578 = vpow.pop %v2577
    %v2579 = vadd.f32 %v2578, 1.0
    %v2580 = vrcp.pop %v2579
    %v2581 = vmul.f32 1.0, %v2580
    %v2582 = vadd.f32 %v2573, %v2510
    %v2583 = vxor.u32 %v2582, 2147483648
    %v2584 = vmul.f32 %v2583, 1.442695
    %v2585 = vpow.pop %v2584
    %v2586 = vadd.f32 %v2585, 1.0
    %v2587 = vrcp.pop %v2586
    %v2588 = vmul.f32 1.0, %v2587
    %v2589 = vmul.f32 %v2581, %v2515
    %v2590 = vadd.f32 %v2574, %v2589
    %v2591 = vtanh.pop %v2590
    %v2592 = vsub.f32 1.0, %v2588
    %v2593 = vmul.f32 %v2592, %v2591
    %v2594 = vmul.f32 %v2588, %v2348
    %v2595 = vadd.f32 %v2593, %v2594
    %v2596 = vld [vmem:[%s894] sm:$0xff]
    %v2597 = vld [vmem:[%s894 + $0x8] sm:$0xff]
    %v2598 = vld [vmem:[%s894 + $0x10] sm:$0xff]
    %v2599 = vadd.f32 %v2596, %v2520
    %v2600 = vxor.u32 %v2599, 2147483648
    %v2601 = vmul.f32 %v2600, 1.442695
    %v2602 = vpow.pop %v2601
    %v2603 = vadd.f32 %v2602, 1.0
    %v2604 = vrcp.pop %v2603
    %v2605 = vmul.f32 1.0, %v2604
    %v2606 = vadd.f32 %v2597, %v2525
    %v2607 = vxor.u32 %v2606, 2147483648
    %v2608 = vmul.f32 %v2607, 1.442695
    %v2609 = vpow.pop %v2608
    %v2610 = vadd.f32 %v2609, 1.0
    %v2611 = vrcp.pop %v2610
    %v2612 = vmul.f32 1.0, %v2611
    %v2613 = vmul.f32 %v2605, %v2530
    %v2614 = vadd.f32 %v2598, %v2613
    %v2615 = vtanh.pop %v2614
    %v2616 = vsub.f32 1.0, %v2612
    %v2617 = vmul.f32 %v2616, %v2615
    %v2618 = vmul.f32 %v2612, %v2372
    %v2619 = vadd.f32 %v2617, %v2618
    %v2620 = vld [vmem:[%s752] sm:$0xff]
    %v2621 = vld [vmem:[%s752 + $0x8] sm:$0xff]
    %v2622 = vld [vmem:[%s752 + $0x10] sm:$0xff]
    %v2623 = vadd.f32 %v2620, %v2535
    %v2624 = vxor.u32 %v2623, 2147483648
    %v2625 = vmul.f32 %v2624, 1.442695
    %v2626 = vpow.pop %v2625
    %v2627 = vadd.f32 %v2626, 1.0
    %v2628 = vrcp.pop %v2627
    %v2629 = vmul.f32 1.0, %v2628
    %v2630 = vadd.f32 %v2621, %v2540
    %v2631 = vxor.u32 %v2630, 2147483648
    %v2632 = vmul.f32 %v2631, 1.442695
    %v2633 = vpow.pop %v2632
    %v2634 = vadd.f32 %v2633, 1.0
    %v2635 = vrcp.pop %v2634
    %v2636 = vmul.f32 1.0, %v2635
    %v2637 = vmul.f32 %v2629, %v2545
    %v2638 = vadd.f32 %v2622, %v2637
    %v2639 = vtanh.pop %v2638
    %v2640 = vsub.f32 1.0, %v2636
    %v2641 = vmul.f32 %v2640, %v2639
    %v2642 = vmul.f32 %v2636, %v2396
    %v2643 = vadd.f32 %v2641, %v2642
    %s2644 = scalar_lea.vmem [#allocation3], 32
    %2645 = vst.msk [vmem:[%s2644] sm:$0xff] %vm302, %v2571
    %s2646 = scalar_lea.vmem [#allocation4], 24
    %2647 = vst.msk [vmem:[%s2646] sm:$0xff] %vm302, %v2595
    %v2648 = vmax.f32 %v2619, 0.0
    %v2649 = vand.u32 2147483647, %v2619
    %v2650 = vsub.f32 0.0, %v2649
    %v2651 = vmul.f32 %v2650, 1.442695
    %v2652 = vpow.pop %v2651
    %v2653 = vadd.f32 %v2652, 1.0
    %v2654 = vlog2.pop %v2653
    %v2655 = vmul.f32 %v2654, 0.6931472
    %v2656 = vadd.f32 %v2648, %v2655
    %s2657 = scalar_lea.vmem [#allocation7], 32
    %2658 = vst.msk [vmem:[%s2657] sm:$0xff] %vm302, %v2656
    %v2659 = vmax.f32 %v2643, 0.0
    %v2660 = vand.u32 2147483647, %v2643
    %v2661 = vsub.f32 0.0, %v2660
    %v2662 = vmul.f32 %v2661, 1.442695
    %v2663 = vpow.pop %v2662
    %v2664 = vadd.f32 %v2663, 1.0
    %v2665 = vlog2.pop %v2664
    %v2666 = vmul.f32 %v2665, 0.6931472
    %v2667 = vadd.f32 %v2659, %v2666
    %s2668 = scalar_lea.vmem [#allocation7], 88
    %2669 = vst.msk [vmem:[%s2668] sm:$0xff] %vm302, %v2667
    %2670 = vmatprep.subr.mxu0 0.0
    %2671 = vmatpush1.msra.mxu0 0.0
    %2672 = vmatprep.subr.mxu0 0.0
    %2673 = vmatpush1.msra.mxu0 0.0
    %2674 = vmatprep.subr.mxu0 0.0
    %2675 = vmatpush1.msra.mxu0 0.0
    %2676 = vmatprep.subr.mxu0 0.0
    %2677 = vmatpush1.msra.mxu0 0.0
    %2678 = vmatprep.subr.mxu0 0.0
    %2679 = vmatpush1.msra.mxu0 0.0
    %2680 = vmatprep.subr.mxu0 0.0
    %2681 = vmatpush1.msra.mxu0 0.0
    %2682 = vmatprep.subr.mxu0 0.0
    %2683 = vmatpush1.msra.mxu0 0.0
    %2684 = vmatprep.subr.mxu0 0.0
    %2685 = vmatpush1.msra.mxu0 0.0
    %2686 = vmatprep.subr.mxu0 0.0
    %2687 = vmatpush1.msra.mxu0 0.0
    %2688 = vmatprep.subr.mxu0 0.0
    %2689 = vmatpush1.msra.mxu0 0.0
    %2690 = vmatprep.subr.mxu0 0.0
    %2691 = vmatpush1.msra.mxu0 0.0
    %2692 = vmatprep.subr.mxu0 0.0
    %2693 = vmatpush1.msra.mxu0 0.0
    %2694 = vmatprep.subr.mxu0 0.0
    %2695 = vmatpush1.msra.mxu0 %v2643
    %2696 = vmatprep.subr.mxu0 0.0
    %2697 = vmatpush1.msra.mxu0 %v2619
    %2698 = vmatprep.subr.mxu0 0.0
    %2699 = vmatpush1.msra.mxu0 %v2595
    %2700 = vmatprep.subr.mxu0 0.0
    %2701 = vmatpush1.msra.mxu0 %v2571
    %2702 = vmatprep.subr.mxu0 0.0
    %2703 = vmatpush2.msra.mxu0 0.0
    %2704 = vmatprep.subr.mxu0 0.0
    %2705 = vmatpush2.msra.mxu0 0.0
    %2706 = vmatprep.subr.mxu0 0.0
    %2707 = vmatpush2.msra.mxu0 0.0
    %2708 = vmatprep.subr.mxu0 0.0
    %2709 = vmatpush2.msra.mxu0 0.0
    %2710 = vmatprep.subr.mxu0 0.0
    %2711 = vmatpush2.msra.mxu0 0.0
    %2712 = vmatprep.subr.mxu0 0.0
    %2713 = vmatpush2.msra.mxu0 0.0
    %2714 = vmatprep.subr.mxu0 0.0
    %2715 = vmatpush2.msra.mxu0 0.0
    %2716 = vmatprep.subr.mxu0 0.0
    %2717 = vmatpush2.msra.mxu0 0.0
    %2718 = vmatprep.subr.mxu0 0.0
    %2719 = vmatpush2.msra.mxu0 0.0
    %2720 = vmatprep.subr.mxu0 0.0
    %2721 = vmatpush2.msra.mxu0 0.0
    %2722 = vmatprep.subr.mxu0 0.0
    %2723 = vmatpush2.msra.mxu0 0.0
    %2724 = vmatprep.subr.mxu0 0.0
    %2725 = vmatpush2.msra.mxu0 0.0
    %2726 = vmatprep.subr.mxu0 0.0
    %2727 = vmatpush2.msra.mxu0 0.0
    %2728 = vmatprep.subr.mxu0 0.0
    %2729 = vmatpush2.msra.mxu0 0.0
    %2730 = vmatprep.subr.mxu0 0.0
    %2731 = vmatpush2.msra.mxu0 0.0
    %2732 = vmatprep.subr.mxu0 0.0
    %2733 = vmatpush2.msra.mxu0 0.0
    %2734 = vmatprep.mubr.f32.mxu0 0.0
    %2735 = vmatmul.mubr.f32.gmra.mxu0 %v1402
    %v2736 = vpop.f32.mrf.mxu0
    %v2737 = vadd.f32 %v1343, %v2736
    %v2738 = vpop.f32.mrf.mxu0
    %2739 = vmatprep.mubr.f32.mxu0 0.0
    %2740 = vmatmul.mubr.f32.gmra.mxu0 %v1405
    %v2741 = vpop.f32.mrf.mxu0
    %v2742 = vadd.f32 %v1348, %v2741
    %v2743 = vpop.f32.mrf.mxu0
    %2744 = vmatprep.mubr.f32.mxu0 0.0
    %2745 = vmatmul.mubr.f32.gmra.mxu0 %v1408
    %v2746 = vpop.f32.mrf.mxu0
    %v2747 = vadd.f32 %v1353, %v2746
    %v2748 = vpop.f32.mrf.mxu0
    %2749 = vmatprep.mubr.f32.mxu0 0.0
    %2750 = vmatmul.mubr.f32.gmra.mxu0 %v1411
    %v2751 = vpop.f32.mrf.mxu0
    %v2752 = vadd.f32 %v1358, %v2751
    %v2753 = vpop.f32.mrf.mxu0
    %2754 = vmatprep.mubr.f32.mxu0 0.0
    %2755 = vmatmul.mubr.f32.gmra.mxu0 %v1414
    %v2756 = vpop.f32.mrf.mxu0
    %v2757 = vadd.f32 %v1363, %v2756
    %v2758 = vpop.f32.mrf.mxu0
    %2759 = vmatprep.mubr.f32.mxu0 0.0
    %2760 = vmatmul.mubr.f32.gmra.mxu0 %v1417
    %v2761 = vpop.f32.mrf.mxu0
    %v2762 = vadd.f32 %v1368, %v2761
    %v2763 = vpop.f32.mrf.mxu0
    %2764 = vmatprep.mubr.f32.mxu0 0.0
    %2765 = vmatmul.mubr.f32.gmra.mxu0 %v1420
    %v2766 = vpop.f32.mrf.mxu0
    %v2767 = vadd.f32 %v1373, %v2766
    %v2768 = vpop.f32.mrf.mxu0
    %2769 = vmatprep.mubr.f32.mxu0 0.0
    %2770 = vmatmul.mubr.f32.gmra.mxu0 %v1423
    %v2771 = vpop.f32.mrf.mxu0
    %v2772 = vadd.f32 %v1378, %v2771
    %v2773 = vpop.f32.mrf.mxu0
    %2774 = vmatprep.mubr.f32.mxu0 0.0
    %2775 = vmatmul.mubr.f32.gmra.mxu0 %v1426
    %v2776 = vpop.f32.mrf.mxu0
    %v2777 = vadd.f32 %v1383, %v2776
    %v2778 = vpop.f32.mrf.mxu0
    %2779 = vmatprep.mubr.f32.mxu0 0.0
    %2780 = vmatmul.mubr.f32.gmra.mxu0 %v1429
    %v2781 = vpop.f32.mrf.mxu0
    %v2782 = vadd.f32 %v1388, %v2781
    %v2783 = vpop.f32.mrf.mxu0
    %2784 = vmatprep.mubr.f32.mxu0 0.0
    %2785 = vmatmul.mubr.f32.gmra.mxu0 %v1432
    %v2786 = vpop.f32.mrf.mxu0
    %v2787 = vadd.f32 %v1393, %v2786
    %v2788 = vpop.f32.mrf.mxu0
    %2789 = vmatprep.mubr.f32.mxu0 0.0
    %2790 = vmatmul.mubr.f32.gmra.mxu0 %v1435
    %v2791 = vpop.f32.mrf.mxu0
    %v2792 = vadd.f32 %v1398, %v2791
    %v2793 = vpop.f32.mrf.mxu0
    %2794 = vdwg.mxu0
    %v2795 = vld [vmem:[%s1032] sm:$0xff]
    %v2796 = vld [vmem:[%s1032 + $0x8] sm:$0xff]
    %v2797 = vld [vmem:[%s1032 + $0x10] sm:$0xff]
    %v2798 = vadd.f32 %v2795, %v2737
    %v2799 = vxor.u32 %v2798, 2147483648
    %v2800 = vmul.f32 %v2799, 1.442695
    %v2801 = vpow.pop %v2800
    %v2802 = vadd.f32 %v2801, 1.0
    %v2803 = vrcp.pop %v2802
    %v2804 = vmul.f32 1.0, %v2803
    %v2805 = vadd.f32 %v2796, %v2742
    %v2806 = vxor.u32 %v2805, 2147483648
    %v2807 = vmul.f32 %v2806, 1.442695
    %v2808 = vpow.pop %v2807
    %v2809 = vadd.f32 %v2808, 1.0
    %v2810 = vrcp.pop %v2809
    %v2811 = vmul.f32 1.0, %v2810
    %v2812 = vmul.f32 %v2804, %v2747
    %v2813 = vadd.f32 %v2797, %v2812
    %v2814 = vtanh.pop %v2813
    %v2815 = vsub.f32 1.0, %v2811
    %v2816 = vmul.f32 %v2815, %v2814
    %v2817 = vmul.f32 %v2811, %v2571
    %v2818 = vadd.f32 %v2816, %v2817
    %v2819 = vld [vmem:[%s598] sm:$0xff]
    %v2820 = vld [vmem:[%s598 + $0x8] sm:$0xff]
    %v2821 = vld [vmem:[%s598 + $0x10] sm:$0xff]
    %v2822 = vadd.f32 %v2819, %v2752
    %v2823 = vxor.u32 %v2822, 2147483648
    %v2824 = vmul.f32 %v2823, 1.442695
    %v2825 = vpow.pop %v2824
    %v2826 = vadd.f32 %v2825, 1.0
    %v2827 = vrcp.pop %v2826
    %v2828 = vmul.f32 1.0, %v2827
    %v2829 = vadd.f32 %v2820, %v2757
    %v2830 = vxor.u32 %v2829, 2147483648
    %v2831 = vmul.f32 %v2830, 1.442695
    %v2832 = vpow.pop %v2831
    %v2833 = vadd.f32 %v2832, 1.0
    %v2834 = vrcp.pop %v2833
    %v2835 = vmul.f32 1.0, %v2834
    %v2836 = vmul.f32 %v2828, %v2762
    %v2837 = vadd.f32 %v2821, %v2836
    %v2838 = vtanh.pop %v2837
    %v2839 = vsub.f32 1.0, %v2835
    %v2840 = vmul.f32 %v2839, %v2838
    %v2841 = vmul.f32 %v2835, %v2595
    %v2842 = vadd.f32 %v2840, %v2841
    %v2843 = vld [vmem:[%s1040] sm:$0xff]
    %v2844 = vld [vmem:[%s1040 + $0x8] sm:$0xff]
    %v2845 = vld [vmem:[%s1040 + $0x10] sm:$0xff]
    %v2846 = vadd.f32 %v2843, %v2767
    %v2847 = vxor.u32 %v2846, 2147483648
    %v2848 = vmul.f32 %v2847, 1.442695
    %v2849 = vpow.pop %v2848
    %v2850 = vadd.f32 %v2849, 1.0
    %v2851 = vrcp.pop %v2850
    %v2852 = vmul.f32 1.0, %v2851
    %v2853 = vadd.f32 %v2844, %v2772
    %v2854 = vxor.u32 %v2853, 2147483648
    %v2855 = vmul.f32 %v2854, 1.442695
    %v2856 = vpow.pop %v2855
    %v2857 = vadd.f32 %v2856, 1.0
    %v2858 = vrcp.pop %v2857
    %v2859 = vmul.f32 1.0, %v2858
    %v2860 = vmul.f32 %v2852, %v2777
    %v2861 = vadd.f32 %v2845, %v2860
    %v2862 = vtanh.pop %v2861
    %v2863 = vsub.f32 1.0, %v2859
    %v2864 = vmul.f32 %v2863, %v2862
    %v2865 = vmul.f32 %v2859, %v2619
    %v2866 = vadd.f32 %v2864, %v2865
    %v2867 = vld [vmem:[%s606] sm:$0xff]
    %v2868 = vld [vmem:[%s606 + $0x8] sm:$0xff]
    %v2869 = vld [vmem:[%s606 + $0x10] sm:$0xff]
    %v2870 = vadd.f32 %v2867, %v2782
    %v2871 = vxor.u32 %v2870, 2147483648
    %v2872 = vmul.f32 %v2871, 1.442695
    %v2873 = vpow.pop %v2872
    %v2874 = vadd.f32 %v2873, 1.0
    %v2875 = vrcp.pop %v2874
    %v2876 = vmul.f32 1.0, %v2875
    %v2877 = vadd.f32 %v2868, %v2787
    %v2878 = vxor.u32 %v2877, 2147483648
    %v2879 = vmul.f32 %v2878, 1.442695
    %v2880 = vpow.pop %v2879
    %v2881 = vadd.f32 %v2880, 1.0
    %v2882 = vrcp.pop %v2881
    %v2883 = vmul.f32 1.0, %v2882
    %v2884 = vmul.f32 %v2876, %v2792
    %v2885 = vadd.f32 %v2869, %v2884
    %v2886 = vtanh.pop %v2885
    %v2887 = vsub.f32 1.0, %v2883
    %v2888 = vmul.f32 %v2887, %v2886
    %v2889 = vmul.f32 %v2883, %v2643
    %v2890 = vadd.f32 %v2888, %v2889
    %s2891 = scalar_lea.vmem [#allocation3], 40
    %2892 = vst.msk [vmem:[%s2891] sm:$0xff] %vm302, %v2818
    %s2893 = scalar_lea.vmem [#allocation4], 16
    %2894 = vst.msk [vmem:[%s2893] sm:$0xff] %vm302, %v2842
    %v2895 = vmax.f32 %v2866, 0.0
    %v2896 = vand.u32 2147483647, %v2866
    %v2897 = vsub.f32 0.0, %v2896
    %v2898 = vmul.f32 %v2897, 1.442695
    %v2899 = vpow.pop %v2898
    %v2900 = vadd.f32 %v2899, 1.0
    %v2901 = vlog2.pop %v2900
    %v2902 = vmul.f32 %v2901, 0.6931472
    %v2903 = vadd.f32 %v2895, %v2902
    %s2904 = scalar_lea.vmem [#allocation7], 40
    %2905 = vst.msk [vmem:[%s2904] sm:$0xff] %vm302, %v2903
    %v2906 = vmax.f32 %v2890, 0.0
    %v2907 = vand.u32 2147483647, %v2890
    %v2908 = vsub.f32 0.0, %v2907
    %v2909 = vmul.f32 %v2908, 1.442695
    %v2910 = vpow.pop %v2909
    %v2911 = vadd.f32 %v2910, 1.0
    %v2912 = vlog2.pop %v2911
    %v2913 = vmul.f32 %v2912, 0.6931472
    %v2914 = vadd.f32 %v2906, %v2913
    %s2915 = scalar_lea.vmem [#allocation7], 80
    %2916 = vst.msk [vmem:[%s2915] sm:$0xff] %vm302, %v2914
    %2917 = vmatprep.subr.mxu0 0.0
    %2918 = vmatpush1.msra.mxu0 0.0
    %2919 = vmatprep.subr.mxu0 0.0
    %2920 = vmatpush1.msra.mxu0 0.0
    %2921 = vmatprep.subr.mxu0 0.0
    %2922 = vmatpush1.msra.mxu0 0.0
    %2923 = vmatprep.subr.mxu0 0.0
    %2924 = vmatpush1.msra.mxu0 0.0
    %2925 = vmatprep.subr.mxu0 0.0
    %2926 = vmatpush1.msra.mxu0 0.0
    %2927 = vmatprep.subr.mxu0 0.0
    %2928 = vmatpush1.msra.mxu0 0.0
    %2929 = vmatprep.subr.mxu0 0.0
    %2930 = vmatpush1.msra.mxu0 0.0
    %2931 = vmatprep.subr.mxu0 0.0
    %2932 = vmatpush1.msra.mxu0 0.0
    %2933 = vmatprep.subr.mxu0 0.0
    %2934 = vmatpush1.msra.mxu0 0.0
    %2935 = vmatprep.subr.mxu0 0.0
    %2936 = vmatpush1.msra.mxu0 0.0
    %2937 = vmatprep.subr.mxu0 0.0
    %2938 = vmatpush1.msra.mxu0 0.0
    %2939 = vmatprep.subr.mxu0 0.0
    %2940 = vmatpush1.msra.mxu0 0.0
    %2941 = vmatprep.subr.mxu0 0.0
    %2942 = vmatpush1.msra.mxu0 %v2890
    %2943 = vmatprep.subr.mxu0 0.0
    %2944 = vmatpush1.msra.mxu0 %v2866
    %2945 = vmatprep.subr.mxu0 0.0
    %2946 = vmatpush1.msra.mxu0 %v2842
    %2947 = vmatprep.subr.mxu0 0.0
    %2948 = vmatpush1.msra.mxu0 %v2818
    %2949 = vmatprep.subr.mxu0 0.0
    %2950 = vmatpush2.msra.mxu0 0.0
    %2951 = vmatprep.subr.mxu0 0.0
    %2952 = vmatpush2.msra.mxu0 0.0
    %2953 = vmatprep.subr.mxu0 0.0
    %2954 = vmatpush2.msra.mxu0 0.0
    %2955 = vmatprep.subr.mxu0 0.0
    %2956 = vmatpush2.msra.mxu0 0.0
    %2957 = vmatprep.subr.mxu0 0.0
    %2958 = vmatpush2.msra.mxu0 0.0
    %2959 = vmatprep.subr.mxu0 0.0
    %2960 = vmatpush2.msra.mxu0 0.0
    %2961 = vmatprep.subr.mxu0 0.0
    %2962 = vmatpush2.msra.mxu0 0.0
    %2963 = vmatprep.subr.mxu0 0.0
    %2964 = vmatpush2.msra.mxu0 0.0
    %2965 = vmatprep.subr.mxu0 0.0
    %2966 = vmatpush2.msra.mxu0 0.0
    %2967 = vmatprep.subr.mxu0 0.0
    %2968 = vmatpush2.msra.mxu0 0.0
    %2969 = vmatprep.subr.mxu0 0.0
    %2970 = vmatpush2.msra.mxu0 0.0
    %2971 = vmatprep.subr.mxu0 0.0
    %2972 = vmatpush2.msra.mxu0 0.0
    %2973 = vmatprep.subr.mxu0 0.0
    %2974 = vmatpush2.msra.mxu0 0.0
    %2975 = vmatprep.subr.mxu0 0.0
    %2976 = vmatpush2.msra.mxu0 0.0
    %2977 = vmatprep.subr.mxu0 0.0
    %2978 = vmatpush2.msra.mxu0 0.0
    %2979 = vmatprep.subr.mxu0 0.0
    %2980 = vmatpush2.msra.mxu0 0.0
    %2981 = vmatprep.mubr.f32.mxu0 0.0
    %2982 = vmatmul.mubr.f32.gmra.mxu0 %v1402
    %v2983 = vpop.f32.mrf.mxu0
    %v2984 = vadd.f32 %v1343, %v2983
    %v2985 = vpop.f32.mrf.mxu0
    %2986 = vmatprep.mubr.f32.mxu0 0.0
    %2987 = vmatmul.mubr.f32.gmra.mxu0 %v1405
    %v2988 = vpop.f32.mrf.mxu0
    %v2989 = vadd.f32 %v1348, %v2988
    %v2990 = vpop.f32.mrf.mxu0
    %2991 = vmatprep.mubr.f32.mxu0 0.0
    %2992 = vmatmul.mubr.f32.gmra.mxu0 %v1408
    %v2993 = vpop.f32.mrf.mxu0
    %v2994 = vadd.f32 %v1353, %v2993
    %v2995 = vpop.f32.mrf.mxu0
    %2996 = vmatprep.mubr.f32.mxu0 0.0
    %2997 = vmatmul.mubr.f32.gmra.mxu0 %v1411
    %v2998 = vpop.f32.mrf.mxu0
    %v2999 = vadd.f32 %v1358, %v2998
    %v3000 = vpop.f32.mrf.mxu0
    %3001 = vmatprep.mubr.f32.mxu0 0.0
    %3002 = vmatmul.mubr.f32.gmra.mxu0 %v1414
    %v3003 = vpop.f32.mrf.mxu0
    %v3004 = vadd.f32 %v1363, %v3003
    %v3005 = vpop.f32.mrf.mxu0
    %3006 = vmatprep.mubr.f32.mxu0 0.0
    %3007 = vmatmul.mubr.f32.gmra.mxu0 %v1417
    %v3008 = vpop.f32.mrf.mxu0
    %v3009 = vadd.f32 %v1368, %v3008
    %v3010 = vpop.f32.mrf.mxu0
    %3011 = vmatprep.mubr.f32.mxu0 0.0
    %3012 = vmatmul.mubr.f32.gmra.mxu0 %v1420
    %v3013 = vpop.f32.mrf.mxu0
    %v3014 = vadd.f32 %v1373, %v3013
    %v3015 = vpop.f32.mrf.mxu0
    %3016 = vmatprep.mubr.f32.mxu0 0.0
    %3017 = vmatmul.mubr.f32.gmra.mxu0 %v1423
    %v3018 = vpop.f32.mrf.mxu0
    %v3019 = vadd.f32 %v1378, %v3018
    %v3020 = vpop.f32.mrf.mxu0
    %3021 = vmatprep.mubr.f32.mxu0 0.0
    %3022 = vmatmul.mubr.f32.gmra.mxu0 %v1426
    %v3023 = vpop.f32.mrf.mxu0
    %v3024 = vadd.f32 %v1383, %v3023
    %v3025 = vpop.f32.mrf.mxu0
    %3026 = vmatprep.mubr.f32.mxu0 0.0
    %3027 = vmatmul.mubr.f32.gmra.mxu0 %v1429
    %v3028 = vpop.f32.mrf.mxu0
    %v3029 = vadd.f32 %v1388, %v3028
    %v3030 = vpop.f32.mrf.mxu0
    %3031 = vmatprep.mubr.f32.mxu0 0.0
    %3032 = vmatmul.mubr.f32.gmra.mxu0 %v1432
    %v3033 = vpop.f32.mrf.mxu0
    %v3034 = vadd.f32 %v1393, %v3033
    %v3035 = vpop.f32.mrf.mxu0
    %3036 = vmatprep.mubr.f32.mxu0 0.0
    %3037 = vmatmul.mubr.f32.gmra.mxu0 %v1435
    %v3038 = vpop.f32.mrf.mxu0
    %v3039 = vadd.f32 %v1398, %v3038
    %v3040 = vpop.f32.mrf.mxu0
    %3041 = vdwg.mxu0
    %v3042 = vld [vmem:[%s1178] sm:$0xff]
    %v3043 = vld [vmem:[%s1178 + $0x8] sm:$0xff]
    %v3044 = vld [vmem:[%s1178 + $0x10] sm:$0xff]
    %v3045 = vadd.f32 %v3042, %v2984
    %v3046 = vxor.u32 %v3045, 2147483648
    %v3047 = vmul.f32 %v3046, 1.442695
    %v3048 = vpow.pop %v3047
    %v3049 = vadd.f32 %v3048, 1.0
    %v3050 = vrcp.pop %v3049
    %v3051 = vmul.f32 1.0, %v3050
    %v3052 = vadd.f32 %v3043, %v2989
    %v3053 = vxor.u32 %v3052, 2147483648
    %v3054 = vmul.f32 %v3053, 1.442695
    %v3055 = vpow.pop %v3054
    %v3056 = vadd.f32 %v3055, 1.0
    %v3057 = vrcp.pop %v3056
    %v3058 = vmul.f32 1.0, %v3057
    %v3059 = vmul.f32 %v3051, %v2994
    %v3060 = vadd.f32 %v3044, %v3059
    %v3061 = vtanh.pop %v3060
    %v3062 = vsub.f32 1.0, %v3058
    %v3063 = vmul.f32 %v3062, %v3061
    %v3064 = vmul.f32 %v3058, %v2818
    %v3065 = vadd.f32 %v3063, %v3064
    %v3066 = vld [vmem:[%s452] sm:$0xff]
    %v3067 = vld [vmem:[%s452 + $0x8] sm:$0xff]
    %v3068 = vld [vmem:[%s452 + $0x10] sm:$0xff]
    %v3069 = vadd.f32 %v3066, %v2999
    %v3070 = vxor.u32 %v3069, 2147483648
    %v3071 = vmul.f32 %v3070, 1.442695
    %v3072 = vpow.pop %v3071
    %v3073 = vadd.f32 %v3072, 1.0
    %v3074 = vrcp.pop %v3073
    %v3075 = vmul.f32 1.0, %v3074
    %v3076 = vadd.f32 %v3067, %v3004
    %v3077 = vxor.u32 %v3076, 2147483648
    %v3078 = vmul.f32 %v3077, 1.442695
    %v3079 = vpow.pop %v3078
    %v3080 = vadd.f32 %v3079, 1.0
    %v3081 = vrcp.pop %v3080
    %v3082 = vmul.f32 1.0, %v3081
    %v3083 = vmul.f32 %v3075, %v3009
    %v3084 = vadd.f32 %v3068, %v3083
    %v3085 = vtanh.pop %v3084
    %v3086 = vsub.f32 1.0, %v3082
    %v3087 = vmul.f32 %v3086, %v3085
    %v3088 = vmul.f32 %v3082, %v2842
    %v3089 = vadd.f32 %v3087, %v3088
    %v3090 = vld [vmem:[%s1186] sm:$0xff]
    %v3091 = vld [vmem:[%s1186 + $0x8] sm:$0xff]
    %v3092 = vld [vmem:[%s1186 + $0x10] sm:$0xff]
    %v3093 = vadd.f32 %v3090, %v3014
    %v3094 = vxor.u32 %v3093, 2147483648
    %v3095 = vmul.f32 %v3094, 1.442695
    %v3096 = vpow.pop %v3095
    %v3097 = vadd.f32 %v3096, 1.0
    %v3098 = vrcp.pop %v3097
    %v3099 = vmul.f32 1.0, %v3098
    %v3100 = vadd.f32 %v3091, %v3019
    %v3101 = vxor.u32 %v3100, 2147483648
    %v3102 = vmul.f32 %v3101, 1.442695
    %v3103 = vpow.pop %v3102
    %v3104 = vadd.f32 %v3103, 1.0
    %v3105 = vrcp.pop %v3104
    %v3106 = vmul.f32 1.0, %v3105
    %v3107 = vmul.f32 %v3099, %v3024
    %v3108 = vadd.f32 %v3092, %v3107
    %v3109 = vtanh.pop %v3108
    %v3110 = vsub.f32 1.0, %v3106
    %v3111 = vmul.f32 %v3110, %v3109
    %v3112 = vmul.f32 %v3106, %v2866
    %v3113 = vadd.f32 %v3111, %v3112
    %v3114 = vld [vmem:[%s460] sm:$0xff]
    %v3115 = vld [vmem:[%s460 + $0x8] sm:$0xff]
    %v3116 = vld [vmem:[%s460 + $0x10] sm:$0xff]
    %v3117 = vadd.f32 %v3114, %v3029
    %v3118 = vxor.u32 %v3117, 2147483648
    %v3119 = vmul.f32 %v3118, 1.442695
    %v3120 = vpow.pop %v3119
    %v3121 = vadd.f32 %v3120, 1.0
    %v3122 = vrcp.pop %v3121
    %v3123 = vmul.f32 1.0, %v3122
    %v3124 = vadd.f32 %v3115, %v3034
    %v3125 = vxor.u32 %v3124, 2147483648
    %v3126 = vmul.f32 %v3125, 1.442695
    %v3127 = vpow.pop %v3126
    %v3128 = vadd.f32 %v3127, 1.0
    %v3129 = vrcp.pop %v3128
    %v3130 = vmul.f32 1.0, %v3129
    %v3131 = vmul.f32 %v3123, %v3039
    %v3132 = vadd.f32 %v3116, %v3131
    %v3133 = vtanh.pop %v3132
    %v3134 = vsub.f32 1.0, %v3130
    %v3135 = vmul.f32 %v3134, %v3133
    %v3136 = vmul.f32 %v3130, %v2890
    %v3137 = vadd.f32 %v3135, %v3136
    %s3138 = scalar_lea.vmem [#allocation3], 48
    %3139 = vst.msk [vmem:[%s3138] sm:$0xff] %vm302, %v3065
    %s3140 = scalar_lea.vmem [#allocation4], 8
    %3141 = vst.msk [vmem:[%s3140] sm:$0xff] %vm302, %v3089
    %v3142 = vmax.f32 %v3113, 0.0
    %v3143 = vand.u32 2147483647, %v3113
    %v3144 = vsub.f32 0.0, %v3143
    %v3145 = vmul.f32 %v3144, 1.442695
    %v3146 = vpow.pop %v3145
    %v3147 = vadd.f32 %v3146, 1.0
    %v3148 = vlog2.pop %v3147
    %v3149 = vmul.f32 %v3148, 0.6931472
    %v3150 = vadd.f32 %v3142, %v3149
    %s3151 = scalar_lea.vmem [#allocation7], 48
    %3152 = vst.msk [vmem:[%s3151] sm:$0xff] %vm302, %v3150
    %v3153 = vmax.f32 %v3137, 0.0
    %v3154 = vand.u32 2147483647, %v3137
    %v3155 = vsub.f32 0.0, %v3154
    %v3156 = vmul.f32 %v3155, 1.442695
    %v3157 = vpow.pop %v3156
    %v3158 = vadd.f32 %v3157, 1.0
    %v3159 = vlog2.pop %v3158
    %v3160 = vmul.f32 %v3159, 0.6931472
    %v3161 = vadd.f32 %v3153, %v3160
    %s3162 = scalar_lea.vmem [#allocation7], 72
    %3163 = vst.msk [vmem:[%s3162] sm:$0xff] %vm302, %v3161
    %3164 = vmatprep.subr.mxu0 0.0
    %3165 = vmatpush1.msra.mxu0 0.0
    %3166 = vmatprep.subr.mxu0 0.0
    %3167 = vmatpush1.msra.mxu0 0.0
    %3168 = vmatprep.subr.mxu0 0.0
    %3169 = vmatpush1.msra.mxu0 0.0
    %3170 = vmatprep.subr.mxu0 0.0
    %3171 = vmatpush1.msra.mxu0 0.0
    %3172 = vmatprep.subr.mxu0 0.0
    %3173 = vmatpush1.msra.mxu0 0.0
    %3174 = vmatprep.subr.mxu0 0.0
    %3175 = vmatpush1.msra.mxu0 0.0
    %3176 = vmatprep.subr.mxu0 0.0
    %3177 = vmatpush1.msra.mxu0 0.0
    %3178 = vmatprep.subr.mxu0 0.0
    %3179 = vmatpush1.msra.mxu0 0.0
    %3180 = vmatprep.subr.mxu0 0.0
    %3181 = vmatpush1.msra.mxu0 0.0
    %3182 = vmatprep.subr.mxu0 0.0
    %3183 = vmatpush1.msra.mxu0 0.0
    %3184 = vmatprep.subr.mxu0 0.0
    %3185 = vmatpush1.msra.mxu0 0.0
    %3186 = vmatprep.subr.mxu0 0.0
    %3187 = vmatpush1.msra.mxu0 0.0
    %3188 = vmatprep.subr.mxu0 0.0
    %3189 = vmatpush1.msra.mxu0 %v3137
    %3190 = vmatprep.subr.mxu0 0.0
    %3191 = vmatpush1.msra.mxu0 %v3113
    %3192 = vmatprep.subr.mxu0 0.0
    %3193 = vmatpush1.msra.mxu0 %v3089
    %3194 = vmatprep.subr.mxu0 0.0
    %3195 = vmatpush1.msra.mxu0 %v3065
    %3196 = vmatprep.subr.mxu0 0.0
    %3197 = vmatpush2.msra.mxu0 0.0
    %3198 = vmatprep.subr.mxu0 0.0
    %3199 = vmatpush2.msra.mxu0 0.0
    %3200 = vmatprep.subr.mxu0 0.0
    %3201 = vmatpush2.msra.mxu0 0.0
    %3202 = vmatprep.subr.mxu0 0.0
    %3203 = vmatpush2.msra.mxu0 0.0
    %3204 = vmatprep.subr.mxu0 0.0
    %3205 = vmatpush2.msra.mxu0 0.0
    %3206 = vmatprep.subr.mxu0 0.0
    %3207 = vmatpush2.msra.mxu0 0.0
    %3208 = vmatprep.subr.mxu0 0.0
    %3209 = vmatpush2.msra.mxu0 0.0
    %3210 = vmatprep.subr.mxu0 0.0
    %3211 = vmatpush2.msra.mxu0 0.0
    %3212 = vmatprep.subr.mxu0 0.0
    %3213 = vmatpush2.msra.mxu0 0.0
    %3214 = vmatprep.subr.mxu0 0.0
    %3215 = vmatpush2.msra.mxu0 0.0
    %3216 = vmatprep.subr.mxu0 0.0
    %3217 = vmatpush2.msra.mxu0 0.0
    %3218 = vmatprep.subr.mxu0 0.0
    %3219 = vmatpush2.msra.mxu0 0.0
    %3220 = vmatprep.subr.mxu0 0.0
    %3221 = vmatpush2.msra.mxu0 0.0
    %3222 = vmatprep.subr.mxu0 0.0
    %3223 = vmatpush2.msra.mxu0 0.0
    %3224 = vmatprep.subr.mxu0 0.0
    %3225 = vmatpush2.msra.mxu0 0.0
    %3226 = vmatprep.subr.mxu0 0.0
    %3227 = vmatpush2.msra.mxu0 0.0
    %3228 = vmatprep.mubr.f32.mxu0 0.0
    %3229 = vmatmul.mubr.f32.gmra.mxu0 %v1402
    %v3230 = vpop.f32.mrf.mxu0
    %v3231 = vadd.f32 %v1343, %v3230
    %v3232 = vpop.f32.mrf.mxu0
    %3233 = vmatprep.mubr.f32.mxu0 0.0
    %3234 = vmatmul.mubr.f32.gmra.mxu0 %v1405
    %v3235 = vpop.f32.mrf.mxu0
    %v3236 = vadd.f32 %v1348, %v3235
    %v3237 = vpop.f32.mrf.mxu0
    %3238 = vmatprep.mubr.f32.mxu0 0.0
    %3239 = vmatmul.mubr.f32.gmra.mxu0 %v1408
    %v3240 = vpop.f32.mrf.mxu0
    %v3241 = vadd.f32 %v1353, %v3240
    %v3242 = vpop.f32.mrf.mxu0
    %3243 = vmatprep.mubr.f32.mxu0 0.0
    %3244 = vmatmul.mubr.f32.gmra.mxu0 %v1411
    %v3245 = vpop.f32.mrf.mxu0
    %v3246 = vadd.f32 %v1358, %v3245
    %v3247 = vpop.f32.mrf.mxu0
    %3248 = vmatprep.mubr.f32.mxu0 0.0
    %3249 = vmatmul.mubr.f32.gmra.mxu0 %v1414
    %v3250 = vpop.f32.mrf.mxu0
    %v3251 = vadd.f32 %v1363, %v3250
    %v3252 = vpop.f32.mrf.mxu0
    %3253 = vmatprep.mubr.f32.mxu0 0.0
    %3254 = vmatmul.mubr.f32.gmra.mxu0 %v1417
    %v3255 = vpop.f32.mrf.mxu0
    %v3256 = vadd.f32 %v1368, %v3255
    %v3257 = vpop.f32.mrf.mxu0
    %3258 = vmatprep.mubr.f32.mxu0 0.0
    %3259 = vmatmul.mubr.f32.gmra.mxu0 %v1420
    %v3260 = vpop.f32.mrf.mxu0
    %v3261 = vadd.f32 %v1373, %v3260
    %v3262 = vpop.f32.mrf.mxu0
    %3263 = vmatprep.mubr.f32.mxu0 0.0
    %3264 = vmatmul.mubr.f32.gmra.mxu0 %v1423
    %v3265 = vpop.f32.mrf.mxu0
    %v3266 = vadd.f32 %v1378, %v3265
    %v3267 = vpop.f32.mrf.mxu0
    %3268 = vmatprep.mubr.f32.mxu0 0.0
    %3269 = vmatmul.mubr.f32.gmra.mxu0 %v1426
    %v3270 = vpop.f32.mrf.mxu0
    %v3271 = vadd.f32 %v1383, %v3270
    %v3272 = vpop.f32.mrf.mxu0
    %3273 = vmatprep.mubr.f32.mxu0 0.0
    %3274 = vmatmul.mubr.f32.gmra.mxu0 %v1429
    %v3275 = vpop.f32.mrf.mxu0
    %v3276 = vadd.f32 %v1388, %v3275
    %v3277 = vpop.f32.mrf.mxu0
    %3278 = vmatprep.mubr.f32.mxu0 0.0
    %3279 = vmatmul.mubr.f32.gmra.mxu0 %v1432
    %v3280 = vpop.f32.mrf.mxu0
    %v3281 = vadd.f32 %v1393, %v3280
    %v3282 = vpop.f32.mrf.mxu0
    %3283 = vmatprep.mubr.f32.mxu0 0.0
    %3284 = vmatmul.mubr.f32.gmra.mxu0 %v1435
    %v3285 = vpop.f32.mrf.mxu0
    %v3286 = vadd.f32 %v1398, %v3285
    %v3287 = vpop.f32.mrf.mxu0
    %3288 = vdwg.mxu0
    %v3289 = vld [vmem:[%s1324] sm:$0xff]
    %v3290 = vld [vmem:[%s1324 + $0x8] sm:$0xff]
    %v3291 = vld [vmem:[%s1324 + $0x10] sm:$0xff]
    %v3292 = vadd.f32 %v3289, %v3231
    %v3293 = vxor.u32 %v3292, 2147483648
    %v3294 = vmul.f32 %v3293, 1.442695
    %v3295 = vpow.pop %v3294
    %v3296 = vadd.f32 %v3295, 1.0
    %v3297 = vrcp.pop %v3296
    %v3298 = vmul.f32 1.0, %v3297
    %v3299 = vadd.f32 %v3290, %v3236
    %v3300 = vxor.u32 %v3299, 2147483648
    %v3301 = vmul.f32 %v3300, 1.442695
    %v3302 = vpow.pop %v3301
    %v3303 = vadd.f32 %v3302, 1.0
    %v3304 = vrcp.pop %v3303
    %v3305 = vmul.f32 1.0, %v3304
    %v3306 = vmul.f32 %v3298, %v3241
    %v3307 = vadd.f32 %v3291, %v3306
    %v3308 = vtanh.pop %v3307
    %v3309 = vsub.f32 1.0, %v3305
    %v3310 = vmul.f32 %v3309, %v3308
    %v3311 = vmul.f32 %v3305, %v3065
    %v3312 = vadd.f32 %v3310, %v3311
    %v3313 = vld [vmem:[%s306] sm:$0xff]
    %v3314 = vld [vmem:[%s306 + $0x8] sm:$0xff]
    %v3315 = vld [vmem:[%s306 + $0x10] sm:$0xff]
    %v3316 = vadd.f32 %v3313, %v3246
    %v3317 = vxor.u32 %v3316, 2147483648
    %v3318 = vmul.f32 %v3317, 1.442695
    %v3319 = vpow.pop %v3318
    %v3320 = vadd.f32 %v3319, 1.0
    %v3321 = vrcp.pop %v3320
    %v3322 = vmul.f32 1.0, %v3321
    %v3323 = vadd.f32 %v3314, %v3251
    %v3324 = vxor.u32 %v3323, 2147483648
    %v3325 = vmul.f32 %v3324, 1.442695
    %v3326 = vpow.pop %v3325
    %v3327 = vadd.f32 %v3326, 1.0
    %v3328 = vrcp.pop %v3327
    %v3329 = vmul.f32 1.0, %v3328
    %v3330 = vmul.f32 %v3322, %v3256
    %v3331 = vadd.f32 %v3315, %v3330
    %v3332 = vtanh.pop %v3331
    %v3333 = vsub.f32 1.0, %v3329
    %v3334 = vmul.f32 %v3333, %v3332
    %v3335 = vmul.f32 %v3329, %v3089
    %v3336 = vadd.f32 %v3334, %v3335
    %v3337 = vld [vmem:[%s1332] sm:$0xff]
    %v3338 = vld [vmem:[%s1332 + $0x8] sm:$0xff]
    %v3339 = vld [vmem:[%s1332 + $0x10] sm:$0xff]
    %v3340 = vadd.f32 %v3337, %v3261
    %v3341 = vxor.u32 %v3340, 2147483648
    %v3342 = vmul.f32 %v3341, 1.442695
    %v3343 = vpow.pop %v3342
    %v3344 = vadd.f32 %v3343, 1.0
    %v3345 = vrcp.pop %v3344
    %v3346 = vmul.f32 1.0, %v3345
    %v3347 = vadd.f32 %v3338, %v3266
    %v3348 = vxor.u32 %v3347, 2147483648
    %v3349 = vmul.f32 %v3348, 1.442695
    %v3350 = vpow.pop %v3349
    %v3351 = vadd.f32 %v3350, 1.0
    %v3352 = vrcp.pop %v3351
    %v3353 = vmul.f32 1.0, %v3352
    %v3354 = vmul.f32 %v3346, %v3271
    %v3355 = vadd.f32 %v3339, %v3354
    %v3356 = vtanh.pop %v3355
    %v3357 = vsub.f32 1.0, %v3353
    %v3358 = vmul.f32 %v3357, %v3356
    %v3359 = vmul.f32 %v3353, %v3113
    %v3360 = vadd.f32 %v3358, %v3359
    %v3361 = vld [vmem:[%s314] sm:$0xff]
    %v3362 = vld [vmem:[%s314 + $0x8] sm:$0xff]
    %v3363 = vld [vmem:[%s314 + $0x10] sm:$0xff]
    %v3364 = vadd.f32 %v3361, %v3276
    %v3365 = vxor.u32 %v3364, 2147483648
    %v3366 = vmul.f32 %v3365, 1.442695
    %v3367 = vpow.pop %v3366
    %v3368 = vadd.f32 %v3367, 1.0
    %v3369 = vrcp.pop %v3368
    %v3370 = vmul.f32 1.0, %v3369
    %v3371 = vadd.f32 %v3362, %v3281
    %v3372 = vxor.u32 %v3371, 2147483648
    %v3373 = vmul.f32 %v3372, 1.442695
    %v3374 = vpow.pop %v3373
    %v3375 = vadd.f32 %v3374, 1.0
    %v3376 = vrcp.pop %v3375
    %v3377 = vmul.f32 1.0, %v3376
    %v3378 = vmul.f32 %v3370, %v3286
    %v3379 = vadd.f32 %v3363, %v3378
    %v3380 = vtanh.pop %v3379
    %v3381 = vsub.f32 1.0, %v3377
    %v3382 = vmul.f32 %v3381, %v3380
    %v3383 = vmul.f32 %v3377, %v3137
    %v3384 = vadd.f32 %v3382, %v3383
    %s3385 = scalar_lea.vmem [#allocation3], 56
    %3386 = vst.msk [vmem:[%s3385] sm:$0xff] %vm302, %v3312
    %3387 = vst.msk [vmem:[#allocation4] sm:$0xff] %vm302, %v3336
    %v3388 = vmax.f32 %v3360, 0.0
    %v3389 = vand.u32 2147483647, %v3360
    %v3390 = vsub.f32 0.0, %v3389
    %v3391 = vmul.f32 %v3390, 1.442695
    %v3392 = vpow.pop %v3391
    %v3393 = vadd.f32 %v3392, 1.0
    %v3394 = vlog2.pop %v3393
    %v3395 = vmul.f32 %v3394, 0.6931472
    %v3396 = vadd.f32 %v3388, %v3395
    %s3397 = scalar_lea.vmem [#allocation7], 56
    %3398 = vst.msk [vmem:[%s3397] sm:$0xff] %vm302, %v3396
    %v3399 = vmax.f32 %v3384, 0.0
    %v3400 = vand.u32 2147483647, %v3384
    %v3401 = vsub.f32 0.0, %v3400
    %v3402 = vmul.f32 %v3401, 1.442695
    %v3403 = vpow.pop %v3402
    %v3404 = vadd.f32 %v3403, 1.0
    %v3405 = vlog2.pop %v3404
    %v3406 = vmul.f32 %v3405, 0.6931472
    %v3407 = vadd.f32 %v3399, %v3406
    %s3408 = scalar_lea.vmem [#allocation7], 64
    %3409 = vst.msk [vmem:[%s3408] sm:$0xff] %vm302, %v3407
    %v3410 = vld [vmem:[#allocation3] sm:$0xff]
    %v3411 = vld [vmem:[#allocation3 + $0x8] sm:$0xff]
    %v3412 = vld [vmem:[#allocation3 + $0x10] sm:$0xff]
    %v3413 = vld [vmem:[#allocation3 + $0x18] sm:$0xff]
    %v3414 = vld [vmem:[#allocation3 + $0x20] sm:$0xff]
    %v3415 = vld [vmem:[#allocation3 + $0x28] sm:$0xff]
    %v3416 = vld [vmem:[#allocation3 + $0x30] sm:$0xff]
    %v3417 = vld [vmem:[#allocation3 + $0x38] sm:$0xff]
    %v3418 = vld [vmem:[%s5] sm:$0xff]
    %3420 = vset.pattern.permute.xlu0 0
    %3421 = vperm.xlu0 %3420, %v3418
    %v3422 = vpop.permute.xlu0 %3421
    %v3424 = vmul.f32 %v3410, %v3422
    %v3425 = vmul.f32 %v3411, %v3422
    %v3426 = vmul.f32 %v3412, %v3422
    %v3427 = vmul.f32 %v3413, %v3422
    %v3428 = vmul.f32 %v3414, %v3422
    %v3429 = vmul.f32 %v3415, %v3422
    %v3430 = vmul.f32 %v3416, %v3422
    %v3431 = vmul.f32 %v3417, %v3422
    %v3432 = vsel %vm302, %v3424, 0.0
    %v3433 = vrot.slane %v3432, 4
    %v3434 = vadd.f32 %v3432, %v3433
    %v3435 = vrot.slane %v3434, 2
    %v3436 = vadd.f32 %v3434, %v3435
    %v3437 = vrot.slane %v3436, 1
    %v3438 = vadd.f32 %v3436, %v3437
    %v3439 = vsel %vm302, %v3425, 0.0
    %v3440 = vrot.slane %v3439, 4
    %v3441 = vadd.f32 %v3439, %v3440
    %v3442 = vrot.slane %v3441, 2
    %v3443 = vadd.f32 %v3441, %v3442
    %v3444 = vrot.slane %v3443, 1
    %v3445 = vadd.f32 %v3443, %v3444
    %v3446 = vsel %vm302, %v3426, 0.0
    %v3447 = vrot.slane %v3446, 4
    %v3448 = vadd.f32 %v3446, %v3447
    %v3449 = vrot.slane %v3448, 2
    %v3450 = vadd.f32 %v3448, %v3449
    %v3451 = vrot.slane %v3450, 1
    %v3452 = vadd.f32 %v3450, %v3451
    %v3453 = vsel %vm302, %v3427, 0.0
    %v3454 = vrot.slane %v3453, 4
    %v3455 = vadd.f32 %v3453, %v3454
    %v3456 = vrot.slane %v3455, 2
    %v3457 = vadd.f32 %v3455, %v3456
    %v3458 = vrot.slane %v3457, 1
    %v3459 = vadd.f32 %v3457, %v3458
    %v3460 = vsel %vm302, %v3428, 0.0
    %v3461 = vrot.slane %v3460, 4
    %v3462 = vadd.f32 %v3460, %v3461
    %v3463 = vrot.slane %v3462, 2
    %v3464 = vadd.f32 %v3462, %v3463
    %v3465 = vrot.slane %v3464, 1
    %v3466 = vadd.f32 %v3464, %v3465
    %v3467 = vsel %vm302, %v3429, 0.0
    %v3468 = vrot.slane %v3467, 4
    %v3469 = vadd.f32 %v3467, %v3468
    %v3470 = vrot.slane %v3469, 2
    %v3471 = vadd.f32 %v3469, %v3470
    %v3472 = vrot.slane %v3471, 1
    %v3473 = vadd.f32 %v3471, %v3472
    %v3474 = vsel %vm302, %v3430, 0.0
    %v3475 = vrot.slane %v3474, 4
    %v3476 = vadd.f32 %v3474, %v3475
    %v3477 = vrot.slane %v3476, 2
    %v3478 = vadd.f32 %v3476, %v3477
    %v3479 = vrot.slane %v3478, 1
    %v3480 = vadd.f32 %v3478, %v3479
    %v3481 = vsel %vm302, %v3431, 0.0
    %v3482 = vrot.slane %v3481, 4
    %v3483 = vadd.f32 %v3481, %v3482
    %v3484 = vrot.slane %v3483, 2
    %v3485 = vadd.f32 %v3483, %v3484
    %v3486 = vrot.slane %v3485, 1
    %v3487 = vadd.f32 %v3485, %v3486
    %v3488 = vld [vmem:[#allocation4] sm:$0xff]
    %v3489 = vld [vmem:[#allocation4 + $0x8] sm:$0xff]
    %v3490 = vld [vmem:[#allocation4 + $0x10] sm:$0xff]
    %v3491 = vld [vmem:[#allocation4 + $0x18] sm:$0xff]
    %v3492 = vld [vmem:[#allocation4 + $0x20] sm:$0xff]
    %v3493 = vld [vmem:[#allocation4 + $0x28] sm:$0xff]
    %v3494 = vld [vmem:[#allocation4 + $0x30] sm:$0xff]
    %v3495 = vld [vmem:[#allocation4 + $0x38] sm:$0xff]
    %s3496 = scalar_lea.vmem %s5, 8
    %v3497 = vld [vmem:[%s3496] sm:$0xff]
    %3499 = vset.pattern.permute.xlu0 0
    %3500 = vperm.xlu0 %3499, %v3497
    %v3501 = vpop.permute.xlu0 %3500
    %v3503 = vmul.f32 %v3488, %v3501
    %v3504 = vmul.f32 %v3489, %v3501
    %v3505 = vmul.f32 %v3490, %v3501
    %v3506 = vmul.f32 %v3491, %v3501
    %v3507 = vmul.f32 %v3492, %v3501
    %v3508 = vmul.f32 %v3493, %v3501
    %v3509 = vmul.f32 %v3494, %v3501
    %v3510 = vmul.f32 %v3495, %v3501
    %v3511 = vsel %vm302, %v3503, 0.0
    %v3512 = vrot.slane %v3511, 4
    %v3513 = vadd.f32 %v3511, %v3512
    %v3514 = vrot.slane %v3513, 2
    %v3515 = vadd.f32 %v3513, %v3514
    %v3516 = vrot.slane %v3515, 1
    %v3517 = vadd.f32 %v3515, %v3516
    %v3518 = vsel %vm302, %v3504, 0.0
    %v3519 = vrot.slane %v3518, 4
    %v3520 = vadd.f32 %v3518, %v3519
    %v3521 = vrot.slane %v3520, 2
    %v3522 = vadd.f32 %v3520, %v3521
    %v3523 = vrot.slane %v3522, 1
    %v3524 = vadd.f32 %v3522, %v3523
    %v3525 = vsel %vm302, %v3505, 0.0
    %v3526 = vrot.slane %v3525, 4
    %v3527 = vadd.f32 %v3525, %v3526
    %v3528 = vrot.slane %v3527, 2
    %v3529 = vadd.f32 %v3527, %v3528
    %v3530 = vrot.slane %v3529, 1
    %v3531 = vadd.f32 %v3529, %v3530
    %v3532 = vsel %vm302, %v3506, 0.0
    %v3533 = vrot.slane %v3532, 4
    %v3534 = vadd.f32 %v3532, %v3533
    %v3535 = vrot.slane %v3534, 2
    %v3536 = vadd.f32 %v3534, %v3535
    %v3537 = vrot.slane %v3536, 1
    %v3538 = vadd.f32 %v3536, %v3537
    %v3539 = vsel %vm302, %v3507, 0.0
    %v3540 = vrot.slane %v3539, 4
    %v3541 = vadd.f32 %v3539, %v3540
    %v3542 = vrot.slane %v3541, 2
    %v3543 = vadd.f32 %v3541, %v3542
    %v3544 = vrot.slane %v3543, 1
    %v3545 = vadd.f32 %v3543, %v3544
    %v3546 = vsel %vm302, %v3508, 0.0
    %v3547 = vrot.slane %v3546, 4
    %v3548 = vadd.f32 %v3546, %v3547
    %v3549 = vrot.slane %v3548, 2
    %v3550 = vadd.f32 %v3548, %v3549
    %v3551 = vrot.slane %v3550, 1
    %v3552 = vadd.f32 %v3550, %v3551
    %v3553 = vsel %vm302, %v3509, 0.0
    %v3554 = vrot.slane %v3553, 4
    %v3555 = vadd.f32 %v3553, %v3554
    %v3556 = vrot.slane %v3555, 2
    %v3557 = vadd.f32 %v3555, %v3556
    %v3558 = vrot.slane %v3557, 1
    %v3559 = vadd.f32 %v3557, %v3558
    %v3560 = vsel %vm302, %v3510, 0.0
    %v3561 = vrot.slane %v3560, 4
    %v3562 = vadd.f32 %v3560, %v3561
    %v3563 = vrot.slane %v3562, 2
    %v3564 = vadd.f32 %v3562, %v3563
    %v3565 = vrot.slane %v3564, 1
    %v3566 = vadd.f32 %v3564, %v3565
    %v3567 = vadd.f32 %v3438, %v3517
    %v3568 = vadd.f32 %v3445, %v3524
    %v3569 = vadd.f32 %v3452, %v3531
    %v3570 = vadd.f32 %v3459, %v3538
    %v3571 = vadd.f32 %v3466, %v3545
    %v3572 = vadd.f32 %v3473, %v3552
    %v3573 = vadd.f32 %v3480, %v3559
    %v3574 = vadd.f32 %v3487, %v3566
    %v3575 = vmul.f32 %v3567, 1.442695
    %v3576 = vpow.pop %v3575
    %v3577 = vmul.f32 %v3568, 1.442695
    %v3578 = vpow.pop %v3577
    %v3579 = vmul.f32 %v3569, 1.442695
    %v3580 = vpow.pop %v3579
    %v3581 = vmul.f32 %v3570, 1.442695
    %v3582 = vpow.pop %v3581
    %v3583 = vmul.f32 %v3571, 1.442695
    %v3584 = vpow.pop %v3583
    %v3585 = vmul.f32 %v3572, 1.442695
    %v3586 = vpow.pop %v3585
    %v3587 = vmul.f32 %v3573, 1.442695
    %v3588 = vpow.pop %v3587
    %v3589 = vmul.f32 %v3574, 1.442695
    %v3590 = vpow.pop %v3589
    %vm3599 = vcmask 1041409
    %v3600 = vsel %vm3599, %v3578, %v3576
    %vm3601 = vcmask 1042434
    %v3602 = vsel %vm3601, %v3580, %v3600
    %vm3603 = vcmask 1043459
    %v3604 = vsel %vm3603, %v3582, %v3602
    %vm3605 = vcmask 1044484
    %v3606 = vsel %vm3605, %v3584, %v3604
    %vm3607 = vcmask 1045509
    %v3608 = vsel %vm3607, %v3586, %v3606
    %vm3609 = vcmask 1046534
    %v3610 = vsel %vm3609, %v3588, %v3608
    %vm3611 = vcmask 1047559
    %v3612 = vsel %vm3611, %v3590, %v3610
    %3614 = vst.msk [vmem:[#allocation5] sm:$0xff] %vm302, %v3612
    // Predicated region
    $region26: #{tpu_custom_call.1} parent=1 // pred_check
      _
    $region27: #{tpu_custom_call.1} parent=1 // pred_check_branch
      %3616 = sbr.rel (0) target = $region29
    $region28: #{tpu_custom_call.1} parent=1 // pred_region
      %s3618 = ssub.s32 128, 128
      %3619 = vsyncadd [#allocation6], %s3618
      %s3621 = sshll.u32 [#allocation5], 4
      %s3622 = int_to_ptr.vmem [resolvable:$true] %s3621
      %3624 = dma.vmem_to_hbm [thread:$0]  %s3622, 128, %s6, [#allocation6]
    $region29: #{tpu_custom_call.1} parent=1 // pred_fallthru
      _
    // Predicated region
    $region30: #{tpu_custom_call.1} parent=1 // pred_check
      _
    $region31: #{tpu_custom_call.1} parent=1 // pred_check_branch
      %3626 = sbr.rel (0) target = $region33
    $region32: #{tpu_custom_call.1} parent=1 // pred_region
      %s3628 = ssub.s32 2048, 2048
      %3629 = vsyncadd [#allocation8], %s3628
      %s3630 = sshll.u32 [#allocation7], 4
      %s3631 = int_to_ptr.vmem [resolvable:$true] %s3630
      %3636 = dma.vmem_to_hbm [thread:$0]  %s3631, 2048, %s7, [#allocation8], 128, 128, 8
    $region33: #{tpu_custom_call.1} parent=1 // pred_fallthru
      _
    // Predicated region
    $region34: #{tpu_custom_call.1} parent=1 // pred_check
      _
    $region35: #{tpu_custom_call.1} parent=1 // pred_check_branch
      %3638 = sbr.rel (0) target = $region37
    $region36: #{tpu_custom_call.1} parent=1 // pred_region
      %3639 = dma.done [#allocation6], 128
    $region37: #{tpu_custom_call.1} parent=1 // pred_fallthru
      _
    // Predicated region
    $region38: #{tpu_custom_call.1} parent=1 // pred_check
      _
    $region39: #{tpu_custom_call.1} parent=1 // pred_check_branch
      %3641 = sbr.rel (0) target = $region41
    $region40: #{tpu_custom_call.1} parent=1 // pred_region
      %3642 = dma.done [#allocation8], 2048
    $region41: #{tpu_custom_call.1} parent=1 // pred_fallthru
      _
    %3643 = vsyncpa [#allocation6], 1
    %3644 = vsyncpa [#allocation8], 1

</llo_original>
